<compile_context>
chip_gen: v6e
topology: v6e:2x2x1
jax: 0.10.0
libtpu: 0.0.40
codegen_flags: <defaults>
</compile_context>

<pallas_src>
import functools

import jax
import jax.numpy as jnp
from jax.experimental import pallas as pl
from jax.experimental.pallas import tpu as pltpu

BN_EPS = 1e-5


# ----------------------------------------------------------------------------
# Fused BasicBlock kernel
# ----------------------------------------------------------------------------
def _basic_block_kernel(x_ref, w1_ref, b1_ref, w2_ref, b2_ref, *rest,
                        stride, OH, OW, Cin, planes, B_blk, has_proj,
                        emit_preact):
    """One grid step = B_blk batch elements.

    x_ref   : (B_blk, s*s, Hq, Wq, Cin)  bf16 polyphase-padded input
    w1_ref  : (9*Cin, planes)            bf16, BN1 scale pre-folded
    b1_ref  : (1, planes)                f32  BN1 bias
    w2_ref  : (9*planes, planes)         bf16, BN2 scale pre-folded
    b2_ref  : (1, planes)                f32  BN2 bias
    [wsc_ref: (Cin, planes) bf16, bsc_ref: (1, planes) f32]  projection shortcut
    out_ref : (B_blk, OH*OW, planes)     bf16
    [pre_ref: (B_blk, OH*OW, planes)     f32]                pre-activation
    h1pad_ref: VMEM (B_blk, OH+2, OW+2, planes) bf16  relu(bn1(conv1)) padded
    col1_ref : VMEM (M, 9*Cin)    bf16  im2col staging for conv1
    col2_ref : VMEM (M, 9*planes) bf16  im2col staging for conv2
    """
    idx = 0
    if has_proj:
        wsc_ref = rest[idx]
        bsc_ref = rest[idx + 1]
        idx += 2
    out_ref = rest[idx]
    idx += 1
    if emit_preact:
        pre_ref = rest[idx]
        idx += 1
    h1pad_ref, col1_ref, col2_ref = rest[idx], rest[idx + 1], rest[idx + 2]

    s = stride
    M = B_blk * OH * OW

    # ---- conv1 (3x3, stride s) + bn1 + relu : im2col + one K=9*Cin matmul ----
    for kh in range(3):
        for kw in range(3):
            p = (kh % s) * s + (kw % s)        # polyphase slab index
            oh0, ow0 = kh // s, kw // s        # contiguous offset in that slab
            t = kh * 3 + kw
            patch = x_ref[:, p, oh0:oh0 + OH, ow0:ow0 + OW, :]
            col1_ref[:, t * Cin:(t + 1) * Cin] = patch.reshape(M, Cin)
    h1 = jnp.dot(col1_ref[...], w1_ref[...],
                 preferred_element_type=jnp.float32)
    h1 = jnp.maximum(h1 + b1_ref[...], 0.0).astype(jnp.bfloat16)

    # Zero only the 1-pixel border (interior is fully overwritten each step).
    zr = jnp.zeros((B_blk, 1, OW + 2, planes), jnp.bfloat16)
    zc = jnp.zeros((B_blk, OH + 2, 1, planes), jnp.bfloat16)
    h1pad_ref[:, 0:1, :, :] = zr
    h1pad_ref[:, OH + 1:OH + 2, :, :] = zr
    h1pad_ref[:, :, 0:1, :] = zc
    h1pad_ref[:, :, OW + 1:OW + 2, :] = zc
    h1pad_ref[:, 1:OH + 1, 1:OW + 1, :] = h1.reshape(B_blk, OH, OW, planes)

    # ---- conv2 (3x3, stride 1) + bn2 : im2col + one K=9*planes matmul ----
    for kh in range(3):
        for kw in range(3):
            t = kh * 3 + kw
            patch = h1pad_ref[:, kh:kh + OH, kw:kw + OW, :]
            col2_ref[:, t * planes:(t + 1) * planes] = patch.reshape(M, planes)
    acc2 = jnp.dot(col2_ref[...], w2_ref[...],
                   preferred_element_type=jnp.float32) + b2_ref[...]

    # ---- shortcut (identity or 1x1-conv+BN projection) ----
    pc = (1 % s) * s + (1 % s)                 # center tap of the 3x3 grid
    o0 = 1 // s
    sc_patch = x_ref[:, pc, o0:o0 + OH, o0:o0 + OW, :].reshape(M, Cin)
    if has_proj:
        sc = jnp.dot(sc_patch, wsc_ref[...],
                     preferred_element_type=jnp.float32) + bsc_ref[...]
    else:
        sc = sc_patch.astype(jnp.float32)

    preact = acc2 + sc
    out = jnp.maximum(preact, 0.0)
    out_ref[...] = out.reshape(B_blk, OH * OW, planes).astype(out_ref.dtype)
    if emit_preact:
        pre_ref[...] = preact.reshape(B_blk, OH * OW, planes).astype(pre_ref.dtype)


# ----------------------------------------------------------------------------
# pallas_call wrapper
# ----------------------------------------------------------------------------
def basic_block_pallas(xph, w1, b1, w2, b2, wsc, bsc, *, stride, OH, OW,
                       is_last, b_blk):
    N, P, Hq, Wq, Cin = xph.shape
    planes = w1.shape[-1]
    has_proj = wsc is not None
    assert N % b_blk == 0
    grid = (N // b_blk,)
    M = b_blk * OH * OW

    kernel = functools.partial(
        _basic_block_kernel, stride=stride, OH=OH, OW=OW, Cin=Cin,
        planes=planes, B_blk=b_blk, has_proj=has_proj, emit_preact=is_last)

    inputs = [xph, w1, b1, w2, b2]
    in_specs = [
        pl.BlockSpec((b_blk, P, Hq, Wq, Cin), lambda n: (n, 0, 0, 0, 0)),
        pl.BlockSpec((9 * Cin, planes), lambda n: (0, 0)),
        pl.BlockSpec((1, planes), lambda n: (0, 0)),
        pl.BlockSpec((9 * planes, planes), lambda n: (0, 0)),
        pl.BlockSpec((1, planes), lambda n: (0, 0)),
    ]
    if has_proj:
        inputs += [wsc, bsc]
        in_specs += [pl.BlockSpec((Cin, planes), lambda n: (0, 0)),
                     pl.BlockSpec((1, planes), lambda n: (0, 0))]

    out_block = pl.BlockSpec((b_blk, OH * OW, planes), lambda n: (n, 0, 0))
    if is_last:
        out_shape = (jax.ShapeDtypeStruct((N, OH * OW, planes), jnp.bfloat16),
                     jax.ShapeDtypeStruct((N, OH * OW, planes), jnp.float32))
        out_specs = (out_block, out_block)
    else:
        out_shape = jax.ShapeDtypeStruct((N, OH * OW, planes), jnp.bfloat16)
        out_specs = out_block

    flops = 2 * N * OH * OW * planes * (
        9 * Cin + 9 * planes + (Cin if has_proj else 0))
    bytes_accessed = (xph.size * 2 + w1.size * 2 + w2.size * 2
                      + b1.size * 4 + b2.size * 4
                      + ((wsc.size * 2 + bsc.size * 4) if has_proj else 0)
                      + N * OH * OW * planes * (2 + (4 if is_last else 0)))

    return pl.pallas_call(
        kernel,
        out_shape=out_shape,
        grid=grid,
        in_specs=in_specs,
        out_specs=out_specs,
        scratch_shapes=[
            pltpu.VMEM((b_blk, OH + 2, OW + 2, planes), jnp.bfloat16),
            pltpu.VMEM((M, 9 * Cin), jnp.bfloat16),
            pltpu.VMEM((M, 9 * planes), jnp.bfloat16),
        ],
        compiler_params=pltpu.CompilerParams(
            dimension_semantics=("parallel",)),
        cost_estimate=pl.CostEstimate(flops=int(flops), transcendentals=0,
                                      bytes_accessed=int(bytes_accessed)),
    )(*inputs)


# ----------------------------------------------------------------------------
# Plain-JAX glue: zero-duplication polyphase layout + BN folding
# ----------------------------------------------------------------------------
def _make_phases(x_nhwc, stride):
    """Pad by 1 and split into stride x stride polyphase slabs (no duplication).

    Returns (N, stride*stride, Hq, Wq, C) with slab[ph*stride+pw] = xpad[ph::s, pw::s].
    Every 3x3 / 1x1 conv tap then becomes a contiguous (OH, OW) window of a slab.
    """
    N, H, W, C = x_nhwc.shape
    s = stride
    xp = jnp.pad(x_nhwc, ((0, 0), (1, 1), (1, 1), (0, 0)))
    Hp, Wp = H + 2, W + 2
    Hq = -(-Hp // s) * s
    Wq = -(-Wp // s) * s
    xp = jnp.pad(xp, ((0, 0), (0, Hq - Hp), (0, Wq - Wp), (0, 0)))
    xph = xp.reshape(N, Hq // s, s, Wq // s, s, C)
    xph = jnp.transpose(xph, (0, 2, 4, 1, 3, 5))
    return xph.reshape(N, s * s, Hq // s, Wq // s, C)


def _fold_bn(w2d, bn):
    """Fold BN scale into conv weight (last dim = Cout); return bf16 w, f32 bias."""
    scale = bn["gamma"] / jnp.sqrt(bn["var"] + BN_EPS)
    bias = bn["beta"] - bn["mean"] * scale
    wf = (w2d * scale).astype(jnp.bfloat16)
    return wf, bias.reshape(1, -1).astype(jnp.float32)


def _pick_bblk(n, ohow, target_rows=512, max_b=8):
    """Largest divisor of n giving ~target_rows matmul rows, keeping >=2 grid steps."""
    target = max(1, min(max_b, target_rows // max(ohow, 1)))
    b = 1
    for d in range(1, n + 1):
        if n % d == 0 and d <= target:
            b = d
    while b > 1 and (n // b) < 2:
        b -= 1
        while b > 1 and n % b != 0:
            b -= 1
    return max(b, 1)


def basic_block_forward(params, x_nchw, is_last=False):
    """BasicBlock.forward. Accepts/returns NCHW like PyTorch; computes in NHWC."""
    x = jnp.transpose(x_nchw, (0, 2, 3, 1))
    N, H, W, Cin = x.shape
    s = params["stride"]
    OH = (H + 2 - 3) // s + 1
    OW = (W + 2 - 3) // s + 1
    planes = params["conv1_w"].shape[-1]

    xph = _make_phases(x, s).astype(jnp.bfloat16)  # bf16 activations for the MXU

    w1, b1 = _fold_bn(params["conv1_w"].reshape(9 * Cin, planes), params["bn1"])
    w2, b2 = _fold_bn(params["conv2_w"].reshape(9 * planes, planes), params["bn2"])
    if "sc_w" in params:
        wsc, bsc = _fold_bn(params["sc_w"].reshape(Cin, planes), params["sc_bn"])
    else:
        wsc, bsc = None, None

    b_blk = _pick_bblk(N, OH * OW)
    res = basic_block_pallas(xph, w1, b1, w2, b2, wsc, bsc,
                             stride=s, OH=OH, OW=OW, is_last=is_last,
                             b_blk=b_blk)

    def to_nchw(a):
        return jnp.transpose(a.reshape(N, OH, OW, planes), (0, 3, 1, 2))

    if is_last:
        out, pre = res
        return to_nchw(out), to_nchw(pre)
    return to_nchw(res)


# ----------------------------------------------------------------------------
# Deterministic parameter init (kaiming-normal fan_out convs, identity BN)
# ----------------------------------------------------------------------------
def _bn_params(c):
    return {"gamma": jnp.ones((c,), jnp.float32),
            "beta": jnp.zeros((c,), jnp.float32),
            "mean": jnp.zeros((c,), jnp.float32),
            "var": jnp.ones((c,), jnp.float32)}


def init_basic_block(key, in_planes, planes, stride):
    k1, k2, k3 = jax.random.split(key, 3)

    def conv_w(k, kh, kw, cin, cout):
        fan_out = cout * kh * kw
        return jax.random.normal(k, (kh, kw, cin, cout), jnp.float32) * (2.0 / fan_out) ** 0.5

    p = {"stride": stride,
         "conv1_w": conv_w(k1, 3, 3, in_planes, planes),
         "bn1": _bn_params(planes),
         "conv2_w": conv_w(k2, 3, 3, planes, planes),
         "bn2": _bn_params(planes)}
    if stride != 1 or in_planes != planes:
        p["sc_w"] = conv_w(k3, 1, 1, in_planes, planes)
        p["sc_bn"] = _bn_params(planes)
    return p


# ----------------------------------------------------------------------------
# Pure-JAX reference (f32) for correctness checking
# ----------------------------------------------------------------------------
def _conv2d_ref(x, w, stride, padding):
    return jax.lax.conv_general_dilated(
        x, w, window_strides=(stride, stride),
        padding=[(padding, padding), (padding, padding)],
        dimension_numbers=("NHWC", "HWIO", "NHWC"))


def basic_block_ref(x_nhwc, p, is_last=False):
    def bn(y, b):
        scale = b["gamma"] / jnp.sqrt(b["var"] + BN_EPS)
        return y * scale + (b["beta"] - b["mean"] * scale)

    out = jax.nn.relu(bn(_conv2d_ref(x_nhwc, p["conv1_w"], p["stride"], 1), p["bn1"]))
    out = bn(_conv2d_ref(out, p["conv2_w"], 1, 1), p["bn2"])
    if "sc_w" in p:
        sc = bn(_conv2d_ref(x_nhwc, p["sc_w"], p["stride"], 0), p["sc_bn"])
    else:
        sc = x_nhwc
    preact = out + sc
    out = jax.nn.relu(preact)
    return (out, preact) if is_last else out


# ----------------------------------------------------------------------------
if __name__ == "__main__":
    key = jax.random.PRNGKey(0)
    kx, ka, kb, kx8 = jax.random.split(key, 4)

    # Small shapes consistent with the module: batch=2, 64 channels, 16x16.
    N, Cin, H, W = 2, 64, 16, 16
    x = jax.random.normal(kx, (N, Cin, H, W), jnp.float32)

    # Block A: identity shortcut (stride=1, in_planes == planes)
    blkA = init_basic_block(ka, in_planes=Cin, planes=64, stride=1)
    # Block B: projection shortcut (stride=2, channel change), is_last=True
    blkB = init_basic_block(kb, in_planes=64, planes=128, stride=2)

    outA = basic_block_forward(blkA, x)
    outB, preB = basic_block_forward(blkB, outA, is_last=True)
    outA, outB, preB = jax.block_until_ready((outA, outB, preB))

    assert outA.shape == (2, 64, 16, 16), outA.shape
    assert outB.shape == (2, 128, 8, 8), outB.shape
    assert preB.shape == (2, 128, 8, 8), preB.shape
    assert bool(jnp.all(jnp.isfinite(outA.astype(jnp.float32))))
    assert bool(jnp.all(jnp.isfinite(outB.astype(jnp.float32))))
    assert bool(jnp.all(jnp.isfinite(preB)))

    # f32 reference check (bf16 matmul inputs / bf16 output -> loose tolerance).
    x_nhwc = jnp.transpose(x, (0, 2, 3, 1))
    refA = basic_block_ref(x_nhwc, blkA)
    refB, refPre = basic_block_ref(refA, blkB, is_last=True)

    def rel_err(a, b_nhwc):
        a = a.astype(jnp.float32)
        b = jnp.transpose(b_nhwc, (0, 3, 1, 2))
        return float(jnp.linalg.norm(a - b) / (jnp.linalg.norm(b) + 1e-6))

    assert rel_err(outA, refA) < 5e-2
    assert rel_err(outB, refB) < 5e-2
    assert rel_err(preB, refPre) < 5e-2

    # Exercise the batch-blocked path (B_blk=2 -> M=512 rows, grid=(4,)).
    x8 = jax.random.normal(kx8, (8, Cin, H, W), jnp.float32)
    out8 = jax.block_until_ready(basic_block_forward(blkA, x8))
    ref8 = basic_block_ref(jnp.transpose(x8, (0, 2, 3, 1)), blkA)
    assert out8.shape == (8, 64, 16, 16), out8.shape
    assert rel_err(out8, ref8) < 5e-2

    print("KERNEL_OK")
</pallas_src>

<mosaic_0001>
module attributes {stable_mosaic.version = 11 : i64} {
  func.func @_basic_block_kernel(%arg0: i32, %arg1: memref<1x1x18x18x64xbf16, #tpu.memory_space<vmem>>, %arg2: memref<576x64xbf16, #tpu.memory_space<vmem>>, %arg3: memref<1x64xf32, #tpu.memory_space<vmem>>, %arg4: memref<576x64xbf16, #tpu.memory_space<vmem>>, %arg5: memref<1x64xf32, #tpu.memory_space<vmem>>, %arg6: memref<1x256x64xbf16, #tpu.memory_space<vmem>>, %arg7: memref<1x18x18x64xbf16, #tpu.memory_space<vmem>>, %arg8: memref<256x576xbf16, #tpu.memory_space<vmem>>, %arg9: memref<256x576xbf16, #tpu.memory_space<vmem>>) attributes {dimension_semantics = [#tpu.dimension_semantics<parallel>], iteration_bounds = array<i64: 2>, scalar_prefetch = 0 : i64, scratch_operands = 3 : i64, tpu.core_type = #tpu.core_type<tc>, window_params = [{transform_indices = @transform_0, window_bounds = array<i64: 1, 1, 18, 18, 64>}, {pipeline_mode = #tpu.pipeline_mode<synchronous>, transform_indices = @transform_1, window_bounds = array<i64: 576, 64>}, {pipeline_mode = #tpu.pipeline_mode<synchronous>, transform_indices = @transform_2, window_bounds = array<i64: 1, 64>}, {pipeline_mode = #tpu.pipeline_mode<synchronous>, transform_indices = @transform_3, window_bounds = array<i64: 576, 64>}, {pipeline_mode = #tpu.pipeline_mode<synchronous>, transform_indices = @transform_4, window_bounds = array<i64: 1, 64>}, {transform_indices = @transform_5, window_bounds = array<i64: 1, 256, 64>}]} {
    %c0 = arith.constant 0 : index
    %c0_0 = arith.constant 0 : index
    %c0_1 = arith.constant 0 : index
    %c0_2 = arith.constant 0 : index
    %c0_3 = arith.constant 0 : index
    %0 = vector.load %arg1[%c0, %c0_0, %c0_1, %c0_2, %c0_3] : memref<1x1x18x18x64xbf16, #tpu.memory_space<vmem>>, vector<1x1x16x16x64xbf16>
    %1 = vector.shape_cast %0 : vector<1x1x16x16x64xbf16> to vector<1x16x16x64xbf16>
    %2 = vector.shape_cast %1 : vector<1x16x16x64xbf16> to vector<256x64xbf16>
    %c0_4 = arith.constant 0 : index
    %c0_5 = arith.constant 0 : index
    %3 = vector.load %arg8[%c0_4, %c0_5] : memref<256x576xbf16, #tpu.memory_space<vmem>>, vector<256x64xbf16>
    tpu.vector_store %arg8[%c0_4, %c0_5], %2 {strides = array<i32>} : memref<256x576xbf16, #tpu.memory_space<vmem>>, vector<256x64xbf16>,
    %c0_6 = arith.constant 0 : index
    %c0_7 = arith.constant 0 : index
    %c0_8 = arith.constant 0 : index
    %c1 = arith.constant 1 : index
    %c0_9 = arith.constant 0 : index
    %4 = vector.load %arg1[%c0_6, %c0_7, %c0_8, %c1, %c0_9] : memref<1x1x18x18x64xbf16, #tpu.memory_space<vmem>>, vector<1x1x16x16x64xbf16>
    %5 = vector.shape_cast %4 : vector<1x1x16x16x64xbf16> to vector<1x16x16x64xbf16>
    %6 = vector.shape_cast %5 : vector<1x16x16x64xbf16> to vector<256x64xbf16>
    %c0_10 = arith.constant 0 : index
    %c64 = arith.constant 64 : index
    %7 = vector.load %arg8[%c0_10, %c64] : memref<256x576xbf16, #tpu.memory_space<vmem>>, vector<256x64xbf16>
    tpu.vector_store %arg8[%c0_10, %c64], %6 {strides = array<i32>} : memref<256x576xbf16, #tpu.memory_space<vmem>>, vector<256x64xbf16>,
    %c0_11 = arith.constant 0 : index
    %c0_12 = arith.constant 0 : index
    %c0_13 = arith.constant 0 : index
    %c2 = arith.constant 2 : index
    %c0_14 = arith.constant 0 : index
    %8 = vector.load %arg1[%c0_11, %c0_12, %c0_13, %c2, %c0_14] : memref<1x1x18x18x64xbf16, #tpu.memory_space<vmem>>, vector<1x1x16x16x64xbf16>
    %9 = vector.shape_cast %8 : vector<1x1x16x16x64xbf16> to vector<1x16x16x64xbf16>
    %10 = vector.shape_cast %9 : vector<1x16x16x64xbf16> to vector<256x64xbf16>
    %c0_15 = arith.constant 0 : index
    %c128 = arith.constant 128 : index
    %11 = vector.load %arg8[%c0_15, %c128] : memref<256x576xbf16, #tpu.memory_space<vmem>>, vector<256x64xbf16>
    tpu.vector_store %arg8[%c0_15, %c128], %10 {strides = array<i32>} : memref<256x576xbf16, #tpu.memory_space<vmem>>, vector<256x64xbf16>,
    %c0_16 = arith.constant 0 : index
    %c0_17 = arith.constant 0 : index
    %c1_18 = arith.constant 1 : index
    %c0_19 = arith.constant 0 : index
    %c0_20 = arith.constant 0 : index
    %12 = vector.load %arg1[%c0_16, %c0_17, %c1_18, %c0_19, %c0_20] : memref<1x1x18x18x64xbf16, #tpu.memory_space<vmem>>, vector<1x1x16x16x64xbf16>
    %13 = vector.shape_cast %12 : vector<1x1x16x16x64xbf16> to vector<1x16x16x64xbf16>
    %14 = vector.shape_cast %13 : vector<1x16x16x64xbf16> to vector<256x64xbf16>
    %c0_21 = arith.constant 0 : index
    %c192 = arith.constant 192 : index
    %15 = vector.load %arg8[%c0_21, %c192] : memref<256x576xbf16, #tpu.memory_space<vmem>>, vector<256x64xbf16>
    tpu.vector_store %arg8[%c0_21, %c192], %14 {strides = array<i32>} : memref<256x576xbf16, #tpu.memory_space<vmem>>, vector<256x64xbf16>,
    %c0_22 = arith.constant 0 : index
    %c0_23 = arith.constant 0 : index
    %c1_24 = arith.constant 1 : index
    %c1_25 = arith.constant 1 : index
    %c0_26 = arith.constant 0 : index
    %16 = vector.load %arg1[%c0_22, %c0_23, %c1_24, %c1_25, %c0_26] : memref<1x1x18x18x64xbf16, #tpu.memory_space<vmem>>, vector<1x1x16x16x64xbf16>
    %17 = vector.shape_cast %16 : vector<1x1x16x16x64xbf16> to vector<1x16x16x64xbf16>
    %18 = vector.shape_cast %17 : vector<1x16x16x64xbf16> to vector<256x64xbf16>
    %c0_27 = arith.constant 0 : index
    %c256 = arith.constant 256 : index
    %19 = vector.load %arg8[%c0_27, %c256] : memref<256x576xbf16, #tpu.memory_space<vmem>>, vector<256x64xbf16>
    tpu.vector_store %arg8[%c0_27, %c256], %18 {strides = array<i32>} : memref<256x576xbf16, #tpu.memory_space<vmem>>, vector<256x64xbf16>,
    %c0_28 = arith.constant 0 : index
    %c0_29 = arith.constant 0 : index
    %c1_30 = arith.constant 1 : index
    %c2_31 = arith.constant 2 : index
    %c0_32 = arith.constant 0 : index
    %20 = vector.load %arg1[%c0_28, %c0_29, %c1_30, %c2_31, %c0_32] : memref<1x1x18x18x64xbf16, #tpu.memory_space<vmem>>, vector<1x1x16x16x64xbf16>
    %21 = vector.shape_cast %20 : vector<1x1x16x16x64xbf16> to vector<1x16x16x64xbf16>
    %22 = vector.shape_cast %21 : vector<1x16x16x64xbf16> to vector<256x64xbf16>
    %c0_33 = arith.constant 0 : index
    %c320 = arith.constant 320 : index
    %23 = vector.load %arg8[%c0_33, %c320] : memref<256x576xbf16, #tpu.memory_space<vmem>>, vector<256x64xbf16>
    tpu.vector_store %arg8[%c0_33, %c320], %22 {strides = array<i32>} : memref<256x576xbf16, #tpu.memory_space<vmem>>, vector<256x64xbf16>,
    %c0_34 = arith.constant 0 : index
    %c0_35 = arith.constant 0 : index
    %c2_36 = arith.constant 2 : index
    %c0_37 = arith.constant 0 : index
    %c0_38 = arith.constant 0 : index
    %24 = vector.load %arg1[%c0_34, %c0_35, %c2_36, %c0_37, %c0_38] : memref<1x1x18x18x64xbf16, #tpu.memory_space<vmem>>, vector<1x1x16x16x64xbf16>
    %25 = vector.shape_cast %24 : vector<1x1x16x16x64xbf16> to vector<1x16x16x64xbf16>
    %26 = vector.shape_cast %25 : vector<1x16x16x64xbf16> to vector<256x64xbf16>
    %c0_39 = arith.constant 0 : index
    %c384 = arith.constant 384 : index
    %27 = vector.load %arg8[%c0_39, %c384] : memref<256x576xbf16, #tpu.memory_space<vmem>>, vector<256x64xbf16>
    tpu.vector_store %arg8[%c0_39, %c384], %26 {strides = array<i32>} : memref<256x576xbf16, #tpu.memory_space<vmem>>, vector<256x64xbf16>,
    %c0_40 = arith.constant 0 : index
    %c0_41 = arith.constant 0 : index
    %c2_42 = arith.constant 2 : index
    %c1_43 = arith.constant 1 : index
    %c0_44 = arith.constant 0 : index
    %28 = vector.load %arg1[%c0_40, %c0_41, %c2_42, %c1_43, %c0_44] : memref<1x1x18x18x64xbf16, #tpu.memory_space<vmem>>, vector<1x1x16x16x64xbf16>
    %29 = vector.shape_cast %28 : vector<1x1x16x16x64xbf16> to vector<1x16x16x64xbf16>
    %30 = vector.shape_cast %29 : vector<1x16x16x64xbf16> to vector<256x64xbf16>
    %c0_45 = arith.constant 0 : index
    %c448 = arith.constant 448 : index
    %31 = vector.load %arg8[%c0_45, %c448] : memref<256x576xbf16, #tpu.memory_space<vmem>>, vector<256x64xbf16>
    tpu.vector_store %arg8[%c0_45, %c448], %30 {strides = array<i32>} : memref<256x576xbf16, #tpu.memory_space<vmem>>, vector<256x64xbf16>,
    %c0_46 = arith.constant 0 : index
    %c0_47 = arith.constant 0 : index
    %c2_48 = arith.constant 2 : index
    %c2_49 = arith.constant 2 : index
    %c0_50 = arith.constant 0 : index
    %32 = vector.load %arg1[%c0_46, %c0_47, %c2_48, %c2_49, %c0_50] : memref<1x1x18x18x64xbf16, #tpu.memory_space<vmem>>, vector<1x1x16x16x64xbf16>
    %33 = vector.shape_cast %32 : vector<1x1x16x16x64xbf16> to vector<1x16x16x64xbf16>
    %34 = vector.shape_cast %33 : vector<1x16x16x64xbf16> to vector<256x64xbf16>
    %c0_51 = arith.constant 0 : index
    %c512 = arith.constant 512 : index
    %35 = vector.load %arg8[%c0_51, %c512] : memref<256x576xbf16, #tpu.memory_space<vmem>>, vector<256x64xbf16>
    tpu.vector_store %arg8[%c0_51, %c512], %34 {strides = array<i32>} : memref<256x576xbf16, #tpu.memory_space<vmem>>, vector<256x64xbf16>,
    %c0_52 = arith.constant 0 : index
    %c0_53 = arith.constant 0 : index
    %36 = vector.load %arg8[%c0_52, %c0_53] : memref<256x576xbf16, #tpu.memory_space<vmem>>, vector<256x576xbf16>
    %c0_54 = arith.constant 0 : index
    %c0_55 = arith.constant 0 : index
    %37 = vector.load %arg2[%c0_54, %c0_55] : memref<576x64xbf16, #tpu.memory_space<vmem>>, vector<576x64xbf16>
    %cst = arith.constant dense<0.000000e+00> : vector<256x64xf32>
    %38 = tpu.matmul %36, %37, %cst {dimension_numbers = #tpu.dot_dimension_numbers<[1], [0], [0], [1], [0, 0, 1, 1], [], []>} : vector<256x576xbf16>, vector<576x64xbf16>, vector<256x64xf32> -> vector<256x64xf32>
    %c0_56 = arith.constant 0 : index
    %c0_57 = arith.constant 0 : index
    %39 = vector.load %arg3[%c0_56, %c0_57] : memref<1x64xf32, #tpu.memory_space<vmem>>, vector<1x64xf32>
    %40 = vector.broadcast %39 : vector<1x64xf32> to vector<256x64xf32>
    %41 = arith.addf %38, %40 : vector<256x64xf32>
    %cst_58 = arith.constant 0.000000e+00 : f32
    %42 = vector.broadcast %cst_58 : f32 to vector<256x64xf32>
    %43 = arith.maximumf %41, %42 : vector<256x64xf32>
    %44 = arith.truncf %43 : vector<256x64xf32> to vector<256x64xbf16>
    %cst_59 = arith.constant 0.000000e+00 : bf16
    %45 = vector.broadcast %cst_59 : bf16 to vector<1x1x18x64xbf16>
    %cst_60 = arith.constant 0.000000e+00 : bf16
    %46 = vector.broadcast %cst_60 : bf16 to vector<1x18x1x64xbf16>
    %c0_61 = arith.constant 0 : index
    %c0_62 = arith.constant 0 : index
    %c0_63 = arith.constant 0 : index
    %c0_64 = arith.constant 0 : index
    %47 = vector.load %arg7[%c0_61, %c0_62, %c0_63, %c0_64] : memref<1x18x18x64xbf16, #tpu.memory_space<vmem>>, vector<1x1x18x64xbf16>
    tpu.vector_store %arg7[%c0_61, %c0_62, %c0_63, %c0_64], %45 {strides = array<i32>} : memref<1x18x18x64xbf16, #tpu.memory_space<vmem>>, vector<1x1x18x64xbf16>,
    %c0_65 = arith.constant 0 : index
    %c17 = arith.constant 17 : index
    %c0_66 = arith.constant 0 : index
    %c0_67 = arith.constant 0 : index
    %48 = vector.load %arg7[%c0_65, %c17, %c0_66, %c0_67] : memref<1x18x18x64xbf16, #tpu.memory_space<vmem>>, vector<1x1x18x64xbf16>
    tpu.vector_store %arg7[%c0_65, %c17, %c0_66, %c0_67], %45 {strides = array<i32>} : memref<1x18x18x64xbf16, #tpu.memory_space<vmem>>, vector<1x1x18x64xbf16>,
    %c0_68 = arith.constant 0 : index
    %c0_69 = arith.constant 0 : index
    %c0_70 = arith.constant 0 : index
    %c0_71 = arith.constant 0 : index
    %49 = vector.load %arg7[%c0_68, %c0_69, %c0_70, %c0_71] : memref<1x18x18x64xbf16, #tpu.memory_space<vmem>>, vector<1x18x1x64xbf16>
    tpu.vector_store %arg7[%c0_68, %c0_69, %c0_70, %c0_71], %46 {strides = array<i32>} : memref<1x18x18x64xbf16, #tpu.memory_space<vmem>>, vector<1x18x1x64xbf16>,
    %c0_72 = arith.constant 0 : index
    %c0_73 = arith.constant 0 : index
    %c17_74 = arith.constant 17 : index
    %c0_75 = arith.constant 0 : index
    %50 = vector.load %arg7[%c0_72, %c0_73, %c17_74, %c0_75] : memref<1x18x18x64xbf16, #tpu.memory_space<vmem>>, vector<1x18x1x64xbf16>
    tpu.vector_store %arg7[%c0_72, %c0_73, %c17_74, %c0_75], %46 {strides = array<i32>} : memref<1x18x18x64xbf16, #tpu.memory_space<vmem>>, vector<1x18x1x64xbf16>,
    %51 = vector.shape_cast %44 : vector<256x64xbf16> to vector<1x16x16x64xbf16>
    %c0_76 = arith.constant 0 : index
    %c1_77 = arith.constant 1 : index
    %c1_78 = arith.constant 1 : index
    %c0_79 = arith.constant 0 : index
    %52 = vector.load %arg7[%c0_76, %c1_77, %c1_78, %c0_79] : memref<1x18x18x64xbf16, #tpu.memory_space<vmem>>, vector<1x16x16x64xbf16>
    tpu.vector_store %arg7[%c0_76, %c1_77, %c1_78, %c0_79], %51 {strides = array<i32>} : memref<1x18x18x64xbf16, #tpu.memory_space<vmem>>, vector<1x16x16x64xbf16>,
    %c0_80 = arith.constant 0 : index
    %c0_81 = arith.constant 0 : index
    %c0_82 = arith.constant 0 : index
    %c0_83 = arith.constant 0 : index
    %53 = vector.load %arg7[%c0_80, %c0_81, %c0_82, %c0_83] : memref<1x18x18x64xbf16, #tpu.memory_space<vmem>>, vector<1x16x16x64xbf16>
    %54 = vector.shape_cast %53 : vector<1x16x16x64xbf16> to vector<256x64xbf16>
    %c0_84 = arith.constant 0 : index
    %c0_85 = arith.constant 0 : index
    %55 = vector.load %arg9[%c0_84, %c0_85] : memref<256x576xbf16, #tpu.memory_space<vmem>>, vector<256x64xbf16>
    tpu.vector_store %arg9[%c0_84, %c0_85], %54 {strides = array<i32>} : memref<256x576xbf16, #tpu.memory_space<vmem>>, vector<256x64xbf16>,
    %c0_86 = arith.constant 0 : index
    %c0_87 = arith.constant 0 : index
    %c1_88 = arith.constant 1 : index
    %c0_89 = arith.constant 0 : index
    %56 = vector.load %arg7[%c0_86, %c0_87, %c1_88, %c0_89] : memref<1x18x18x64xbf16, #tpu.memory_space<vmem>>, vector<1x16x16x64xbf16>
    %57 = vector.shape_cast %56 : vector<1x16x16x64xbf16> to vector<256x64xbf16>
    %c0_90 = arith.constant 0 : index
    %c64_91 = arith.constant 64 : index
    %58 = vector.load %arg9[%c0_90, %c64_91] : memref<256x576xbf16, #tpu.memory_space<vmem>>, vector<256x64xbf16>
    tpu.vector_store %arg9[%c0_90, %c64_91], %57 {strides = array<i32>} : memref<256x576xbf16, #tpu.memory_space<vmem>>, vector<256x64xbf16>,
    %c0_92 = arith.constant 0 : index
    %c0_93 = arith.constant 0 : index
    %c2_94 = arith.constant 2 : index
    %c0_95 = arith.constant 0 : index
    %59 = vector.load %arg7[%c0_92, %c0_93, %c2_94, %c0_95] : memref<1x18x18x64xbf16, #tpu.memory_space<vmem>>, vector<1x16x16x64xbf16>
    %60 = vector.shape_cast %59 : vector<1x16x16x64xbf16> to vector<256x64xbf16>
    %c0_96 = arith.constant 0 : index
    %c128_97 = arith.constant 128 : index
    %61 = vector.load %arg9[%c0_96, %c128_97] : memref<256x576xbf16, #tpu.memory_space<vmem>>, vector<256x64xbf16>
    tpu.vector_store %arg9[%c0_96, %c128_97], %60 {strides = array<i32>} : memref<256x576xbf16, #tpu.memory_space<vmem>>, vector<256x64xbf16>,
    %c0_98 = arith.constant 0 : index
    %c1_99 = arith.constant 1 : index
    %c0_100 = arith.constant 0 : index
    %c0_101 = arith.constant 0 : index
    %62 = vector.load %arg7[%c0_98, %c1_99, %c0_100, %c0_101] : memref<1x18x18x64xbf16, #tpu.memory_space<vmem>>, vector<1x16x16x64xbf16>
    %63 = vector.shape_cast %62 : vector<1x16x16x64xbf16> to vector<256x64xbf16>
    %c0_102 = arith.constant 0 : index
    %c192_103 = arith.constant 192 : index
    %64 = vector.load %arg9[%c0_102, %c192_103] : memref<256x576xbf16, #tpu.memory_space<vmem>>, vector<256x64xbf16>
    tpu.vector_store %arg9[%c0_102, %c192_103], %63 {strides = array<i32>} : memref<256x576xbf16, #tpu.memory_space<vmem>>, vector<256x64xbf16>,
    %c0_104 = arith.constant 0 : index
    %c1_105 = arith.constant 1 : index
    %c1_106 = arith.constant 1 : index
    %c0_107 = arith.constant 0 : index
    %65 = vector.load %arg7[%c0_104, %c1_105, %c1_106, %c0_107] : memref<1x18x18x64xbf16, #tpu.memory_space<vmem>>, vector<1x16x16x64xbf16>
    %66 = vector.shape_cast %65 : vector<1x16x16x64xbf16> to vector<256x64xbf16>
    %c0_108 = arith.constant 0 : index
    %c256_109 = arith.constant 256 : index
    %67 = vector.load %arg9[%c0_108, %c256_109] : memref<256x576xbf16, #tpu.memory_space<vmem>>, vector<256x64xbf16>
    tpu.vector_store %arg9[%c0_108, %c256_109], %66 {strides = array<i32>} : memref<256x576xbf16, #tpu.memory_space<vmem>>, vector<256x64xbf16>,
    %c0_110 = arith.constant 0 : index
    %c1_111 = arith.constant 1 : index
    %c2_112 = arith.constant 2 : index
    %c0_113 = arith.constant 0 : index
    %68 = vector.load %arg7[%c0_110, %c1_111, %c2_112, %c0_113] : memref<1x18x18x64xbf16, #tpu.memory_space<vmem>>, vector<1x16x16x64xbf16>
    %69 = vector.shape_cast %68 : vector<1x16x16x64xbf16> to vector<256x64xbf16>
    %c0_114 = arith.constant 0 : index
    %c320_115 = arith.constant 320 : index
    %70 = vector.load %arg9[%c0_114, %c320_115] : memref<256x576xbf16, #tpu.memory_space<vmem>>, vector<256x64xbf16>
    tpu.vector_store %arg9[%c0_114, %c320_115], %69 {strides = array<i32>} : memref<256x576xbf16, #tpu.memory_space<vmem>>, vector<256x64xbf16>,
    %c0_116 = arith.constant 0 : index
    %c2_117 = arith.constant 2 : index
    %c0_118 = arith.constant 0 : index
    %c0_119 = arith.constant 0 : index
    %71 = vector.load %arg7[%c0_116, %c2_117, %c0_118, %c0_119] : memref<1x18x18x64xbf16, #tpu.memory_space<vmem>>, vector<1x16x16x64xbf16>
    %72 = vector.shape_cast %71 : vector<1x16x16x64xbf16> to vector<256x64xbf16>
    %c0_120 = arith.constant 0 : index
    %c384_121 = arith.constant 384 : index
    %73 = vector.load %arg9[%c0_120, %c384_121] : memref<256x576xbf16, #tpu.memory_space<vmem>>, vector<256x64xbf16>
    tpu.vector_store %arg9[%c0_120, %c384_121], %72 {strides = array<i32>} : memref<256x576xbf16, #tpu.memory_space<vmem>>, vector<256x64xbf16>,
    %c0_122 = arith.constant 0 : index
    %c2_123 = arith.constant 2 : index
    %c1_124 = arith.constant 1 : index
    %c0_125 = arith.constant 0 : index
    %74 = vector.load %arg7[%c0_122, %c2_123, %c1_124, %c0_125] : memref<1x18x18x64xbf16, #tpu.memory_space<vmem>>, vector<1x16x16x64xbf16>
    %75 = vector.shape_cast %74 : vector<1x16x16x64xbf16> to vector<256x64xbf16>
    %c0_126 = arith.constant 0 : index
    %c448_127 = arith.constant 448 : index
    %76 = vector.load %arg9[%c0_126, %c448_127] : memref<256x576xbf16, #tpu.memory_space<vmem>>, vector<256x64xbf16>
    tpu.vector_store %arg9[%c0_126, %c448_127], %75 {strides = array<i32>} : memref<256x576xbf16, #tpu.memory_space<vmem>>, vector<256x64xbf16>,
    %c0_128 = arith.constant 0 : index
    %c2_129 = arith.constant 2 : index
    %c2_130 = arith.constant 2 : index
    %c0_131 = arith.constant 0 : index
    %77 = vector.load %arg7[%c0_128, %c2_129, %c2_130, %c0_131] : memref<1x18x18x64xbf16, #tpu.memory_space<vmem>>, vector<1x16x16x64xbf16>
    %78 = vector.shape_cast %77 : vector<1x16x16x64xbf16> to vector<256x64xbf16>
    %c0_132 = arith.constant 0 : index
    %c512_133 = arith.constant 512 : index
    %79 = vector.load %arg9[%c0_132, %c512_133] : memref<256x576xbf16, #tpu.memory_space<vmem>>, vector<256x64xbf16>
    tpu.vector_store %arg9[%c0_132, %c512_133], %78 {strides = array<i32>} : memref<256x576xbf16, #tpu.memory_space<vmem>>, vector<256x64xbf16>,
    %c0_134 = arith.constant 0 : index
    %c0_135 = arith.constant 0 : index
    %80 = vector.load %arg9[%c0_134, %c0_135] : memref<256x576xbf16, #tpu.memory_space<vmem>>, vector<256x576xbf16>
    %c0_136 = arith.constant 0 : index
    %c0_137 = arith.constant 0 : index
    %81 = vector.load %arg4[%c0_136, %c0_137] : memref<576x64xbf16, #tpu.memory_space<vmem>>, vector<576x64xbf16>
    %cst_138 = arith.constant dense<0.000000e+00> : vector<256x64xf32>
    %82 = tpu.matmul %80, %81, %cst_138 {dimension_numbers = #tpu.dot_dimension_numbers<[1], [0], [0], [1], [0, 0, 1, 1], [], []>} : vector<256x576xbf16>, vector<576x64xbf16>, vector<256x64xf32> -> vector<256x64xf32>
    %c0_139 = arith.constant 0 : index
    %c0_140 = arith.constant 0 : index
    %83 = vector.load %arg5[%c0_139, %c0_140] : memref<1x64xf32, #tpu.memory_space<vmem>>, vector<1x64xf32>
    %84 = vector.broadcast %83 : vector<1x64xf32> to vector<256x64xf32>
    %85 = arith.addf %82, %84 : vector<256x64xf32>
    %c0_141 = arith.constant 0 : index
    %c0_142 = arith.constant 0 : index
    %c1_143 = arith.constant 1 : index
    %c1_144 = arith.constant 1 : index
    %c0_145 = arith.constant 0 : index
    %86 = vector.load %arg1[%c0_141, %c0_142, %c1_143, %c1_144, %c0_145] : memref<1x1x18x18x64xbf16, #tpu.memory_space<vmem>>, vector<1x1x16x16x64xbf16>
    %87 = vector.shape_cast %86 : vector<1x1x16x16x64xbf16> to vector<1x16x16x64xbf16>
    %88 = vector.shape_cast %87 : vector<1x16x16x64xbf16> to vector<256x64xbf16>
    %89 = arith.extf %88 : vector<256x64xbf16> to vector<256x64xf32>
    %90 = arith.addf %85, %89 : vector<256x64xf32>
    %cst_146 = arith.constant 0.000000e+00 : f32
    %91 = vector.broadcast %cst_146 : f32 to vector<256x64xf32>
    %92 = arith.maximumf %90, %91 : vector<256x64xf32>
    %93 = vector.shape_cast %92 : vector<256x64xf32> to vector<1x256x64xf32>
    %94 = arith.truncf %93 : vector<1x256x64xf32> to vector<1x256x64xbf16>
    %c0_147 = arith.constant 0 : index
    %c0_148 = arith.constant 0 : index
    %c0_149 = arith.constant 0 : index
    %95 = vector.load %arg6[%c0_147, %c0_148, %c0_149] : memref<1x256x64xbf16, #tpu.memory_space<vmem>>, vector<1x256x64xbf16>
    tpu.vector_store %arg6[%c0_147, %c0_148, %c0_149], %94 {strides = array<i32>} : memref<1x256x64xbf16, #tpu.memory_space<vmem>>, vector<1x256x64xbf16>,
    return
  }
  func.func @transform_0(%arg0: i32) -> (i32, i32, i32, i32, i32) {
    %c0_i32 = arith.constant 0 : i32
    %c0_i32_0 = arith.constant 0 : i32
    %c0_i32_1 = arith.constant 0 : i32
    %c0_i32_2 = arith.constant 0 : i32
    %c0_i32_3 = arith.constant 0 : i32
    return %arg0, %c0_i32, %c0_i32_0, %c0_i32_1, %c0_i32_2 : i32, i32, i32, i32, i32
  }
  func.func @transform_1(%arg0: i32) -> (i32, i32) {
    %c0_i32 = arith.constant 0 : i32
    %c0_i32_0 = arith.constant 0 : i32
    %c0_i32_1 = arith.constant 0 : i32
    return %c0_i32, %c0_i32_0 : i32, i32
  }
  func.func @transform_2(%arg0: i32) -> (i32, i32) {
    %c0_i32 = arith.constant 0 : i32
    %c0_i32_0 = arith.constant 0 : i32
    %c0_i32_1 = arith.constant 0 : i32
    return %c0_i32, %c0_i32_0 : i32, i32
  }
  func.func @transform_3(%arg0: i32) -> (i32, i32) {
    %c0_i32 = arith.constant 0 : i32
    %c0_i32_0 = arith.constant 0 : i32
    %c0_i32_1 = arith.constant 0 : i32
    return %c0_i32, %c0_i32_0 : i32, i32
  }
  func.func @transform_4(%arg0: i32) -> (i32, i32) {
    %c0_i32 = arith.constant 0 : i32
    %c0_i32_0 = arith.constant 0 : i32
    %c0_i32_1 = arith.constant 0 : i32
    return %c0_i32, %c0_i32_0 : i32, i32
  }
  func.func @transform_5(%arg0: i32) -> (i32, i32, i32) {
    %c0_i32 = arith.constant 0 : i32
    %c0_i32_0 = arith.constant 0 : i32
    %c0_i32_1 = arith.constant 0 : i32
    return %arg0, %c0_i32, %c0_i32_0 : i32, i32, i32
  }
}

</mosaic_0001>

<llo_original>
// kernel: tpu_custom_call.1
$region0: #{tpu_custom_call.1}
  #allocation0 [shape = 'u32[]', space=smem, size = 0x4, offset = 0x4, fixed_abs, tag = 'smem constant byte address 0x4 - core index']
  #allocation1 [shape = 'u32[144,128]{1,0:T(1,128)}', space=vmem, size = 0x12000, scoped, tag = 'internal scratch']
  #allocation2 [shape = 'bf16[1,18,18,64]{3,2,1,0:T(8,128)(2,1)}', space=vmem, size = 0x1b000, scoped, tag = 'scratch operand']
  #allocation3 [shape = 'bf16[256,576]{1,0:T(8,128)(2,1)}', space=vmem, size = 0x50000, scoped, tag = 'scratch operand']
  #allocation4 [shape = 'bf16[256,576]{1,0:T(8,128)(2,1)}', space=vmem, size = 0x50000, scoped, tag = 'scratch operand']
  %s0 = inlined_call_operand.vmem [shape: bf16[2,1,18,18,64], index: 0, kind: input, shape index: {}]
  %s1 = inlined_call_operand.vmem [shape: bf16[576,64], index: 1, kind: input, shape index: {}]
  %s2 = inlined_call_operand.vmem [shape: f32[1,64], index: 2, kind: input, shape index: {}]
  %s3 = inlined_call_operand.vmem [shape: bf16[576,64], index: 3, kind: input, shape index: {}]
  %s4 = inlined_call_operand.vmem [shape: f32[1,64], index: 4, kind: input, shape index: {}]
  %s5 = inlined_call_operand.vmem [shape: bf16[2,256,64], index: 5, kind: output, shape index: {}]
  %s6 = sld [smem:[#allocation0]]
  $region53: #{tpu_custom_call.1} parent=0
    _
  %s8 = ssub.s32 1, %s6
  %s9 = scalar_select 0, %s8, %s6
  loop: start=0, step=1, limit=4
  $region2: #{tpu_custom_call.1} parent=0 // loop_pre_header
    _
  $region3: #{tpu_custom_call.1} parent=0 // loop_header
    %s11 = sphi 0, %s15
    %p12 = scmp.ge.s32.totalorder %s11, 4
    %s21 = sphi 0, %s23
    %s24 = sphi 0, %s21
    %s25 = sphi 0, %s24
    %s41 = sphi 0, %s25
    %s45 = sphi 0, %s45
    %s47 = sphi 0, %s45
    %s48 = sphi 0, %s47
    %s62 = sphi 0, %s48
    %s66 = sphi 0, %s66
    %s68 = sphi 0, %s66
    %s69 = sphi 0, %s68
    %s83 = sphi 0, %s69
    %s87 = sphi 0, %s87
    %s89 = sphi 0, %s87
    %s90 = sphi 0, %s89
    %s104 = sphi 0, %s90
    %s108 = sphi 0, %s108
    %s110 = sphi 0, %s108
    %s111 = sphi 0, %s110
    %s125 = sphi 0, %s111
    %s131 = sphi 0, %s133
    %s134 = sphi 0, %s131
    %s135 = sphi 0, %s134
    %s151 = sphi 0, %s135
  $region4: #{tpu_custom_call.1} parent=0 // loop_header_branch
    %14 = sbr.rel (%p12) target = $region8
  $region5: #{tpu_custom_call.1} parent=0 // loop_body
    %s16 = ssub.s32 %s11, 1
    %s17 = ssub.s32 %s11, 2
    %s18 = sadd.s32 %s11, 1
    %s19 = ssub.s32 %s11, %s18
    %p20 = scmp.eq.s32.totalorder %s19, 0
    %s22 = sadd.s32 %s21, 1
    %s23 = scalar_select %p20, %s21, %s22
    %p26 = pneg %p20
    %p27 = scmp.eq.s32.totalorder %s11, 1
    %p28 = por %p26, %p27
    %p29 = scmp.ne.s32.totalorder %s21, %s24
    %p30 = scmp.eq.s32.totalorder %s11, 0
    %p31 = por %p29, %p30
    %p32 = scmp.ne.s32.totalorder %s21, %s24
    %p33 = scmp.eq.s32.totalorder %s16, 1
    %p34 = por %p32, %p33
    %p35 = scmp.ne.s32.totalorder %s24, %s25
    %p36 = scmp.eq.s32.totalorder %s16, 0
    %p37 = por %p35, %p36
    %p38 = scmp.ne.s32.totalorder %s24, %s25
    %p39 = scmp.eq.s32.totalorder %s17, 1
    %p40 = por %p38, %p39
    %p42 = scmp.ne.s32.totalorder %s25, %s41
    %p43 = scmp.eq.s32.totalorder %s17, 0
    %p44 = por %p42, %p43
    %s46 = sadd.s32 %s45, 1
    %p49 = scmp.eq.s32.totalorder %s11, 1
    %p50 = scmp.ne.s32.totalorder %s45, %s47
    %p51 = scmp.eq.s32.totalorder %s11, 0
    %p52 = por %p50, %p51
    %p53 = scmp.ne.s32.totalorder %s45, %s47
    %p54 = scmp.eq.s32.totalorder %s16, 1
    %p55 = por %p53, %p54
    %p56 = scmp.ne.s32.totalorder %s47, %s48
    %p57 = scmp.eq.s32.totalorder %s16, 0
    %p58 = por %p56, %p57
    %p59 = scmp.ne.s32.totalorder %s47, %s48
    %p60 = scmp.eq.s32.totalorder %s17, 1
    %p61 = por %p59, %p60
    %p63 = scmp.ne.s32.totalorder %s48, %s62
    %p64 = scmp.eq.s32.totalorder %s17, 0
    %p65 = por %p63, %p64
    %s67 = sadd.s32 %s66, 1
    %p70 = scmp.eq.s32.totalorder %s11, 1
    %p71 = scmp.ne.s32.totalorder %s66, %s68
    %p72 = scmp.eq.s32.totalorder %s11, 0
    %p73 = por %p71, %p72
    %p74 = scmp.ne.s32.totalorder %s66, %s68
    %p75 = scmp.eq.s32.totalorder %s16, 1
    %p76 = por %p74, %p75
    %p77 = scmp.ne.s32.totalorder %s68, %s69
    %p78 = scmp.eq.s32.totalorder %s16, 0
    %p79 = por %p77, %p78
    %p80 = scmp.ne.s32.totalorder %s68, %s69
    %p81 = scmp.eq.s32.totalorder %s17, 1
    %p82 = por %p80, %p81
    %p84 = scmp.ne.s32.totalorder %s69, %s83
    %p85 = scmp.eq.s32.totalorder %s17, 0
    %p86 = por %p84, %p85
    %s88 = sadd.s32 %s87, 1
    %p91 = scmp.eq.s32.totalorder %s11, 1
    %p92 = scmp.ne.s32.totalorder %s87, %s89
    %p93 = scmp.eq.s32.totalorder %s11, 0
    %p94 = por %p92, %p93
    %p95 = scmp.ne.s32.totalorder %s87, %s89
    %p96 = scmp.eq.s32.totalorder %s16, 1
    %p97 = por %p95, %p96
    %p98 = scmp.ne.s32.totalorder %s89, %s90
    %p99 = scmp.eq.s32.totalorder %s16, 0
    %p100 = por %p98, %p99
    %p101 = scmp.ne.s32.totalorder %s89, %s90
    %p102 = scmp.eq.s32.totalorder %s17, 1
    %p103 = por %p101, %p102
    %p105 = scmp.ne.s32.totalorder %s90, %s104
    %p106 = scmp.eq.s32.totalorder %s17, 0
    %p107 = por %p105, %p106
    %s109 = sadd.s32 %s108, 1
    %p112 = scmp.eq.s32.totalorder %s11, 1
    %p113 = scmp.ne.s32.totalorder %s108, %s110
    %p114 = scmp.eq.s32.totalorder %s11, 0
    %p115 = por %p113, %p114
    %p116 = scmp.ne.s32.totalorder %s108, %s110
    %p117 = scmp.eq.s32.totalorder %s16, 1
    %p118 = por %p116, %p117
    %p119 = scmp.ne.s32.totalorder %s110, %s111
    %p120 = scmp.eq.s32.totalorder %s16, 0
    %p121 = por %p119, %p120
    %p122 = scmp.ne.s32.totalorder %s110, %s111
    %p123 = scmp.eq.s32.totalorder %s17, 1
    %p124 = por %p122, %p123
    %p126 = scmp.ne.s32.totalorder %s111, %s125
    %p127 = scmp.eq.s32.totalorder %s17, 0
    %p128 = por %p126, %p127
    %s129 = ssub.s32 %s11, %s18
    %p130 = scmp.eq.s32.totalorder %s129, 0
    %s132 = sadd.s32 %s131, 1
    %s133 = scalar_select %p130, %s131, %s132
    %p136 = pneg %p130
    %p137 = scmp.eq.s32.totalorder %s11, 1
    %p138 = por %p136, %p137
    %p139 = scmp.ne.s32.totalorder %s131, %s134
    %p140 = scmp.eq.s32.totalorder %s11, 0
    %p141 = por %p139, %p140
    %p142 = scmp.ne.s32.totalorder %s131, %s134
    %p143 = scmp.eq.s32.totalorder %s16, 1
    %p144 = por %p142, %p143
    %p145 = scmp.ne.s32.totalorder %s134, %s135
    %p146 = scmp.eq.s32.totalorder %s16, 0
    %p147 = por %p145, %p146
    %p148 = scmp.ne.s32.totalorder %s134, %s135
    %p149 = scmp.eq.s32.totalorder %s17, 1
    %p150 = por %p148, %p149
    %p152 = scmp.ne.s32.totalorder %s135, %s151
    %p153 = scmp.eq.s32.totalorder %s17, 0
    %p154 = por %p152, %p153
    %p155 = scmp.le.s32.totalorder 1, %s11
    %p156 = scmp.lt.s32.totalorder %s11, 3
    %p157 = pnand %p155, %p156
    %p158 = pneg %p157
    // Predicated region
    $region9: #{tpu_custom_call.1} parent=5 // pred_check
      _
    $region10: #{tpu_custom_call.1} parent=5 // pred_check_branch
      %160 = sbr.rel (%p157) target = $region12
    $region11: #{tpu_custom_call.1} parent=5 // pred_region
      %s161 = ssub.s32 %s11, 1
      // Predicated region
      $region13: #{tpu_custom_call.1} parent=11 // pred_check
        %p162 = pneg %p58
      $region14: #{tpu_custom_call.1} parent=11 // pred_check_branch
        %164 = sbr.rel (%p162) target = $region16
      $region15: #{tpu_custom_call.1} parent=11 // pred_region
        _
      $region16: #{tpu_custom_call.1} parent=11 // pred_fallthru
        _
      // Predicated region
      $region17: #{tpu_custom_call.1} parent=11 // pred_check
        %p165 = pneg %p79
      $region18: #{tpu_custom_call.1} parent=11 // pred_check_branch
        %167 = sbr.rel (%p165) target = $region20
      $region19: #{tpu_custom_call.1} parent=11 // pred_region
        _
      $region20: #{tpu_custom_call.1} parent=11 // pred_fallthru
        _
      // Predicated region
      $region21: #{tpu_custom_call.1} parent=11 // pred_check
        %p168 = pneg %p100
      $region22: #{tpu_custom_call.1} parent=11 // pred_check_branch
        %170 = sbr.rel (%p168) target = $region24
      $region23: #{tpu_custom_call.1} parent=11 // pred_region
        _
      $region24: #{tpu_custom_call.1} parent=11 // pred_fallthru
        _
      // Predicated region
      $region25: #{tpu_custom_call.1} parent=11 // pred_check
        %p171 = pneg %p121
      $region26: #{tpu_custom_call.1} parent=11 // pred_check_branch
        %173 = sbr.rel (%p171) target = $region28
      $region27: #{tpu_custom_call.1} parent=11 // pred_region
        _
      $region28: #{tpu_custom_call.1} parent=11 // pred_fallthru
        _
    $region12: #{tpu_custom_call.1} parent=5 // pred_fallthru
      _
    %p174 = scmp.lt.s32.totalorder %s11, 2
    // Predicated region
    $region29: #{tpu_custom_call.1} parent=5 // pred_check
      %p175 = pneg %p174
    $region30: #{tpu_custom_call.1} parent=5 // pred_check_branch
      %177 = sbr.rel (%p175) target = $region32
    $region31: #{tpu_custom_call.1} parent=5 // pred_region
      // Predicated region
      $region33: #{tpu_custom_call.1} parent=31 // pred_check
        %p178 = pneg %p31
      $region34: #{tpu_custom_call.1} parent=31 // pred_check_branch
        %180 = sbr.rel (%p178) target = $region36
      $region35: #{tpu_custom_call.1} parent=31 // pred_region
        %p181 = scmp.lt.s32.totalorder %s11, 1
        %s182 = scalar_select %p181, %s11, 1
        %s183 = smul.addr %s182, 54
        %s184 = smul.addr %s183, 4
        %s185 = scalar_lea.vmem %s0, %s184
      $region36: #{tpu_custom_call.1} parent=31 // pred_fallthru
        _
    $region32: #{tpu_custom_call.1} parent=5 // pred_fallthru
      _
    %p186 = scmp.le.s32.totalorder 1, %s11
    %p187 = scmp.lt.s32.totalorder %s11, 3
    %p188 = pnand %p186, %p187
    %p189 = pneg %p188
    // Predicated region
    $region37: #{tpu_custom_call.1} parent=5 // pred_check
      _
    $region38: #{tpu_custom_call.1} parent=5 // pred_check_branch
      %191 = sbr.rel (%p188) target = $region40
    $region39: #{tpu_custom_call.1} parent=5 // pred_region
      %s192 = ssub.s32 %s11, 1
      %p193 = scmp.lt.s32.totalorder %s16, 1
      %s194 = scalar_select %p193, %s16, 1
      %s195 = smul.addr %s194, 54
      %s196 = smul.addr %s195, 4
      %s197 = scalar_lea.vmem %s0, %s196
      %p198 = pneg %p37
      %p199 = pneg %p34
      %p200 = pneg %p58
      %p201 = pneg %p55
      %p202 = pneg %p79
      %p203 = pneg %p76
      %p204 = pneg %p100
      %p205 = pneg %p97
      %p206 = pneg %p121
      %p207 = pneg %p118
      %p208 = pneg %p147
      %p209 = pneg %p144
      %p210 = scmp.lt.s32.totalorder %s16, 1
      %s211 = scalar_select %p210, %s16, 1
      %s212 = smul.addr %s211, 32
      %s213 = smul.addr %s212, 4
      %s214 = scalar_lea.vmem %s5, %s213
      %p215 = scmp.lt.s32.totalorder %s16, 1
      %s216 = scalar_select %p215, %s16, 1
      %s217 = smul.addr %s216, 54
      %s218 = smul.addr %s217, 4
      %s219 = scalar_lea.vmem %s0, %s218
      %p220 = scmp.lt.s32.totalorder %s16, 1
      %s221 = scalar_select %p220, %s16, 1
      %s222 = smul.addr %s221, 32
      %s223 = smul.addr %s222, 4
      %s224 = scalar_lea.vmem %s5, %s223
      %v226 = vld [vmem:[%s219] sm:$0xf]
      %v227 = vld [vmem:[%s219 + $0x4] sm:$0xf]
      %v228 = vld [vmem:[%s219 + $0xc] sm:$0xf]
      %v229 = vld [vmem:[%s219 + $0x10] sm:$0xf]
      %v230 = vld [vmem:[%s219 + $0x18] sm:$0xf]
      %v231 = vld [vmem:[%s219 + $0x1c] sm:$0xf]
      %v232 = vld [vmem:[%s219 + $0x24] sm:$0xf]
      %v233 = vld [vmem:[%s219 + $0x28] sm:$0xf]
      %v234 = vld [vmem:[%s219 + $0x30] sm:$0xf]
      %v235 = vld [vmem:[%s219 + $0x34] sm:$0xf]
      %v236 = vld [vmem:[%s219 + $0x3c] sm:$0xf]
      %v237 = vld [vmem:[%s219 + $0x40] sm:$0xf]
      %v238 = vld [vmem:[%s219 + $0x48] sm:$0xf]
      %v239 = vld [vmem:[%s219 + $0x4c] sm:$0xf]
      %v240 = vld [vmem:[%s219 + $0x54] sm:$0xf]
      %v241 = vld [vmem:[%s219 + $0x58] sm:$0xf]
      %v242 = vld [vmem:[%s219 + $0x60] sm:$0xf]
      %v243 = vld [vmem:[%s219 + $0x64] sm:$0xf]
      %v244 = vld [vmem:[%s219 + $0x6c] sm:$0xf]
      %v245 = vld [vmem:[%s219 + $0x70] sm:$0xf]
      %v246 = vld [vmem:[%s219 + $0x78] sm:$0xf]
      %v247 = vld [vmem:[%s219 + $0x7c] sm:$0xf]
      %v248 = vld [vmem:[%s219 + $0x84] sm:$0xf]
      %v249 = vld [vmem:[%s219 + $0x88] sm:$0xf]
      %v250 = vld [vmem:[%s219 + $0x90] sm:$0xf]
      %v251 = vld [vmem:[%s219 + $0x94] sm:$0xf]
      %v252 = vld [vmem:[%s219 + $0x9c] sm:$0xf]
      %v253 = vld [vmem:[%s219 + $0xa0] sm:$0xf]
      %v254 = vld [vmem:[%s219 + $0xa8] sm:$0xf]
      %v255 = vld [vmem:[%s219 + $0xac] sm:$0xf]
      %v256 = vld [vmem:[%s219 + $0xb4] sm:$0xf]
      %v257 = vld [vmem:[%s219 + $0xb8] sm:$0xf]
      %vm258 = vcmask 519168
      %259 = vst.msk [vmem:[#allocation3] sm:$0xf] %vm258, %v226
      %260 = vst.msk [vmem:[#allocation3 + $0x14] sm:$0xf] %vm258, %v227
      %261 = vst.msk [vmem:[#allocation3 + $0x28] sm:$0xf] %vm258, %v228
      %262 = vst.msk [vmem:[#allocation3 + $0x3c] sm:$0xf] %vm258, %v229
      %263 = vst.msk [vmem:[#allocation3 + $0x50] sm:$0xf] %vm258, %v230
      %264 = vst.msk [vmem:[#allocation3 + $0x64] sm:$0xf] %vm258, %v231
      %265 = vst.msk [vmem:[#allocation3 + $0x78] sm:$0xf] %vm258, %v232
      %266 = vst.msk [vmem:[#allocation3 + $0x8c] sm:$0xf] %vm258, %v233
      %267 = vst.msk [vmem:[#allocation3 + $0xa0] sm:$0xf] %vm258, %v234
      %268 = vst.msk [vmem:[#allocation3 + $0xb4] sm:$0xf] %vm258, %v235
      %269 = vst.msk [vmem:[#allocation3 + $0xc8] sm:$0xf] %vm258, %v236
      %270 = vst.msk [vmem:[#allocation3 + $0xdc] sm:$0xf] %vm258, %v237
      %271 = vst.msk [vmem:[#allocation3 + $0xf0] sm:$0xf] %vm258, %v238
      %272 = vst.msk [vmem:[#allocation3 + $0x104] sm:$0xf] %vm258, %v239
      %273 = vst.msk [vmem:[#allocation3 + $0x118] sm:$0xf] %vm258, %v240
      %274 = vst.msk [vmem:[#allocation3 + $0x12c] sm:$0xf] %vm258, %v241
      %275 = vst.msk [vmem:[#allocation3 + $0x140] sm:$0xf] %vm258, %v242
      %276 = vst.msk [vmem:[#allocation3 + $0x154] sm:$0xf] %vm258, %v243
      %277 = vst.msk [vmem:[#allocation3 + $0x168] sm:$0xf] %vm258, %v244
      %278 = vst.msk [vmem:[#allocation3 + $0x17c] sm:$0xf] %vm258, %v245
      %279 = vst.msk [vmem:[#allocation3 + $0x190] sm:$0xf] %vm258, %v246
      %280 = vst.msk [vmem:[#allocation3 + $0x1a4] sm:$0xf] %vm258, %v247
      %281 = vst.msk [vmem:[#allocation3 + $0x1b8] sm:$0xf] %vm258, %v248
      %282 = vst.msk [vmem:[#allocation3 + $0x1cc] sm:$0xf] %vm258, %v249
      %283 = vst.msk [vmem:[#allocation3 + $0x1e0] sm:$0xf] %vm258, %v250
      %284 = vst.msk [vmem:[#allocation3 + $0x1f4] sm:$0xf] %vm258, %v251
      %285 = vst.msk [vmem:[#allocation3 + $0x208] sm:$0xf] %vm258, %v252
      %286 = vst.msk [vmem:[#allocation3 + $0x21c] sm:$0xf] %vm258, %v253
      %287 = vst.msk [vmem:[#allocation3 + $0x230] sm:$0xf] %vm258, %v254
      %288 = vst.msk [vmem:[#allocation3 + $0x244] sm:$0xf] %vm258, %v255
      %289 = vst.msk [vmem:[#allocation3 + $0x258] sm:$0xf] %vm258, %v256
      %290 = vst.msk [vmem:[#allocation3 + $0x26c] sm:$0xf] %vm258, %v257
      %v291 = vld [vmem:[%s219] sm:$0xf]
      %v292 = vld [vmem:[%s219 + $0x4] sm:$0xf]
      %v293 = vld [vmem:[%s219 + $0x8] sm:$0x1]
      %v294 = vld [vmem:[%s219 + $0xc] sm:$0xf]
      %v295 = vld [vmem:[%s219 + $0x10] sm:$0xf]
      %v296 = vld [vmem:[%s219 + $0x14] sm:$0x1]
      %v297 = vld [vmem:[%s219 + $0x18] sm:$0xf]
      %v298 = vld [vmem:[%s219 + $0x1c] sm:$0xf]
      %v299 = vld [vmem:[%s219 + $0x20] sm:$0x1]
      %v300 = vld [vmem:[%s219 + $0x24] sm:$0xf]
      %v301 = vld [vmem:[%s219 + $0x28] sm:$0xf]
      %v302 = vld [vmem:[%s219 + $0x2c] sm:$0x1]
      %v303 = vld [vmem:[%s219 + $0x30] sm:$0xf]
      %v304 = vld [vmem:[%s219 + $0x34] sm:$0xf]
      %v305 = vld [vmem:[%s219 + $0x38] sm:$0x1]
      %v306 = vld [vmem:[%s219 + $0x3c] sm:$0xf]
      %v307 = vld [vmem:[%s219 + $0x40] sm:$0xf]
      %v308 = vld [vmem:[%s219 + $0x44] sm:$0x1]
      %v309 = vld [vmem:[%s219 + $0x48] sm:$0xf]
      %v310 = vld [vmem:[%s219 + $0x4c] sm:$0xf]
      %v311 = vld [vmem:[%s219 + $0x50] sm:$0x1]
      %v312 = vld [vmem:[%s219 + $0x54] sm:$0xf]
      %v313 = vld [vmem:[%s219 + $0x58] sm:$0xf]
      %v314 = vld [vmem:[%s219 + $0x5c] sm:$0x1]
      %v315 = vld [vmem:[%s219 + $0x60] sm:$0xf]
      %v316 = vld [vmem:[%s219 + $0x64] sm:$0xf]
      %v317 = vld [vmem:[%s219 + $0x68] sm:$0x1]
      %v318 = vld [vmem:[%s219 + $0x6c] sm:$0xf]
      %v319 = vld [vmem:[%s219 + $0x70] sm:$0xf]
      %v320 = vld [vmem:[%s219 + $0x74] sm:$0x1]
      %v321 = vld [vmem:[%s219 + $0x78] sm:$0xf]
      %v322 = vld [vmem:[%s219 + $0x7c] sm:$0xf]
      %v323 = vld [vmem:[%s219 + $0x80] sm:$0x1]
      %v324 = vld [vmem:[%s219 + $0x84] sm:$0xf]
      %v325 = vld [vmem:[%s219 + $0x88] sm:$0xf]
      %v326 = vld [vmem:[%s219 + $0x8c] sm:$0x1]
      %v327 = vld [vmem:[%s219 + $0x90] sm:$0xf]
      %v328 = vld [vmem:[%s219 + $0x94] sm:$0xf]
      %v329 = vld [vmem:[%s219 + $0x98] sm:$0x1]
      %v330 = vld [vmem:[%s219 + $0x9c] sm:$0xf]
      %v331 = vld [vmem:[%s219 + $0xa0] sm:$0xf]
      %v332 = vld [vmem:[%s219 + $0xa4] sm:$0x1]
      %v333 = vld [vmem:[%s219 + $0xa8] sm:$0xf]
      %v334 = vld [vmem:[%s219 + $0xac] sm:$0xf]
      %v335 = vld [vmem:[%s219 + $0xb0] sm:$0x1]
      %v336 = vld [vmem:[%s219 + $0xb4] sm:$0xf]
      %v337 = vld [vmem:[%s219 + $0xb8] sm:$0xf]
      %v338 = vld [vmem:[%s219 + $0xbc] sm:$0x1]
      %vm339 = vsmask.f32 3328
      %vm340 = vsmask.f32 7440
      %vm341 = vmor %vm339, %vm340
      %v343 = vshrl.u32 %v291, 16
      %v345 = vrot.slane %v343, 4
      %v346 = vshll.u32 %v291, 16
      %v348 = vrot.slane %v346, 5
      %v349 = vor.u32 %v345, %v348
      %v350 = vrot.slane %v349, 4
      %v352 = vshll.u32 %v292, 16
      %v354 = vrot.slane %v352, 5
      %v355 = vsel %vm341, %v350, %v354
      %v356 = vshrl.u32 %v292, 16
      %v358 = vrot.slane %v356, 4
      %v359 = vor.u32 %v358, %v354
      %v360 = vrot.slane %v359, 4
      %v362 = vshll.u32 %v293, 16
      %v364 = vrot.slane %v362, 5
      %v365 = vsel %vm341, %v360, %v364
      %v367 = vshrl.u32 %v294, 16
      %v369 = vrot.slane %v367, 4
      %v370 = vshll.u32 %v294, 16
      %v372 = vrot.slane %v370, 5
      %v373 = vor.u32 %v369, %v372
      %v374 = vrot.slane %v373, 4
      %v376 = vshll.u32 %v295, 16
      %v378 = vrot.slane %v376, 5
      %v379 = vsel %vm341, %v374, %v378
      %v380 = vshrl.u32 %v295, 16
      %v382 = vrot.slane %v380, 4
      %v383 = vor.u32 %v382, %v378
      %v384 = vrot.slane %v383, 4
      %v386 = vshll.u32 %v296, 16
      %v388 = vrot.slane %v386, 5
      %v389 = vsel %vm341, %v384, %v388
      %v391 = vshrl.u32 %v297, 16
      %v393 = vrot.slane %v391, 4
      %v394 = vshll.u32 %v297, 16
      %v396 = vrot.slane %v394, 5
      %v397 = vor.u32 %v393, %v396
      %v398 = vrot.slane %v397, 4
      %v400 = vshll.u32 %v298, 16
      %v402 = vrot.slane %v400, 5
      %v403 = vsel %vm341, %v398, %v402
      %v404 = vshrl.u32 %v298, 16
      %v406 = vrot.slane %v404, 4
      %v407 = vor.u32 %v406, %v402
      %v408 = vrot.slane %v407, 4
      %v410 = vshll.u32 %v299, 16
      %v412 = vrot.slane %v410, 5
      %v413 = vsel %vm341, %v408, %v412
      %v415 = vshrl.u32 %v300, 16
      %v417 = vrot.slane %v415, 4
      %v418 = vshll.u32 %v300, 16
      %v420 = vrot.slane %v418, 5
      %v421 = vor.u32 %v417, %v420
      %v422 = vrot.slane %v421, 4
      %v424 = vshll.u32 %v301, 16
      %v426 = vrot.slane %v424, 5
      %v427 = vsel %vm341, %v422, %v426
      %v428 = vshrl.u32 %v301, 16
      %v430 = vrot.slane %v428, 4
      %v431 = vor.u32 %v430, %v426
      %v432 = vrot.slane %v431, 4
      %v434 = vshll.u32 %v302, 16
      %v436 = vrot.slane %v434, 5
      %v437 = vsel %vm341, %v432, %v436
      %v439 = vshrl.u32 %v303, 16
      %v441 = vrot.slane %v439, 4
      %v442 = vshll.u32 %v303, 16
      %v444 = vrot.slane %v442, 5
      %v445 = vor.u32 %v441, %v444
      %v446 = vrot.slane %v445, 4
      %v448 = vshll.u32 %v304, 16
      %v450 = vrot.slane %v448, 5
      %v451 = vsel %vm341, %v446, %v450
      %v452 = vshrl.u32 %v304, 16
      %v454 = vrot.slane %v452, 4
      %v455 = vor.u32 %v454, %v450
      %v456 = vrot.slane %v455, 4
      %v458 = vshll.u32 %v305, 16
      %v460 = vrot.slane %v458, 5
      %v461 = vsel %vm341, %v456, %v460
      %v463 = vshrl.u32 %v306, 16
      %v465 = vrot.slane %v463, 4
      %v466 = vshll.u32 %v306, 16
      %v468 = vrot.slane %v466, 5
      %v469 = vor.u32 %v465, %v468
      %v470 = vrot.slane %v469, 4
      %v472 = vshll.u32 %v307, 16
      %v474 = vrot.slane %v472, 5
      %v475 = vsel %vm341, %v470, %v474
      %v476 = vshrl.u32 %v307, 16
      %v478 = vrot.slane %v476, 4
      %v479 = vor.u32 %v478, %v474
      %v480 = vrot.slane %v479, 4
      %v482 = vshll.u32 %v308, 16
      %v484 = vrot.slane %v482, 5
      %v485 = vsel %vm341, %v480, %v484
      %v487 = vshrl.u32 %v309, 16
      %v489 = vrot.slane %v487, 4
      %v490 = vshll.u32 %v309, 16
      %v492 = vrot.slane %v490, 5
      %v493 = vor.u32 %v489, %v492
      %v494 = vrot.slane %v493, 4
      %v496 = vshll.u32 %v310, 16
      %v498 = vrot.slane %v496, 5
      %v499 = vsel %vm341, %v494, %v498
      %v500 = vshrl.u32 %v310, 16
      %v502 = vrot.slane %v500, 4
      %v503 = vor.u32 %v502, %v498
      %v504 = vrot.slane %v503, 4
      %v506 = vshll.u32 %v311, 16
      %v508 = vrot.slane %v506, 5
      %v509 = vsel %vm341, %v504, %v508
      %v511 = vshrl.u32 %v312, 16
      %v513 = vrot.slane %v511, 4
      %v514 = vshll.u32 %v312, 16
      %v516 = vrot.slane %v514, 5
      %v517 = vor.u32 %v513, %v516
      %v518 = vrot.slane %v517, 4
      %v520 = vshll.u32 %v313, 16
      %v522 = vrot.slane %v520, 5
      %v523 = vsel %vm341, %v518, %v522
      %v524 = vshrl.u32 %v313, 16
      %v526 = vrot.slane %v524, 4
      %v527 = vor.u32 %v526, %v522
      %v528 = vrot.slane %v527, 4
      %v530 = vshll.u32 %v314, 16
      %v532 = vrot.slane %v530, 5
      %v533 = vsel %vm341, %v528, %v532
      %v535 = vshrl.u32 %v315, 16
      %v537 = vrot.slane %v535, 4
      %v538 = vshll.u32 %v315, 16
      %v540 = vrot.slane %v538, 5
      %v541 = vor.u32 %v537, %v540
      %v542 = vrot.slane %v541, 4
      %v544 = vshll.u32 %v316, 16
      %v546 = vrot.slane %v544, 5
      %v547 = vsel %vm341, %v542, %v546
      %v548 = vshrl.u32 %v316, 16
      %v550 = vrot.slane %v548, 4
      %v551 = vor.u32 %v550, %v546
      %v552 = vrot.slane %v551, 4
      %v554 = vshll.u32 %v317, 16
      %v556 = vrot.slane %v554, 5
      %v557 = vsel %vm341, %v552, %v556
      %v559 = vshrl.u32 %v318, 16
      %v561 = vrot.slane %v559, 4
      %v562 = vshll.u32 %v318, 16
      %v564 = vrot.slane %v562, 5
      %v565 = vor.u32 %v561, %v564
      %v566 = vrot.slane %v565, 4
      %v568 = vshll.u32 %v319, 16
      %v570 = vrot.slane %v568, 5
      %v571 = vsel %vm341, %v566, %v570
      %v572 = vshrl.u32 %v319, 16
      %v574 = vrot.slane %v572, 4
      %v575 = vor.u32 %v574, %v570
      %v576 = vrot.slane %v575, 4
      %v578 = vshll.u32 %v320, 16
      %v580 = vrot.slane %v578, 5
      %v581 = vsel %vm341, %v576, %v580
      %v583 = vshrl.u32 %v321, 16
      %v585 = vrot.slane %v583, 4
      %v586 = vshll.u32 %v321, 16
      %v588 = vrot.slane %v586, 5
      %v589 = vor.u32 %v585, %v588
      %v590 = vrot.slane %v589, 4
      %v592 = vshll.u32 %v322, 16
      %v594 = vrot.slane %v592, 5
      %v595 = vsel %vm341, %v590, %v594
      %v596 = vshrl.u32 %v322, 16
      %v598 = vrot.slane %v596, 4
      %v599 = vor.u32 %v598, %v594
      %v600 = vrot.slane %v599, 4
      %v602 = vshll.u32 %v323, 16
      %v604 = vrot.slane %v602, 5
      %v605 = vsel %vm341, %v600, %v604
      %v607 = vshrl.u32 %v324, 16
      %v609 = vrot.slane %v607, 4
      %v610 = vshll.u32 %v324, 16
      %v612 = vrot.slane %v610, 5
      %v613 = vor.u32 %v609, %v612
      %v614 = vrot.slane %v613, 4
      %v616 = vshll.u32 %v325, 16
      %v618 = vrot.slane %v616, 5
      %v619 = vsel %vm341, %v614, %v618
      %v620 = vshrl.u32 %v325, 16
      %v622 = vrot.slane %v620, 4
      %v623 = vor.u32 %v622, %v618
      %v624 = vrot.slane %v623, 4
      %v626 = vshll.u32 %v326, 16
      %v628 = vrot.slane %v626, 5
      %v629 = vsel %vm341, %v624, %v628
      %v631 = vshrl.u32 %v327, 16
      %v633 = vrot.slane %v631, 4
      %v634 = vshll.u32 %v327, 16
      %v636 = vrot.slane %v634, 5
      %v637 = vor.u32 %v633, %v636
      %v638 = vrot.slane %v637, 4
      %v640 = vshll.u32 %v328, 16
      %v642 = vrot.slane %v640, 5
      %v643 = vsel %vm341, %v638, %v642
      %v644 = vshrl.u32 %v328, 16
      %v646 = vrot.slane %v644, 4
      %v647 = vor.u32 %v646, %v642
      %v648 = vrot.slane %v647, 4
      %v650 = vshll.u32 %v329, 16
      %v652 = vrot.slane %v650, 5
      %v653 = vsel %vm341, %v648, %v652
      %v655 = vshrl.u32 %v330, 16
      %v657 = vrot.slane %v655, 4
      %v658 = vshll.u32 %v330, 16
      %v660 = vrot.slane %v658, 5
      %v661 = vor.u32 %v657, %v660
      %v662 = vrot.slane %v661, 4
      %v664 = vshll.u32 %v331, 16
      %v666 = vrot.slane %v664, 5
      %v667 = vsel %vm341, %v662, %v666
      %v668 = vshrl.u32 %v331, 16
      %v670 = vrot.slane %v668, 4
      %v671 = vor.u32 %v670, %v666
      %v672 = vrot.slane %v671, 4
      %v674 = vshll.u32 %v332, 16
      %v676 = vrot.slane %v674, 5
      %v677 = vsel %vm341, %v672, %v676
      %v679 = vshrl.u32 %v333, 16
      %v681 = vrot.slane %v679, 4
      %v682 = vshll.u32 %v333, 16
      %v684 = vrot.slane %v682, 5
      %v685 = vor.u32 %v681, %v684
      %v686 = vrot.slane %v685, 4
      %v688 = vshll.u32 %v334, 16
      %v690 = vrot.slane %v688, 5
      %v691 = vsel %vm341, %v686, %v690
      %v692 = vshrl.u32 %v334, 16
      %v694 = vrot.slane %v692, 4
      %v695 = vor.u32 %v694, %v690
      %v696 = vrot.slane %v695, 4
      %v698 = vshll.u32 %v335, 16
      %v700 = vrot.slane %v698, 5
      %v701 = vsel %vm341, %v696, %v700
      %v703 = vshrl.u32 %v336, 16
      %v705 = vrot.slane %v703, 4
      %v706 = vshll.u32 %v336, 16
      %v708 = vrot.slane %v706, 5
      %v709 = vor.u32 %v705, %v708
      %v710 = vrot.slane %v709, 4
      %v712 = vshll.u32 %v337, 16
      %v714 = vrot.slane %v712, 5
      %v715 = vsel %vm341, %v710, %v714
      %v716 = vshrl.u32 %v337, 16
      %v718 = vrot.slane %v716, 4
      %v719 = vor.u32 %v718, %v714
      %v720 = vrot.slane %v719, 4
      %v722 = vshll.u32 %v338, 16
      %v724 = vrot.slane %v722, 5
      %v725 = vsel %vm341, %v720, %v724
      %726 = vrot.lane.b32.xlu0 %v355, 64
      %v727 = vpop.permute.xlu0 %726
      %728 = vrot.lane.b32.xlu0 %v365, 64
      %v729 = vpop.permute.xlu0 %728
      %730 = vrot.lane.b32.xlu0 %v379, 64
      %v731 = vpop.permute.xlu0 %730
      %732 = vrot.lane.b32.xlu0 %v389, 64
      %v733 = vpop.permute.xlu0 %732
      %734 = vrot.lane.b32.xlu0 %v403, 64
      %v735 = vpop.permute.xlu0 %734
      %736 = vrot.lane.b32.xlu0 %v413, 64
      %v737 = vpop.permute.xlu0 %736
      %738 = vrot.lane.b32.xlu0 %v427, 64
      %v739 = vpop.permute.xlu0 %738
      %740 = vrot.lane.b32.xlu0 %v437, 64
      %v741 = vpop.permute.xlu0 %740
      %742 = vrot.lane.b32.xlu0 %v451, 64
      %v743 = vpop.permute.xlu0 %742
      %744 = vrot.lane.b32.xlu0 %v461, 64
      %v745 = vpop.permute.xlu0 %744
      %746 = vrot.lane.b32.xlu0 %v475, 64
      %v747 = vpop.permute.xlu0 %746
      %748 = vrot.lane.b32.xlu0 %v485, 64
      %v749 = vpop.permute.xlu0 %748
      %750 = vrot.lane.b32.xlu0 %v499, 64
      %v751 = vpop.permute.xlu0 %750
      %752 = vrot.lane.b32.xlu0 %v509, 64
      %v753 = vpop.permute.xlu0 %752
      %754 = vrot.lane.b32.xlu0 %v523, 64
      %v755 = vpop.permute.xlu0 %754
      %756 = vrot.lane.b32.xlu0 %v533, 64
      %v757 = vpop.permute.xlu0 %756
      %758 = vrot.lane.b32.xlu0 %v547, 64
      %v759 = vpop.permute.xlu0 %758
      %760 = vrot.lane.b32.xlu0 %v557, 64
      %v761 = vpop.permute.xlu0 %760
      %762 = vrot.lane.b32.xlu0 %v571, 64
      %v763 = vpop.permute.xlu0 %762
      %764 = vrot.lane.b32.xlu0 %v581, 64
      %v765 = vpop.permute.xlu0 %764
      %766 = vrot.lane.b32.xlu0 %v595, 64
      %v767 = vpop.permute.xlu0 %766
      %768 = vrot.lane.b32.xlu0 %v605, 64
      %v769 = vpop.permute.xlu0 %768
      %770 = vrot.lane.b32.xlu0 %v619, 64
      %v771 = vpop.permute.xlu0 %770
      %772 = vrot.lane.b32.xlu0 %v629, 64
      %v773 = vpop.permute.xlu0 %772
      %774 = vrot.lane.b32.xlu0 %v643, 64
      %v775 = vpop.permute.xlu0 %774
      %776 = vrot.lane.b32.xlu0 %v653, 64
      %v777 = vpop.permute.xlu0 %776
      %778 = vrot.lane.b32.xlu0 %v667, 64
      %v779 = vpop.permute.xlu0 %778
      %780 = vrot.lane.b32.xlu0 %v677, 64
      %v781 = vpop.permute.xlu0 %780
      %782 = vrot.lane.b32.xlu0 %v691, 64
      %v783 = vpop.permute.xlu0 %782
      %784 = vrot.lane.b32.xlu0 %v701, 64
      %v785 = vpop.permute.xlu0 %784
      %786 = vrot.lane.b32.xlu0 %v715, 64
      %v787 = vpop.permute.xlu0 %786
      %788 = vrot.lane.b32.xlu0 %v725, 64
      %v789 = vpop.permute.xlu0 %788
      %vm822 = vcmask 1043968
      %823 = vst.msk [vmem:[#allocation3] sm:$0xf] %vm822, %v727
      %824 = vst.msk [vmem:[#allocation3 + $0x14] sm:$0xf] %vm822, %v729
      %825 = vst.msk [vmem:[#allocation3 + $0x28] sm:$0xf] %vm822, %v731
      %826 = vst.msk [vmem:[#allocation3 + $0x3c] sm:$0xf] %vm822, %v733
      %827 = vst.msk [vmem:[#allocation3 + $0x50] sm:$0xf] %vm822, %v735
      %828 = vst.msk [vmem:[#allocation3 + $0x64] sm:$0xf] %vm822, %v737
      %829 = vst.msk [vmem:[#allocation3 + $0x78] sm:$0xf] %vm822, %v739
      %830 = vst.msk [vmem:[#allocation3 + $0x8c] sm:$0xf] %vm822, %v741
      %831 = vst.msk [vmem:[#allocation3 + $0xa0] sm:$0xf] %vm822, %v743
      %832 = vst.msk [vmem:[#allocation3 + $0xb4] sm:$0xf] %vm822, %v745
      %833 = vst.msk [vmem:[#allocation3 + $0xc8] sm:$0xf] %vm822, %v747
      %834 = vst.msk [vmem:[#allocation3 + $0xdc] sm:$0xf] %vm822, %v749
      %835 = vst.msk [vmem:[#allocation3 + $0xf0] sm:$0xf] %vm822, %v751
      %836 = vst.msk [vmem:[#allocation3 + $0x104] sm:$0xf] %vm822, %v753
      %837 = vst.msk [vmem:[#allocation3 + $0x118] sm:$0xf] %vm822, %v755
      %838 = vst.msk [vmem:[#allocation3 + $0x12c] sm:$0xf] %vm822, %v757
      %839 = vst.msk [vmem:[#allocation3 + $0x140] sm:$0xf] %vm822, %v759
      %840 = vst.msk [vmem:[#allocation3 + $0x154] sm:$0xf] %vm822, %v761
      %841 = vst.msk [vmem:[#allocation3 + $0x168] sm:$0xf] %vm822, %v763
      %842 = vst.msk [vmem:[#allocation3 + $0x17c] sm:$0xf] %vm822, %v765
      %843 = vst.msk [vmem:[#allocation3 + $0x190] sm:$0xf] %vm822, %v767
      %844 = vst.msk [vmem:[#allocation3 + $0x1a4] sm:$0xf] %vm822, %v769
      %845 = vst.msk [vmem:[#allocation3 + $0x1b8] sm:$0xf] %vm822, %v771
      %846 = vst.msk [vmem:[#allocation3 + $0x1cc] sm:$0xf] %vm822, %v773
      %847 = vst.msk [vmem:[#allocation3 + $0x1e0] sm:$0xf] %vm822, %v775
      %848 = vst.msk [vmem:[#allocation3 + $0x1f4] sm:$0xf] %vm822, %v777
      %849 = vst.msk [vmem:[#allocation3 + $0x208] sm:$0xf] %vm822, %v779
      %850 = vst.msk [vmem:[#allocation3 + $0x21c] sm:$0xf] %vm822, %v781
      %851 = vst.msk [vmem:[#allocation3 + $0x230] sm:$0xf] %vm822, %v783
      %852 = vst.msk [vmem:[#allocation3 + $0x244] sm:$0xf] %vm822, %v785
      %853 = vst.msk [vmem:[#allocation3 + $0x258] sm:$0xf] %vm822, %v787
      %854 = vst.msk [vmem:[#allocation3 + $0x26c] sm:$0xf] %vm822, %v789
      %v855 = vld [vmem:[%s219] sm:$0xe]
      %v856 = vld [vmem:[%s219 + $0x4] sm:$0xf]
      %v857 = vld [vmem:[%s219 + $0x8] sm:$0x1]
      %v858 = vld [vmem:[%s219 + $0xc] sm:$0xe]
      %v859 = vld [vmem:[%s219 + $0x10] sm:$0xf]
      %v860 = vld [vmem:[%s219 + $0x14] sm:$0x1]
      %v861 = vld [vmem:[%s219 + $0x18] sm:$0xe]
      %v862 = vld [vmem:[%s219 + $0x1c] sm:$0xf]
      %v863 = vld [vmem:[%s219 + $0x20] sm:$0x1]
      %v864 = vld [vmem:[%s219 + $0x24] sm:$0xe]
      %v865 = vld [vmem:[%s219 + $0x28] sm:$0xf]
      %v866 = vld [vmem:[%s219 + $0x2c] sm:$0x1]
      %v867 = vld [vmem:[%s219 + $0x30] sm:$0xe]
      %v868 = vld [vmem:[%s219 + $0x34] sm:$0xf]
      %v869 = vld [vmem:[%s219 + $0x38] sm:$0x1]
      %v870 = vld [vmem:[%s219 + $0x3c] sm:$0xe]
      %v871 = vld [vmem:[%s219 + $0x40] sm:$0xf]
      %v872 = vld [vmem:[%s219 + $0x44] sm:$0x1]
      %v873 = vld [vmem:[%s219 + $0x48] sm:$0xe]
      %v874 = vld [vmem:[%s219 + $0x4c] sm:$0xf]
      %v875 = vld [vmem:[%s219 + $0x50] sm:$0x1]
      %v876 = vld [vmem:[%s219 + $0x54] sm:$0xe]
      %v877 = vld [vmem:[%s219 + $0x58] sm:$0xf]
      %v878 = vld [vmem:[%s219 + $0x5c] sm:$0x1]
      %v879 = vld [vmem:[%s219 + $0x60] sm:$0xe]
      %v880 = vld [vmem:[%s219 + $0x64] sm:$0xf]
      %v881 = vld [vmem:[%s219 + $0x68] sm:$0x1]
      %v882 = vld [vmem:[%s219 + $0x6c] sm:$0xe]
      %v883 = vld [vmem:[%s219 + $0x70] sm:$0xf]
      %v884 = vld [vmem:[%s219 + $0x74] sm:$0x1]
      %v885 = vld [vmem:[%s219 + $0x78] sm:$0xe]
      %v886 = vld [vmem:[%s219 + $0x7c] sm:$0xf]
      %v887 = vld [vmem:[%s219 + $0x80] sm:$0x1]
      %v888 = vld [vmem:[%s219 + $0x84] sm:$0xe]
      %v889 = vld [vmem:[%s219 + $0x88] sm:$0xf]
      %v890 = vld [vmem:[%s219 + $0x8c] sm:$0x1]
      %v891 = vld [vmem:[%s219 + $0x90] sm:$0xe]
      %v892 = vld [vmem:[%s219 + $0x94] sm:$0xf]
      %v893 = vld [vmem:[%s219 + $0x98] sm:$0x1]
      %v894 = vld [vmem:[%s219 + $0x9c] sm:$0xe]
      %v895 = vld [vmem:[%s219 + $0xa0] sm:$0xf]
      %v896 = vld [vmem:[%s219 + $0xa4] sm:$0x1]
      %v897 = vld [vmem:[%s219 + $0xa8] sm:$0xe]
      %v898 = vld [vmem:[%s219 + $0xac] sm:$0xf]
      %v899 = vld [vmem:[%s219 + $0xb0] sm:$0x1]
      %v900 = vld [vmem:[%s219 + $0xb4] sm:$0xe]
      %v901 = vld [vmem:[%s219 + $0xb8] sm:$0xf]
      %v902 = vld [vmem:[%s219 + $0xbc] sm:$0x1]
      %vm951 = vcmask 1042432
      %vm952 = vcmask 1046532
      %vm953 = vmor %vm951, %vm952
      %v954 = vrot.slane %v855, 5
      %v955 = vrot.slane %v954, 4
      %v956 = vrot.slane %v856, 5
      %v957 = vsel %vm953, %v955, %v956
      %v958 = vrot.slane %v956, 4
      %v959 = vrot.slane %v857, 5
      %v960 = vsel %vm953, %v958, %v959
      %v961 = vrot.slane %v858, 5
      %v962 = vrot.slane %v961, 4
      %v963 = vrot.slane %v859, 5
      %v964 = vsel %vm953, %v962, %v963
      %v965 = vrot.slane %v963, 4
      %v966 = vrot.slane %v860, 5
      %v967 = vsel %vm953, %v965, %v966
      %v968 = vrot.slane %v861, 5
      %v969 = vrot.slane %v968, 4
      %v970 = vrot.slane %v862, 5
      %v971 = vsel %vm953, %v969, %v970
      %v972 = vrot.slane %v970, 4
      %v973 = vrot.slane %v863, 5
      %v974 = vsel %vm953, %v972, %v973
      %v975 = vrot.slane %v864, 5
      %v976 = vrot.slane %v975, 4
      %v977 = vrot.slane %v865, 5
      %v978 = vsel %vm953, %v976, %v977
      %v979 = vrot.slane %v977, 4
      %v980 = vrot.slane %v866, 5
      %v981 = vsel %vm953, %v979, %v980
      %v982 = vrot.slane %v867, 5
      %v983 = vrot.slane %v982, 4
      %v984 = vrot.slane %v868, 5
      %v985 = vsel %vm953, %v983, %v984
      %v986 = vrot.slane %v984, 4
      %v987 = vrot.slane %v869, 5
      %v988 = vsel %vm953, %v986, %v987
      %v989 = vrot.slane %v870, 5
      %v990 = vrot.slane %v989, 4
      %v991 = vrot.slane %v871, 5
      %v992 = vsel %vm953, %v990, %v991
      %v993 = vrot.slane %v991, 4
      %v994 = vrot.slane %v872, 5
      %v995 = vsel %vm953, %v993, %v994
      %v996 = vrot.slane %v873, 5
      %v997 = vrot.slane %v996, 4
      %v998 = vrot.slane %v874, 5
      %v999 = vsel %vm953, %v997, %v998
      %v1000 = vrot.slane %v998, 4
      %v1001 = vrot.slane %v875, 5
      %v1002 = vsel %vm953, %v1000, %v1001
      %v1003 = vrot.slane %v876, 5
      %v1004 = vrot.slane %v1003, 4
      %v1005 = vrot.slane %v877, 5
      %v1006 = vsel %vm953, %v1004, %v1005
      %v1007 = vrot.slane %v1005, 4
      %v1008 = vrot.slane %v878, 5
      %v1009 = vsel %vm953, %v1007, %v1008
      %v1010 = vrot.slane %v879, 5
      %v1011 = vrot.slane %v1010, 4
      %v1012 = vrot.slane %v880, 5
      %v1013 = vsel %vm953, %v1011, %v1012
      %v1014 = vrot.slane %v1012, 4
      %v1015 = vrot.slane %v881, 5
      %v1016 = vsel %vm953, %v1014, %v1015
      %v1017 = vrot.slane %v882, 5
      %v1018 = vrot.slane %v1017, 4
      %v1019 = vrot.slane %v883, 5
      %v1020 = vsel %vm953, %v1018, %v1019
      %v1021 = vrot.slane %v1019, 4
      %v1022 = vrot.slane %v884, 5
      %v1023 = vsel %vm953, %v1021, %v1022
      %v1024 = vrot.slane %v885, 5
      %v1025 = vrot.slane %v1024, 4
      %v1026 = vrot.slane %v886, 5
      %v1027 = vsel %vm953, %v1025, %v1026
      %v1028 = vrot.slane %v1026, 4
      %v1029 = vrot.slane %v887, 5
      %v1030 = vsel %vm953, %v1028, %v1029
      %v1031 = vrot.slane %v888, 5
      %v1032 = vrot.slane %v1031, 4
      %v1033 = vrot.slane %v889, 5
      %v1034 = vsel %vm953, %v1032, %v1033
      %v1035 = vrot.slane %v1033, 4
      %v1036 = vrot.slane %v890, 5
      %v1037 = vsel %vm953, %v1035, %v1036
      %v1038 = vrot.slane %v891, 5
      %v1039 = vrot.slane %v1038, 4
      %v1040 = vrot.slane %v892, 5
      %v1041 = vsel %vm953, %v1039, %v1040
      %v1042 = vrot.slane %v1040, 4
      %v1043 = vrot.slane %v893, 5
      %v1044 = vsel %vm953, %v1042, %v1043
      %v1045 = vrot.slane %v894, 5
      %v1046 = vrot.slane %v1045, 4
      %v1047 = vrot.slane %v895, 5
      %v1048 = vsel %vm953, %v1046, %v1047
      %v1049 = vrot.slane %v1047, 4
      %v1050 = vrot.slane %v896, 5
      %v1051 = vsel %vm953, %v1049, %v1050
      %v1052 = vrot.slane %v897, 5
      %v1053 = vrot.slane %v1052, 4
      %v1054 = vrot.slane %v898, 5
      %v1055 = vsel %vm953, %v1053, %v1054
      %v1056 = vrot.slane %v1054, 4
      %v1057 = vrot.slane %v899, 5
      %v1058 = vsel %vm953, %v1056, %v1057
      %v1059 = vrot.slane %v900, 5
      %v1060 = vrot.slane %v1059, 4
      %v1061 = vrot.slane %v901, 5
      %v1062 = vsel %vm953, %v1060, %v1061
      %v1063 = vrot.slane %v1061, 4
      %v1064 = vrot.slane %v902, 5
      %v1065 = vsel %vm953, %v1063, %v1064
      %1098 = vst.msk [vmem:[#allocation3 + $0x4] sm:$0xf] %vm258, %v957
      %1099 = vst.msk [vmem:[#allocation3 + $0x18] sm:$0xf] %vm258, %v960
      %1100 = vst.msk [vmem:[#allocation3 + $0x2c] sm:$0xf] %vm258, %v964
      %1101 = vst.msk [vmem:[#allocation3 + $0x40] sm:$0xf] %vm258, %v967
      %1102 = vst.msk [vmem:[#allocation3 + $0x54] sm:$0xf] %vm258, %v971
      %1103 = vst.msk [vmem:[#allocation3 + $0x68] sm:$0xf] %vm258, %v974
      %1104 = vst.msk [vmem:[#allocation3 + $0x7c] sm:$0xf] %vm258, %v978
      %1105 = vst.msk [vmem:[#allocation3 + $0x90] sm:$0xf] %vm258, %v981
      %1106 = vst.msk [vmem:[#allocation3 + $0xa4] sm:$0xf] %vm258, %v985
      %1107 = vst.msk [vmem:[#allocation3 + $0xb8] sm:$0xf] %vm258, %v988
      %1108 = vst.msk [vmem:[#allocation3 + $0xcc] sm:$0xf] %vm258, %v992
      %1109 = vst.msk [vmem:[#allocation3 + $0xe0] sm:$0xf] %vm258, %v995
      %1110 = vst.msk [vmem:[#allocation3 + $0xf4] sm:$0xf] %vm258, %v999
      %1111 = vst.msk [vmem:[#allocation3 + $0x108] sm:$0xf] %vm258, %v1002
      %1112 = vst.msk [vmem:[#allocation3 + $0x11c] sm:$0xf] %vm258, %v1006
      %1113 = vst.msk [vmem:[#allocation3 + $0x130] sm:$0xf] %vm258, %v1009
      %1114 = vst.msk [vmem:[#allocation3 + $0x144] sm:$0xf] %vm258, %v1013
      %1115 = vst.msk [vmem:[#allocation3 + $0x158] sm:$0xf] %vm258, %v1016
      %1116 = vst.msk [vmem:[#allocation3 + $0x16c] sm:$0xf] %vm258, %v1020
      %1117 = vst.msk [vmem:[#allocation3 + $0x180] sm:$0xf] %vm258, %v1023
      %1118 = vst.msk [vmem:[#allocation3 + $0x194] sm:$0xf] %vm258, %v1027
      %1119 = vst.msk [vmem:[#allocation3 + $0x1a8] sm:$0xf] %vm258, %v1030
      %1120 = vst.msk [vmem:[#allocation3 + $0x1bc] sm:$0xf] %vm258, %v1034
      %1121 = vst.msk [vmem:[#allocation3 + $0x1d0] sm:$0xf] %vm258, %v1037
      %1122 = vst.msk [vmem:[#allocation3 + $0x1e4] sm:$0xf] %vm258, %v1041
      %1123 = vst.msk [vmem:[#allocation3 + $0x1f8] sm:$0xf] %vm258, %v1044
      %1124 = vst.msk [vmem:[#allocation3 + $0x20c] sm:$0xf] %vm258, %v1048
      %1125 = vst.msk [vmem:[#allocation3 + $0x220] sm:$0xf] %vm258, %v1051
      %1126 = vst.msk [vmem:[#allocation3 + $0x234] sm:$0xf] %vm258, %v1055
      %1127 = vst.msk [vmem:[#allocation3 + $0x248] sm:$0xf] %vm258, %v1058
      %1128 = vst.msk [vmem:[#allocation3 + $0x25c] sm:$0xf] %vm258, %v1062
      %1129 = vst.msk [vmem:[#allocation3 + $0x270] sm:$0xf] %vm258, %v1065
      %s1130 = scalar_lea.vmem %s219, 12
      %v1131 = vld [vmem:[%s1130] sm:$0xf]
      %v1132 = vld [vmem:[%s1130 + $0x4] sm:$0xf]
      %v1133 = vld [vmem:[%s1130 + $0xc] sm:$0xf]
      %v1134 = vld [vmem:[%s1130 + $0x10] sm:$0xf]
      %v1135 = vld [vmem:[%s1130 + $0x18] sm:$0xf]
      %v1136 = vld [vmem:[%s1130 + $0x1c] sm:$0xf]
      %v1137 = vld [vmem:[%s1130 + $0x24] sm:$0xf]
      %v1138 = vld [vmem:[%s1130 + $0x28] sm:$0xf]
      %v1139 = vld [vmem:[%s1130 + $0x30] sm:$0xf]
      %v1140 = vld [vmem:[%s1130 + $0x34] sm:$0xf]
      %v1141 = vld [vmem:[%s1130 + $0x3c] sm:$0xf]
      %v1142 = vld [vmem:[%s1130 + $0x40] sm:$0xf]
      %v1143 = vld [vmem:[%s1130 + $0x48] sm:$0xf]
      %v1144 = vld [vmem:[%s1130 + $0x4c] sm:$0xf]
      %v1145 = vld [vmem:[%s1130 + $0x54] sm:$0xf]
      %v1146 = vld [vmem:[%s1130 + $0x58] sm:$0xf]
      %v1147 = vld [vmem:[%s1130 + $0x60] sm:$0xf]
      %v1148 = vld [vmem:[%s1130 + $0x64] sm:$0xf]
      %v1149 = vld [vmem:[%s1130 + $0x6c] sm:$0xf]
      %v1150 = vld [vmem:[%s1130 + $0x70] sm:$0xf]
      %v1151 = vld [vmem:[%s1130 + $0x78] sm:$0xf]
      %v1152 = vld [vmem:[%s1130 + $0x7c] sm:$0xf]
      %v1153 = vld [vmem:[%s1130 + $0x84] sm:$0xf]
      %v1154 = vld [vmem:[%s1130 + $0x88] sm:$0xf]
      %v1155 = vld [vmem:[%s1130 + $0x90] sm:$0xf]
      %v1156 = vld [vmem:[%s1130 + $0x94] sm:$0xf]
      %v1157 = vld [vmem:[%s1130 + $0x9c] sm:$0xf]
      %v1158 = vld [vmem:[%s1130 + $0xa0] sm:$0xf]
      %v1159 = vld [vmem:[%s1130 + $0xa8] sm:$0xf]
      %v1160 = vld [vmem:[%s1130 + $0xac] sm:$0xf]
      %v1161 = vld [vmem:[%s1130 + $0xb4] sm:$0xf]
      %v1162 = vld [vmem:[%s1130 + $0xb8] sm:$0xf]
      %1195 = vrot.lane.b32.xlu0 %v1131, 64
      %v1196 = vpop.permute.xlu0 %1195
      %1197 = vrot.lane.b32.xlu0 %v1132, 64
      %v1198 = vpop.permute.xlu0 %1197
      %1199 = vrot.lane.b32.xlu0 %v1133, 64
      %v1200 = vpop.permute.xlu0 %1199
      %1201 = vrot.lane.b32.xlu0 %v1134, 64
      %v1202 = vpop.permute.xlu0 %1201
      %1203 = vrot.lane.b32.xlu0 %v1135, 64
      %v1204 = vpop.permute.xlu0 %1203
      %1205 = vrot.lane.b32.xlu0 %v1136, 64
      %v1206 = vpop.permute.xlu0 %1205
      %1207 = vrot.lane.b32.xlu0 %v1137, 64
      %v1208 = vpop.permute.xlu0 %1207
      %1209 = vrot.lane.b32.xlu0 %v1138, 64
      %v1210 = vpop.permute.xlu0 %1209
      %1211 = vrot.lane.b32.xlu0 %v1139, 64
      %v1212 = vpop.permute.xlu0 %1211
      %1213 = vrot.lane.b32.xlu0 %v1140, 64
      %v1214 = vpop.permute.xlu0 %1213
      %1215 = vrot.lane.b32.xlu0 %v1141, 64
      %v1216 = vpop.permute.xlu0 %1215
      %1217 = vrot.lane.b32.xlu0 %v1142, 64
      %v1218 = vpop.permute.xlu0 %1217
      %1219 = vrot.lane.b32.xlu0 %v1143, 64
      %v1220 = vpop.permute.xlu0 %1219
      %1221 = vrot.lane.b32.xlu0 %v1144, 64
      %v1222 = vpop.permute.xlu0 %1221
      %1223 = vrot.lane.b32.xlu0 %v1145, 64
      %v1224 = vpop.permute.xlu0 %1223
      %1225 = vrot.lane.b32.xlu0 %v1146, 64
      %v1226 = vpop.permute.xlu0 %1225
      %1227 = vrot.lane.b32.xlu0 %v1147, 64
      %v1228 = vpop.permute.xlu0 %1227
      %1229 = vrot.lane.b32.xlu0 %v1148, 64
      %v1230 = vpop.permute.xlu0 %1229
      %1231 = vrot.lane.b32.xlu0 %v1149, 64
      %v1232 = vpop.permute.xlu0 %1231
      %1233 = vrot.lane.b32.xlu0 %v1150, 64
      %v1234 = vpop.permute.xlu0 %1233
      %1235 = vrot.lane.b32.xlu0 %v1151, 64
      %v1236 = vpop.permute.xlu0 %1235
      %1237 = vrot.lane.b32.xlu0 %v1152, 64
      %v1238 = vpop.permute.xlu0 %1237
      %1239 = vrot.lane.b32.xlu0 %v1153, 64
      %v1240 = vpop.permute.xlu0 %1239
      %1241 = vrot.lane.b32.xlu0 %v1154, 64
      %v1242 = vpop.permute.xlu0 %1241
      %1243 = vrot.lane.b32.xlu0 %v1155, 64
      %v1244 = vpop.permute.xlu0 %1243
      %1245 = vrot.lane.b32.xlu0 %v1156, 64
      %v1246 = vpop.permute.xlu0 %1245
      %1247 = vrot.lane.b32.xlu0 %v1157, 64
      %v1248 = vpop.permute.xlu0 %1247
      %1249 = vrot.lane.b32.xlu0 %v1158, 64
      %v1250 = vpop.permute.xlu0 %1249
      %1251 = vrot.lane.b32.xlu0 %v1159, 64
      %v1252 = vpop.permute.xlu0 %1251
      %1253 = vrot.lane.b32.xlu0 %v1160, 64
      %v1254 = vpop.permute.xlu0 %1253
      %1255 = vrot.lane.b32.xlu0 %v1161, 64
      %v1256 = vpop.permute.xlu0 %1255
      %1257 = vrot.lane.b32.xlu0 %v1162, 64
      %v1258 = vpop.permute.xlu0 %1257
      %1291 = vst.msk [vmem:[#allocation3 + $0x4] sm:$0xf] %vm822, %v1196
      %1292 = vst.msk [vmem:[#allocation3 + $0x18] sm:$0xf] %vm822, %v1198
      %1293 = vst.msk [vmem:[#allocation3 + $0x2c] sm:$0xf] %vm822, %v1200
      %1294 = vst.msk [vmem:[#allocation3 + $0x40] sm:$0xf] %vm822, %v1202
      %1295 = vst.msk [vmem:[#allocation3 + $0x54] sm:$0xf] %vm822, %v1204
      %1296 = vst.msk [vmem:[#allocation3 + $0x68] sm:$0xf] %vm822, %v1206
      %1297 = vst.msk [vmem:[#allocation3 + $0x7c] sm:$0xf] %vm822, %v1208
      %1298 = vst.msk [vmem:[#allocation3 + $0x90] sm:$0xf] %vm822, %v1210
      %1299 = vst.msk [vmem:[#allocation3 + $0xa4] sm:$0xf] %vm822, %v1212
      %1300 = vst.msk [vmem:[#allocation3 + $0xb8] sm:$0xf] %vm822, %v1214
      %1301 = vst.msk [vmem:[#allocation3 + $0xcc] sm:$0xf] %vm822, %v1216
      %1302 = vst.msk [vmem:[#allocation3 + $0xe0] sm:$0xf] %vm822, %v1218
      %1303 = vst.msk [vmem:[#allocation3 + $0xf4] sm:$0xf] %vm822, %v1220
      %1304 = vst.msk [vmem:[#allocation3 + $0x108] sm:$0xf] %vm822, %v1222
      %1305 = vst.msk [vmem:[#allocation3 + $0x11c] sm:$0xf] %vm822, %v1224
      %1306 = vst.msk [vmem:[#allocation3 + $0x130] sm:$0xf] %vm822, %v1226
      %1307 = vst.msk [vmem:[#allocation3 + $0x144] sm:$0xf] %vm822, %v1228
      %1308 = vst.msk [vmem:[#allocation3 + $0x158] sm:$0xf] %vm822, %v1230
      %1309 = vst.msk [vmem:[#allocation3 + $0x16c] sm:$0xf] %vm822, %v1232
      %1310 = vst.msk [vmem:[#allocation3 + $0x180] sm:$0xf] %vm822, %v1234
      %1311 = vst.msk [vmem:[#allocation3 + $0x194] sm:$0xf] %vm822, %v1236
      %1312 = vst.msk [vmem:[#allocation3 + $0x1a8] sm:$0xf] %vm822, %v1238
      %1313 = vst.msk [vmem:[#allocation3 + $0x1bc] sm:$0xf] %vm822, %v1240
      %1314 = vst.msk [vmem:[#allocation3 + $0x1d0] sm:$0xf] %vm822, %v1242
      %1315 = vst.msk [vmem:[#allocation3 + $0x1e4] sm:$0xf] %vm822, %v1244
      %1316 = vst.msk [vmem:[#allocation3 + $0x1f8] sm:$0xf] %vm822, %v1246
      %1317 = vst.msk [vmem:[#allocation3 + $0x20c] sm:$0xf] %vm822, %v1248
      %1318 = vst.msk [vmem:[#allocation3 + $0x220] sm:$0xf] %vm822, %v1250
      %1319 = vst.msk [vmem:[#allocation3 + $0x234] sm:$0xf] %vm822, %v1252
      %1320 = vst.msk [vmem:[#allocation3 + $0x248] sm:$0xf] %vm822, %v1254
      %1321 = vst.msk [vmem:[#allocation3 + $0x25c] sm:$0xf] %vm822, %v1256
      %1322 = vst.msk [vmem:[#allocation3 + $0x270] sm:$0xf] %vm822, %v1258
      %v1323 = vld [vmem:[%s1130] sm:$0xf]
      %v1324 = vld [vmem:[%s1130 + $0x4] sm:$0xf]
      %v1325 = vld [vmem:[%s1130 + $0x8] sm:$0x1]
      %v1326 = vld [vmem:[%s1130 + $0xc] sm:$0xf]
      %v1327 = vld [vmem:[%s1130 + $0x10] sm:$0xf]
      %v1328 = vld [vmem:[%s1130 + $0x14] sm:$0x1]
      %v1329 = vld [vmem:[%s1130 + $0x18] sm:$0xf]
      %v1330 = vld [vmem:[%s1130 + $0x1c] sm:$0xf]
      %v1331 = vld [vmem:[%s1130 + $0x20] sm:$0x1]
      %v1332 = vld [vmem:[%s1130 + $0x24] sm:$0xf]
      %v1333 = vld [vmem:[%s1130 + $0x28] sm:$0xf]
      %v1334 = vld [vmem:[%s1130 + $0x2c] sm:$0x1]
      %v1335 = vld [vmem:[%s1130 + $0x30] sm:$0xf]
      %v1336 = vld [vmem:[%s1130 + $0x34] sm:$0xf]
      %v1337 = vld [vmem:[%s1130 + $0x38] sm:$0x1]
      %v1338 = vld [vmem:[%s1130 + $0x3c] sm:$0xf]
      %v1339 = vld [vmem:[%s1130 + $0x40] sm:$0xf]
      %v1340 = vld [vmem:[%s1130 + $0x44] sm:$0x1]
      %v1341 = vld [vmem:[%s1130 + $0x48] sm:$0xf]
      %v1342 = vld [vmem:[%s1130 + $0x4c] sm:$0xf]
      %v1343 = vld [vmem:[%s1130 + $0x50] sm:$0x1]
      %v1344 = vld [vmem:[%s1130 + $0x54] sm:$0xf]
      %v1345 = vld [vmem:[%s1130 + $0x58] sm:$0xf]
      %v1346 = vld [vmem:[%s1130 + $0x5c] sm:$0x1]
      %v1347 = vld [vmem:[%s1130 + $0x60] sm:$0xf]
      %v1348 = vld [vmem:[%s1130 + $0x64] sm:$0xf]
      %v1349 = vld [vmem:[%s1130 + $0x68] sm:$0x1]
      %v1350 = vld [vmem:[%s1130 + $0x6c] sm:$0xf]
      %v1351 = vld [vmem:[%s1130 + $0x70] sm:$0xf]
      %v1352 = vld [vmem:[%s1130 + $0x74] sm:$0x1]
      %v1353 = vld [vmem:[%s1130 + $0x78] sm:$0xf]
      %v1354 = vld [vmem:[%s1130 + $0x7c] sm:$0xf]
      %v1355 = vld [vmem:[%s1130 + $0x80] sm:$0x1]
      %v1356 = vld [vmem:[%s1130 + $0x84] sm:$0xf]
      %v1357 = vld [vmem:[%s1130 + $0x88] sm:$0xf]
      %v1358 = vld [vmem:[%s1130 + $0x8c] sm:$0x1]
      %v1359 = vld [vmem:[%s1130 + $0x90] sm:$0xf]
      %v1360 = vld [vmem:[%s1130 + $0x94] sm:$0xf]
      %v1361 = vld [vmem:[%s1130 + $0x98] sm:$0x1]
      %v1362 = vld [vmem:[%s1130 + $0x9c] sm:$0xf]
      %v1363 = vld [vmem:[%s1130 + $0xa0] sm:$0xf]
      %v1364 = vld [vmem:[%s1130 + $0xa4] sm:$0x1]
      %v1365 = vld [vmem:[%s1130 + $0xa8] sm:$0xf]
      %v1366 = vld [vmem:[%s1130 + $0xac] sm:$0xf]
      %v1367 = vld [vmem:[%s1130 + $0xb0] sm:$0x1]
      %v1368 = vld [vmem:[%s1130 + $0xb4] sm:$0xf]
      %v1369 = vld [vmem:[%s1130 + $0xb8] sm:$0xf]
      %v1370 = vld [vmem:[%s1130 + $0xbc] sm:$0x1]
      %v1372 = vshrl.u32 %v1323, 16
      %v1374 = vrot.slane %v1372, 4
      %v1375 = vshll.u32 %v1323, 16
      %v1377 = vrot.slane %v1375, 5
      %v1378 = vor.u32 %v1374, %v1377
      %v1379 = vrot.slane %v1378, 4
      %v1381 = vshll.u32 %v1324, 16
      %v1383 = vrot.slane %v1381, 5
      %v1384 = vsel %vm341, %v1379, %v1383
      %v1385 = vshrl.u32 %v1324, 16
      %v1387 = vrot.slane %v1385, 4
      %v1388 = vor.u32 %v1387, %v1383
      %v1389 = vrot.slane %v1388, 4
      %v1391 = vshll.u32 %v1325, 16
      %v1393 = vrot.slane %v1391, 5
      %v1394 = vsel %vm341, %v1389, %v1393
      %v1396 = vshrl.u32 %v1326, 16
      %v1398 = vrot.slane %v1396, 4
      %v1399 = vshll.u32 %v1326, 16
      %v1401 = vrot.slane %v1399, 5
      %v1402 = vor.u32 %v1398, %v1401
      %v1403 = vrot.slane %v1402, 4
      %v1405 = vshll.u32 %v1327, 16
      %v1407 = vrot.slane %v1405, 5
      %v1408 = vsel %vm341, %v1403, %v1407
      %v1409 = vshrl.u32 %v1327, 16
      %v1411 = vrot.slane %v1409, 4
      %v1412 = vor.u32 %v1411, %v1407
      %v1413 = vrot.slane %v1412, 4
      %v1415 = vshll.u32 %v1328, 16
      %v1417 = vrot.slane %v1415, 5
      %v1418 = vsel %vm341, %v1413, %v1417
      %v1420 = vshrl.u32 %v1329, 16
      %v1422 = vrot.slane %v1420, 4
      %v1423 = vshll.u32 %v1329, 16
      %v1425 = vrot.slane %v1423, 5
      %v1426 = vor.u32 %v1422, %v1425
      %v1427 = vrot.slane %v1426, 4
      %v1429 = vshll.u32 %v1330, 16
      %v1431 = vrot.slane %v1429, 5
      %v1432 = vsel %vm341, %v1427, %v1431
      %v1433 = vshrl.u32 %v1330, 16
      %v1435 = vrot.slane %v1433, 4
      %v1436 = vor.u32 %v1435, %v1431
      %v1437 = vrot.slane %v1436, 4
      %v1439 = vshll.u32 %v1331, 16
      %v1441 = vrot.slane %v1439, 5
      %v1442 = vsel %vm341, %v1437, %v1441
      %v1444 = vshrl.u32 %v1332, 16
      %v1446 = vrot.slane %v1444, 4
      %v1447 = vshll.u32 %v1332, 16
      %v1449 = vrot.slane %v1447, 5
      %v1450 = vor.u32 %v1446, %v1449
      %v1451 = vrot.slane %v1450, 4
      %v1453 = vshll.u32 %v1333, 16
      %v1455 = vrot.slane %v1453, 5
      %v1456 = vsel %vm341, %v1451, %v1455
      %v1457 = vshrl.u32 %v1333, 16
      %v1459 = vrot.slane %v1457, 4
      %v1460 = vor.u32 %v1459, %v1455
      %v1461 = vrot.slane %v1460, 4
      %v1463 = vshll.u32 %v1334, 16
      %v1465 = vrot.slane %v1463, 5
      %v1466 = vsel %vm341, %v1461, %v1465
      %v1468 = vshrl.u32 %v1335, 16
      %v1470 = vrot.slane %v1468, 4
      %v1471 = vshll.u32 %v1335, 16
      %v1473 = vrot.slane %v1471, 5
      %v1474 = vor.u32 %v1470, %v1473
      %v1475 = vrot.slane %v1474, 4
      %v1477 = vshll.u32 %v1336, 16
      %v1479 = vrot.slane %v1477, 5
      %v1480 = vsel %vm341, %v1475, %v1479
      %v1481 = vshrl.u32 %v1336, 16
      %v1483 = vrot.slane %v1481, 4
      %v1484 = vor.u32 %v1483, %v1479
      %v1485 = vrot.slane %v1484, 4
      %v1487 = vshll.u32 %v1337, 16
      %v1489 = vrot.slane %v1487, 5
      %v1490 = vsel %vm341, %v1485, %v1489
      %v1492 = vshrl.u32 %v1338, 16
      %v1494 = vrot.slane %v1492, 4
      %v1495 = vshll.u32 %v1338, 16
      %v1497 = vrot.slane %v1495, 5
      %v1498 = vor.u32 %v1494, %v1497
      %v1499 = vrot.slane %v1498, 4
      %v1501 = vshll.u32 %v1339, 16
      %v1503 = vrot.slane %v1501, 5
      %v1504 = vsel %vm341, %v1499, %v1503
      %v1505 = vshrl.u32 %v1339, 16
      %v1507 = vrot.slane %v1505, 4
      %v1508 = vor.u32 %v1507, %v1503
      %v1509 = vrot.slane %v1508, 4
      %v1511 = vshll.u32 %v1340, 16
      %v1513 = vrot.slane %v1511, 5
      %v1514 = vsel %vm341, %v1509, %v1513
      %v1516 = vshrl.u32 %v1341, 16
      %v1518 = vrot.slane %v1516, 4
      %v1519 = vshll.u32 %v1341, 16
      %v1521 = vrot.slane %v1519, 5
      %v1522 = vor.u32 %v1518, %v1521
      %v1523 = vrot.slane %v1522, 4
      %v1525 = vshll.u32 %v1342, 16
      %v1527 = vrot.slane %v1525, 5
      %v1528 = vsel %vm341, %v1523, %v1527
      %v1529 = vshrl.u32 %v1342, 16
      %v1531 = vrot.slane %v1529, 4
      %v1532 = vor.u32 %v1531, %v1527
      %v1533 = vrot.slane %v1532, 4
      %v1535 = vshll.u32 %v1343, 16
      %v1537 = vrot.slane %v1535, 5
      %v1538 = vsel %vm341, %v1533, %v1537
      %v1540 = vshrl.u32 %v1344, 16
      %v1542 = vrot.slane %v1540, 4
      %v1543 = vshll.u32 %v1344, 16
      %v1545 = vrot.slane %v1543, 5
      %v1546 = vor.u32 %v1542, %v1545
      %v1547 = vrot.slane %v1546, 4
      %v1549 = vshll.u32 %v1345, 16
      %v1551 = vrot.slane %v1549, 5
      %v1552 = vsel %vm341, %v1547, %v1551
      %v1553 = vshrl.u32 %v1345, 16
      %v1555 = vrot.slane %v1553, 4
      %v1556 = vor.u32 %v1555, %v1551
      %v1557 = vrot.slane %v1556, 4
      %v1559 = vshll.u32 %v1346, 16
      %v1561 = vrot.slane %v1559, 5
      %v1562 = vsel %vm341, %v1557, %v1561
      %v1564 = vshrl.u32 %v1347, 16
      %v1566 = vrot.slane %v1564, 4
      %v1567 = vshll.u32 %v1347, 16
      %v1569 = vrot.slane %v1567, 5
      %v1570 = vor.u32 %v1566, %v1569
      %v1571 = vrot.slane %v1570, 4
      %v1573 = vshll.u32 %v1348, 16
      %v1575 = vrot.slane %v1573, 5
      %v1576 = vsel %vm341, %v1571, %v1575
      %v1577 = vshrl.u32 %v1348, 16
      %v1579 = vrot.slane %v1577, 4
      %v1580 = vor.u32 %v1579, %v1575
      %v1581 = vrot.slane %v1580, 4
      %v1583 = vshll.u32 %v1349, 16
      %v1585 = vrot.slane %v1583, 5
      %v1586 = vsel %vm341, %v1581, %v1585
      %v1588 = vshrl.u32 %v1350, 16
      %v1590 = vrot.slane %v1588, 4
      %v1591 = vshll.u32 %v1350, 16
      %v1593 = vrot.slane %v1591, 5
      %v1594 = vor.u32 %v1590, %v1593
      %v1595 = vrot.slane %v1594, 4
      %v1597 = vshll.u32 %v1351, 16
      %v1599 = vrot.slane %v1597, 5
      %v1600 = vsel %vm341, %v1595, %v1599
      %v1601 = vshrl.u32 %v1351, 16
      %v1603 = vrot.slane %v1601, 4
      %v1604 = vor.u32 %v1603, %v1599
      %v1605 = vrot.slane %v1604, 4
      %v1607 = vshll.u32 %v1352, 16
      %v1609 = vrot.slane %v1607, 5
      %v1610 = vsel %vm341, %v1605, %v1609
      %v1612 = vshrl.u32 %v1353, 16
      %v1614 = vrot.slane %v1612, 4
      %v1615 = vshll.u32 %v1353, 16
      %v1617 = vrot.slane %v1615, 5
      %v1618 = vor.u32 %v1614, %v1617
      %v1619 = vrot.slane %v1618, 4
      %v1621 = vshll.u32 %v1354, 16
      %v1623 = vrot.slane %v1621, 5
      %v1624 = vsel %vm341, %v1619, %v1623
      %v1625 = vshrl.u32 %v1354, 16
      %v1627 = vrot.slane %v1625, 4
      %v1628 = vor.u32 %v1627, %v1623
      %v1629 = vrot.slane %v1628, 4
      %v1631 = vshll.u32 %v1355, 16
      %v1633 = vrot.slane %v1631, 5
      %v1634 = vsel %vm341, %v1629, %v1633
      %v1636 = vshrl.u32 %v1356, 16
      %v1638 = vrot.slane %v1636, 4
      %v1639 = vshll.u32 %v1356, 16
      %v1641 = vrot.slane %v1639, 5
      %v1642 = vor.u32 %v1638, %v1641
      %v1643 = vrot.slane %v1642, 4
      %v1645 = vshll.u32 %v1357, 16
      %v1647 = vrot.slane %v1645, 5
      %v1648 = vsel %vm341, %v1643, %v1647
      %v1649 = vshrl.u32 %v1357, 16
      %v1651 = vrot.slane %v1649, 4
      %v1652 = vor.u32 %v1651, %v1647
      %v1653 = vrot.slane %v1652, 4
      %v1655 = vshll.u32 %v1358, 16
      %v1657 = vrot.slane %v1655, 5
      %v1658 = vsel %vm341, %v1653, %v1657
      %v1660 = vshrl.u32 %v1359, 16
      %v1662 = vrot.slane %v1660, 4
      %v1663 = vshll.u32 %v1359, 16
      %v1665 = vrot.slane %v1663, 5
      %v1666 = vor.u32 %v1662, %v1665
      %v1667 = vrot.slane %v1666, 4
      %v1669 = vshll.u32 %v1360, 16
      %v1671 = vrot.slane %v1669, 5
      %v1672 = vsel %vm341, %v1667, %v1671
      %v1673 = vshrl.u32 %v1360, 16
      %v1675 = vrot.slane %v1673, 4
      %v1676 = vor.u32 %v1675, %v1671
      %v1677 = vrot.slane %v1676, 4
      %v1679 = vshll.u32 %v1361, 16
      %v1681 = vrot.slane %v1679, 5
      %v1682 = vsel %vm341, %v1677, %v1681
      %v1684 = vshrl.u32 %v1362, 16
      %v1686 = vrot.slane %v1684, 4
      %v1687 = vshll.u32 %v1362, 16
      %v1689 = vrot.slane %v1687, 5
      %v1690 = vor.u32 %v1686, %v1689
      %v1691 = vrot.slane %v1690, 4
      %v1693 = vshll.u32 %v1363, 16
      %v1695 = vrot.slane %v1693, 5
      %v1696 = vsel %vm341, %v1691, %v1695
      %v1697 = vshrl.u32 %v1363, 16
      %v1699 = vrot.slane %v1697, 4
      %v1700 = vor.u32 %v1699, %v1695
      %v1701 = vrot.slane %v1700, 4
      %v1703 = vshll.u32 %v1364, 16
      %v1705 = vrot.slane %v1703, 5
      %v1706 = vsel %vm341, %v1701, %v1705
      %v1708 = vshrl.u32 %v1365, 16
      %v1710 = vrot.slane %v1708, 4
      %v1711 = vshll.u32 %v1365, 16
      %v1713 = vrot.slane %v1711, 5
      %v1714 = vor.u32 %v1710, %v1713
      %v1715 = vrot.slane %v1714, 4
      %v1717 = vshll.u32 %v1366, 16
      %v1719 = vrot.slane %v1717, 5
      %v1720 = vsel %vm341, %v1715, %v1719
      %v1721 = vshrl.u32 %v1366, 16
      %v1723 = vrot.slane %v1721, 4
      %v1724 = vor.u32 %v1723, %v1719
      %v1725 = vrot.slane %v1724, 4
      %v1727 = vshll.u32 %v1367, 16
      %v1729 = vrot.slane %v1727, 5
      %v1730 = vsel %vm341, %v1725, %v1729
      %v1732 = vshrl.u32 %v1368, 16
      %v1734 = vrot.slane %v1732, 4
      %v1735 = vshll.u32 %v1368, 16
      %v1737 = vrot.slane %v1735, 5
      %v1738 = vor.u32 %v1734, %v1737
      %v1739 = vrot.slane %v1738, 4
      %v1741 = vshll.u32 %v1369, 16
      %v1743 = vrot.slane %v1741, 5
      %v1744 = vsel %vm341, %v1739, %v1743
      %v1745 = vshrl.u32 %v1369, 16
      %v1747 = vrot.slane %v1745, 4
      %v1748 = vor.u32 %v1747, %v1743
      %v1749 = vrot.slane %v1748, 4
      %v1751 = vshll.u32 %v1370, 16
      %v1753 = vrot.slane %v1751, 5
      %v1754 = vsel %vm341, %v1749, %v1753
      %1787 = vst.msk [vmem:[#allocation3 + $0x8] sm:$0xf] %vm258, %v1384
      %1788 = vst.msk [vmem:[#allocation3 + $0x1c] sm:$0xf] %vm258, %v1394
      %1789 = vst.msk [vmem:[#allocation3 + $0x30] sm:$0xf] %vm258, %v1408
      %1790 = vst.msk [vmem:[#allocation3 + $0x44] sm:$0xf] %vm258, %v1418
      %1791 = vst.msk [vmem:[#allocation3 + $0x58] sm:$0xf] %vm258, %v1432
      %1792 = vst.msk [vmem:[#allocation3 + $0x6c] sm:$0xf] %vm258, %v1442
      %1793 = vst.msk [vmem:[#allocation3 + $0x80] sm:$0xf] %vm258, %v1456
      %1794 = vst.msk [vmem:[#allocation3 + $0x94] sm:$0xf] %vm258, %v1466
      %1795 = vst.msk [vmem:[#allocation3 + $0xa8] sm:$0xf] %vm258, %v1480
      %1796 = vst.msk [vmem:[#allocation3 + $0xbc] sm:$0xf] %vm258, %v1490
      %1797 = vst.msk [vmem:[#allocation3 + $0xd0] sm:$0xf] %vm258, %v1504
      %1798 = vst.msk [vmem:[#allocation3 + $0xe4] sm:$0xf] %vm258, %v1514
      %1799 = vst.msk [vmem:[#allocation3 + $0xf8] sm:$0xf] %vm258, %v1528
      %1800 = vst.msk [vmem:[#allocation3 + $0x10c] sm:$0xf] %vm258, %v1538
      %1801 = vst.msk [vmem:[#allocation3 + $0x120] sm:$0xf] %vm258, %v1552
      %1802 = vst.msk [vmem:[#allocation3 + $0x134] sm:$0xf] %vm258, %v1562
      %1803 = vst.msk [vmem:[#allocation3 + $0x148] sm:$0xf] %vm258, %v1576
      %1804 = vst.msk [vmem:[#allocation3 + $0x15c] sm:$0xf] %vm258, %v1586
      %1805 = vst.msk [vmem:[#allocation3 + $0x170] sm:$0xf] %vm258, %v1600
      %1806 = vst.msk [vmem:[#allocation3 + $0x184] sm:$0xf] %vm258, %v1610
      %1807 = vst.msk [vmem:[#allocation3 + $0x198] sm:$0xf] %vm258, %v1624
      %1808 = vst.msk [vmem:[#allocation3 + $0x1ac] sm:$0xf] %vm258, %v1634
      %1809 = vst.msk [vmem:[#allocation3 + $0x1c0] sm:$0xf] %vm258, %v1648
      %1810 = vst.msk [vmem:[#allocation3 + $0x1d4] sm:$0xf] %vm258, %v1658
      %1811 = vst.msk [vmem:[#allocation3 + $0x1e8] sm:$0xf] %vm258, %v1672
      %1812 = vst.msk [vmem:[#allocation3 + $0x1fc] sm:$0xf] %vm258, %v1682
      %1813 = vst.msk [vmem:[#allocation3 + $0x210] sm:$0xf] %vm258, %v1696
      %1814 = vst.msk [vmem:[#allocation3 + $0x224] sm:$0xf] %vm258, %v1706
      %1815 = vst.msk [vmem:[#allocation3 + $0x238] sm:$0xf] %vm258, %v1720
      %1816 = vst.msk [vmem:[#allocation3 + $0x24c] sm:$0xf] %vm258, %v1730
      %1817 = vst.msk [vmem:[#allocation3 + $0x260] sm:$0xf] %vm258, %v1744
      %1818 = vst.msk [vmem:[#allocation3 + $0x274] sm:$0xf] %vm258, %v1754
      %v1819 = vld [vmem:[%s1130] sm:$0xe]
      %v1820 = vld [vmem:[%s1130 + $0x4] sm:$0xf]
      %v1821 = vld [vmem:[%s1130 + $0x8] sm:$0x1]
      %v1822 = vld [vmem:[%s1130 + $0xc] sm:$0xe]
      %v1823 = vld [vmem:[%s1130 + $0x10] sm:$0xf]
      %v1824 = vld [vmem:[%s1130 + $0x14] sm:$0x1]
      %v1825 = vld [vmem:[%s1130 + $0x18] sm:$0xe]
      %v1826 = vld [vmem:[%s1130 + $0x1c] sm:$0xf]
      %v1827 = vld [vmem:[%s1130 + $0x20] sm:$0x1]
      %v1828 = vld [vmem:[%s1130 + $0x24] sm:$0xe]
      %v1829 = vld [vmem:[%s1130 + $0x28] sm:$0xf]
      %v1830 = vld [vmem:[%s1130 + $0x2c] sm:$0x1]
      %v1831 = vld [vmem:[%s1130 + $0x30] sm:$0xe]
      %v1832 = vld [vmem:[%s1130 + $0x34] sm:$0xf]
      %v1833 = vld [vmem:[%s1130 + $0x38] sm:$0x1]
      %v1834 = vld [vmem:[%s1130 + $0x3c] sm:$0xe]
      %v1835 = vld [vmem:[%s1130 + $0x40] sm:$0xf]
      %v1836 = vld [vmem:[%s1130 + $0x44] sm:$0x1]
      %v1837 = vld [vmem:[%s1130 + $0x48] sm:$0xe]
      %v1838 = vld [vmem:[%s1130 + $0x4c] sm:$0xf]
      %v1839 = vld [vmem:[%s1130 + $0x50] sm:$0x1]
      %v1840 = vld [vmem:[%s1130 + $0x54] sm:$0xe]
      %v1841 = vld [vmem:[%s1130 + $0x58] sm:$0xf]
      %v1842 = vld [vmem:[%s1130 + $0x5c] sm:$0x1]
      %v1843 = vld [vmem:[%s1130 + $0x60] sm:$0xe]
      %v1844 = vld [vmem:[%s1130 + $0x64] sm:$0xf]
      %v1845 = vld [vmem:[%s1130 + $0x68] sm:$0x1]
      %v1846 = vld [vmem:[%s1130 + $0x6c] sm:$0xe]
      %v1847 = vld [vmem:[%s1130 + $0x70] sm:$0xf]
      %v1848 = vld [vmem:[%s1130 + $0x74] sm:$0x1]
      %v1849 = vld [vmem:[%s1130 + $0x78] sm:$0xe]
      %v1850 = vld [vmem:[%s1130 + $0x7c] sm:$0xf]
      %v1851 = vld [vmem:[%s1130 + $0x80] sm:$0x1]
      %v1852 = vld [vmem:[%s1130 + $0x84] sm:$0xe]
      %v1853 = vld [vmem:[%s1130 + $0x88] sm:$0xf]
      %v1854 = vld [vmem:[%s1130 + $0x8c] sm:$0x1]
      %v1855 = vld [vmem:[%s1130 + $0x90] sm:$0xe]
      %v1856 = vld [vmem:[%s1130 + $0x94] sm:$0xf]
      %v1857 = vld [vmem:[%s1130 + $0x98] sm:$0x1]
      %v1858 = vld [vmem:[%s1130 + $0x9c] sm:$0xe]
      %v1859 = vld [vmem:[%s1130 + $0xa0] sm:$0xf]
      %v1860 = vld [vmem:[%s1130 + $0xa4] sm:$0x1]
      %v1861 = vld [vmem:[%s1130 + $0xa8] sm:$0xe]
      %v1862 = vld [vmem:[%s1130 + $0xac] sm:$0xf]
      %v1863 = vld [vmem:[%s1130 + $0xb0] sm:$0x1]
      %v1864 = vld [vmem:[%s1130 + $0xb4] sm:$0xe]
      %v1865 = vld [vmem:[%s1130 + $0xb8] sm:$0xf]
      %v1866 = vld [vmem:[%s1130 + $0xbc] sm:$0x1]
      %v1915 = vrot.slane %v1819, 5
      %v1916 = vrot.slane %v1915, 4
      %v1917 = vrot.slane %v1820, 5
      %v1918 = vsel %vm953, %v1916, %v1917
      %v1919 = vrot.slane %v1917, 4
      %v1920 = vrot.slane %v1821, 5
      %v1921 = vsel %vm953, %v1919, %v1920
      %v1922 = vrot.slane %v1822, 5
      %v1923 = vrot.slane %v1922, 4
      %v1924 = vrot.slane %v1823, 5
      %v1925 = vsel %vm953, %v1923, %v1924
      %v1926 = vrot.slane %v1924, 4
      %v1927 = vrot.slane %v1824, 5
      %v1928 = vsel %vm953, %v1926, %v1927
      %v1929 = vrot.slane %v1825, 5
      %v1930 = vrot.slane %v1929, 4
      %v1931 = vrot.slane %v1826, 5
      %v1932 = vsel %vm953, %v1930, %v1931
      %v1933 = vrot.slane %v1931, 4
      %v1934 = vrot.slane %v1827, 5
      %v1935 = vsel %vm953, %v1933, %v1934
      %v1936 = vrot.slane %v1828, 5
      %v1937 = vrot.slane %v1936, 4
      %v1938 = vrot.slane %v1829, 5
      %v1939 = vsel %vm953, %v1937, %v1938
      %v1940 = vrot.slane %v1938, 4
      %v1941 = vrot.slane %v1830, 5
      %v1942 = vsel %vm953, %v1940, %v1941
      %v1943 = vrot.slane %v1831, 5
      %v1944 = vrot.slane %v1943, 4
      %v1945 = vrot.slane %v1832, 5
      %v1946 = vsel %vm953, %v1944, %v1945
      %v1947 = vrot.slane %v1945, 4
      %v1948 = vrot.slane %v1833, 5
      %v1949 = vsel %vm953, %v1947, %v1948
      %v1950 = vrot.slane %v1834, 5
      %v1951 = vrot.slane %v1950, 4
      %v1952 = vrot.slane %v1835, 5
      %v1953 = vsel %vm953, %v1951, %v1952
      %v1954 = vrot.slane %v1952, 4
      %v1955 = vrot.slane %v1836, 5
      %v1956 = vsel %vm953, %v1954, %v1955
      %v1957 = vrot.slane %v1837, 5
      %v1958 = vrot.slane %v1957, 4
      %v1959 = vrot.slane %v1838, 5
      %v1960 = vsel %vm953, %v1958, %v1959
      %v1961 = vrot.slane %v1959, 4
      %v1962 = vrot.slane %v1839, 5
      %v1963 = vsel %vm953, %v1961, %v1962
      %v1964 = vrot.slane %v1840, 5
      %v1965 = vrot.slane %v1964, 4
      %v1966 = vrot.slane %v1841, 5
      %v1967 = vsel %vm953, %v1965, %v1966
      %v1968 = vrot.slane %v1966, 4
      %v1969 = vrot.slane %v1842, 5
      %v1970 = vsel %vm953, %v1968, %v1969
      %v1971 = vrot.slane %v1843, 5
      %v1972 = vrot.slane %v1971, 4
      %v1973 = vrot.slane %v1844, 5
      %v1974 = vsel %vm953, %v1972, %v1973
      %v1975 = vrot.slane %v1973, 4
      %v1976 = vrot.slane %v1845, 5
      %v1977 = vsel %vm953, %v1975, %v1976
      %v1978 = vrot.slane %v1846, 5
      %v1979 = vrot.slane %v1978, 4
      %v1980 = vrot.slane %v1847, 5
      %v1981 = vsel %vm953, %v1979, %v1980
      %v1982 = vrot.slane %v1980, 4
      %v1983 = vrot.slane %v1848, 5
      %v1984 = vsel %vm953, %v1982, %v1983
      %v1985 = vrot.slane %v1849, 5
      %v1986 = vrot.slane %v1985, 4
      %v1987 = vrot.slane %v1850, 5
      %v1988 = vsel %vm953, %v1986, %v1987
      %v1989 = vrot.slane %v1987, 4
      %v1990 = vrot.slane %v1851, 5
      %v1991 = vsel %vm953, %v1989, %v1990
      %v1992 = vrot.slane %v1852, 5
      %v1993 = vrot.slane %v1992, 4
      %v1994 = vrot.slane %v1853, 5
      %v1995 = vsel %vm953, %v1993, %v1994
      %v1996 = vrot.slane %v1994, 4
      %v1997 = vrot.slane %v1854, 5
      %v1998 = vsel %vm953, %v1996, %v1997
      %v1999 = vrot.slane %v1855, 5
      %v2000 = vrot.slane %v1999, 4
      %v2001 = vrot.slane %v1856, 5
      %v2002 = vsel %vm953, %v2000, %v2001
      %v2003 = vrot.slane %v2001, 4
      %v2004 = vrot.slane %v1857, 5
      %v2005 = vsel %vm953, %v2003, %v2004
      %v2006 = vrot.slane %v1858, 5
      %v2007 = vrot.slane %v2006, 4
      %v2008 = vrot.slane %v1859, 5
      %v2009 = vsel %vm953, %v2007, %v2008
      %v2010 = vrot.slane %v2008, 4
      %v2011 = vrot.slane %v1860, 5
      %v2012 = vsel %vm953, %v2010, %v2011
      %v2013 = vrot.slane %v1861, 5
      %v2014 = vrot.slane %v2013, 4
      %v2015 = vrot.slane %v1862, 5
      %v2016 = vsel %vm953, %v2014, %v2015
      %v2017 = vrot.slane %v2015, 4
      %v2018 = vrot.slane %v1863, 5
      %v2019 = vsel %vm953, %v2017, %v2018
      %v2020 = vrot.slane %v1864, 5
      %v2021 = vrot.slane %v2020, 4
      %v2022 = vrot.slane %v1865, 5
      %v2023 = vsel %vm953, %v2021, %v2022
      %v2024 = vrot.slane %v2022, 4
      %v2025 = vrot.slane %v1866, 5
      %v2026 = vsel %vm953, %v2024, %v2025
      %2027 = vrot.lane.b32.xlu0 %v1918, 64
      %v2028 = vpop.permute.xlu0 %2027
      %2029 = vrot.lane.b32.xlu0 %v1921, 64
      %v2030 = vpop.permute.xlu0 %2029
      %2031 = vrot.lane.b32.xlu0 %v1925, 64
      %v2032 = vpop.permute.xlu0 %2031
      %2033 = vrot.lane.b32.xlu0 %v1928, 64
      %v2034 = vpop.permute.xlu0 %2033
      %2035 = vrot.lane.b32.xlu0 %v1932, 64
      %v2036 = vpop.permute.xlu0 %2035
      %2037 = vrot.lane.b32.xlu0 %v1935, 64
      %v2038 = vpop.permute.xlu0 %2037
      %2039 = vrot.lane.b32.xlu0 %v1939, 64
      %v2040 = vpop.permute.xlu0 %2039
      %2041 = vrot.lane.b32.xlu0 %v1942, 64
      %v2042 = vpop.permute.xlu0 %2041
      %2043 = vrot.lane.b32.xlu0 %v1946, 64
      %v2044 = vpop.permute.xlu0 %2043
      %2045 = vrot.lane.b32.xlu0 %v1949, 64
      %v2046 = vpop.permute.xlu0 %2045
      %2047 = vrot.lane.b32.xlu0 %v1953, 64
      %v2048 = vpop.permute.xlu0 %2047
      %2049 = vrot.lane.b32.xlu0 %v1956, 64
      %v2050 = vpop.permute.xlu0 %2049
      %2051 = vrot.lane.b32.xlu0 %v1960, 64
      %v2052 = vpop.permute.xlu0 %2051
      %2053 = vrot.lane.b32.xlu0 %v1963, 64
      %v2054 = vpop.permute.xlu0 %2053
      %2055 = vrot.lane.b32.xlu0 %v1967, 64
      %v2056 = vpop.permute.xlu0 %2055
      %2057 = vrot.lane.b32.xlu0 %v1970, 64
      %v2058 = vpop.permute.xlu0 %2057
      %2059 = vrot.lane.b32.xlu0 %v1974, 64
      %v2060 = vpop.permute.xlu0 %2059
      %2061 = vrot.lane.b32.xlu0 %v1977, 64
      %v2062 = vpop.permute.xlu0 %2061
      %2063 = vrot.lane.b32.xlu0 %v1981, 64
      %v2064 = vpop.permute.xlu0 %2063
      %2065 = vrot.lane.b32.xlu0 %v1984, 64
      %v2066 = vpop.permute.xlu0 %2065
      %2067 = vrot.lane.b32.xlu0 %v1988, 64
      %v2068 = vpop.permute.xlu0 %2067
      %2069 = vrot.lane.b32.xlu0 %v1991, 64
      %v2070 = vpop.permute.xlu0 %2069
      %2071 = vrot.lane.b32.xlu0 %v1995, 64
      %v2072 = vpop.permute.xlu0 %2071
      %2073 = vrot.lane.b32.xlu0 %v1998, 64
      %v2074 = vpop.permute.xlu0 %2073
      %2075 = vrot.lane.b32.xlu0 %v2002, 64
      %v2076 = vpop.permute.xlu0 %2075
      %2077 = vrot.lane.b32.xlu0 %v2005, 64
      %v2078 = vpop.permute.xlu0 %2077
      %2079 = vrot.lane.b32.xlu0 %v2009, 64
      %v2080 = vpop.permute.xlu0 %2079
      %2081 = vrot.lane.b32.xlu0 %v2012, 64
      %v2082 = vpop.permute.xlu0 %2081
      %2083 = vrot.lane.b32.xlu0 %v2016, 64
      %v2084 = vpop.permute.xlu0 %2083
      %2085 = vrot.lane.b32.xlu0 %v2019, 64
      %v2086 = vpop.permute.xlu0 %2085
      %2087 = vrot.lane.b32.xlu0 %v2023, 64
      %v2088 = vpop.permute.xlu0 %2087
      %2089 = vrot.lane.b32.xlu0 %v2026, 64
      %v2090 = vpop.permute.xlu0 %2089
      %2123 = vst.msk [vmem:[#allocation3 + $0x8] sm:$0xf] %vm822, %v2028
      %2124 = vst.msk [vmem:[#allocation3 + $0x1c] sm:$0xf] %vm822, %v2030
      %2125 = vst.msk [vmem:[#allocation3 + $0x30] sm:$0xf] %vm822, %v2032
      %2126 = vst.msk [vmem:[#allocation3 + $0x44] sm:$0xf] %vm822, %v2034
      %2127 = vst.msk [vmem:[#allocation3 + $0x58] sm:$0xf] %vm822, %v2036
      %2128 = vst.msk [vmem:[#allocation3 + $0x6c] sm:$0xf] %vm822, %v2038
      %2129 = vst.msk [vmem:[#allocation3 + $0x80] sm:$0xf] %vm822, %v2040
      %2130 = vst.msk [vmem:[#allocation3 + $0x94] sm:$0xf] %vm822, %v2042
      %2131 = vst.msk [vmem:[#allocation3 + $0xa8] sm:$0xf] %vm822, %v2044
      %2132 = vst.msk [vmem:[#allocation3 + $0xbc] sm:$0xf] %vm822, %v2046
      %2133 = vst.msk [vmem:[#allocation3 + $0xd0] sm:$0xf] %vm822, %v2048
      %2134 = vst.msk [vmem:[#allocation3 + $0xe4] sm:$0xf] %vm822, %v2050
      %2135 = vst.msk [vmem:[#allocation3 + $0xf8] sm:$0xf] %vm822, %v2052
      %2136 = vst.msk [vmem:[#allocation3 + $0x10c] sm:$0xf] %vm822, %v2054
      %2137 = vst.msk [vmem:[#allocation3 + $0x120] sm:$0xf] %vm822, %v2056
      %2138 = vst.msk [vmem:[#allocation3 + $0x134] sm:$0xf] %vm822, %v2058
      %2139 = vst.msk [vmem:[#allocation3 + $0x148] sm:$0xf] %vm822, %v2060
      %2140 = vst.msk [vmem:[#allocation3 + $0x15c] sm:$0xf] %vm822, %v2062
      %2141 = vst.msk [vmem:[#allocation3 + $0x170] sm:$0xf] %vm822, %v2064
      %2142 = vst.msk [vmem:[#allocation3 + $0x184] sm:$0xf] %vm822, %v2066
      %2143 = vst.msk [vmem:[#allocation3 + $0x198] sm:$0xf] %vm822, %v2068
      %2144 = vst.msk [vmem:[#allocation3 + $0x1ac] sm:$0xf] %vm822, %v2070
      %2145 = vst.msk [vmem:[#allocation3 + $0x1c0] sm:$0xf] %vm822, %v2072
      %2146 = vst.msk [vmem:[#allocation3 + $0x1d4] sm:$0xf] %vm822, %v2074
      %2147 = vst.msk [vmem:[#allocation3 + $0x1e8] sm:$0xf] %vm822, %v2076
      %2148 = vst.msk [vmem:[#allocation3 + $0x1fc] sm:$0xf] %vm822, %v2078
      %2149 = vst.msk [vmem:[#allocation3 + $0x210] sm:$0xf] %vm822, %v2080
      %2150 = vst.msk [vmem:[#allocation3 + $0x224] sm:$0xf] %vm822, %v2082
      %2151 = vst.msk [vmem:[#allocation3 + $0x238] sm:$0xf] %vm822, %v2084
      %2152 = vst.msk [vmem:[#allocation3 + $0x24c] sm:$0xf] %vm822, %v2086
      %2153 = vst.msk [vmem:[#allocation3 + $0x260] sm:$0xf] %vm822, %v2088
      %2154 = vst.msk [vmem:[#allocation3 + $0x274] sm:$0xf] %vm822, %v2090
      %s2155 = scalar_lea.vmem %s219, 24
      %v2156 = vld [vmem:[%s2155] sm:$0xf]
      %v2157 = vld [vmem:[%s2155 + $0x4] sm:$0xf]
      %v2158 = vld [vmem:[%s2155 + $0xc] sm:$0xf]
      %v2159 = vld [vmem:[%s2155 + $0x10] sm:$0xf]
      %v2160 = vld [vmem:[%s2155 + $0x18] sm:$0xf]
      %v2161 = vld [vmem:[%s2155 + $0x1c] sm:$0xf]
      %v2162 = vld [vmem:[%s2155 + $0x24] sm:$0xf]
      %v2163 = vld [vmem:[%s2155 + $0x28] sm:$0xf]
      %v2164 = vld [vmem:[%s2155 + $0x30] sm:$0xf]
      %v2165 = vld [vmem:[%s2155 + $0x34] sm:$0xf]
      %v2166 = vld [vmem:[%s2155 + $0x3c] sm:$0xf]
      %v2167 = vld [vmem:[%s2155 + $0x40] sm:$0xf]
      %v2168 = vld [vmem:[%s2155 + $0x48] sm:$0xf]
      %v2169 = vld [vmem:[%s2155 + $0x4c] sm:$0xf]
      %v2170 = vld [vmem:[%s2155 + $0x54] sm:$0xf]
      %v2171 = vld [vmem:[%s2155 + $0x58] sm:$0xf]
      %v2172 = vld [vmem:[%s2155 + $0x60] sm:$0xf]
      %v2173 = vld [vmem:[%s2155 + $0x64] sm:$0xf]
      %v2174 = vld [vmem:[%s2155 + $0x6c] sm:$0xf]
      %v2175 = vld [vmem:[%s2155 + $0x70] sm:$0xf]
      %v2176 = vld [vmem:[%s2155 + $0x78] sm:$0xf]
      %v2177 = vld [vmem:[%s2155 + $0x7c] sm:$0xf]
      %v2178 = vld [vmem:[%s2155 + $0x84] sm:$0xf]
      %v2179 = vld [vmem:[%s2155 + $0x88] sm:$0xf]
      %v2180 = vld [vmem:[%s2155 + $0x90] sm:$0xf]
      %v2181 = vld [vmem:[%s2155 + $0x94] sm:$0xf]
      %v2182 = vld [vmem:[%s2155 + $0x9c] sm:$0xf]
      %v2183 = vld [vmem:[%s2155 + $0xa0] sm:$0xf]
      %v2184 = vld [vmem:[%s2155 + $0xa8] sm:$0xf]
      %v2185 = vld [vmem:[%s2155 + $0xac] sm:$0xf]
      %v2186 = vld [vmem:[%s2155 + $0xb4] sm:$0xf]
      %v2187 = vld [vmem:[%s2155 + $0xb8] sm:$0xf]
      %2188 = vst.msk [vmem:[#allocation3 + $0xc] sm:$0xf] %vm258, %v2156
      %2189 = vst.msk [vmem:[#allocation3 + $0x20] sm:$0xf] %vm258, %v2157
      %2190 = vst.msk [vmem:[#allocation3 + $0x34] sm:$0xf] %vm258, %v2158
      %2191 = vst.msk [vmem:[#allocation3 + $0x48] sm:$0xf] %vm258, %v2159
      %2192 = vst.msk [vmem:[#allocation3 + $0x5c] sm:$0xf] %vm258, %v2160
      %2193 = vst.msk [vmem:[#allocation3 + $0x70] sm:$0xf] %vm258, %v2161
      %2194 = vst.msk [vmem:[#allocation3 + $0x84] sm:$0xf] %vm258, %v2162
      %2195 = vst.msk [vmem:[#allocation3 + $0x98] sm:$0xf] %vm258, %v2163
      %2196 = vst.msk [vmem:[#allocation3 + $0xac] sm:$0xf] %vm258, %v2164
      %2197 = vst.msk [vmem:[#allocation3 + $0xc0] sm:$0xf] %vm258, %v2165
      %2198 = vst.msk [vmem:[#allocation3 + $0xd4] sm:$0xf] %vm258, %v2166
      %2199 = vst.msk [vmem:[#allocation3 + $0xe8] sm:$0xf] %vm258, %v2167
      %2200 = vst.msk [vmem:[#allocation3 + $0xfc] sm:$0xf] %vm258, %v2168
      %2201 = vst.msk [vmem:[#allocation3 + $0x110] sm:$0xf] %vm258, %v2169
      %2202 = vst.msk [vmem:[#allocation3 + $0x124] sm:$0xf] %vm258, %v2170
      %2203 = vst.msk [vmem:[#allocation3 + $0x138] sm:$0xf] %vm258, %v2171
      %2204 = vst.msk [vmem:[#allocation3 + $0x14c] sm:$0xf] %vm258, %v2172
      %2205 = vst.msk [vmem:[#allocation3 + $0x160] sm:$0xf] %vm258, %v2173
      %2206 = vst.msk [vmem:[#allocation3 + $0x174] sm:$0xf] %vm258, %v2174
      %2207 = vst.msk [vmem:[#allocation3 + $0x188] sm:$0xf] %vm258, %v2175
      %2208 = vst.msk [vmem:[#allocation3 + $0x19c] sm:$0xf] %vm258, %v2176
      %2209 = vst.msk [vmem:[#allocation3 + $0x1b0] sm:$0xf] %vm258, %v2177
      %2210 = vst.msk [vmem:[#allocation3 + $0x1c4] sm:$0xf] %vm258, %v2178
      %2211 = vst.msk [vmem:[#allocation3 + $0x1d8] sm:$0xf] %vm258, %v2179
      %2212 = vst.msk [vmem:[#allocation3 + $0x1ec] sm:$0xf] %vm258, %v2180
      %2213 = vst.msk [vmem:[#allocation3 + $0x200] sm:$0xf] %vm258, %v2181
      %2214 = vst.msk [vmem:[#allocation3 + $0x214] sm:$0xf] %vm258, %v2182
      %2215 = vst.msk [vmem:[#allocation3 + $0x228] sm:$0xf] %vm258, %v2183
      %2216 = vst.msk [vmem:[#allocation3 + $0x23c] sm:$0xf] %vm258, %v2184
      %2217 = vst.msk [vmem:[#allocation3 + $0x250] sm:$0xf] %vm258, %v2185
      %2218 = vst.msk [vmem:[#allocation3 + $0x264] sm:$0xf] %vm258, %v2186
      %2219 = vst.msk [vmem:[#allocation3 + $0x278] sm:$0xf] %vm258, %v2187
      %v2220 = vld [vmem:[%s2155] sm:$0xf]
      %v2221 = vld [vmem:[%s2155 + $0x4] sm:$0xf]
      %v2222 = vld [vmem:[%s2155 + $0x8] sm:$0x1]
      %v2223 = vld [vmem:[%s2155 + $0xc] sm:$0xf]
      %v2224 = vld [vmem:[%s2155 + $0x10] sm:$0xf]
      %v2225 = vld [vmem:[%s2155 + $0x14] sm:$0x1]
      %v2226 = vld [vmem:[%s2155 + $0x18] sm:$0xf]
      %v2227 = vld [vmem:[%s2155 + $0x1c] sm:$0xf]
      %v2228 = vld [vmem:[%s2155 + $0x20] sm:$0x1]
      %v2229 = vld [vmem:[%s2155 + $0x24] sm:$0xf]
      %v2230 = vld [vmem:[%s2155 + $0x28] sm:$0xf]
      %v2231 = vld [vmem:[%s2155 + $0x2c] sm:$0x1]
      %v2232 = vld [vmem:[%s2155 + $0x30] sm:$0xf]
      %v2233 = vld [vmem:[%s2155 + $0x34] sm:$0xf]
      %v2234 = vld [vmem:[%s2155 + $0x38] sm:$0x1]
      %v2235 = vld [vmem:[%s2155 + $0x3c] sm:$0xf]
      %v2236 = vld [vmem:[%s2155 + $0x40] sm:$0xf]
      %v2237 = vld [vmem:[%s2155 + $0x44] sm:$0x1]
      %v2238 = vld [vmem:[%s2155 + $0x48] sm:$0xf]
      %v2239 = vld [vmem:[%s2155 + $0x4c] sm:$0xf]
      %v2240 = vld [vmem:[%s2155 + $0x50] sm:$0x1]
      %v2241 = vld [vmem:[%s2155 + $0x54] sm:$0xf]
      %v2242 = vld [vmem:[%s2155 + $0x58] sm:$0xf]
      %v2243 = vld [vmem:[%s2155 + $0x5c] sm:$0x1]
      %v2244 = vld [vmem:[%s2155 + $0x60] sm:$0xf]
      %v2245 = vld [vmem:[%s2155 + $0x64] sm:$0xf]
      %v2246 = vld [vmem:[%s2155 + $0x68] sm:$0x1]
      %v2247 = vld [vmem:[%s2155 + $0x6c] sm:$0xf]
      %v2248 = vld [vmem:[%s2155 + $0x70] sm:$0xf]
      %v2249 = vld [vmem:[%s2155 + $0x74] sm:$0x1]
      %v2250 = vld [vmem:[%s2155 + $0x78] sm:$0xf]
      %v2251 = vld [vmem:[%s2155 + $0x7c] sm:$0xf]
      %v2252 = vld [vmem:[%s2155 + $0x80] sm:$0x1]
      %v2253 = vld [vmem:[%s2155 + $0x84] sm:$0xf]
      %v2254 = vld [vmem:[%s2155 + $0x88] sm:$0xf]
      %v2255 = vld [vmem:[%s2155 + $0x8c] sm:$0x1]
      %v2256 = vld [vmem:[%s2155 + $0x90] sm:$0xf]
      %v2257 = vld [vmem:[%s2155 + $0x94] sm:$0xf]
      %v2258 = vld [vmem:[%s2155 + $0x98] sm:$0x1]
      %v2259 = vld [vmem:[%s2155 + $0x9c] sm:$0xf]
      %v2260 = vld [vmem:[%s2155 + $0xa0] sm:$0xf]
      %v2261 = vld [vmem:[%s2155 + $0xa4] sm:$0x1]
      %v2262 = vld [vmem:[%s2155 + $0xa8] sm:$0xf]
      %v2263 = vld [vmem:[%s2155 + $0xac] sm:$0xf]
      %v2264 = vld [vmem:[%s2155 + $0xb0] sm:$0x1]
      %v2265 = vld [vmem:[%s2155 + $0xb4] sm:$0xf]
      %v2266 = vld [vmem:[%s2155 + $0xb8] sm:$0xf]
      %v2267 = vld [vmem:[%s2155 + $0xbc] sm:$0x1]
      %v2269 = vshrl.u32 %v2220, 16
      %v2271 = vrot.slane %v2269, 4
      %v2272 = vshll.u32 %v2220, 16
      %v2274 = vrot.slane %v2272, 5
      %v2275 = vor.u32 %v2271, %v2274
      %v2276 = vrot.slane %v2275, 4
      %v2278 = vshll.u32 %v2221, 16
      %v2280 = vrot.slane %v2278, 5
      %v2281 = vsel %vm341, %v2276, %v2280
      %v2282 = vshrl.u32 %v2221, 16
      %v2284 = vrot.slane %v2282, 4
      %v2285 = vor.u32 %v2284, %v2280
      %v2286 = vrot.slane %v2285, 4
      %v2288 = vshll.u32 %v2222, 16
      %v2290 = vrot.slane %v2288, 5
      %v2291 = vsel %vm341, %v2286, %v2290
      %v2293 = vshrl.u32 %v2223, 16
      %v2295 = vrot.slane %v2293, 4
      %v2296 = vshll.u32 %v2223, 16
      %v2298 = vrot.slane %v2296, 5
      %v2299 = vor.u32 %v2295, %v2298
      %v2300 = vrot.slane %v2299, 4
      %v2302 = vshll.u32 %v2224, 16
      %v2304 = vrot.slane %v2302, 5
      %v2305 = vsel %vm341, %v2300, %v2304
      %v2306 = vshrl.u32 %v2224, 16
      %v2308 = vrot.slane %v2306, 4
      %v2309 = vor.u32 %v2308, %v2304
      %v2310 = vrot.slane %v2309, 4
      %v2312 = vshll.u32 %v2225, 16
      %v2314 = vrot.slane %v2312, 5
      %v2315 = vsel %vm341, %v2310, %v2314
      %v2317 = vshrl.u32 %v2226, 16
      %v2319 = vrot.slane %v2317, 4
      %v2320 = vshll.u32 %v2226, 16
      %v2322 = vrot.slane %v2320, 5
      %v2323 = vor.u32 %v2319, %v2322
      %v2324 = vrot.slane %v2323, 4
      %v2326 = vshll.u32 %v2227, 16
      %v2328 = vrot.slane %v2326, 5
      %v2329 = vsel %vm341, %v2324, %v2328
      %v2330 = vshrl.u32 %v2227, 16
      %v2332 = vrot.slane %v2330, 4
      %v2333 = vor.u32 %v2332, %v2328
      %v2334 = vrot.slane %v2333, 4
      %v2336 = vshll.u32 %v2228, 16
      %v2338 = vrot.slane %v2336, 5
      %v2339 = vsel %vm341, %v2334, %v2338
      %v2341 = vshrl.u32 %v2229, 16
      %v2343 = vrot.slane %v2341, 4
      %v2344 = vshll.u32 %v2229, 16
      %v2346 = vrot.slane %v2344, 5
      %v2347 = vor.u32 %v2343, %v2346
      %v2348 = vrot.slane %v2347, 4
      %v2350 = vshll.u32 %v2230, 16
      %v2352 = vrot.slane %v2350, 5
      %v2353 = vsel %vm341, %v2348, %v2352
      %v2354 = vshrl.u32 %v2230, 16
      %v2356 = vrot.slane %v2354, 4
      %v2357 = vor.u32 %v2356, %v2352
      %v2358 = vrot.slane %v2357, 4
      %v2360 = vshll.u32 %v2231, 16
      %v2362 = vrot.slane %v2360, 5
      %v2363 = vsel %vm341, %v2358, %v2362
      %v2365 = vshrl.u32 %v2232, 16
      %v2367 = vrot.slane %v2365, 4
      %v2368 = vshll.u32 %v2232, 16
      %v2370 = vrot.slane %v2368, 5
      %v2371 = vor.u32 %v2367, %v2370
      %v2372 = vrot.slane %v2371, 4
      %v2374 = vshll.u32 %v2233, 16
      %v2376 = vrot.slane %v2374, 5
      %v2377 = vsel %vm341, %v2372, %v2376
      %v2378 = vshrl.u32 %v2233, 16
      %v2380 = vrot.slane %v2378, 4
      %v2381 = vor.u32 %v2380, %v2376
      %v2382 = vrot.slane %v2381, 4
      %v2384 = vshll.u32 %v2234, 16
      %v2386 = vrot.slane %v2384, 5
      %v2387 = vsel %vm341, %v2382, %v2386
      %v2389 = vshrl.u32 %v2235, 16
      %v2391 = vrot.slane %v2389, 4
      %v2392 = vshll.u32 %v2235, 16
      %v2394 = vrot.slane %v2392, 5
      %v2395 = vor.u32 %v2391, %v2394
      %v2396 = vrot.slane %v2395, 4
      %v2398 = vshll.u32 %v2236, 16
      %v2400 = vrot.slane %v2398, 5
      %v2401 = vsel %vm341, %v2396, %v2400
      %v2402 = vshrl.u32 %v2236, 16
      %v2404 = vrot.slane %v2402, 4
      %v2405 = vor.u32 %v2404, %v2400
      %v2406 = vrot.slane %v2405, 4
      %v2408 = vshll.u32 %v2237, 16
      %v2410 = vrot.slane %v2408, 5
      %v2411 = vsel %vm341, %v2406, %v2410
      %v2413 = vshrl.u32 %v2238, 16
      %v2415 = vrot.slane %v2413, 4
      %v2416 = vshll.u32 %v2238, 16
      %v2418 = vrot.slane %v2416, 5
      %v2419 = vor.u32 %v2415, %v2418
      %v2420 = vrot.slane %v2419, 4
      %v2422 = vshll.u32 %v2239, 16
      %v2424 = vrot.slane %v2422, 5
      %v2425 = vsel %vm341, %v2420, %v2424
      %v2426 = vshrl.u32 %v2239, 16
      %v2428 = vrot.slane %v2426, 4
      %v2429 = vor.u32 %v2428, %v2424
      %v2430 = vrot.slane %v2429, 4
      %v2432 = vshll.u32 %v2240, 16
      %v2434 = vrot.slane %v2432, 5
      %v2435 = vsel %vm341, %v2430, %v2434
      %v2437 = vshrl.u32 %v2241, 16
      %v2439 = vrot.slane %v2437, 4
      %v2440 = vshll.u32 %v2241, 16
      %v2442 = vrot.slane %v2440, 5
      %v2443 = vor.u32 %v2439, %v2442
      %v2444 = vrot.slane %v2443, 4
      %v2446 = vshll.u32 %v2242, 16
      %v2448 = vrot.slane %v2446, 5
      %v2449 = vsel %vm341, %v2444, %v2448
      %v2450 = vshrl.u32 %v2242, 16
      %v2452 = vrot.slane %v2450, 4
      %v2453 = vor.u32 %v2452, %v2448
      %v2454 = vrot.slane %v2453, 4
      %v2456 = vshll.u32 %v2243, 16
      %v2458 = vrot.slane %v2456, 5
      %v2459 = vsel %vm341, %v2454, %v2458
      %v2461 = vshrl.u32 %v2244, 16
      %v2463 = vrot.slane %v2461, 4
      %v2464 = vshll.u32 %v2244, 16
      %v2466 = vrot.slane %v2464, 5
      %v2467 = vor.u32 %v2463, %v2466
      %v2468 = vrot.slane %v2467, 4
      %v2470 = vshll.u32 %v2245, 16
      %v2472 = vrot.slane %v2470, 5
      %v2473 = vsel %vm341, %v2468, %v2472
      %v2474 = vshrl.u32 %v2245, 16
      %v2476 = vrot.slane %v2474, 4
      %v2477 = vor.u32 %v2476, %v2472
      %v2478 = vrot.slane %v2477, 4
      %v2480 = vshll.u32 %v2246, 16
      %v2482 = vrot.slane %v2480, 5
      %v2483 = vsel %vm341, %v2478, %v2482
      %v2485 = vshrl.u32 %v2247, 16
      %v2487 = vrot.slane %v2485, 4
      %v2488 = vshll.u32 %v2247, 16
      %v2490 = vrot.slane %v2488, 5
      %v2491 = vor.u32 %v2487, %v2490
      %v2492 = vrot.slane %v2491, 4
      %v2494 = vshll.u32 %v2248, 16
      %v2496 = vrot.slane %v2494, 5
      %v2497 = vsel %vm341, %v2492, %v2496
      %v2498 = vshrl.u32 %v2248, 16
      %v2500 = vrot.slane %v2498, 4
      %v2501 = vor.u32 %v2500, %v2496
      %v2502 = vrot.slane %v2501, 4
      %v2504 = vshll.u32 %v2249, 16
      %v2506 = vrot.slane %v2504, 5
      %v2507 = vsel %vm341, %v2502, %v2506
      %v2509 = vshrl.u32 %v2250, 16
      %v2511 = vrot.slane %v2509, 4
      %v2512 = vshll.u32 %v2250, 16
      %v2514 = vrot.slane %v2512, 5
      %v2515 = vor.u32 %v2511, %v2514
      %v2516 = vrot.slane %v2515, 4
      %v2518 = vshll.u32 %v2251, 16
      %v2520 = vrot.slane %v2518, 5
      %v2521 = vsel %vm341, %v2516, %v2520
      %v2522 = vshrl.u32 %v2251, 16
      %v2524 = vrot.slane %v2522, 4
      %v2525 = vor.u32 %v2524, %v2520
      %v2526 = vrot.slane %v2525, 4
      %v2528 = vshll.u32 %v2252, 16
      %v2530 = vrot.slane %v2528, 5
      %v2531 = vsel %vm341, %v2526, %v2530
      %v2533 = vshrl.u32 %v2253, 16
      %v2535 = vrot.slane %v2533, 4
      %v2536 = vshll.u32 %v2253, 16
      %v2538 = vrot.slane %v2536, 5
      %v2539 = vor.u32 %v2535, %v2538
      %v2540 = vrot.slane %v2539, 4
      %v2542 = vshll.u32 %v2254, 16
      %v2544 = vrot.slane %v2542, 5
      %v2545 = vsel %vm341, %v2540, %v2544
      %v2546 = vshrl.u32 %v2254, 16
      %v2548 = vrot.slane %v2546, 4
      %v2549 = vor.u32 %v2548, %v2544
      %v2550 = vrot.slane %v2549, 4
      %v2552 = vshll.u32 %v2255, 16
      %v2554 = vrot.slane %v2552, 5
      %v2555 = vsel %vm341, %v2550, %v2554
      %v2557 = vshrl.u32 %v2256, 16
      %v2559 = vrot.slane %v2557, 4
      %v2560 = vshll.u32 %v2256, 16
      %v2562 = vrot.slane %v2560, 5
      %v2563 = vor.u32 %v2559, %v2562
      %v2564 = vrot.slane %v2563, 4
      %v2566 = vshll.u32 %v2257, 16
      %v2568 = vrot.slane %v2566, 5
      %v2569 = vsel %vm341, %v2564, %v2568
      %v2570 = vshrl.u32 %v2257, 16
      %v2572 = vrot.slane %v2570, 4
      %v2573 = vor.u32 %v2572, %v2568
      %v2574 = vrot.slane %v2573, 4
      %v2576 = vshll.u32 %v2258, 16
      %v2578 = vrot.slane %v2576, 5
      %v2579 = vsel %vm341, %v2574, %v2578
      %v2581 = vshrl.u32 %v2259, 16
      %v2583 = vrot.slane %v2581, 4
      %v2584 = vshll.u32 %v2259, 16
      %v2586 = vrot.slane %v2584, 5
      %v2587 = vor.u32 %v2583, %v2586
      %v2588 = vrot.slane %v2587, 4
      %v2590 = vshll.u32 %v2260, 16
      %v2592 = vrot.slane %v2590, 5
      %v2593 = vsel %vm341, %v2588, %v2592
      %v2594 = vshrl.u32 %v2260, 16
      %v2596 = vrot.slane %v2594, 4
      %v2597 = vor.u32 %v2596, %v2592
      %v2598 = vrot.slane %v2597, 4
      %v2600 = vshll.u32 %v2261, 16
      %v2602 = vrot.slane %v2600, 5
      %v2603 = vsel %vm341, %v2598, %v2602
      %v2605 = vshrl.u32 %v2262, 16
      %v2607 = vrot.slane %v2605, 4
      %v2608 = vshll.u32 %v2262, 16
      %v2610 = vrot.slane %v2608, 5
      %v2611 = vor.u32 %v2607, %v2610
      %v2612 = vrot.slane %v2611, 4
      %v2614 = vshll.u32 %v2263, 16
      %v2616 = vrot.slane %v2614, 5
      %v2617 = vsel %vm341, %v2612, %v2616
      %v2618 = vshrl.u32 %v2263, 16
      %v2620 = vrot.slane %v2618, 4
      %v2621 = vor.u32 %v2620, %v2616
      %v2622 = vrot.slane %v2621, 4
      %v2624 = vshll.u32 %v2264, 16
      %v2626 = vrot.slane %v2624, 5
      %v2627 = vsel %vm341, %v2622, %v2626
      %v2629 = vshrl.u32 %v2265, 16
      %v2631 = vrot.slane %v2629, 4
      %v2632 = vshll.u32 %v2265, 16
      %v2634 = vrot.slane %v2632, 5
      %v2635 = vor.u32 %v2631, %v2634
      %v2636 = vrot.slane %v2635, 4
      %v2638 = vshll.u32 %v2266, 16
      %v2640 = vrot.slane %v2638, 5
      %v2641 = vsel %vm341, %v2636, %v2640
      %v2642 = vshrl.u32 %v2266, 16
      %v2644 = vrot.slane %v2642, 4
      %v2645 = vor.u32 %v2644, %v2640
      %v2646 = vrot.slane %v2645, 4
      %v2648 = vshll.u32 %v2267, 16
      %v2650 = vrot.slane %v2648, 5
      %v2651 = vsel %vm341, %v2646, %v2650
      %2652 = vrot.lane.b32.xlu0 %v2281, 64
      %v2653 = vpop.permute.xlu0 %2652
      %2654 = vrot.lane.b32.xlu0 %v2291, 64
      %v2655 = vpop.permute.xlu0 %2654
      %2656 = vrot.lane.b32.xlu0 %v2305, 64
      %v2657 = vpop.permute.xlu0 %2656
      %2658 = vrot.lane.b32.xlu0 %v2315, 64
      %v2659 = vpop.permute.xlu0 %2658
      %2660 = vrot.lane.b32.xlu0 %v2329, 64
      %v2661 = vpop.permute.xlu0 %2660
      %2662 = vrot.lane.b32.xlu0 %v2339, 64
      %v2663 = vpop.permute.xlu0 %2662
      %2664 = vrot.lane.b32.xlu0 %v2353, 64
      %v2665 = vpop.permute.xlu0 %2664
      %2666 = vrot.lane.b32.xlu0 %v2363, 64
      %v2667 = vpop.permute.xlu0 %2666
      %2668 = vrot.lane.b32.xlu0 %v2377, 64
      %v2669 = vpop.permute.xlu0 %2668
      %2670 = vrot.lane.b32.xlu0 %v2387, 64
      %v2671 = vpop.permute.xlu0 %2670
      %2672 = vrot.lane.b32.xlu0 %v2401, 64
      %v2673 = vpop.permute.xlu0 %2672
      %2674 = vrot.lane.b32.xlu0 %v2411, 64
      %v2675 = vpop.permute.xlu0 %2674
      %2676 = vrot.lane.b32.xlu0 %v2425, 64
      %v2677 = vpop.permute.xlu0 %2676
      %2678 = vrot.lane.b32.xlu0 %v2435, 64
      %v2679 = vpop.permute.xlu0 %2678
      %2680 = vrot.lane.b32.xlu0 %v2449, 64
      %v2681 = vpop.permute.xlu0 %2680
      %2682 = vrot.lane.b32.xlu0 %v2459, 64
      %v2683 = vpop.permute.xlu0 %2682
      %2684 = vrot.lane.b32.xlu0 %v2473, 64
      %v2685 = vpop.permute.xlu0 %2684
      %2686 = vrot.lane.b32.xlu0 %v2483, 64
      %v2687 = vpop.permute.xlu0 %2686
      %2688 = vrot.lane.b32.xlu0 %v2497, 64
      %v2689 = vpop.permute.xlu0 %2688
      %2690 = vrot.lane.b32.xlu0 %v2507, 64
      %v2691 = vpop.permute.xlu0 %2690
      %2692 = vrot.lane.b32.xlu0 %v2521, 64
      %v2693 = vpop.permute.xlu0 %2692
      %2694 = vrot.lane.b32.xlu0 %v2531, 64
      %v2695 = vpop.permute.xlu0 %2694
      %2696 = vrot.lane.b32.xlu0 %v2545, 64
      %v2697 = vpop.permute.xlu0 %2696
      %2698 = vrot.lane.b32.xlu0 %v2555, 64
      %v2699 = vpop.permute.xlu0 %2698
      %2700 = vrot.lane.b32.xlu0 %v2569, 64
      %v2701 = vpop.permute.xlu0 %2700
      %2702 = vrot.lane.b32.xlu0 %v2579, 64
      %v2703 = vpop.permute.xlu0 %2702
      %2704 = vrot.lane.b32.xlu0 %v2593, 64
      %v2705 = vpop.permute.xlu0 %2704
      %2706 = vrot.lane.b32.xlu0 %v2603, 64
      %v2707 = vpop.permute.xlu0 %2706
      %2708 = vrot.lane.b32.xlu0 %v2617, 64
      %v2709 = vpop.permute.xlu0 %2708
      %2710 = vrot.lane.b32.xlu0 %v2627, 64
      %v2711 = vpop.permute.xlu0 %2710
      %2712 = vrot.lane.b32.xlu0 %v2641, 64
      %v2713 = vpop.permute.xlu0 %2712
      %2714 = vrot.lane.b32.xlu0 %v2651, 64
      %v2715 = vpop.permute.xlu0 %2714
      %2748 = vst.msk [vmem:[#allocation3 + $0xc] sm:$0xf] %vm822, %v2653
      %2749 = vst.msk [vmem:[#allocation3 + $0x20] sm:$0xf] %vm822, %v2655
      %2750 = vst.msk [vmem:[#allocation3 + $0x34] sm:$0xf] %vm822, %v2657
      %2751 = vst.msk [vmem:[#allocation3 + $0x48] sm:$0xf] %vm822, %v2659
      %2752 = vst.msk [vmem:[#allocation3 + $0x5c] sm:$0xf] %vm822, %v2661
      %2753 = vst.msk [vmem:[#allocation3 + $0x70] sm:$0xf] %vm822, %v2663
      %2754 = vst.msk [vmem:[#allocation3 + $0x84] sm:$0xf] %vm822, %v2665
      %2755 = vst.msk [vmem:[#allocation3 + $0x98] sm:$0xf] %vm822, %v2667
      %2756 = vst.msk [vmem:[#allocation3 + $0xac] sm:$0xf] %vm822, %v2669
      %2757 = vst.msk [vmem:[#allocation3 + $0xc0] sm:$0xf] %vm822, %v2671
      %2758 = vst.msk [vmem:[#allocation3 + $0xd4] sm:$0xf] %vm822, %v2673
      %2759 = vst.msk [vmem:[#allocation3 + $0xe8] sm:$0xf] %vm822, %v2675
      %2760 = vst.msk [vmem:[#allocation3 + $0xfc] sm:$0xf] %vm822, %v2677
      %2761 = vst.msk [vmem:[#allocation3 + $0x110] sm:$0xf] %vm822, %v2679
      %2762 = vst.msk [vmem:[#allocation3 + $0x124] sm:$0xf] %vm822, %v2681
      %2763 = vst.msk [vmem:[#allocation3 + $0x138] sm:$0xf] %vm822, %v2683
      %2764 = vst.msk [vmem:[#allocation3 + $0x14c] sm:$0xf] %vm822, %v2685
      %2765 = vst.msk [vmem:[#allocation3 + $0x160] sm:$0xf] %vm822, %v2687
      %2766 = vst.msk [vmem:[#allocation3 + $0x174] sm:$0xf] %vm822, %v2689
      %2767 = vst.msk [vmem:[#allocation3 + $0x188] sm:$0xf] %vm822, %v2691
      %2768 = vst.msk [vmem:[#allocation3 + $0x19c] sm:$0xf] %vm822, %v2693
      %2769 = vst.msk [vmem:[#allocation3 + $0x1b0] sm:$0xf] %vm822, %v2695
      %2770 = vst.msk [vmem:[#allocation3 + $0x1c4] sm:$0xf] %vm822, %v2697
      %2771 = vst.msk [vmem:[#allocation3 + $0x1d8] sm:$0xf] %vm822, %v2699
      %2772 = vst.msk [vmem:[#allocation3 + $0x1ec] sm:$0xf] %vm822, %v2701
      %2773 = vst.msk [vmem:[#allocation3 + $0x200] sm:$0xf] %vm822, %v2703
      %2774 = vst.msk [vmem:[#allocation3 + $0x214] sm:$0xf] %vm822, %v2705
      %2775 = vst.msk [vmem:[#allocation3 + $0x228] sm:$0xf] %vm822, %v2707
      %2776 = vst.msk [vmem:[#allocation3 + $0x23c] sm:$0xf] %vm822, %v2709
      %2777 = vst.msk [vmem:[#allocation3 + $0x250] sm:$0xf] %vm822, %v2711
      %2778 = vst.msk [vmem:[#allocation3 + $0x264] sm:$0xf] %vm822, %v2713
      %2779 = vst.msk [vmem:[#allocation3 + $0x278] sm:$0xf] %vm822, %v2715
      %v2780 = vld [vmem:[%s2155] sm:$0xe]
      %v2781 = vld [vmem:[%s2155 + $0x4] sm:$0xf]
      %v2782 = vld [vmem:[%s2155 + $0x8] sm:$0x1]
      %v2783 = vld [vmem:[%s2155 + $0xc] sm:$0xe]
      %v2784 = vld [vmem:[%s2155 + $0x10] sm:$0xf]
      %v2785 = vld [vmem:[%s2155 + $0x14] sm:$0x1]
      %v2786 = vld [vmem:[%s2155 + $0x18] sm:$0xe]
      %v2787 = vld [vmem:[%s2155 + $0x1c] sm:$0xf]
      %v2788 = vld [vmem:[%s2155 + $0x20] sm:$0x1]
      %v2789 = vld [vmem:[%s2155 + $0x24] sm:$0xe]
      %v2790 = vld [vmem:[%s2155 + $0x28] sm:$0xf]
      %v2791 = vld [vmem:[%s2155 + $0x2c] sm:$0x1]
      %v2792 = vld [vmem:[%s2155 + $0x30] sm:$0xe]
      %v2793 = vld [vmem:[%s2155 + $0x34] sm:$0xf]
      %v2794 = vld [vmem:[%s2155 + $0x38] sm:$0x1]
      %v2795 = vld [vmem:[%s2155 + $0x3c] sm:$0xe]
      %v2796 = vld [vmem:[%s2155 + $0x40] sm:$0xf]
      %v2797 = vld [vmem:[%s2155 + $0x44] sm:$0x1]
      %v2798 = vld [vmem:[%s2155 + $0x48] sm:$0xe]
      %v2799 = vld [vmem:[%s2155 + $0x4c] sm:$0xf]
      %v2800 = vld [vmem:[%s2155 + $0x50] sm:$0x1]
      %v2801 = vld [vmem:[%s2155 + $0x54] sm:$0xe]
      %v2802 = vld [vmem:[%s2155 + $0x58] sm:$0xf]
      %v2803 = vld [vmem:[%s2155 + $0x5c] sm:$0x1]
      %v2804 = vld [vmem:[%s2155 + $0x60] sm:$0xe]
      %v2805 = vld [vmem:[%s2155 + $0x64] sm:$0xf]
      %v2806 = vld [vmem:[%s2155 + $0x68] sm:$0x1]
      %v2807 = vld [vmem:[%s2155 + $0x6c] sm:$0xe]
      %v2808 = vld [vmem:[%s2155 + $0x70] sm:$0xf]
      %v2809 = vld [vmem:[%s2155 + $0x74] sm:$0x1]
      %v2810 = vld [vmem:[%s2155 + $0x78] sm:$0xe]
      %v2811 = vld [vmem:[%s2155 + $0x7c] sm:$0xf]
      %v2812 = vld [vmem:[%s2155 + $0x80] sm:$0x1]
      %v2813 = vld [vmem:[%s2155 + $0x84] sm:$0xe]
      %v2814 = vld [vmem:[%s2155 + $0x88] sm:$0xf]
      %v2815 = vld [vmem:[%s2155 + $0x8c] sm:$0x1]
      %v2816 = vld [vmem:[%s2155 + $0x90] sm:$0xe]
      %v2817 = vld [vmem:[%s2155 + $0x94] sm:$0xf]
      %v2818 = vld [vmem:[%s2155 + $0x98] sm:$0x1]
      %v2819 = vld [vmem:[%s2155 + $0x9c] sm:$0xe]
      %v2820 = vld [vmem:[%s2155 + $0xa0] sm:$0xf]
      %v2821 = vld [vmem:[%s2155 + $0xa4] sm:$0x1]
      %v2822 = vld [vmem:[%s2155 + $0xa8] sm:$0xe]
      %v2823 = vld [vmem:[%s2155 + $0xac] sm:$0xf]
      %v2824 = vld [vmem:[%s2155 + $0xb0] sm:$0x1]
      %v2825 = vld [vmem:[%s2155 + $0xb4] sm:$0xe]
      %v2826 = vld [vmem:[%s2155 + $0xb8] sm:$0xf]
      %v2827 = vld [vmem:[%s2155 + $0xbc] sm:$0x1]
      %v2876 = vrot.slane %v2780, 5
      %v2877 = vrot.slane %v2876, 4
      %v2878 = vrot.slane %v2781, 5
      %v2879 = vsel %vm953, %v2877, %v2878
      %v2880 = vrot.slane %v2878, 4
      %v2881 = vrot.slane %v2782, 5
      %v2882 = vsel %vm953, %v2880, %v2881
      %v2883 = vrot.slane %v2783, 5
      %v2884 = vrot.slane %v2883, 4
      %v2885 = vrot.slane %v2784, 5
      %v2886 = vsel %vm953, %v2884, %v2885
      %v2887 = vrot.slane %v2885, 4
      %v2888 = vrot.slane %v2785, 5
      %v2889 = vsel %vm953, %v2887, %v2888
      %v2890 = vrot.slane %v2786, 5
      %v2891 = vrot.slane %v2890, 4
      %v2892 = vrot.slane %v2787, 5
      %v2893 = vsel %vm953, %v2891, %v2892
      %v2894 = vrot.slane %v2892, 4
      %v2895 = vrot.slane %v2788, 5
      %v2896 = vsel %vm953, %v2894, %v2895
      %v2897 = vrot.slane %v2789, 5
      %v2898 = vrot.slane %v2897, 4
      %v2899 = vrot.slane %v2790, 5
      %v2900 = vsel %vm953, %v2898, %v2899
      %v2901 = vrot.slane %v2899, 4
      %v2902 = vrot.slane %v2791, 5
      %v2903 = vsel %vm953, %v2901, %v2902
      %v2904 = vrot.slane %v2792, 5
      %v2905 = vrot.slane %v2904, 4
      %v2906 = vrot.slane %v2793, 5
      %v2907 = vsel %vm953, %v2905, %v2906
      %v2908 = vrot.slane %v2906, 4
      %v2909 = vrot.slane %v2794, 5
      %v2910 = vsel %vm953, %v2908, %v2909
      %v2911 = vrot.slane %v2795, 5
      %v2912 = vrot.slane %v2911, 4
      %v2913 = vrot.slane %v2796, 5
      %v2914 = vsel %vm953, %v2912, %v2913
      %v2915 = vrot.slane %v2913, 4
      %v2916 = vrot.slane %v2797, 5
      %v2917 = vsel %vm953, %v2915, %v2916
      %v2918 = vrot.slane %v2798, 5
      %v2919 = vrot.slane %v2918, 4
      %v2920 = vrot.slane %v2799, 5
      %v2921 = vsel %vm953, %v2919, %v2920
      %v2922 = vrot.slane %v2920, 4
      %v2923 = vrot.slane %v2800, 5
      %v2924 = vsel %vm953, %v2922, %v2923
      %v2925 = vrot.slane %v2801, 5
      %v2926 = vrot.slane %v2925, 4
      %v2927 = vrot.slane %v2802, 5
      %v2928 = vsel %vm953, %v2926, %v2927
      %v2929 = vrot.slane %v2927, 4
      %v2930 = vrot.slane %v2803, 5
      %v2931 = vsel %vm953, %v2929, %v2930
      %v2932 = vrot.slane %v2804, 5
      %v2933 = vrot.slane %v2932, 4
      %v2934 = vrot.slane %v2805, 5
      %v2935 = vsel %vm953, %v2933, %v2934
      %v2936 = vrot.slane %v2934, 4
      %v2937 = vrot.slane %v2806, 5
      %v2938 = vsel %vm953, %v2936, %v2937
      %v2939 = vrot.slane %v2807, 5
      %v2940 = vrot.slane %v2939, 4
      %v2941 = vrot.slane %v2808, 5
      %v2942 = vsel %vm953, %v2940, %v2941
      %v2943 = vrot.slane %v2941, 4
      %v2944 = vrot.slane %v2809, 5
      %v2945 = vsel %vm953, %v2943, %v2944
      %v2946 = vrot.slane %v2810, 5
      %v2947 = vrot.slane %v2946, 4
      %v2948 = vrot.slane %v2811, 5
      %v2949 = vsel %vm953, %v2947, %v2948
      %v2950 = vrot.slane %v2948, 4
      %v2951 = vrot.slane %v2812, 5
      %v2952 = vsel %vm953, %v2950, %v2951
      %v2953 = vrot.slane %v2813, 5
      %v2954 = vrot.slane %v2953, 4
      %v2955 = vrot.slane %v2814, 5
      %v2956 = vsel %vm953, %v2954, %v2955
      %v2957 = vrot.slane %v2955, 4
      %v2958 = vrot.slane %v2815, 5
      %v2959 = vsel %vm953, %v2957, %v2958
      %v2960 = vrot.slane %v2816, 5
      %v2961 = vrot.slane %v2960, 4
      %v2962 = vrot.slane %v2817, 5
      %v2963 = vsel %vm953, %v2961, %v2962
      %v2964 = vrot.slane %v2962, 4
      %v2965 = vrot.slane %v2818, 5
      %v2966 = vsel %vm953, %v2964, %v2965
      %v2967 = vrot.slane %v2819, 5
      %v2968 = vrot.slane %v2967, 4
      %v2969 = vrot.slane %v2820, 5
      %v2970 = vsel %vm953, %v2968, %v2969
      %v2971 = vrot.slane %v2969, 4
      %v2972 = vrot.slane %v2821, 5
      %v2973 = vsel %vm953, %v2971, %v2972
      %v2974 = vrot.slane %v2822, 5
      %v2975 = vrot.slane %v2974, 4
      %v2976 = vrot.slane %v2823, 5
      %v2977 = vsel %vm953, %v2975, %v2976
      %v2978 = vrot.slane %v2976, 4
      %v2979 = vrot.slane %v2824, 5
      %v2980 = vsel %vm953, %v2978, %v2979
      %v2981 = vrot.slane %v2825, 5
      %v2982 = vrot.slane %v2981, 4
      %v2983 = vrot.slane %v2826, 5
      %v2984 = vsel %vm953, %v2982, %v2983
      %v2985 = vrot.slane %v2983, 4
      %v2986 = vrot.slane %v2827, 5
      %v2987 = vsel %vm953, %v2985, %v2986
      %3020 = vst.msk [vmem:[#allocation3 + $0x10] sm:$0xf] %vm258, %v2879
      %3021 = vst.msk [vmem:[#allocation3 + $0x24] sm:$0xf] %vm258, %v2882
      %3022 = vst.msk [vmem:[#allocation3 + $0x38] sm:$0xf] %vm258, %v2886
      %3023 = vst.msk [vmem:[#allocation3 + $0x4c] sm:$0xf] %vm258, %v2889
      %3024 = vst.msk [vmem:[#allocation3 + $0x60] sm:$0xf] %vm258, %v2893
      %3025 = vst.msk [vmem:[#allocation3 + $0x74] sm:$0xf] %vm258, %v2896
      %3026 = vst.msk [vmem:[#allocation3 + $0x88] sm:$0xf] %vm258, %v2900
      %3027 = vst.msk [vmem:[#allocation3 + $0x9c] sm:$0xf] %vm258, %v2903
      %3028 = vst.msk [vmem:[#allocation3 + $0xb0] sm:$0xf] %vm258, %v2907
      %3029 = vst.msk [vmem:[#allocation3 + $0xc4] sm:$0xf] %vm258, %v2910
      %3030 = vst.msk [vmem:[#allocation3 + $0xd8] sm:$0xf] %vm258, %v2914
      %3031 = vst.msk [vmem:[#allocation3 + $0xec] sm:$0xf] %vm258, %v2917
      %3032 = vst.msk [vmem:[#allocation3 + $0x100] sm:$0xf] %vm258, %v2921
      %3033 = vst.msk [vmem:[#allocation3 + $0x114] sm:$0xf] %vm258, %v2924
      %3034 = vst.msk [vmem:[#allocation3 + $0x128] sm:$0xf] %vm258, %v2928
      %3035 = vst.msk [vmem:[#allocation3 + $0x13c] sm:$0xf] %vm258, %v2931
      %3036 = vst.msk [vmem:[#allocation3 + $0x150] sm:$0xf] %vm258, %v2935
      %3037 = vst.msk [vmem:[#allocation3 + $0x164] sm:$0xf] %vm258, %v2938
      %3038 = vst.msk [vmem:[#allocation3 + $0x178] sm:$0xf] %vm258, %v2942
      %3039 = vst.msk [vmem:[#allocation3 + $0x18c] sm:$0xf] %vm258, %v2945
      %3040 = vst.msk [vmem:[#allocation3 + $0x1a0] sm:$0xf] %vm258, %v2949
      %3041 = vst.msk [vmem:[#allocation3 + $0x1b4] sm:$0xf] %vm258, %v2952
      %3042 = vst.msk [vmem:[#allocation3 + $0x1c8] sm:$0xf] %vm258, %v2956
      %3043 = vst.msk [vmem:[#allocation3 + $0x1dc] sm:$0xf] %vm258, %v2959
      %3044 = vst.msk [vmem:[#allocation3 + $0x1f0] sm:$0xf] %vm258, %v2963
      %3045 = vst.msk [vmem:[#allocation3 + $0x204] sm:$0xf] %vm258, %v2966
      %3046 = vst.msk [vmem:[#allocation3 + $0x218] sm:$0xf] %vm258, %v2970
      %3047 = vst.msk [vmem:[#allocation3 + $0x22c] sm:$0xf] %vm258, %v2973
      %3048 = vst.msk [vmem:[#allocation3 + $0x240] sm:$0xf] %vm258, %v2977
      %3049 = vst.msk [vmem:[#allocation3 + $0x254] sm:$0xf] %vm258, %v2980
      %3050 = vst.msk [vmem:[#allocation3 + $0x268] sm:$0xf] %vm258, %v2984
      %3051 = vst.msk [vmem:[#allocation3 + $0x27c] sm:$0xf] %vm258, %v2987
      %v3052 = vld [vmem:[#allocation3] sm:$0xff]
      %v3053 = vld [vmem:[#allocation3 + $0x8] sm:$0xff]
      %v3054 = vld [vmem:[#allocation3 + $0x10] sm:$0xf]
      %v3055 = vld [vmem:[#allocation3 + $0x14] sm:$0xff]
      %v3056 = vld [vmem:[#allocation3 + $0x1c] sm:$0xff]
      %v3057 = vld [vmem:[#allocation3 + $0x24] sm:$0xf]
      %v3058 = vld [vmem:[#allocation3 + $0x28] sm:$0xff]
      %v3059 = vld [vmem:[#allocation3 + $0x30] sm:$0xff]
      %v3060 = vld [vmem:[#allocation3 + $0x38] sm:$0xf]
      %v3061 = vld [vmem:[#allocation3 + $0x3c] sm:$0xff]
      %v3062 = vld [vmem:[#allocation3 + $0x44] sm:$0xff]
      %v3063 = vld [vmem:[#allocation3 + $0x4c] sm:$0xf]
      %v3064 = vld [vmem:[#allocation3 + $0x50] sm:$0xff]
      %v3065 = vld [vmem:[#allocation3 + $0x58] sm:$0xff]
      %v3066 = vld [vmem:[#allocation3 + $0x60] sm:$0xf]
      %v3067 = vld [vmem:[#allocation3 + $0x64] sm:$0xff]
      %v3068 = vld [vmem:[#allocation3 + $0x6c] sm:$0xff]
      %v3069 = vld [vmem:[#allocation3 + $0x74] sm:$0xf]
      %v3070 = vld [vmem:[#allocation3 + $0x78] sm:$0xff]
      %v3071 = vld [vmem:[#allocation3 + $0x80] sm:$0xff]
      %v3072 = vld [vmem:[#allocation3 + $0x88] sm:$0xf]
      %v3073 = vld [vmem:[#allocation3 + $0x8c] sm:$0xff]
      %v3074 = vld [vmem:[#allocation3 + $0x94] sm:$0xff]
      %v3075 = vld [vmem:[#allocation3 + $0x9c] sm:$0xf]
      %v3076 = vld [vmem:[#allocation3 + $0xa0] sm:$0xff]
      %v3077 = vld [vmem:[#allocation3 + $0xa8] sm:$0xff]
      %v3078 = vld [vmem:[#allocation3 + $0xb0] sm:$0xf]
      %v3079 = vld [vmem:[#allocation3 + $0xb4] sm:$0xff]
      %v3080 = vld [vmem:[#allocation3 + $0xbc] sm:$0xff]
      %v3081 = vld [vmem:[#allocation3 + $0xc4] sm:$0xf]
      %v3082 = vld [vmem:[#allocation3 + $0xc8] sm:$0xff]
      %v3083 = vld [vmem:[#allocation3 + $0xd0] sm:$0xff]
      %v3084 = vld [vmem:[#allocation3 + $0xd8] sm:$0xf]
      %v3085 = vld [vmem:[#allocation3 + $0xdc] sm:$0xff]
      %v3086 = vld [vmem:[#allocation3 + $0xe4] sm:$0xff]
      %v3087 = vld [vmem:[#allocation3 + $0xec] sm:$0xf]
      %v3088 = vld [vmem:[#allocation3 + $0xf0] sm:$0xff]
      %v3089 = vld [vmem:[#allocation3 + $0xf8] sm:$0xff]
      %v3090 = vld [vmem:[#allocation3 + $0x100] sm:$0xf]
      %v3091 = vld [vmem:[#allocation3 + $0x104] sm:$0xff]
      %v3092 = vld [vmem:[#allocation3 + $0x10c] sm:$0xff]
      %v3093 = vld [vmem:[#allocation3 + $0x114] sm:$0xf]
      %v3094 = vld [vmem:[#allocation3 + $0x118] sm:$0xff]
      %v3095 = vld [vmem:[#allocation3 + $0x120] sm:$0xff]
      %v3096 = vld [vmem:[#allocation3 + $0x128] sm:$0xf]
      %v3097 = vld [vmem:[#allocation3 + $0x12c] sm:$0xff]
      %v3098 = vld [vmem:[#allocation3 + $0x134] sm:$0xff]
      %v3099 = vld [vmem:[#allocation3 + $0x13c] sm:$0xf]
      %v3100 = vld [vmem:[#allocation3 + $0x140] sm:$0xff]
      %v3101 = vld [vmem:[#allocation3 + $0x148] sm:$0xff]
      %v3102 = vld [vmem:[#allocation3 + $0x150] sm:$0xf]
      %v3103 = vld [vmem:[#allocation3 + $0x154] sm:$0xff]
      %v3104 = vld [vmem:[#allocation3 + $0x15c] sm:$0xff]
      %v3105 = vld [vmem:[#allocation3 + $0x164] sm:$0xf]
      %v3106 = vld [vmem:[#allocation3 + $0x168] sm:$0xff]
      %v3107 = vld [vmem:[#allocation3 + $0x170] sm:$0xff]
      %v3108 = vld [vmem:[#allocation3 + $0x178] sm:$0xf]
      %v3109 = vld [vmem:[#allocation3 + $0x17c] sm:$0xff]
      %v3110 = vld [vmem:[#allocation3 + $0x184] sm:$0xff]
      %v3111 = vld [vmem:[#allocation3 + $0x18c] sm:$0xf]
      %v3112 = vld [vmem:[#allocation3 + $0x190] sm:$0xff]
      %v3113 = vld [vmem:[#allocation3 + $0x198] sm:$0xff]
      %v3114 = vld [vmem:[#allocation3 + $0x1a0] sm:$0xf]
      %v3115 = vld [vmem:[#allocation3 + $0x1a4] sm:$0xff]
      %v3116 = vld [vmem:[#allocation3 + $0x1ac] sm:$0xff]
      %v3117 = vld [vmem:[#allocation3 + $0x1b4] sm:$0xf]
      %v3118 = vld [vmem:[#allocation3 + $0x1b8] sm:$0xff]
      %v3119 = vld [vmem:[#allocation3 + $0x1c0] sm:$0xff]
      %v3120 = vld [vmem:[#allocation3 + $0x1c8] sm:$0xf]
      %v3121 = vld [vmem:[#allocation3 + $0x1cc] sm:$0xff]
      %v3122 = vld [vmem:[#allocation3 + $0x1d4] sm:$0xff]
      %v3123 = vld [vmem:[#allocation3 + $0x1dc] sm:$0xf]
      %v3124 = vld [vmem:[#allocation3 + $0x1e0] sm:$0xff]
      %v3125 = vld [vmem:[#allocation3 + $0x1e8] sm:$0xff]
      %v3126 = vld [vmem:[#allocation3 + $0x1f0] sm:$0xf]
      %v3127 = vld [vmem:[#allocation3 + $0x1f4] sm:$0xff]
      %v3128 = vld [vmem:[#allocation3 + $0x1fc] sm:$0xff]
      %v3129 = vld [vmem:[#allocation3 + $0x204] sm:$0xf]
      %v3130 = vld [vmem:[#allocation3 + $0x208] sm:$0xff]
      %v3131 = vld [vmem:[#allocation3 + $0x210] sm:$0xff]
      %v3132 = vld [vmem:[#allocation3 + $0x218] sm:$0xf]
      %v3133 = vld [vmem:[#allocation3 + $0x21c] sm:$0xff]
      %v3134 = vld [vmem:[#allocation3 + $0x224] sm:$0xff]
      %v3135 = vld [vmem:[#allocation3 + $0x22c] sm:$0xf]
      %v3136 = vld [vmem:[#allocation3 + $0x230] sm:$0xff]
      %v3137 = vld [vmem:[#allocation3 + $0x238] sm:$0xff]
      %v3138 = vld [vmem:[#allocation3 + $0x240] sm:$0xf]
      %v3139 = vld [vmem:[#allocation3 + $0x244] sm:$0xff]
      %v3140 = vld [vmem:[#allocation3 + $0x24c] sm:$0xff]
      %v3141 = vld [vmem:[#allocation3 + $0x254] sm:$0xf]
      %v3142 = vld [vmem:[#allocation3 + $0x258] sm:$0xff]
      %v3143 = vld [vmem:[#allocation3 + $0x260] sm:$0xff]
      %v3144 = vld [vmem:[#allocation3 + $0x268] sm:$0xf]
      %v3145 = vld [vmem:[#allocation3 + $0x26c] sm:$0xff]
      %v3146 = vld [vmem:[#allocation3 + $0x274] sm:$0xff]
      %v3147 = vld [vmem:[#allocation3 + $0x27c] sm:$0xf]
      %v3148 = vld [vmem:[%s1] sm:$0xf]
      %v3149 = vld [vmem:[%s1 + $0x4] sm:$0xf]
      %v3150 = vld [vmem:[%s1 + $0x8] sm:$0xf]
      %v3151 = vld [vmem:[%s1 + $0xc] sm:$0xf]
      %v3152 = vld [vmem:[%s1 + $0x10] sm:$0xf]
      %v3153 = vld [vmem:[%s1 + $0x14] sm:$0xf]
      %v3154 = vld [vmem:[%s1 + $0x18] sm:$0xf]
      %v3155 = vld [vmem:[%s1 + $0x1c] sm:$0xf]
      %v3156 = vld [vmem:[%s1 + $0x20] sm:$0xf]
      %v3157 = vld [vmem:[%s1 + $0x24] sm:$0xf]
      %v3158 = vld [vmem:[%s1 + $0x28] sm:$0xf]
      %v3159 = vld [vmem:[%s1 + $0x2c] sm:$0xf]
      %v3160 = vld [vmem:[%s1 + $0x30] sm:$0xf]
      %v3161 = vld [vmem:[%s1 + $0x34] sm:$0xf]
      %v3162 = vld [vmem:[%s1 + $0x38] sm:$0xf]
      %v3163 = vld [vmem:[%s1 + $0x3c] sm:$0xf]
      %v3164 = vld [vmem:[%s1 + $0x40] sm:$0xf]
      %v3165 = vld [vmem:[%s1 + $0x44] sm:$0xf]
      %v3166 = vld [vmem:[%s1 + $0x48] sm:$0xf]
      %v3167 = vld [vmem:[%s1 + $0x4c] sm:$0xf]
      %v3168 = vld [vmem:[%s1 + $0x50] sm:$0xf]
      %v3169 = vld [vmem:[%s1 + $0x54] sm:$0xf]
      %v3170 = vld [vmem:[%s1 + $0x58] sm:$0xf]
      %v3171 = vld [vmem:[%s1 + $0x5c] sm:$0xf]
      %v3172 = vld [vmem:[%s1 + $0x60] sm:$0xf]
      %v3173 = vld [vmem:[%s1 + $0x64] sm:$0xf]
      %v3174 = vld [vmem:[%s1 + $0x68] sm:$0xf]
      %v3175 = vld [vmem:[%s1 + $0x6c] sm:$0xf]
      %v3176 = vld [vmem:[%s1 + $0x70] sm:$0xf]
      %v3177 = vld [vmem:[%s1 + $0x74] sm:$0xf]
      %v3178 = vld [vmem:[%s1 + $0x78] sm:$0xf]
      %v3179 = vld [vmem:[%s1 + $0x7c] sm:$0xf]
      %v3180 = vld [vmem:[%s1 + $0x80] sm:$0xf]
      %v3181 = vld [vmem:[%s1 + $0x84] sm:$0xf]
      %v3182 = vld [vmem:[%s1 + $0x88] sm:$0xf]
      %v3183 = vld [vmem:[%s1 + $0x8c] sm:$0xf]
      %v3184 = vld [vmem:[%s1 + $0x90] sm:$0xf]
      %v3185 = vld [vmem:[%s1 + $0x94] sm:$0xf]
      %v3186 = vld [vmem:[%s1 + $0x98] sm:$0xf]
      %v3187 = vld [vmem:[%s1 + $0x9c] sm:$0xf]
      %v3188 = vld [vmem:[%s1 + $0xa0] sm:$0xf]
      %v3189 = vld [vmem:[%s1 + $0xa4] sm:$0xf]
      %v3190 = vld [vmem:[%s1 + $0xa8] sm:$0xf]
      %v3191 = vld [vmem:[%s1 + $0xac] sm:$0xf]
      %v3192 = vld [vmem:[%s1 + $0xb0] sm:$0xf]
      %v3193 = vld [vmem:[%s1 + $0xb4] sm:$0xf]
      %v3194 = vld [vmem:[%s1 + $0xb8] sm:$0xf]
      %v3195 = vld [vmem:[%s1 + $0xbc] sm:$0xf]
      %v3196 = vld [vmem:[%s1 + $0xc0] sm:$0xf]
      %v3197 = vld [vmem:[%s1 + $0xc4] sm:$0xf]
      %v3198 = vld [vmem:[%s1 + $0xc8] sm:$0xf]
      %v3199 = vld [vmem:[%s1 + $0xcc] sm:$0xf]
      %v3200 = vld [vmem:[%s1 + $0xd0] sm:$0xf]
      %v3201 = vld [vmem:[%s1 + $0xd4] sm:$0xf]
      %v3202 = vld [vmem:[%s1 + $0xd8] sm:$0xf]
      %v3203 = vld [vmem:[%s1 + $0xdc] sm:$0xf]
      %v3204 = vld [vmem:[%s1 + $0xe0] sm:$0xf]
      %v3205 = vld [vmem:[%s1 + $0xe4] sm:$0xf]
      %v3206 = vld [vmem:[%s1 + $0xe8] sm:$0xf]
      %v3207 = vld [vmem:[%s1 + $0xec] sm:$0xf]
      %v3208 = vld [vmem:[%s1 + $0xf0] sm:$0xf]
      %v3209 = vld [vmem:[%s1 + $0xf4] sm:$0xf]
      %v3210 = vld [vmem:[%s1 + $0xf8] sm:$0xf]
      %v3211 = vld [vmem:[%s1 + $0xfc] sm:$0xf]
      %v3212 = vld [vmem:[%s1 + $0x100] sm:$0xf]
      %v3213 = vld [vmem:[%s1 + $0x104] sm:$0xf]
      %v3214 = vld [vmem:[%s1 + $0x108] sm:$0xf]
      %v3215 = vld [vmem:[%s1 + $0x10c] sm:$0xf]
      %v3216 = vld [vmem:[%s1 + $0x110] sm:$0xf]
      %v3217 = vld [vmem:[%s1 + $0x114] sm:$0xf]
      %v3218 = vld [vmem:[%s1 + $0x118] sm:$0xf]
      %v3219 = vld [vmem:[%s1 + $0x11c] sm:$0xf]
      %v3220 = vld [vmem:[%s2] sm:$0x1]
      %v3222 = vlaneseq
      %v3223 = vshrl.u32 %v3222, 7
      %v3224 = vsub.s32 0, %v3223
      %v3225 = vrot.slane %v3220, %v3224
      %v3323 = vunpack.c.l.b16 %v3052
      %v3324 = vunpack.c.h.b16 %v3052
      %v3325 = vunpack.c.l.b16 %v3053
      %v3326 = vunpack.c.h.b16 %v3053
      %v3327 = vunpack.c.l.b16 %v3054
      %v3328 = vunpack.c.l.b16 %v3055
      %v3329 = vunpack.c.h.b16 %v3055
      %v3330 = vunpack.c.l.b16 %v3056
      %v3331 = vunpack.c.h.b16 %v3056
      %v3332 = vunpack.c.l.b16 %v3057
      %v3333 = vunpack.c.l.b16 %v3058
      %v3334 = vunpack.c.h.b16 %v3058
      %v3335 = vunpack.c.l.b16 %v3059
      %v3336 = vunpack.c.h.b16 %v3059
      %v3337 = vunpack.c.l.b16 %v3060
      %v3338 = vunpack.c.l.b16 %v3061
      %v3339 = vunpack.c.h.b16 %v3061
      %v3340 = vunpack.c.l.b16 %v3062
      %v3341 = vunpack.c.h.b16 %v3062
      %v3342 = vunpack.c.l.b16 %v3063
      %v3343 = vunpack.c.l.b16 %v3064
      %v3344 = vunpack.c.h.b16 %v3064
      %v3345 = vunpack.c.l.b16 %v3065
      %v3346 = vunpack.c.h.b16 %v3065
      %v3347 = vunpack.c.l.b16 %v3066
      %v3348 = vunpack.c.l.b16 %v3067
      %v3349 = vunpack.c.h.b16 %v3067
      %v3350 = vunpack.c.l.b16 %v3068
      %v3351 = vunpack.c.h.b16 %v3068
      %v3352 = vunpack.c.l.b16 %v3069
      %v3353 = vunpack.c.l.b16 %v3070
      %v3354 = vunpack.c.h.b16 %v3070
      %v3355 = vunpack.c.l.b16 %v3071
      %v3356 = vunpack.c.h.b16 %v3071
      %v3357 = vunpack.c.l.b16 %v3072
      %v3358 = vunpack.c.l.b16 %v3073
      %v3359 = vunpack.c.h.b16 %v3073
      %v3360 = vunpack.c.l.b16 %v3074
      %v3361 = vunpack.c.h.b16 %v3074
      %v3362 = vunpack.c.l.b16 %v3075
      %v3363 = vunpack.c.l.b16 %v3076
      %v3364 = vunpack.c.h.b16 %v3076
      %v3365 = vunpack.c.l.b16 %v3077
      %v3366 = vunpack.c.h.b16 %v3077
      %v3367 = vunpack.c.l.b16 %v3078
      %v3368 = vunpack.c.l.b16 %v3079
      %v3369 = vunpack.c.h.b16 %v3079
      %v3370 = vunpack.c.l.b16 %v3080
      %v3371 = vunpack.c.h.b16 %v3080
      %v3372 = vunpack.c.l.b16 %v3081
      %v3373 = vunpack.c.l.b16 %v3082
      %v3374 = vunpack.c.h.b16 %v3082
      %v3375 = vunpack.c.l.b16 %v3083
      %v3376 = vunpack.c.h.b16 %v3083
      %v3377 = vunpack.c.l.b16 %v3084
      %v3378 = vunpack.c.l.b16 %v3085
      %v3379 = vunpack.c.h.b16 %v3085
      %v3380 = vunpack.c.l.b16 %v3086
      %v3381 = vunpack.c.h.b16 %v3086
      %v3382 = vunpack.c.l.b16 %v3087
      %v3383 = vunpack.c.l.b16 %v3088
      %v3384 = vunpack.c.h.b16 %v3088
      %v3385 = vunpack.c.l.b16 %v3089
      %v3386 = vunpack.c.h.b16 %v3089
      %v3387 = vunpack.c.l.b16 %v3090
      %v3388 = vunpack.c.l.b16 %v3091
      %v3389 = vunpack.c.h.b16 %v3091
      %v3390 = vunpack.c.l.b16 %v3092
      %v3391 = vunpack.c.h.b16 %v3092
      %v3392 = vunpack.c.l.b16 %v3093
      %v3393 = vunpack.c.l.b16 %v3094
      %v3394 = vunpack.c.h.b16 %v3094
      %v3395 = vunpack.c.l.b16 %v3095
      %v3396 = vunpack.c.h.b16 %v3095
      %v3397 = vunpack.c.l.b16 %v3096
      %v3398 = vunpack.c.l.b16 %v3097
      %v3399 = vunpack.c.h.b16 %v3097
      %v3400 = vunpack.c.l.b16 %v3098
      %v3401 = vunpack.c.h.b16 %v3098
      %v3402 = vunpack.c.l.b16 %v3099
      %v3403 = vunpack.c.l.b16 %v3100
      %v3404 = vunpack.c.h.b16 %v3100
      %v3405 = vunpack.c.l.b16 %v3101
      %v3406 = vunpack.c.h.b16 %v3101
      %v3407 = vunpack.c.l.b16 %v3102
      %v3408 = vunpack.c.l.b16 %v3103
      %v3409 = vunpack.c.h.b16 %v3103
      %v3410 = vunpack.c.l.b16 %v3104
      %v3411 = vunpack.c.h.b16 %v3104
      %v3412 = vunpack.c.l.b16 %v3105
      %v3413 = vunpack.c.l.b16 %v3106
      %v3414 = vunpack.c.h.b16 %v3106
      %v3415 = vunpack.c.l.b16 %v3107
      %v3416 = vunpack.c.h.b16 %v3107
      %v3417 = vunpack.c.l.b16 %v3108
      %v3418 = vunpack.c.l.b16 %v3109
      %v3419 = vunpack.c.h.b16 %v3109
      %v3420 = vunpack.c.l.b16 %v3110
      %v3421 = vunpack.c.h.b16 %v3110
      %v3422 = vunpack.c.l.b16 %v3111
      %v3423 = vunpack.c.l.b16 %v3112
      %v3424 = vunpack.c.h.b16 %v3112
      %v3425 = vunpack.c.l.b16 %v3113
      %v3426 = vunpack.c.h.b16 %v3113
      %v3427 = vunpack.c.l.b16 %v3114
      %v3428 = vunpack.c.l.b16 %v3115
      %v3429 = vunpack.c.h.b16 %v3115
      %v3430 = vunpack.c.l.b16 %v3116
      %v3431 = vunpack.c.h.b16 %v3116
      %v3432 = vunpack.c.l.b16 %v3117
      %v3433 = vunpack.c.l.b16 %v3118
      %v3434 = vunpack.c.h.b16 %v3118
      %v3435 = vunpack.c.l.b16 %v3119
      %v3436 = vunpack.c.h.b16 %v3119
      %v3437 = vunpack.c.l.b16 %v3120
      %v3438 = vunpack.c.l.b16 %v3121
      %v3439 = vunpack.c.h.b16 %v3121
      %v3440 = vunpack.c.l.b16 %v3122
      %v3441 = vunpack.c.h.b16 %v3122
      %v3442 = vunpack.c.l.b16 %v3123
      %v3443 = vunpack.c.l.b16 %v3124
      %v3444 = vunpack.c.h.b16 %v3124
      %v3445 = vunpack.c.l.b16 %v3125
      %v3446 = vunpack.c.h.b16 %v3125
      %v3447 = vunpack.c.l.b16 %v3126
      %v3448 = vunpack.c.l.b16 %v3127
      %v3449 = vunpack.c.h.b16 %v3127
      %v3450 = vunpack.c.l.b16 %v3128
      %v3451 = vunpack.c.h.b16 %v3128
      %v3452 = vunpack.c.l.b16 %v3129
      %v3453 = vunpack.c.l.b16 %v3130
      %v3454 = vunpack.c.h.b16 %v3130
      %v3455 = vunpack.c.l.b16 %v3131
      %v3456 = vunpack.c.h.b16 %v3131
      %v3457 = vunpack.c.l.b16 %v3132
      %v3458 = vunpack.c.l.b16 %v3133
      %v3459 = vunpack.c.h.b16 %v3133
      %v3460 = vunpack.c.l.b16 %v3134
      %v3461 = vunpack.c.h.b16 %v3134
      %v3462 = vunpack.c.l.b16 %v3135
      %v3463 = vunpack.c.l.b16 %v3136
      %v3464 = vunpack.c.h.b16 %v3136
      %v3465 = vunpack.c.l.b16 %v3137
      %v3466 = vunpack.c.h.b16 %v3137
      %v3467 = vunpack.c.l.b16 %v3138
      %v3468 = vunpack.c.l.b16 %v3139
      %v3469 = vunpack.c.h.b16 %v3139
      %v3470 = vunpack.c.l.b16 %v3140
      %v3471 = vunpack.c.h.b16 %v3140
      %v3472 = vunpack.c.l.b16 %v3141
      %v3473 = vunpack.c.l.b16 %v3142
      %v3474 = vunpack.c.h.b16 %v3142
      %v3475 = vunpack.c.l.b16 %v3143
      %v3476 = vunpack.c.h.b16 %v3143
      %v3477 = vunpack.c.l.b16 %v3144
      %v3478 = vunpack.c.l.b16 %v3145
      %v3479 = vunpack.c.h.b16 %v3145
      %v3480 = vunpack.c.l.b16 %v3146
      %v3481 = vunpack.c.h.b16 %v3146
      %v3482 = vunpack.c.l.b16 %v3147
      %v3483 = vpack.c.b16 %v3328, %v3323
      %v3484 = vpack.c.b16 %v3329, %v3324
      %v3485 = vpack.c.b16 %v3330, %v3325
      %v3486 = vpack.c.b16 %v3331, %v3326
      %v3487 = vpack.c.b16 %v3332, %v3327
      %v3488 = vpack.c.b16 %v3338, %v3333
      %v3489 = vpack.c.b16 %v3339, %v3334
      %v3490 = vpack.c.b16 %v3340, %v3335
      %v3491 = vpack.c.b16 %v3341, %v3336
      %v3492 = vpack.c.b16 %v3342, %v3337
      %v3493 = vpack.c.b16 %v3348, %v3343
      %v3494 = vpack.c.b16 %v3349, %v3344
      %v3495 = vpack.c.b16 %v3350, %v3345
      %v3496 = vpack.c.b16 %v3351, %v3346
      %v3497 = vpack.c.b16 %v3352, %v3347
      %v3498 = vpack.c.b16 %v3358, %v3353
      %v3499 = vpack.c.b16 %v3359, %v3354
      %v3500 = vpack.c.b16 %v3360, %v3355
      %v3501 = vpack.c.b16 %v3361, %v3356
      %v3502 = vpack.c.b16 %v3362, %v3357
      %v3503 = vpack.c.b16 %v3368, %v3363
      %v3504 = vpack.c.b16 %v3369, %v3364
      %v3505 = vpack.c.b16 %v3370, %v3365
      %v3506 = vpack.c.b16 %v3371, %v3366
      %v3507 = vpack.c.b16 %v3372, %v3367
      %v3508 = vpack.c.b16 %v3378, %v3373
      %v3509 = vpack.c.b16 %v3379, %v3374
      %v3510 = vpack.c.b16 %v3380, %v3375
      %v3511 = vpack.c.b16 %v3381, %v3376
      %v3512 = vpack.c.b16 %v3382, %v3377
      %v3513 = vpack.c.b16 %v3388, %v3383
      %v3514 = vpack.c.b16 %v3389, %v3384
      %v3515 = vpack.c.b16 %v3390, %v3385
      %v3516 = vpack.c.b16 %v3391, %v3386
      %v3517 = vpack.c.b16 %v3392, %v3387
      %v3518 = vpack.c.b16 %v3398, %v3393
      %v3519 = vpack.c.b16 %v3399, %v3394
      %v3520 = vpack.c.b16 %v3400, %v3395
      %v3521 = vpack.c.b16 %v3401, %v3396
      %v3522 = vpack.c.b16 %v3402, %v3397
      %v3523 = vpack.c.b16 %v3408, %v3403
      %v3524 = vpack.c.b16 %v3409, %v3404
      %v3525 = vpack.c.b16 %v3410, %v3405
      %v3526 = vpack.c.b16 %v3411, %v3406
      %v3527 = vpack.c.b16 %v3412, %v3407
      %v3528 = vpack.c.b16 %v3418, %v3413
      %v3529 = vpack.c.b16 %v3419, %v3414
      %v3530 = vpack.c.b16 %v3420, %v3415
      %v3531 = vpack.c.b16 %v3421, %v3416
      %v3532 = vpack.c.b16 %v3422, %v3417
      %v3533 = vpack.c.b16 %v3428, %v3423
      %v3534 = vpack.c.b16 %v3429, %v3424
      %v3535 = vpack.c.b16 %v3430, %v3425
      %v3536 = vpack.c.b16 %v3431, %v3426
      %v3537 = vpack.c.b16 %v3432, %v3427
      %v3538 = vpack.c.b16 %v3438, %v3433
      %v3539 = vpack.c.b16 %v3439, %v3434
      %v3540 = vpack.c.b16 %v3440, %v3435
      %v3541 = vpack.c.b16 %v3441, %v3436
      %v3542 = vpack.c.b16 %v3442, %v3437
      %v3543 = vpack.c.b16 %v3448, %v3443
      %v3544 = vpack.c.b16 %v3449, %v3444
      %v3545 = vpack.c.b16 %v3450, %v3445
      %v3546 = vpack.c.b16 %v3451, %v3446
      %v3547 = vpack.c.b16 %v3452, %v3447
      %v3548 = vpack.c.b16 %v3458, %v3453
      %v3549 = vpack.c.b16 %v3459, %v3454
      %v3550 = vpack.c.b16 %v3460, %v3455
      %v3551 = vpack.c.b16 %v3461, %v3456
      %v3552 = vpack.c.b16 %v3462, %v3457
      %v3553 = vpack.c.b16 %v3468, %v3463
      %v3554 = vpack.c.b16 %v3469, %v3464
      %v3555 = vpack.c.b16 %v3470, %v3465
      %v3556 = vpack.c.b16 %v3471, %v3466
      %v3557 = vpack.c.b16 %v3472, %v3467
      %v3558 = vpack.c.b16 %v3478, %v3473
      %v3559 = vpack.c.b16 %v3479, %v3474
      %v3560 = vpack.c.b16 %v3480, %v3475
      %v3561 = vpack.c.b16 %v3481, %v3476
      %v3562 = vpack.c.b16 %v3482, %v3477
      %v3699 = vunpack.c.l.b16 %v3148
      %v3700 = vunpack.c.l.b16 %v3149
      %v3701 = vunpack.c.l.b16 %v3150
      %v3702 = vunpack.c.l.b16 %v3151
      %v3703 = vunpack.c.l.b16 %v3152
      %v3704 = vunpack.c.l.b16 %v3153
      %v3705 = vunpack.c.l.b16 %v3154
      %v3706 = vunpack.c.l.b16 %v3155
      %v3707 = vunpack.c.l.b16 %v3156
      %v3708 = vunpack.c.l.b16 %v3157
      %v3709 = vunpack.c.l.b16 %v3158
      %v3710 = vunpack.c.l.b16 %v3159
      %v3711 = vunpack.c.l.b16 %v3160
      %v3712 = vunpack.c.l.b16 %v3161
      %v3713 = vunpack.c.l.b16 %v3162
      %v3714 = vunpack.c.l.b16 %v3163
      %v3715 = vunpack.c.l.b16 %v3164
      %v3716 = vunpack.c.l.b16 %v3165
      %v3717 = vunpack.c.l.b16 %v3166
      %v3718 = vunpack.c.l.b16 %v3167
      %v3719 = vunpack.c.l.b16 %v3168
      %v3720 = vunpack.c.l.b16 %v3169
      %v3721 = vunpack.c.l.b16 %v3170
      %v3722 = vunpack.c.l.b16 %v3171
      %v3723 = vunpack.c.l.b16 %v3172
      %v3724 = vunpack.c.l.b16 %v3173
      %v3725 = vunpack.c.l.b16 %v3174
      %v3726 = vunpack.c.l.b16 %v3175
      %v3727 = vunpack.c.l.b16 %v3176
      %v3728 = vunpack.c.l.b16 %v3177
      %v3729 = vunpack.c.l.b16 %v3178
      %v3730 = vunpack.c.l.b16 %v3179
      %v3731 = vunpack.c.l.b16 %v3180
      %v3732 = vunpack.c.l.b16 %v3181
      %v3733 = vunpack.c.l.b16 %v3182
      %v3734 = vunpack.c.l.b16 %v3183
      %v3735 = vunpack.c.l.b16 %v3184
      %v3736 = vunpack.c.l.b16 %v3185
      %v3737 = vunpack.c.l.b16 %v3186
      %v3738 = vunpack.c.l.b16 %v3187
      %v3739 = vunpack.c.l.b16 %v3188
      %v3740 = vunpack.c.l.b16 %v3189
      %v3741 = vunpack.c.l.b16 %v3190
      %v3742 = vunpack.c.l.b16 %v3191
      %v3743 = vunpack.c.l.b16 %v3192
      %v3744 = vunpack.c.l.b16 %v3193
      %v3745 = vunpack.c.l.b16 %v3194
      %v3746 = vunpack.c.l.b16 %v3195
      %v3747 = vunpack.c.l.b16 %v3196
      %v3748 = vunpack.c.l.b16 %v3197
      %v3749 = vunpack.c.l.b16 %v3198
      %v3750 = vunpack.c.l.b16 %v3199
      %v3751 = vunpack.c.l.b16 %v3200
      %v3752 = vunpack.c.l.b16 %v3201
      %v3753 = vunpack.c.l.b16 %v3202
      %v3754 = vunpack.c.l.b16 %v3203
      %v3755 = vunpack.c.l.b16 %v3204
      %v3756 = vunpack.c.l.b16 %v3205
      %v3757 = vunpack.c.l.b16 %v3206
      %v3758 = vunpack.c.l.b16 %v3207
      %v3759 = vunpack.c.l.b16 %v3208
      %v3760 = vunpack.c.l.b16 %v3209
      %v3761 = vunpack.c.l.b16 %v3210
      %v3762 = vunpack.c.l.b16 %v3211
      %v3763 = vunpack.c.l.b16 %v3212
      %v3764 = vunpack.c.l.b16 %v3213
      %v3765 = vunpack.c.l.b16 %v3214
      %v3766 = vunpack.c.l.b16 %v3215
      %v3767 = vunpack.c.l.b16 %v3216
      %v3768 = vunpack.c.l.b16 %v3217
      %v3769 = vunpack.c.l.b16 %v3218
      %v3770 = vunpack.c.l.b16 %v3219
      %v3771 = vpack.c.b16 %v3700, %v3699
      %v3772 = vpack.c.b16 %v3702, %v3701
      %v3773 = vpack.c.b16 %v3704, %v3703
      %v3774 = vpack.c.b16 %v3706, %v3705
      %v3775 = vpack.c.b16 %v3708, %v3707
      %v3776 = vpack.c.b16 %v3710, %v3709
      %v3777 = vpack.c.b16 %v3712, %v3711
      %v3778 = vpack.c.b16 %v3714, %v3713
      %v3779 = vpack.c.b16 %v3716, %v3715
      %v3780 = vpack.c.b16 %v3718, %v3717
      %v3781 = vpack.c.b16 %v3720, %v3719
      %v3782 = vpack.c.b16 %v3722, %v3721
      %v3783 = vpack.c.b16 %v3724, %v3723
      %v3784 = vpack.c.b16 %v3726, %v3725
      %v3785 = vpack.c.b16 %v3728, %v3727
      %v3786 = vpack.c.b16 %v3730, %v3729
      %v3787 = vpack.c.b16 %v3732, %v3731
      %v3788 = vpack.c.b16 %v3734, %v3733
      %v3789 = vpack.c.b16 %v3736, %v3735
      %v3790 = vpack.c.b16 %v3738, %v3737
      %v3791 = vpack.c.b16 %v3740, %v3739
      %v3792 = vpack.c.b16 %v3742, %v3741
      %v3793 = vpack.c.b16 %v3744, %v3743
      %v3794 = vpack.c.b16 %v3746, %v3745
      %v3795 = vpack.c.b16 %v3748, %v3747
      %v3796 = vpack.c.b16 %v3750, %v3749
      %v3797 = vpack.c.b16 %v3752, %v3751
      %v3798 = vpack.c.b16 %v3754, %v3753
      %v3799 = vpack.c.b16 %v3756, %v3755
      %v3800 = vpack.c.b16 %v3758, %v3757
      %v3801 = vpack.c.b16 %v3760, %v3759
      %v3802 = vpack.c.b16 %v3762, %v3761
      %v3803 = vpack.c.b16 %v3764, %v3763
      %v3804 = vpack.c.b16 %v3766, %v3765
      %v3805 = vpack.c.b16 %v3768, %v3767
      %v3806 = vpack.c.b16 %v3770, %v3769
      %vm3843 = vcmask 523264
      %v3845 = vsel %vm3843, %v3487, 0
      %v3848 = vsel %vm3843, %v3492, 0
      %v3851 = vsel %vm3843, %v3497, 0
      %v3854 = vsel %vm3843, %v3502, 0
      %v3857 = vsel %vm3843, %v3507, 0
      %v3860 = vsel %vm3843, %v3512, 0
      %v3863 = vsel %vm3843, %v3517, 0
      %v3866 = vsel %vm3843, %v3522, 0
      %v3869 = vsel %vm3843, %v3527, 0
      %v3872 = vsel %vm3843, %v3532, 0
      %v3875 = vsel %vm3843, %v3537, 0
      %v3878 = vsel %vm3843, %v3542, 0
      %v3881 = vsel %vm3843, %v3547, 0
      %v3884 = vsel %vm3843, %v3552, 0
      %v3887 = vsel %vm3843, %v3557, 0
      %v3890 = vsel %vm3843, %v3562, 0
      %3892 = vmatprep.subr.bf16.mxu0 0
      %3893 = vmatpush1.bf16.msra.mxu0 %v3778
      %3894 = vmatprep.subr.bf16.mxu0 0
      %3895 = vmatpush1.bf16.msra.mxu0 %v3777
      %3896 = vmatprep.subr.bf16.mxu0 0
      %3897 = vmatpush1.bf16.msra.mxu0 %v3776
      %3898 = vmatprep.subr.bf16.mxu0 0
      %3899 = vmatpush1.bf16.msra.mxu0 %v3775
      %3900 = vmatprep.subr.bf16.mxu0 0
      %3901 = vmatpush1.bf16.msra.mxu0 %v3774
      %3902 = vmatprep.subr.bf16.mxu0 0
      %3903 = vmatpush1.bf16.msra.mxu0 %v3773
      %3904 = vmatprep.subr.bf16.mxu0 0
      %3905 = vmatpush1.bf16.msra.mxu0 %v3772
      %3906 = vmatprep.subr.bf16.mxu0 0
      %3907 = vmatpush1.bf16.msra.mxu0 %v3771
      %3908 = vmatprep.subr.bf16.mxu0 0
      %3909 = vmatpush2.bf16.msra.mxu0 %v3786
      %3910 = vmatprep.subr.bf16.mxu0 0
      %3911 = vmatpush2.bf16.msra.mxu0 %v3785
      %3912 = vmatprep.subr.bf16.mxu0 0
      %3913 = vmatpush2.bf16.msra.mxu0 %v3784
      %3914 = vmatprep.subr.bf16.mxu0 0
      %3915 = vmatpush2.bf16.msra.mxu0 %v3783
      %3916 = vmatprep.subr.bf16.mxu0 0
      %3917 = vmatpush2.bf16.msra.mxu0 %v3782
      %3918 = vmatprep.subr.bf16.mxu0 0
      %3919 = vmatpush2.bf16.msra.mxu0 %v3781
      %3920 = vmatprep.subr.bf16.mxu0 0
      %3921 = vmatpush2.bf16.msra.mxu0 %v3780
      %3922 = vmatprep.subr.bf16.mxu0 0
      %3923 = vmatpush2.bf16.msra.mxu0 %v3779
      %3924 = vmatprep.mubr.bf16.mxu0 %v3484
      %3925 = vmatmul.mubr.bf16.gmra.mxu0 %v3483
      %v3926 = vpop.f32.mrf.mxu0
      %v3927 = vadd.f32 %v3225, %v3926
      %v3928 = vpop.f32.mrf.mxu0
      %v3929 = vpop.f32.mrf.mxu0
      %v3930 = vadd.f32 %v3225, %v3929
      %v3931 = vpop.f32.mrf.mxu0
      %3932 = vmatprep.mubr.bf16.mxu0 %v3489
      %3933 = vmatmul.mubr.bf16.gmra.mxu0 %v3488
      %v3934 = vpop.f32.mrf.mxu0
      %v3935 = vadd.f32 %v3225, %v3934
      %v3936 = vpop.f32.mrf.mxu0
      %v3937 = vpop.f32.mrf.mxu0
      %v3938 = vadd.f32 %v3225, %v3937
      %v3939 = vpop.f32.mrf.mxu0
      %3940 = vmatprep.mubr.bf16.mxu0 %v3494
      %3941 = vmatmul.mubr.bf16.gmra.mxu0 %v3493
      %v3942 = vpop.f32.mrf.mxu0
      %v3943 = vadd.f32 %v3225, %v3942
      %v3944 = vpop.f32.mrf.mxu0
      %v3945 = vpop.f32.mrf.mxu0
      %v3946 = vadd.f32 %v3225, %v3945
      %v3947 = vpop.f32.mrf.mxu0
      %3948 = vmatprep.mubr.bf16.mxu0 %v3499
      %3949 = vmatmul.mubr.bf16.gmra.mxu0 %v3498
      %v3950 = vpop.f32.mrf.mxu0
      %v3951 = vadd.f32 %v3225, %v3950
      %v3952 = vpop.f32.mrf.mxu0
      %v3953 = vpop.f32.mrf.mxu0
      %v3954 = vadd.f32 %v3225, %v3953
      %v3955 = vpop.f32.mrf.mxu0
      %3956 = vmatprep.mubr.bf16.mxu0 %v3504
      %3957 = vmatmul.mubr.bf16.gmra.mxu0 %v3503
      %v3958 = vpop.f32.mrf.mxu0
      %v3959 = vadd.f32 %v3225, %v3958
      %v3960 = vpop.f32.mrf.mxu0
      %v3961 = vpop.f32.mrf.mxu0
      %v3962 = vadd.f32 %v3225, %v3961
      %v3963 = vpop.f32.mrf.mxu0
      %3964 = vmatprep.mubr.bf16.mxu0 %v3509
      %3965 = vmatmul.mubr.bf16.gmra.mxu0 %v3508
      %v3966 = vpop.f32.mrf.mxu0
      %v3967 = vadd.f32 %v3225, %v3966
      %v3968 = vpop.f32.mrf.mxu0
      %v3969 = vpop.f32.mrf.mxu0
      %v3970 = vadd.f32 %v3225, %v3969
      %v3971 = vpop.f32.mrf.mxu0
      %3972 = vmatprep.mubr.bf16.mxu0 %v3514
      %3973 = vmatmul.mubr.bf16.gmra.mxu0 %v3513
      %v3974 = vpop.f32.mrf.mxu0
      %v3975 = vadd.f32 %v3225, %v3974
      %v3976 = vpop.f32.mrf.mxu0
      %v3977 = vpop.f32.mrf.mxu0
      %v3978 = vadd.f32 %v3225, %v3977
      %v3979 = vpop.f32.mrf.mxu0
      %3980 = vmatprep.mubr.bf16.mxu0 %v3519
      %3981 = vmatmul.mubr.bf16.gmra.mxu0 %v3518
      %v3982 = vpop.f32.mrf.mxu0
      %v3983 = vadd.f32 %v3225, %v3982
      %v3984 = vpop.f32.mrf.mxu0
      %v3985 = vpop.f32.mrf.mxu0
      %v3986 = vadd.f32 %v3225, %v3985
      %v3987 = vpop.f32.mrf.mxu0
      %3988 = vmatprep.mubr.bf16.mxu0 %v3524
      %3989 = vmatmul.mubr.bf16.gmra.mxu0 %v3523
      %v3990 = vpop.f32.mrf.mxu0
      %v3991 = vadd.f32 %v3225, %v3990
      %v3992 = vpop.f32.mrf.mxu0
      %v3993 = vpop.f32.mrf.mxu0
      %v3994 = vadd.f32 %v3225, %v3993
      %v3995 = vpop.f32.mrf.mxu0
      %3996 = vmatprep.mubr.bf16.mxu0 %v3529
      %3997 = vmatmul.mubr.bf16.gmra.mxu0 %v3528
      %v3998 = vpop.f32.mrf.mxu0
      %v3999 = vadd.f32 %v3225, %v3998
      %v4000 = vpop.f32.mrf.mxu0
      %v4001 = vpop.f32.mrf.mxu0
      %v4002 = vadd.f32 %v3225, %v4001
      %v4003 = vpop.f32.mrf.mxu0
      %4004 = vmatprep.mubr.bf16.mxu0 %v3534
      %4005 = vmatmul.mubr.bf16.gmra.mxu0 %v3533
      %v4006 = vpop.f32.mrf.mxu0
      %v4007 = vadd.f32 %v3225, %v4006
      %v4008 = vpop.f32.mrf.mxu0
      %v4009 = vpop.f32.mrf.mxu0
      %v4010 = vadd.f32 %v3225, %v4009
      %v4011 = vpop.f32.mrf.mxu0
      %4012 = vmatprep.mubr.bf16.mxu0 %v3539
      %4013 = vmatmul.mubr.bf16.gmra.mxu0 %v3538
      %v4014 = vpop.f32.mrf.mxu0
      %v4015 = vadd.f32 %v3225, %v4014
      %v4016 = vpop.f32.mrf.mxu0
      %v4017 = vpop.f32.mrf.mxu0
      %v4018 = vadd.f32 %v3225, %v4017
      %v4019 = vpop.f32.mrf.mxu0
      %4020 = vmatprep.mubr.bf16.mxu0 %v3544
      %4021 = vmatmul.mubr.bf16.gmra.mxu0 %v3543
      %v4022 = vpop.f32.mrf.mxu0
      %v4023 = vadd.f32 %v3225, %v4022
      %v4024 = vpop.f32.mrf.mxu0
      %v4025 = vpop.f32.mrf.mxu0
      %v4026 = vadd.f32 %v3225, %v4025
      %v4027 = vpop.f32.mrf.mxu0
      %4028 = vmatprep.mubr.bf16.mxu0 %v3549
      %4029 = vmatmul.mubr.bf16.gmra.mxu0 %v3548
      %v4030 = vpop.f32.mrf.mxu0
      %v4031 = vadd.f32 %v3225, %v4030
      %v4032 = vpop.f32.mrf.mxu0
      %v4033 = vpop.f32.mrf.mxu0
      %v4034 = vadd.f32 %v3225, %v4033
      %v4035 = vpop.f32.mrf.mxu0
      %4036 = vmatprep.mubr.bf16.mxu0 %v3554
      %4037 = vmatmul.mubr.bf16.gmra.mxu0 %v3553
      %v4038 = vpop.f32.mrf.mxu0
      %v4039 = vadd.f32 %v3225, %v4038
      %v4040 = vpop.f32.mrf.mxu0
      %v4041 = vpop.f32.mrf.mxu0
      %v4042 = vadd.f32 %v3225, %v4041
      %v4043 = vpop.f32.mrf.mxu0
      %4044 = vmatprep.mubr.bf16.mxu0 %v3559
      %4045 = vmatmul.mubr.bf16.gmra.mxu0 %v3558
      %v4046 = vpop.f32.mrf.mxu0
      %v4047 = vadd.f32 %v3225, %v4046
      %v4048 = vpop.f32.mrf.mxu0
      %v4049 = vpop.f32.mrf.mxu0
      %v4050 = vadd.f32 %v3225, %v4049
      %v4051 = vpop.f32.mrf.mxu0
      %4052 = vdwg.mxu0
      %4053 = vmatprep.subr.bf16.mxu0 0
      %4054 = vmatpush1.bf16.msra.mxu0 %v3794
      %4055 = vmatprep.subr.bf16.mxu0 0
      %4056 = vmatpush1.bf16.msra.mxu0 %v3793
      %4057 = vmatprep.subr.bf16.mxu0 0
      %4058 = vmatpush1.bf16.msra.mxu0 %v3792
      %4059 = vmatprep.subr.bf16.mxu0 0
      %4060 = vmatpush1.bf16.msra.mxu0 %v3791
      %4061 = vmatprep.subr.bf16.mxu0 0
      %4062 = vmatpush1.bf16.msra.mxu0 %v3790
      %4063 = vmatprep.subr.bf16.mxu0 0
      %4064 = vmatpush1.bf16.msra.mxu0 %v3789
      %4065 = vmatprep.subr.bf16.mxu0 0
      %4066 = vmatpush1.bf16.msra.mxu0 %v3788
      %4067 = vmatprep.subr.bf16.mxu0 0
      %4068 = vmatpush1.bf16.msra.mxu0 %v3787
      %4069 = vmatprep.subr.bf16.mxu0 0
      %4070 = vmatpush2.bf16.msra.mxu0 %v3802
      %4071 = vmatprep.subr.bf16.mxu0 0
      %4072 = vmatpush2.bf16.msra.mxu0 %v3801
      %4073 = vmatprep.subr.bf16.mxu0 0
      %4074 = vmatpush2.bf16.msra.mxu0 %v3800
      %4075 = vmatprep.subr.bf16.mxu0 0
      %4076 = vmatpush2.bf16.msra.mxu0 %v3799
      %4077 = vmatprep.subr.bf16.mxu0 0
      %4078 = vmatpush2.bf16.msra.mxu0 %v3798
      %4079 = vmatprep.subr.bf16.mxu0 0
      %4080 = vmatpush2.bf16.msra.mxu0 %v3797
      %4081 = vmatprep.subr.bf16.mxu0 0
      %4082 = vmatpush2.bf16.msra.mxu0 %v3796
      %4083 = vmatprep.subr.bf16.mxu0 0
      %4084 = vmatpush2.bf16.msra.mxu0 %v3795
      %4085 = vmatprep.mubr.bf16.mxu0 %v3486
      %4086 = vmatmul.mubr.bf16.gmra.mxu0 %v3485
      %v4087 = vpop.f32.mrf.mxu0
      %v4088 = vadd.f32 %v3927, %v4087
      %v4089 = vpop.f32.mrf.mxu0
      %v4090 = vpop.f32.mrf.mxu0
      %v4091 = vadd.f32 %v3930, %v4090
      %v4092 = vpop.f32.mrf.mxu0
      %4093 = vmatprep.mubr.bf16.mxu0 %v3491
      %4094 = vmatmul.mubr.bf16.gmra.mxu0 %v3490
      %v4095 = vpop.f32.mrf.mxu0
      %v4096 = vadd.f32 %v3935, %v4095
      %v4097 = vpop.f32.mrf.mxu0
      %v4098 = vpop.f32.mrf.mxu0
      %v4099 = vadd.f32 %v3938, %v4098
      %v4100 = vpop.f32.mrf.mxu0
      %4101 = vmatprep.mubr.bf16.mxu0 %v3496
      %4102 = vmatmul.mubr.bf16.gmra.mxu0 %v3495
      %v4103 = vpop.f32.mrf.mxu0
      %v4104 = vadd.f32 %v3943, %v4103
      %v4105 = vpop.f32.mrf.mxu0
      %v4106 = vpop.f32.mrf.mxu0
      %v4107 = vadd.f32 %v3946, %v4106
      %v4108 = vpop.f32.mrf.mxu0
      %4109 = vmatprep.mubr.bf16.mxu0 %v3501
      %4110 = vmatmul.mubr.bf16.gmra.mxu0 %v3500
      %v4111 = vpop.f32.mrf.mxu0
      %v4112 = vadd.f32 %v3951, %v4111
      %v4113 = vpop.f32.mrf.mxu0
      %v4114 = vpop.f32.mrf.mxu0
      %v4115 = vadd.f32 %v3954, %v4114
      %v4116 = vpop.f32.mrf.mxu0
      %4117 = vmatprep.mubr.bf16.mxu0 %v3506
      %4118 = vmatmul.mubr.bf16.gmra.mxu0 %v3505
      %v4119 = vpop.f32.mrf.mxu0
      %v4120 = vadd.f32 %v3959, %v4119
      %v4121 = vpop.f32.mrf.mxu0
      %v4122 = vpop.f32.mrf.mxu0
      %v4123 = vadd.f32 %v3962, %v4122
      %v4124 = vpop.f32.mrf.mxu0
      %4125 = vmatprep.mubr.bf16.mxu0 %v3511
      %4126 = vmatmul.mubr.bf16.gmra.mxu0 %v3510
      %v4127 = vpop.f32.mrf.mxu0
      %v4128 = vadd.f32 %v3967, %v4127
      %v4129 = vpop.f32.mrf.mxu0
      %v4130 = vpop.f32.mrf.mxu0
      %v4131 = vadd.f32 %v3970, %v4130
      %v4132 = vpop.f32.mrf.mxu0
      %4133 = vmatprep.mubr.bf16.mxu0 %v3516
      %4134 = vmatmul.mubr.bf16.gmra.mxu0 %v3515
      %v4135 = vpop.f32.mrf.mxu0
      %v4136 = vadd.f32 %v3975, %v4135
      %v4137 = vpop.f32.mrf.mxu0
      %v4138 = vpop.f32.mrf.mxu0
      %v4139 = vadd.f32 %v3978, %v4138
      %v4140 = vpop.f32.mrf.mxu0
      %4141 = vmatprep.mubr.bf16.mxu0 %v3521
      %4142 = vmatmul.mubr.bf16.gmra.mxu0 %v3520
      %v4143 = vpop.f32.mrf.mxu0
      %v4144 = vadd.f32 %v3983, %v4143
      %v4145 = vpop.f32.mrf.mxu0
      %v4146 = vpop.f32.mrf.mxu0
      %v4147 = vadd.f32 %v3986, %v4146
      %v4148 = vpop.f32.mrf.mxu0
      %4149 = vmatprep.mubr.bf16.mxu0 %v3526
      %4150 = vmatmul.mubr.bf16.gmra.mxu0 %v3525
      %v4151 = vpop.f32.mrf.mxu0
      %v4152 = vadd.f32 %v3991, %v4151
      %v4153 = vpop.f32.mrf.mxu0
      %v4154 = vpop.f32.mrf.mxu0
      %v4155 = vadd.f32 %v3994, %v4154
      %v4156 = vpop.f32.mrf.mxu0
      %4157 = vmatprep.mubr.bf16.mxu0 %v3531
      %4158 = vmatmul.mubr.bf16.gmra.mxu0 %v3530
      %v4159 = vpop.f32.mrf.mxu0
      %v4160 = vadd.f32 %v3999, %v4159
      %v4161 = vpop.f32.mrf.mxu0
      %v4162 = vpop.f32.mrf.mxu0
      %v4163 = vadd.f32 %v4002, %v4162
      %v4164 = vpop.f32.mrf.mxu0
      %4165 = vmatprep.mubr.bf16.mxu0 %v3536
      %4166 = vmatmul.mubr.bf16.gmra.mxu0 %v3535
      %v4167 = vpop.f32.mrf.mxu0
      %v4168 = vadd.f32 %v4007, %v4167
      %v4169 = vpop.f32.mrf.mxu0
      %v4170 = vpop.f32.mrf.mxu0
      %v4171 = vadd.f32 %v4010, %v4170
      %v4172 = vpop.f32.mrf.mxu0
      %4173 = vmatprep.mubr.bf16.mxu0 %v3541
      %4174 = vmatmul.mubr.bf16.gmra.mxu0 %v3540
      %v4175 = vpop.f32.mrf.mxu0
      %v4176 = vadd.f32 %v4015, %v4175
      %v4177 = vpop.f32.mrf.mxu0
      %v4178 = vpop.f32.mrf.mxu0
      %v4179 = vadd.f32 %v4018, %v4178
      %v4180 = vpop.f32.mrf.mxu0
      %4181 = vmatprep.mubr.bf16.mxu0 %v3546
      %4182 = vmatmul.mubr.bf16.gmra.mxu0 %v3545
      %v4183 = vpop.f32.mrf.mxu0
      %v4184 = vadd.f32 %v4023, %v4183
      %v4185 = vpop.f32.mrf.mxu0
      %v4186 = vpop.f32.mrf.mxu0
      %v4187 = vadd.f32 %v4026, %v4186
      %v4188 = vpop.f32.mrf.mxu0
      %4189 = vmatprep.mubr.bf16.mxu0 %v3551
      %4190 = vmatmul.mubr.bf16.gmra.mxu0 %v3550
      %v4191 = vpop.f32.mrf.mxu0
      %v4192 = vadd.f32 %v4031, %v4191
      %v4193 = vpop.f32.mrf.mxu0
      %v4194 = vpop.f32.mrf.mxu0
      %v4195 = vadd.f32 %v4034, %v4194
      %v4196 = vpop.f32.mrf.mxu0
      %4197 = vmatprep.mubr.bf16.mxu0 %v3556
      %4198 = vmatmul.mubr.bf16.gmra.mxu0 %v3555
      %v4199 = vpop.f32.mrf.mxu0
      %v4200 = vadd.f32 %v4039, %v4199
      %v4201 = vpop.f32.mrf.mxu0
      %v4202 = vpop.f32.mrf.mxu0
      %v4203 = vadd.f32 %v4042, %v4202
      %v4204 = vpop.f32.mrf.mxu0
      %4205 = vmatprep.mubr.bf16.mxu0 %v3561
      %4206 = vmatmul.mubr.bf16.gmra.mxu0 %v3560
      %v4207 = vpop.f32.mrf.mxu0
      %v4208 = vadd.f32 %v4047, %v4207
      %v4209 = vpop.f32.mrf.mxu0
      %v4210 = vpop.f32.mrf.mxu0
      %v4211 = vadd.f32 %v4050, %v4210
      %v4212 = vpop.f32.mrf.mxu0
      %4213 = vdwg.mxu0
      %4214 = vmatprep.subr.bf16.mxu0 0
      %4215 = vmatpush1.bf16.msra.mxu0 0
      %4216 = vmatprep.subr.bf16.mxu0 0
      %4217 = vmatpush1.bf16.msra.mxu0 0
      %4218 = vmatprep.subr.bf16.mxu0 0
      %4219 = vmatpush1.bf16.msra.mxu0 0
      %4220 = vmatprep.subr.bf16.mxu0 0
      %4221 = vmatpush1.bf16.msra.mxu0 0
      %4222 = vmatprep.subr.bf16.mxu0 0
      %4223 = vmatpush1.bf16.msra.mxu0 %v3806
      %4224 = vmatprep.subr.bf16.mxu0 0
      %4225 = vmatpush1.bf16.msra.mxu0 %v3805
      %4226 = vmatprep.subr.bf16.mxu0 0
      %4227 = vmatpush1.bf16.msra.mxu0 %v3804
      %4228 = vmatprep.subr.bf16.mxu0 0
      %4229 = vmatpush1.bf16.msra.mxu0 %v3803
      %4230 = vmatprep.subr.bf16.mxu0 0
      %4231 = vmatpush2.bf16.msra.mxu0 0
      %4232 = vmatprep.subr.bf16.mxu0 0
      %4233 = vmatpush2.bf16.msra.mxu0 0
      %4234 = vmatprep.subr.bf16.mxu0 0
      %4235 = vmatpush2.bf16.msra.mxu0 0
      %4236 = vmatprep.subr.bf16.mxu0 0
      %4237 = vmatpush2.bf16.msra.mxu0 0
      %4238 = vmatprep.subr.bf16.mxu0 0
      %4239 = vmatpush2.bf16.msra.mxu0 0
      %4240 = vmatprep.subr.bf16.mxu0 0
      %4241 = vmatpush2.bf16.msra.mxu0 0
      %4242 = vmatprep.subr.bf16.mxu0 0
      %4243 = vmatpush2.bf16.msra.mxu0 0
      %4244 = vmatprep.subr.bf16.mxu0 0
      %4245 = vmatpush2.bf16.msra.mxu0 0
      %4246 = vmatprep.mubr.bf16.mxu0 0
      %4247 = vmatmul.mubr.bf16.gmra.mxu0 %v3845
      %v4248 = vpop.f32.mrf.mxu0
      %v4249 = vadd.f32 %v4088, %v4248
      %v4250 = vpop.f32.mrf.mxu0
      %v4251 = vpop.f32.mrf.mxu0
      %v4252 = vadd.f32 %v4091, %v4251
      %v4253 = vpop.f32.mrf.mxu0
      %4254 = vmatprep.mubr.bf16.mxu0 0
      %4255 = vmatmul.mubr.bf16.gmra.mxu0 %v3848
      %v4256 = vpop.f32.mrf.mxu0
      %v4257 = vadd.f32 %v4096, %v4256
      %v4258 = vpop.f32.mrf.mxu0
      %v4259 = vpop.f32.mrf.mxu0
      %v4260 = vadd.f32 %v4099, %v4259
      %v4261 = vpop.f32.mrf.mxu0
      %4262 = vmatprep.mubr.bf16.mxu0 0
      %4263 = vmatmul.mubr.bf16.gmra.mxu0 %v3851
      %v4264 = vpop.f32.mrf.mxu0
      %v4265 = vadd.f32 %v4104, %v4264
      %v4266 = vpop.f32.mrf.mxu0
      %v4267 = vpop.f32.mrf.mxu0
      %v4268 = vadd.f32 %v4107, %v4267
      %v4269 = vpop.f32.mrf.mxu0
      %4270 = vmatprep.mubr.bf16.mxu0 0
      %4271 = vmatmul.mubr.bf16.gmra.mxu0 %v3854
      %v4272 = vpop.f32.mrf.mxu0
      %v4273 = vadd.f32 %v4112, %v4272
      %v4274 = vpop.f32.mrf.mxu0
      %v4275 = vpop.f32.mrf.mxu0
      %v4276 = vadd.f32 %v4115, %v4275
      %v4277 = vpop.f32.mrf.mxu0
      %4278 = vmatprep.mubr.bf16.mxu0 0
      %4279 = vmatmul.mubr.bf16.gmra.mxu0 %v3857
      %v4280 = vpop.f32.mrf.mxu0
      %v4281 = vadd.f32 %v4120, %v4280
      %v4282 = vpop.f32.mrf.mxu0
      %v4283 = vpop.f32.mrf.mxu0
      %v4284 = vadd.f32 %v4123, %v4283
      %v4285 = vpop.f32.mrf.mxu0
      %4286 = vmatprep.mubr.bf16.mxu0 0
      %4287 = vmatmul.mubr.bf16.gmra.mxu0 %v3860
      %v4288 = vpop.f32.mrf.mxu0
      %v4289 = vadd.f32 %v4128, %v4288
      %v4290 = vpop.f32.mrf.mxu0
      %v4291 = vpop.f32.mrf.mxu0
      %v4292 = vadd.f32 %v4131, %v4291
      %v4293 = vpop.f32.mrf.mxu0
      %4294 = vmatprep.mubr.bf16.mxu0 0
      %4295 = vmatmul.mubr.bf16.gmra.mxu0 %v3863
      %v4296 = vpop.f32.mrf.mxu0
      %v4297 = vadd.f32 %v4136, %v4296
      %v4298 = vpop.f32.mrf.mxu0
      %v4299 = vpop.f32.mrf.mxu0
      %v4300 = vadd.f32 %v4139, %v4299
      %v4301 = vpop.f32.mrf.mxu0
      %4302 = vmatprep.mubr.bf16.mxu0 0
      %4303 = vmatmul.mubr.bf16.gmra.mxu0 %v3866
      %v4304 = vpop.f32.mrf.mxu0
      %v4305 = vadd.f32 %v4144, %v4304
      %v4306 = vpop.f32.mrf.mxu0
      %v4307 = vpop.f32.mrf.mxu0
      %v4308 = vadd.f32 %v4147, %v4307
      %v4309 = vpop.f32.mrf.mxu0
      %4310 = vmatprep.mubr.bf16.mxu0 0
      %4311 = vmatmul.mubr.bf16.gmra.mxu0 %v3869
      %v4312 = vpop.f32.mrf.mxu0
      %v4313 = vadd.f32 %v4152, %v4312
      %v4314 = vpop.f32.mrf.mxu0
      %v4315 = vpop.f32.mrf.mxu0
      %v4316 = vadd.f32 %v4155, %v4315
      %v4317 = vpop.f32.mrf.mxu0
      %4318 = vmatprep.mubr.bf16.mxu0 0
      %4319 = vmatmul.mubr.bf16.gmra.mxu0 %v3872
      %v4320 = vpop.f32.mrf.mxu0
      %v4321 = vadd.f32 %v4160, %v4320
      %v4322 = vpop.f32.mrf.mxu0
      %v4323 = vpop.f32.mrf.mxu0
      %v4324 = vadd.f32 %v4163, %v4323
      %v4325 = vpop.f32.mrf.mxu0
      %4326 = vmatprep.mubr.bf16.mxu0 0
      %4327 = vmatmul.mubr.bf16.gmra.mxu0 %v3875
      %v4328 = vpop.f32.mrf.mxu0
      %v4329 = vadd.f32 %v4168, %v4328
      %v4330 = vpop.f32.mrf.mxu0
      %v4331 = vpop.f32.mrf.mxu0
      %v4332 = vadd.f32 %v4171, %v4331
      %v4333 = vpop.f32.mrf.mxu0
      %4334 = vmatprep.mubr.bf16.mxu0 0
      %4335 = vmatmul.mubr.bf16.gmra.mxu0 %v3878
      %v4336 = vpop.f32.mrf.mxu0
      %v4337 = vadd.f32 %v4176, %v4336
      %v4338 = vpop.f32.mrf.mxu0
      %v4339 = vpop.f32.mrf.mxu0
      %v4340 = vadd.f32 %v4179, %v4339
      %v4341 = vpop.f32.mrf.mxu0
      %4342 = vmatprep.mubr.bf16.mxu0 0
      %4343 = vmatmul.mubr.bf16.gmra.mxu0 %v3881
      %v4344 = vpop.f32.mrf.mxu0
      %v4345 = vadd.f32 %v4184, %v4344
      %v4346 = vpop.f32.mrf.mxu0
      %v4347 = vpop.f32.mrf.mxu0
      %v4348 = vadd.f32 %v4187, %v4347
      %v4349 = vpop.f32.mrf.mxu0
      %4350 = vmatprep.mubr.bf16.mxu0 0
      %4351 = vmatmul.mubr.bf16.gmra.mxu0 %v3884
      %v4352 = vpop.f32.mrf.mxu0
      %v4353 = vadd.f32 %v4192, %v4352
      %v4354 = vpop.f32.mrf.mxu0
      %v4355 = vpop.f32.mrf.mxu0
      %v4356 = vadd.f32 %v4195, %v4355
      %v4357 = vpop.f32.mrf.mxu0
      %4358 = vmatprep.mubr.bf16.mxu0 0
      %4359 = vmatmul.mubr.bf16.gmra.mxu0 %v3887
      %v4360 = vpop.f32.mrf.mxu0
      %v4361 = vadd.f32 %v4200, %v4360
      %v4362 = vpop.f32.mrf.mxu0
      %v4363 = vpop.f32.mrf.mxu0
      %v4364 = vadd.f32 %v4203, %v4363
      %v4365 = vpop.f32.mrf.mxu0
      %4366 = vmatprep.mubr.bf16.mxu0 0
      %4367 = vmatmul.mubr.bf16.gmra.mxu0 %v3890
      %v4368 = vpop.f32.mrf.mxu0
      %v4369 = vadd.f32 %v4208, %v4368
      %v4370 = vpop.f32.mrf.mxu0
      %v4371 = vpop.f32.mrf.mxu0
      %v4372 = vadd.f32 %v4211, %v4371
      %v4373 = vpop.f32.mrf.mxu0
      %4374 = vdwg.mxu0
      %v4375 = vmax.f32 %v4249, 0.0
      %v4376 = vmax.f32 %v4252, 0.0
      %v4377 = vmax.f32 %v4257, 0.0
      %v4378 = vmax.f32 %v4260, 0.0
      %v4379 = vmax.f32 %v4265, 0.0
      %v4380 = vmax.f32 %v4268, 0.0
      %v4381 = vmax.f32 %v4273, 0.0
      %v4382 = vmax.f32 %v4276, 0.0
      %v4383 = vmax.f32 %v4281, 0.0
      %v4384 = vmax.f32 %v4284, 0.0
      %v4385 = vmax.f32 %v4289, 0.0
      %v4386 = vmax.f32 %v4292, 0.0
      %v4387 = vmax.f32 %v4297, 0.0
      %v4388 = vmax.f32 %v4300, 0.0
      %v4389 = vmax.f32 %v4305, 0.0
      %v4390 = vmax.f32 %v4308, 0.0
      %v4391 = vmax.f32 %v4313, 0.0
      %v4392 = vmax.f32 %v4316, 0.0
      %v4393 = vmax.f32 %v4321, 0.0
      %v4394 = vmax.f32 %v4324, 0.0
      %v4395 = vmax.f32 %v4329, 0.0
      %v4396 = vmax.f32 %v4332, 0.0
      %v4397 = vmax.f32 %v4337, 0.0
      %v4398 = vmax.f32 %v4340, 0.0
      %v4399 = vmax.f32 %v4345, 0.0
      %v4400 = vmax.f32 %v4348, 0.0
      %v4401 = vmax.f32 %v4353, 0.0
      %v4402 = vmax.f32 %v4356, 0.0
      %v4403 = vmax.f32 %v4361, 0.0
      %v4404 = vmax.f32 %v4364, 0.0
      %v4405 = vmax.f32 %v4369, 0.0
      %v4406 = vmax.f32 %v4372, 0.0
      %v4407 = vpack.c.bf16 %v4376, %v4375
      %v4408 = vpack.c.bf16 %v4378, %v4377
      %v4409 = vpack.c.bf16 %v4380, %v4379
      %v4410 = vpack.c.bf16 %v4382, %v4381
      %v4411 = vpack.c.bf16 %v4384, %v4383
      %v4412 = vpack.c.bf16 %v4386, %v4385
      %v4413 = vpack.c.bf16 %v4388, %v4387
      %v4414 = vpack.c.bf16 %v4390, %v4389
      %v4415 = vpack.c.bf16 %v4392, %v4391
      %v4416 = vpack.c.bf16 %v4394, %v4393
      %v4417 = vpack.c.bf16 %v4396, %v4395
      %v4418 = vpack.c.bf16 %v4398, %v4397
      %v4419 = vpack.c.bf16 %v4400, %v4399
      %v4420 = vpack.c.bf16 %v4402, %v4401
      %v4421 = vpack.c.bf16 %v4404, %v4403
      %v4422 = vpack.c.bf16 %v4406, %v4405
      %4423 = vst.msk [vmem:[#allocation2] sm:$0xf] %vm258, 0
      %4424 = vst.msk [vmem:[#allocation2 + $0x4] sm:$0xf] %vm258, 0
      %vm4425 = vcmask 516096
      %4426 = vst.msk [vmem:[#allocation2 + $0x8] sm:$0x1] %vm4425, 0
      %s4427 = scalar_lea.vmem [#allocation2], 204
      %4428 = vst.msk [vmem:[%s4427] sm:$0xf] %vm258, 0
      %4429 = vst.msk [vmem:[%s4427 + $0x4] sm:$0xf] %vm258, 0
      %4430 = vst.msk [vmem:[%s4427 + $0x8] sm:$0x1] %vm4425, 0
      %vm4431 = vcmask 516096
      %vm4432 = vsmask.f32 256
      %vm4433 = vmand %vm4431, %vm4432
      %v4434 = vld [vmem:[#allocation2] sm:$0x1]
      %v4435 = vsel %vm4433, 0, %v4434
      %4436 = vst [vmem:[#allocation2] sm:$0x1] %v4435
      %v4437 = vld [vmem:[#allocation2 + $0xc] sm:$0x1]
      %v4438 = vsel %vm4433, 0, %v4437
      %4439 = vst [vmem:[#allocation2 + $0xc] sm:$0x1] %v4438
      %v4440 = vld [vmem:[#allocation2 + $0x18] sm:$0x1]
      %v4441 = vsel %vm4433, 0, %v4440
      %4442 = vst [vmem:[#allocation2 + $0x18] sm:$0x1] %v4441
      %v4443 = vld [vmem:[#allocation2 + $0x24] sm:$0x1]
      %v4444 = vsel %vm4433, 0, %v4443
      %4445 = vst [vmem:[#allocation2 + $0x24] sm:$0x1] %v4444
      %v4446 = vld [vmem:[#allocation2 + $0x30] sm:$0x1]
      %v4447 = vsel %vm4433, 0, %v4446
      %4448 = vst [vmem:[#allocation2 + $0x30] sm:$0x1] %v4447
      %v4449 = vld [vmem:[#allocation2 + $0x3c] sm:$0x1]
      %v4450 = vsel %vm4433, 0, %v4449
      %4451 = vst [vmem:[#allocation2 + $0x3c] sm:$0x1] %v4450
      %v4452 = vld [vmem:[#allocation2 + $0x48] sm:$0x1]
      %v4453 = vsel %vm4433, 0, %v4452
      %4454 = vst [vmem:[#allocation2 + $0x48] sm:$0x1] %v4453
      %v4455 = vld [vmem:[#allocation2 + $0x54] sm:$0x1]
      %v4456 = vsel %vm4433, 0, %v4455
      %4457 = vst [vmem:[#allocation2 + $0x54] sm:$0x1] %v4456
      %v4458 = vld [vmem:[#allocation2 + $0x60] sm:$0x1]
      %v4459 = vsel %vm4433, 0, %v4458
      %4460 = vst [vmem:[#allocation2 + $0x60] sm:$0x1] %v4459
      %v4461 = vld [vmem:[#allocation2 + $0x6c] sm:$0x1]
      %v4462 = vsel %vm4433, 0, %v4461
      %4463 = vst [vmem:[#allocation2 + $0x6c] sm:$0x1] %v4462
      %v4464 = vld [vmem:[#allocation2 + $0x78] sm:$0x1]
      %v4465 = vsel %vm4433, 0, %v4464
      %4466 = vst [vmem:[#allocation2 + $0x78] sm:$0x1] %v4465
      %v4467 = vld [vmem:[#allocation2 + $0x84] sm:$0x1]
      %v4468 = vsel %vm4433, 0, %v4467
      %4469 = vst [vmem:[#allocation2 + $0x84] sm:$0x1] %v4468
      %v4470 = vld [vmem:[#allocation2 + $0x90] sm:$0x1]
      %v4471 = vsel %vm4433, 0, %v4470
      %4472 = vst [vmem:[#allocation2 + $0x90] sm:$0x1] %v4471
      %v4473 = vld [vmem:[#allocation2 + $0x9c] sm:$0x1]
      %v4474 = vsel %vm4433, 0, %v4473
      %4475 = vst [vmem:[#allocation2 + $0x9c] sm:$0x1] %v4474
      %v4476 = vld [vmem:[#allocation2 + $0xa8] sm:$0x1]
      %v4477 = vsel %vm4433, 0, %v4476
      %4478 = vst [vmem:[#allocation2 + $0xa8] sm:$0x1] %v4477
      %v4479 = vld [vmem:[#allocation2 + $0xb4] sm:$0x1]
      %v4480 = vsel %vm4433, 0, %v4479
      %4481 = vst [vmem:[#allocation2 + $0xb4] sm:$0x1] %v4480
      %v4482 = vld [vmem:[#allocation2 + $0xc0] sm:$0x1]
      %v4483 = vsel %vm4433, 0, %v4482
      %4484 = vst [vmem:[#allocation2 + $0xc0] sm:$0x1] %v4483
      %v4485 = vld [vmem:[#allocation2 + $0xcc] sm:$0x1]
      %v4486 = vsel %vm4433, 0, %v4485
      %4487 = vst [vmem:[#allocation2 + $0xcc] sm:$0x1] %v4486
      %vm4488 = vsmask.f32 7938
      %vm4489 = vmand %vm4431, %vm4488
      %v4490 = vld [vmem:[#allocation2 + $0x8] sm:$0x1]
      %v4491 = vsel %vm4489, 0, %v4490
      %4492 = vst [vmem:[#allocation2 + $0x8] sm:$0x1] %v4491
      %v4493 = vld [vmem:[#allocation2 + $0x14] sm:$0x1]
      %v4494 = vsel %vm4489, 0, %v4493
      %4495 = vst [vmem:[#allocation2 + $0x14] sm:$0x1] %v4494
      %v4496 = vld [vmem:[#allocation2 + $0x20] sm:$0x1]
      %v4497 = vsel %vm4489, 0, %v4496
      %4498 = vst [vmem:[#allocation2 + $0x20] sm:$0x1] %v4497
      %v4499 = vld [vmem:[#allocation2 + $0x2c] sm:$0x1]
      %v4500 = vsel %vm4489, 0, %v4499
      %4501 = vst [vmem:[#allocation2 + $0x2c] sm:$0x1] %v4500
      %v4502 = vld [vmem:[#allocation2 + $0x38] sm:$0x1]
      %v4503 = vsel %vm4489, 0, %v4502
      %4504 = vst [vmem:[#allocation2 + $0x38] sm:$0x1] %v4503
      %v4505 = vld [vmem:[#allocation2 + $0x44] sm:$0x1]
      %v4506 = vsel %vm4489, 0, %v4505
      %4507 = vst [vmem:[#allocation2 + $0x44] sm:$0x1] %v4506
      %v4508 = vld [vmem:[#allocation2 + $0x50] sm:$0x1]
      %v4509 = vsel %vm4489, 0, %v4508
      %4510 = vst [vmem:[#allocation2 + $0x50] sm:$0x1] %v4509
      %v4511 = vld [vmem:[#allocation2 + $0x5c] sm:$0x1]
      %v4512 = vsel %vm4489, 0, %v4511
      %4513 = vst [vmem:[#allocation2 + $0x5c] sm:$0x1] %v4512
      %v4514 = vld [vmem:[#allocation2 + $0x68] sm:$0x1]
      %v4515 = vsel %vm4489, 0, %v4514
      %4516 = vst [vmem:[#allocation2 + $0x68] sm:$0x1] %v4515
      %v4517 = vld [vmem:[#allocation2 + $0x74] sm:$0x1]
      %v4518 = vsel %vm4489, 0, %v4517
      %4519 = vst [vmem:[#allocation2 + $0x74] sm:$0x1] %v4518
      %v4520 = vld [vmem:[#allocation2 + $0x80] sm:$0x1]
      %v4521 = vsel %vm4489, 0, %v4520
      %4522 = vst [vmem:[#allocation2 + $0x80] sm:$0x1] %v4521
      %v4523 = vld [vmem:[#allocation2 + $0x8c] sm:$0x1]
      %v4524 = vsel %vm4489, 0, %v4523
      %4525 = vst [vmem:[#allocation2 + $0x8c] sm:$0x1] %v4524
      %v4526 = vld [vmem:[#allocation2 + $0x98] sm:$0x1]
      %v4527 = vsel %vm4489, 0, %v4526
      %4528 = vst [vmem:[#allocation2 + $0x98] sm:$0x1] %v4527
      %v4529 = vld [vmem:[#allocation2 + $0xa4] sm:$0x1]
      %v4530 = vsel %vm4489, 0, %v4529
      %4531 = vst [vmem:[#allocation2 + $0xa4] sm:$0x1] %v4530
      %v4532 = vld [vmem:[#allocation2 + $0xb0] sm:$0x1]
      %v4533 = vsel %vm4489, 0, %v4532
      %4534 = vst [vmem:[#allocation2 + $0xb0] sm:$0x1] %v4533
      %v4535 = vld [vmem:[#allocation2 + $0xbc] sm:$0x1]
      %v4536 = vsel %vm4489, 0, %v4535
      %4537 = vst [vmem:[#allocation2 + $0xbc] sm:$0x1] %v4536
      %v4538 = vld [vmem:[#allocation2 + $0xc8] sm:$0x1]
      %v4539 = vsel %vm4489, 0, %v4538
      %4540 = vst [vmem:[#allocation2 + $0xc8] sm:$0x1] %v4539
      %v4541 = vld [vmem:[#allocation2 + $0xd4] sm:$0x1]
      %v4542 = vsel %vm4489, 0, %v4541
      %4543 = vst [vmem:[#allocation2 + $0xd4] sm:$0x1] %v4542
      %v4560 = vunpack.c.l.b16 %v4407
      %v4561 = vunpack.c.h.b16 %v4407
      %v4562 = vunpack.c.l.b16 %v4408
      %v4563 = vunpack.c.h.b16 %v4408
      %v4564 = vunpack.c.l.b16 %v4409
      %v4565 = vunpack.c.h.b16 %v4409
      %v4566 = vunpack.c.l.b16 %v4410
      %v4567 = vunpack.c.h.b16 %v4410
      %v4568 = vunpack.c.l.b16 %v4411
      %v4569 = vunpack.c.h.b16 %v4411
      %v4570 = vunpack.c.l.b16 %v4412
      %v4571 = vunpack.c.h.b16 %v4412
      %v4572 = vunpack.c.l.b16 %v4413
      %v4573 = vunpack.c.h.b16 %v4413
      %v4574 = vunpack.c.l.b16 %v4414
      %v4575 = vunpack.c.h.b16 %v4414
      %v4576 = vunpack.c.l.b16 %v4415
      %v4577 = vunpack.c.h.b16 %v4415
      %v4578 = vunpack.c.l.b16 %v4416
      %v4579 = vunpack.c.h.b16 %v4416
      %v4580 = vunpack.c.l.b16 %v4417
      %v4581 = vunpack.c.h.b16 %v4417
      %v4582 = vunpack.c.l.b16 %v4418
      %v4583 = vunpack.c.h.b16 %v4418
      %v4584 = vunpack.c.l.b16 %v4419
      %v4585 = vunpack.c.h.b16 %v4419
      %v4586 = vunpack.c.l.b16 %v4420
      %v4587 = vunpack.c.h.b16 %v4420
      %v4588 = vunpack.c.l.b16 %v4421
      %v4589 = vunpack.c.h.b16 %v4421
      %v4590 = vunpack.c.l.b16 %v4422
      %v4591 = vunpack.c.h.b16 %v4422
      %v4592 = vpack.c.b16 %v4560, %v4560
      %v4593 = vpack.c.b16 %v4561, %v4561
      %v4594 = vpack.c.b16 %v4562, %v4562
      %v4595 = vpack.c.b16 %v4563, %v4563
      %v4596 = vpack.c.b16 %v4564, %v4564
      %v4597 = vpack.c.b16 %v4565, %v4565
      %v4598 = vpack.c.b16 %v4566, %v4566
      %v4599 = vpack.c.b16 %v4567, %v4567
      %v4600 = vpack.c.b16 %v4568, %v4568
      %v4601 = vpack.c.b16 %v4569, %v4569
      %v4602 = vpack.c.b16 %v4570, %v4570
      %v4603 = vpack.c.b16 %v4571, %v4571
      %v4604 = vpack.c.b16 %v4572, %v4572
      %v4605 = vpack.c.b16 %v4573, %v4573
      %v4606 = vpack.c.b16 %v4574, %v4574
      %v4607 = vpack.c.b16 %v4575, %v4575
      %v4608 = vpack.c.b16 %v4576, %v4576
      %v4609 = vpack.c.b16 %v4577, %v4577
      %v4610 = vpack.c.b16 %v4578, %v4578
      %v4611 = vpack.c.b16 %v4579, %v4579
      %v4612 = vpack.c.b16 %v4580, %v4580
      %v4613 = vpack.c.b16 %v4581, %v4581
      %v4614 = vpack.c.b16 %v4582, %v4582
      %v4615 = vpack.c.b16 %v4583, %v4583
      %v4616 = vpack.c.b16 %v4584, %v4584
      %v4617 = vpack.c.b16 %v4585, %v4585
      %v4618 = vpack.c.b16 %v4586, %v4586
      %v4619 = vpack.c.b16 %v4587, %v4587
      %v4620 = vpack.c.b16 %v4588, %v4588
      %v4621 = vpack.c.b16 %v4589, %v4589
      %v4622 = vpack.c.b16 %v4590, %v4590
      %v4623 = vpack.c.b16 %v4591, %v4591
      %vm4624 = vsmask.f32 4368
      %vm4625 = vmor %vm4432, %vm4624
      %v4627 = vshrl.u32 %v4592, 16
      %v4629 = vrot.slane %v4627, 7
      %v4630 = vshll.u32 %v4592, 16
      %v4632 = vor.u32 %v4629, %v4630
      %v4633 = vrot.slane %v4629, 4
      %v4635 = vshrl.u32 %v4593, 16
      %v4637 = vrot.slane %v4635, 7
      %v4638 = vshll.u32 %v4593, 16
      %v4640 = vor.u32 %v4637, %v4638
      %v4641 = vsel %vm4625, %v4633, %v4640
      %v4642 = vrot.slane %v4637, 4
      %v4644 = vshrl.u32 %v4594, 16
      %v4646 = vrot.slane %v4644, 7
      %v4647 = vshll.u32 %v4594, 16
      %v4649 = vor.u32 %v4646, %v4647
      %v4650 = vrot.slane %v4646, 4
      %v4652 = vshrl.u32 %v4595, 16
      %v4654 = vrot.slane %v4652, 7
      %v4655 = vshll.u32 %v4595, 16
      %v4657 = vor.u32 %v4654, %v4655
      %v4658 = vsel %vm4625, %v4650, %v4657
      %v4659 = vrot.slane %v4654, 4
      %v4661 = vshrl.u32 %v4596, 16
      %v4663 = vrot.slane %v4661, 7
      %v4664 = vshll.u32 %v4596, 16
      %v4666 = vor.u32 %v4663, %v4664
      %v4667 = vrot.slane %v4663, 4
      %v4669 = vshrl.u32 %v4597, 16
      %v4671 = vrot.slane %v4669, 7
      %v4672 = vshll.u32 %v4597, 16
      %v4674 = vor.u32 %v4671, %v4672
      %v4675 = vsel %vm4625, %v4667, %v4674
      %v4676 = vrot.slane %v4671, 4
      %v4678 = vshrl.u32 %v4598, 16
      %v4680 = vrot.slane %v4678, 7
      %v4681 = vshll.u32 %v4598, 16
      %v4683 = vor.u32 %v4680, %v4681
      %v4684 = vrot.slane %v4680, 4
      %v4686 = vshrl.u32 %v4599, 16
      %v4688 = vrot.slane %v4686, 7
      %v4689 = vshll.u32 %v4599, 16
      %v4691 = vor.u32 %v4688, %v4689
      %v4692 = vsel %vm4625, %v4684, %v4691
      %v4693 = vrot.slane %v4688, 4
      %v4695 = vshrl.u32 %v4600, 16
      %v4697 = vrot.slane %v4695, 7
      %v4698 = vshll.u32 %v4600, 16
      %v4700 = vor.u32 %v4697, %v4698
      %v4701 = vrot.slane %v4697, 4
      %v4703 = vshrl.u32 %v4601, 16
      %v4705 = vrot.slane %v4703, 7
      %v4706 = vshll.u32 %v4601, 16
      %v4708 = vor.u32 %v4705, %v4706
      %v4709 = vsel %vm4625, %v4701, %v4708
      %v4710 = vrot.slane %v4705, 4
      %v4712 = vshrl.u32 %v4602, 16
      %v4714 = vrot.slane %v4712, 7
      %v4715 = vshll.u32 %v4602, 16
      %v4717 = vor.u32 %v4714, %v4715
      %v4718 = vrot.slane %v4714, 4
      %v4720 = vshrl.u32 %v4603, 16
      %v4722 = vrot.slane %v4720, 7
      %v4723 = vshll.u32 %v4603, 16
      %v4725 = vor.u32 %v4722, %v4723
      %v4726 = vsel %vm4625, %v4718, %v4725
      %v4727 = vrot.slane %v4722, 4
      %v4729 = vshrl.u32 %v4604, 16
      %v4731 = vrot.slane %v4729, 7
      %v4732 = vshll.u32 %v4604, 16
      %v4734 = vor.u32 %v4731, %v4732
      %v4735 = vrot.slane %v4731, 4
      %v4737 = vshrl.u32 %v4605, 16
      %v4739 = vrot.slane %v4737, 7
      %v4740 = vshll.u32 %v4605, 16
      %v4742 = vor.u32 %v4739, %v4740
      %v4743 = vsel %vm4625, %v4735, %v4742
      %v4744 = vrot.slane %v4739, 4
      %v4746 = vshrl.u32 %v4606, 16
      %v4748 = vrot.slane %v4746, 7
      %v4749 = vshll.u32 %v4606, 16
      %v4751 = vor.u32 %v4748, %v4749
      %v4752 = vrot.slane %v4748, 4
      %v4754 = vshrl.u32 %v4607, 16
      %v4756 = vrot.slane %v4754, 7
      %v4757 = vshll.u32 %v4607, 16
      %v4759 = vor.u32 %v4756, %v4757
      %v4760 = vsel %vm4625, %v4752, %v4759
      %v4761 = vrot.slane %v4756, 4
      %v4763 = vshrl.u32 %v4608, 16
      %v4765 = vrot.slane %v4763, 7
      %v4766 = vshll.u32 %v4608, 16
      %v4768 = vor.u32 %v4765, %v4766
      %v4769 = vrot.slane %v4765, 4
      %v4771 = vshrl.u32 %v4609, 16
      %v4773 = vrot.slane %v4771, 7
      %v4774 = vshll.u32 %v4609, 16
      %v4776 = vor.u32 %v4773, %v4774
      %v4777 = vsel %vm4625, %v4769, %v4776
      %v4778 = vrot.slane %v4773, 4
      %v4780 = vshrl.u32 %v4610, 16
      %v4782 = vrot.slane %v4780, 7
      %v4783 = vshll.u32 %v4610, 16
      %v4785 = vor.u32 %v4782, %v4783
      %v4786 = vrot.slane %v4782, 4
      %v4788 = vshrl.u32 %v4611, 16
      %v4790 = vrot.slane %v4788, 7
      %v4791 = vshll.u32 %v4611, 16
      %v4793 = vor.u32 %v4790, %v4791
      %v4794 = vsel %vm4625, %v4786, %v4793
      %v4795 = vrot.slane %v4790, 4
      %v4797 = vshrl.u32 %v4612, 16
      %v4799 = vrot.slane %v4797, 7
      %v4800 = vshll.u32 %v4612, 16
      %v4802 = vor.u32 %v4799, %v4800
      %v4803 = vrot.slane %v4799, 4
      %v4805 = vshrl.u32 %v4613, 16
      %v4807 = vrot.slane %v4805, 7
      %v4808 = vshll.u32 %v4613, 16
      %v4810 = vor.u32 %v4807, %v4808
      %v4811 = vsel %vm4625, %v4803, %v4810
      %v4812 = vrot.slane %v4807, 4
      %v4814 = vshrl.u32 %v4614, 16
      %v4816 = vrot.slane %v4814, 7
      %v4817 = vshll.u32 %v4614, 16
      %v4819 = vor.u32 %v4816, %v4817
      %v4820 = vrot.slane %v4816, 4
      %v4822 = vshrl.u32 %v4615, 16
      %v4824 = vrot.slane %v4822, 7
      %v4825 = vshll.u32 %v4615, 16
      %v4827 = vor.u32 %v4824, %v4825
      %v4828 = vsel %vm4625, %v4820, %v4827
      %v4829 = vrot.slane %v4824, 4
      %v4831 = vshrl.u32 %v4616, 16
      %v4833 = vrot.slane %v4831, 7
      %v4834 = vshll.u32 %v4616, 16
      %v4836 = vor.u32 %v4833, %v4834
      %v4837 = vrot.slane %v4833, 4
      %v4839 = vshrl.u32 %v4617, 16
      %v4841 = vrot.slane %v4839, 7
      %v4842 = vshll.u32 %v4617, 16
      %v4844 = vor.u32 %v4841, %v4842
      %v4845 = vsel %vm4625, %v4837, %v4844
      %v4846 = vrot.slane %v4841, 4
      %v4848 = vshrl.u32 %v4618, 16
      %v4850 = vrot.slane %v4848, 7
      %v4851 = vshll.u32 %v4618, 16
      %v4853 = vor.u32 %v4850, %v4851
      %v4854 = vrot.slane %v4850, 4
      %v4856 = vshrl.u32 %v4619, 16
      %v4858 = vrot.slane %v4856, 7
      %v4859 = vshll.u32 %v4619, 16
      %v4861 = vor.u32 %v4858, %v4859
      %v4862 = vsel %vm4625, %v4854, %v4861
      %v4863 = vrot.slane %v4858, 4
      %v4865 = vshrl.u32 %v4620, 16
      %v4867 = vrot.slane %v4865, 7
      %v4868 = vshll.u32 %v4620, 16
      %v4870 = vor.u32 %v4867, %v4868
      %v4871 = vrot.slane %v4867, 4
      %v4873 = vshrl.u32 %v4621, 16
      %v4875 = vrot.slane %v4873, 7
      %v4876 = vshll.u32 %v4621, 16
      %v4878 = vor.u32 %v4875, %v4876
      %v4879 = vsel %vm4625, %v4871, %v4878
      %v4880 = vrot.slane %v4875, 4
      %v4882 = vshrl.u32 %v4622, 16
      %v4884 = vrot.slane %v4882, 7
      %v4885 = vshll.u32 %v4622, 16
      %v4887 = vor.u32 %v4884, %v4885
      %v4888 = vrot.slane %v4884, 4
      %v4890 = vshrl.u32 %v4623, 16
      %v4892 = vrot.slane %v4890, 7
      %v4893 = vshll.u32 %v4623, 16
      %v4895 = vor.u32 %v4892, %v4893
      %v4896 = vsel %vm4625, %v4888, %v4895
      %v4897 = vrot.slane %v4892, 4
      %s4946 = scalar_lea.vmem [#allocation2], 12
      %vm4947 = vcmask 519168
      %vm4948 = vmand %vm4947, %vm4488
      %v4949 = vld [vmem:[%s4946] sm:$0xf]
      %v4950 = vsel %vm4948, %v4632, %v4949
      %4951 = vst [vmem:[%s4946] sm:$0xf] %v4950
      %4952 = vst.msk [vmem:[%s4946 + $0x4] sm:$0xf] %vm258, %v4641
      %v4953 = vld [vmem:[%s4946 + $0x8] sm:$0x1]
      %v4954 = vsel %vm4433, %v4642, %v4953
      %4955 = vst [vmem:[%s4946 + $0x8] sm:$0x1] %v4954
      %v4956 = vld [vmem:[%s4946 + $0xc] sm:$0xf]
      %v4957 = vsel %vm4948, %v4649, %v4956
      %4958 = vst [vmem:[%s4946 + $0xc] sm:$0xf] %v4957
      %4959 = vst.msk [vmem:[%s4946 + $0x10] sm:$0xf] %vm258, %v4658
      %v4960 = vld [vmem:[%s4946 + $0x14] sm:$0x1]
      %v4961 = vsel %vm4433, %v4659, %v4960
      %4962 = vst [vmem:[%s4946 + $0x14] sm:$0x1] %v4961
      %v4963 = vld [vmem:[%s4946 + $0x18] sm:$0xf]
      %v4964 = vsel %vm4948, %v4666, %v4963
      %4965 = vst [vmem:[%s4946 + $0x18] sm:$0xf] %v4964
      %4966 = vst.msk [vmem:[%s4946 + $0x1c] sm:$0xf] %vm258, %v4675
      %v4967 = vld [vmem:[%s4946 + $0x20] sm:$0x1]
      %v4968 = vsel %vm4433, %v4676, %v4967
      %4969 = vst [vmem:[%s4946 + $0x20] sm:$0x1] %v4968
      %v4970 = vld [vmem:[%s4946 + $0x24] sm:$0xf]
      %v4971 = vsel %vm4948, %v4683, %v4970
      %4972 = vst [vmem:[%s4946 + $0x24] sm:$0xf] %v4971
      %4973 = vst.msk [vmem:[%s4946 + $0x28] sm:$0xf] %vm258, %v4692
      %v4974 = vld [vmem:[%s4946 + $0x2c] sm:$0x1]
      %v4975 = vsel %vm4433, %v4693, %v4974
      %4976 = vst [vmem:[%s4946 + $0x2c] sm:$0x1] %v4975
      %v4977 = vld [vmem:[%s4946 + $0x30] sm:$0xf]
      %v4978 = vsel %vm4948, %v4700, %v4977
      %4979 = vst [vmem:[%s4946 + $0x30] sm:$0xf] %v4978
      %4980 = vst.msk [vmem:[%s4946 + $0x34] sm:$0xf] %vm258, %v4709
      %v4981 = vld [vmem:[%s4946 + $0x38] sm:$0x1]
      %v4982 = vsel %vm4433, %v4710, %v4981
      %4983 = vst [vmem:[%s4946 + $0x38] sm:$0x1] %v4982
      %v4984 = vld [vmem:[%s4946 + $0x3c] sm:$0xf]
      %v4985 = vsel %vm4948, %v4717, %v4984
      %4986 = vst [vmem:[%s4946 + $0x3c] sm:$0xf] %v4985
      %4987 = vst.msk [vmem:[%s4946 + $0x40] sm:$0xf] %vm258, %v4726
      %v4988 = vld [vmem:[%s4946 + $0x44] sm:$0x1]
      %v4989 = vsel %vm4433, %v4727, %v4988
      %4990 = vst [vmem:[%s4946 + $0x44] sm:$0x1] %v4989
      %v4991 = vld [vmem:[%s4946 + $0x48] sm:$0xf]
      %v4992 = vsel %vm4948, %v4734, %v4991
      %4993 = vst [vmem:[%s4946 + $0x48] sm:$0xf] %v4992
      %4994 = vst.msk [vmem:[%s4946 + $0x4c] sm:$0xf] %vm258, %v4743
      %v4995 = vld [vmem:[%s4946 + $0x50] sm:$0x1]
      %v4996 = vsel %vm4433, %v4744, %v4995
      %4997 = vst [vmem:[%s4946 + $0x50] sm:$0x1] %v4996
      %v4998 = vld [vmem:[%s4946 + $0x54] sm:$0xf]
      %v4999 = vsel %vm4948, %v4751, %v4998
      %5000 = vst [vmem:[%s4946 + $0x54] sm:$0xf] %v4999
      %5001 = vst.msk [vmem:[%s4946 + $0x58] sm:$0xf] %vm258, %v4760
      %v5002 = vld [vmem:[%s4946 + $0x5c] sm:$0x1]
      %v5003 = vsel %vm4433, %v4761, %v5002
      %5004 = vst [vmem:[%s4946 + $0x5c] sm:$0x1] %v5003
      %v5005 = vld [vmem:[%s4946 + $0x60] sm:$0xf]
      %v5006 = vsel %vm4948, %v4768, %v5005
      %5007 = vst [vmem:[%s4946 + $0x60] sm:$0xf] %v5006
      %5008 = vst.msk [vmem:[%s4946 + $0x64] sm:$0xf] %vm258, %v4777
      %v5009 = vld [vmem:[%s4946 + $0x68] sm:$0x1]
      %v5010 = vsel %vm4433, %v4778, %v5009
      %5011 = vst [vmem:[%s4946 + $0x68] sm:$0x1] %v5010
      %v5012 = vld [vmem:[%s4946 + $0x6c] sm:$0xf]
      %v5013 = vsel %vm4948, %v4785, %v5012
      %5014 = vst [vmem:[%s4946 + $0x6c] sm:$0xf] %v5013
      %5015 = vst.msk [vmem:[%s4946 + $0x70] sm:$0xf] %vm258, %v4794
      %v5016 = vld [vmem:[%s4946 + $0x74] sm:$0x1]
      %v5017 = vsel %vm4433, %v4795, %v5016
      %5018 = vst [vmem:[%s4946 + $0x74] sm:$0x1] %v5017
      %v5019 = vld [vmem:[%s4946 + $0x78] sm:$0xf]
      %v5020 = vsel %vm4948, %v4802, %v5019
      %5021 = vst [vmem:[%s4946 + $0x78] sm:$0xf] %v5020
      %5022 = vst.msk [vmem:[%s4946 + $0x7c] sm:$0xf] %vm258, %v4811
      %v5023 = vld [vmem:[%s4946 + $0x80] sm:$0x1]
      %v5024 = vsel %vm4433, %v4812, %v5023
      %5025 = vst [vmem:[%s4946 + $0x80] sm:$0x1] %v5024
      %v5026 = vld [vmem:[%s4946 + $0x84] sm:$0xf]
      %v5027 = vsel %vm4948, %v4819, %v5026
      %5028 = vst [vmem:[%s4946 + $0x84] sm:$0xf] %v5027
      %5029 = vst.msk [vmem:[%s4946 + $0x88] sm:$0xf] %vm258, %v4828
      %v5030 = vld [vmem:[%s4946 + $0x8c] sm:$0x1]
      %v5031 = vsel %vm4433, %v4829, %v5030
      %5032 = vst [vmem:[%s4946 + $0x8c] sm:$0x1] %v5031
      %v5033 = vld [vmem:[%s4946 + $0x90] sm:$0xf]
      %v5034 = vsel %vm4948, %v4836, %v5033
      %5035 = vst [vmem:[%s4946 + $0x90] sm:$0xf] %v5034
      %5036 = vst.msk [vmem:[%s4946 + $0x94] sm:$0xf] %vm258, %v4845
      %v5037 = vld [vmem:[%s4946 + $0x98] sm:$0x1]
      %v5038 = vsel %vm4433, %v4846, %v5037
      %5039 = vst [vmem:[%s4946 + $0x98] sm:$0x1] %v5038
      %v5040 = vld [vmem:[%s4946 + $0x9c] sm:$0xf]
      %v5041 = vsel %vm4948, %v4853, %v5040
      %5042 = vst [vmem:[%s4946 + $0x9c] sm:$0xf] %v5041
      %5043 = vst.msk [vmem:[%s4946 + $0xa0] sm:$0xf] %vm258, %v4862
      %v5044 = vld [vmem:[%s4946 + $0xa4] sm:$0x1]
      %v5045 = vsel %vm4433, %v4863, %v5044
      %5046 = vst [vmem:[%s4946 + $0xa4] sm:$0x1] %v5045
      %v5047 = vld [vmem:[%s4946 + $0xa8] sm:$0xf]
      %v5048 = vsel %vm4948, %v4870, %v5047
      %5049 = vst [vmem:[%s4946 + $0xa8] sm:$0xf] %v5048
      %5050 = vst.msk [vmem:[%s4946 + $0xac] sm:$0xf] %vm258, %v4879
      %v5051 = vld [vmem:[%s4946 + $0xb0] sm:$0x1]
      %v5052 = vsel %vm4433, %v4880, %v5051
      %5053 = vst [vmem:[%s4946 + $0xb0] sm:$0x1] %v5052
      %v5054 = vld [vmem:[%s4946 + $0xb4] sm:$0xf]
      %v5055 = vsel %vm4948, %v4887, %v5054
      %5056 = vst [vmem:[%s4946 + $0xb4] sm:$0xf] %v5055
      %5057 = vst.msk [vmem:[%s4946 + $0xb8] sm:$0xf] %vm258, %v4896
      %v5058 = vld [vmem:[%s4946 + $0xbc] sm:$0x1]
      %v5059 = vsel %vm4433, %v4897, %v5058
      %5060 = vst [vmem:[%s4946 + $0xbc] sm:$0x1] %v5059
      %v5061 = vld [vmem:[#allocation2] sm:$0xf]
      %v5062 = vld [vmem:[#allocation2 + $0x4] sm:$0xf]
      %v5063 = vld [vmem:[#allocation2 + $0xc] sm:$0xf]
      %v5064 = vld [vmem:[#allocation2 + $0x10] sm:$0xf]
      %v5065 = vld [vmem:[#allocation2 + $0x18] sm:$0xf]
      %v5066 = vld [vmem:[#allocation2 + $0x1c] sm:$0xf]
      %v5067 = vld [vmem:[#allocation2 + $0x24] sm:$0xf]
      %v5068 = vld [vmem:[#allocation2 + $0x28] sm:$0xf]
      %v5069 = vld [vmem:[#allocation2 + $0x30] sm:$0xf]
      %v5070 = vld [vmem:[#allocation2 + $0x34] sm:$0xf]
      %v5071 = vld [vmem:[#allocation2 + $0x3c] sm:$0xf]
      %v5072 = vld [vmem:[#allocation2 + $0x40] sm:$0xf]
      %v5073 = vld [vmem:[#allocation2 + $0x48] sm:$0xf]
      %v5074 = vld [vmem:[#allocation2 + $0x4c] sm:$0xf]
      %v5075 = vld [vmem:[#allocation2 + $0x54] sm:$0xf]
      %v5076 = vld [vmem:[#allocation2 + $0x58] sm:$0xf]
      %v5077 = vld [vmem:[#allocation2 + $0x60] sm:$0xf]
      %v5078 = vld [vmem:[#allocation2 + $0x64] sm:$0xf]
      %v5079 = vld [vmem:[#allocation2 + $0x6c] sm:$0xf]
      %v5080 = vld [vmem:[#allocation2 + $0x70] sm:$0xf]
      %v5081 = vld [vmem:[#allocation2 + $0x78] sm:$0xf]
      %v5082 = vld [vmem:[#allocation2 + $0x7c] sm:$0xf]
      %v5083 = vld [vmem:[#allocation2 + $0x84] sm:$0xf]
      %v5084 = vld [vmem:[#allocation2 + $0x88] sm:$0xf]
      %v5085 = vld [vmem:[#allocation2 + $0x90] sm:$0xf]
      %v5086 = vld [vmem:[#allocation2 + $0x94] sm:$0xf]
      %v5087 = vld [vmem:[#allocation2 + $0x9c] sm:$0xf]
      %v5088 = vld [vmem:[#allocation2 + $0xa0] sm:$0xf]
      %v5089 = vld [vmem:[#allocation2 + $0xa8] sm:$0xf]
      %v5090 = vld [vmem:[#allocation2 + $0xac] sm:$0xf]
      %v5091 = vld [vmem:[#allocation2 + $0xb4] sm:$0xf]
      %v5092 = vld [vmem:[#allocation2 + $0xb8] sm:$0xf]
      %5093 = vst.msk [vmem:[#allocation4] sm:$0xf] %vm258, %v5061
      %5094 = vst.msk [vmem:[#allocation4 + $0x14] sm:$0xf] %vm258, %v5062
      %5095 = vst.msk [vmem:[#allocation4 + $0x28] sm:$0xf] %vm258, %v5063
      %5096 = vst.msk [vmem:[#allocation4 + $0x3c] sm:$0xf] %vm258, %v5064
      %5097 = vst.msk [vmem:[#allocation4 + $0x50] sm:$0xf] %vm258, %v5065
      %5098 = vst.msk [vmem:[#allocation4 + $0x64] sm:$0xf] %vm258, %v5066
      %5099 = vst.msk [vmem:[#allocation4 + $0x78] sm:$0xf] %vm258, %v5067
      %5100 = vst.msk [vmem:[#allocation4 + $0x8c] sm:$0xf] %vm258, %v5068
      %5101 = vst.msk [vmem:[#allocation4 + $0xa0] sm:$0xf] %vm258, %v5069
      %5102 = vst.msk [vmem:[#allocation4 + $0xb4] sm:$0xf] %vm258, %v5070
      %5103 = vst.msk [vmem:[#allocation4 + $0xc8] sm:$0xf] %vm258, %v5071
      %5104 = vst.msk [vmem:[#allocation4 + $0xdc] sm:$0xf] %vm258, %v5072
      %5105 = vst.msk [vmem:[#allocation4 + $0xf0] sm:$0xf] %vm258, %v5073
      %5106 = vst.msk [vmem:[#allocation4 + $0x104] sm:$0xf] %vm258, %v5074
      %5107 = vst.msk [vmem:[#allocation4 + $0x118] sm:$0xf] %vm258, %v5075
      %5108 = vst.msk [vmem:[#allocation4 + $0x12c] sm:$0xf] %vm258, %v5076
      %5109 = vst.msk [vmem:[#allocation4 + $0x140] sm:$0xf] %vm258, %v5077
      %5110 = vst.msk [vmem:[#allocation4 + $0x154] sm:$0xf] %vm258, %v5078
      %5111 = vst.msk [vmem:[#allocation4 + $0x168] sm:$0xf] %vm258, %v5079
      %5112 = vst.msk [vmem:[#allocation4 + $0x17c] sm:$0xf] %vm258, %v5080
      %5113 = vst.msk [vmem:[#allocation4 + $0x190] sm:$0xf] %vm258, %v5081
      %5114 = vst.msk [vmem:[#allocation4 + $0x1a4] sm:$0xf] %vm258, %v5082
      %5115 = vst.msk [vmem:[#allocation4 + $0x1b8] sm:$0xf] %vm258, %v5083
      %5116 = vst.msk [vmem:[#allocation4 + $0x1cc] sm:$0xf] %vm258, %v5084
      %5117 = vst.msk [vmem:[#allocation4 + $0x1e0] sm:$0xf] %vm258, %v5085
      %5118 = vst.msk [vmem:[#allocation4 + $0x1f4] sm:$0xf] %vm258, %v5086
      %5119 = vst.msk [vmem:[#allocation4 + $0x208] sm:$0xf] %vm258, %v5087
      %5120 = vst.msk [vmem:[#allocation4 + $0x21c] sm:$0xf] %vm258, %v5088
      %5121 = vst.msk [vmem:[#allocation4 + $0x230] sm:$0xf] %vm258, %v5089
      %5122 = vst.msk [vmem:[#allocation4 + $0x244] sm:$0xf] %vm258, %v5090
      %5123 = vst.msk [vmem:[#allocation4 + $0x258] sm:$0xf] %vm258, %v5091
      %5124 = vst.msk [vmem:[#allocation4 + $0x26c] sm:$0xf] %vm258, %v5092
      %v5125 = vld [vmem:[#allocation2] sm:$0xf]
      %v5126 = vld [vmem:[#allocation2 + $0x4] sm:$0xf]
      %v5127 = vld [vmem:[#allocation2 + $0x8] sm:$0x1]
      %v5128 = vld [vmem:[#allocation2 + $0xc] sm:$0xf]
      %v5129 = vld [vmem:[#allocation2 + $0x10] sm:$0xf]
      %v5130 = vld [vmem:[#allocation2 + $0x14] sm:$0x1]
      %v5131 = vld [vmem:[#allocation2 + $0x18] sm:$0xf]
      %v5132 = vld [vmem:[#allocation2 + $0x1c] sm:$0xf]
      %v5133 = vld [vmem:[#allocation2 + $0x20] sm:$0x1]
      %v5134 = vld [vmem:[#allocation2 + $0x24] sm:$0xf]
      %v5135 = vld [vmem:[#allocation2 + $0x28] sm:$0xf]
      %v5136 = vld [vmem:[#allocation2 + $0x2c] sm:$0x1]
      %v5137 = vld [vmem:[#allocation2 + $0x30] sm:$0xf]
      %v5138 = vld [vmem:[#allocation2 + $0x34] sm:$0xf]
      %v5139 = vld [vmem:[#allocation2 + $0x38] sm:$0x1]
      %v5140 = vld [vmem:[#allocation2 + $0x3c] sm:$0xf]
      %v5141 = vld [vmem:[#allocation2 + $0x40] sm:$0xf]
      %v5142 = vld [vmem:[#allocation2 + $0x44] sm:$0x1]
      %v5143 = vld [vmem:[#allocation2 + $0x48] sm:$0xf]
      %v5144 = vld [vmem:[#allocation2 + $0x4c] sm:$0xf]
      %v5145 = vld [vmem:[#allocation2 + $0x50] sm:$0x1]
      %v5146 = vld [vmem:[#allocation2 + $0x54] sm:$0xf]
      %v5147 = vld [vmem:[#allocation2 + $0x58] sm:$0xf]
      %v5148 = vld [vmem:[#allocation2 + $0x5c] sm:$0x1]
      %v5149 = vld [vmem:[#allocation2 + $0x60] sm:$0xf]
      %v5150 = vld [vmem:[#allocation2 + $0x64] sm:$0xf]
      %v5151 = vld [vmem:[#allocation2 + $0x68] sm:$0x1]
      %v5152 = vld [vmem:[#allocation2 + $0x6c] sm:$0xf]
      %v5153 = vld [vmem:[#allocation2 + $0x70] sm:$0xf]
      %v5154 = vld [vmem:[#allocation2 + $0x74] sm:$0x1]
      %v5155 = vld [vmem:[#allocation2 + $0x78] sm:$0xf]
      %v5156 = vld [vmem:[#allocation2 + $0x7c] sm:$0xf]
      %v5157 = vld [vmem:[#allocation2 + $0x80] sm:$0x1]
      %v5158 = vld [vmem:[#allocation2 + $0x84] sm:$0xf]
      %v5159 = vld [vmem:[#allocation2 + $0x88] sm:$0xf]
      %v5160 = vld [vmem:[#allocation2 + $0x8c] sm:$0x1]
      %v5161 = vld [vmem:[#allocation2 + $0x90] sm:$0xf]
      %v5162 = vld [vmem:[#allocation2 + $0x94] sm:$0xf]
      %v5163 = vld [vmem:[#allocation2 + $0x98] sm:$0x1]
      %v5164 = vld [vmem:[#allocation2 + $0x9c] sm:$0xf]
      %v5165 = vld [vmem:[#allocation2 + $0xa0] sm:$0xf]
      %v5166 = vld [vmem:[#allocation2 + $0xa4] sm:$0x1]
      %v5167 = vld [vmem:[#allocation2 + $0xa8] sm:$0xf]
      %v5168 = vld [vmem:[#allocation2 + $0xac] sm:$0xf]
      %v5169 = vld [vmem:[#allocation2 + $0xb0] sm:$0x1]
      %v5170 = vld [vmem:[#allocation2 + $0xb4] sm:$0xf]
      %v5171 = vld [vmem:[#allocation2 + $0xb8] sm:$0xf]
      %v5172 = vld [vmem:[#allocation2 + $0xbc] sm:$0x1]
      %v5174 = vshrl.u32 %v5125, 16
      %v5176 = vrot.slane %v5174, 4
      %v5177 = vshll.u32 %v5125, 16
      %v5179 = vrot.slane %v5177, 5
      %v5180 = vor.u32 %v5176, %v5179
      %v5181 = vrot.slane %v5180, 4
      %v5183 = vshll.u32 %v5126, 16
      %v5185 = vrot.slane %v5183, 5
      %v5186 = vsel %vm341, %v5181, %v5185
      %v5187 = vshrl.u32 %v5126, 16
      %v5189 = vrot.slane %v5187, 4
      %v5190 = vor.u32 %v5189, %v5185
      %v5191 = vrot.slane %v5190, 4
      %v5193 = vshll.u32 %v5127, 16
      %v5195 = vrot.slane %v5193, 5
      %v5196 = vsel %vm341, %v5191, %v5195
      %v5198 = vshrl.u32 %v5128, 16
      %v5200 = vrot.slane %v5198, 4
      %v5201 = vshll.u32 %v5128, 16
      %v5203 = vrot.slane %v5201, 5
      %v5204 = vor.u32 %v5200, %v5203
      %v5205 = vrot.slane %v5204, 4
      %v5207 = vshll.u32 %v5129, 16
      %v5209 = vrot.slane %v5207, 5
      %v5210 = vsel %vm341, %v5205, %v5209
      %v5211 = vshrl.u32 %v5129, 16
      %v5213 = vrot.slane %v5211, 4
      %v5214 = vor.u32 %v5213, %v5209
      %v5215 = vrot.slane %v5214, 4
      %v5217 = vshll.u32 %v5130, 16
      %v5219 = vrot.slane %v5217, 5
      %v5220 = vsel %vm341, %v5215, %v5219
      %v5222 = vshrl.u32 %v5131, 16
      %v5224 = vrot.slane %v5222, 4
      %v5225 = vshll.u32 %v5131, 16
      %v5227 = vrot.slane %v5225, 5
      %v5228 = vor.u32 %v5224, %v5227
      %v5229 = vrot.slane %v5228, 4
      %v5231 = vshll.u32 %v5132, 16
      %v5233 = vrot.slane %v5231, 5
      %v5234 = vsel %vm341, %v5229, %v5233
      %v5235 = vshrl.u32 %v5132, 16
      %v5237 = vrot.slane %v5235, 4
      %v5238 = vor.u32 %v5237, %v5233
      %v5239 = vrot.slane %v5238, 4
      %v5241 = vshll.u32 %v5133, 16
      %v5243 = vrot.slane %v5241, 5
      %v5244 = vsel %vm341, %v5239, %v5243
      %v5246 = vshrl.u32 %v5134, 16
      %v5248 = vrot.slane %v5246, 4
      %v5249 = vshll.u32 %v5134, 16
      %v5251 = vrot.slane %v5249, 5
      %v5252 = vor.u32 %v5248, %v5251
      %v5253 = vrot.slane %v5252, 4
      %v5255 = vshll.u32 %v5135, 16
      %v5257 = vrot.slane %v5255, 5
      %v5258 = vsel %vm341, %v5253, %v5257
      %v5259 = vshrl.u32 %v5135, 16
      %v5261 = vrot.slane %v5259, 4
      %v5262 = vor.u32 %v5261, %v5257
      %v5263 = vrot.slane %v5262, 4
      %v5265 = vshll.u32 %v5136, 16
      %v5267 = vrot.slane %v5265, 5
      %v5268 = vsel %vm341, %v5263, %v5267
      %v5270 = vshrl.u32 %v5137, 16
      %v5272 = vrot.slane %v5270, 4
      %v5273 = vshll.u32 %v5137, 16
      %v5275 = vrot.slane %v5273, 5
      %v5276 = vor.u32 %v5272, %v5275
      %v5277 = vrot.slane %v5276, 4
      %v5279 = vshll.u32 %v5138, 16
      %v5281 = vrot.slane %v5279, 5
      %v5282 = vsel %vm341, %v5277, %v5281
      %v5283 = vshrl.u32 %v5138, 16
      %v5285 = vrot.slane %v5283, 4
      %v5286 = vor.u32 %v5285, %v5281
      %v5287 = vrot.slane %v5286, 4
      %v5289 = vshll.u32 %v5139, 16
      %v5291 = vrot.slane %v5289, 5
      %v5292 = vsel %vm341, %v5287, %v5291
      %v5294 = vshrl.u32 %v5140, 16
      %v5296 = vrot.slane %v5294, 4
      %v5297 = vshll.u32 %v5140, 16
      %v5299 = vrot.slane %v5297, 5
      %v5300 = vor.u32 %v5296, %v5299
      %v5301 = vrot.slane %v5300, 4
      %v5303 = vshll.u32 %v5141, 16
      %v5305 = vrot.slane %v5303, 5
      %v5306 = vsel %vm341, %v5301, %v5305
      %v5307 = vshrl.u32 %v5141, 16
      %v5309 = vrot.slane %v5307, 4
      %v5310 = vor.u32 %v5309, %v5305
      %v5311 = vrot.slane %v5310, 4
      %v5313 = vshll.u32 %v5142, 16
      %v5315 = vrot.slane %v5313, 5
      %v5316 = vsel %vm341, %v5311, %v5315
      %v5318 = vshrl.u32 %v5143, 16
      %v5320 = vrot.slane %v5318, 4
      %v5321 = vshll.u32 %v5143, 16
      %v5323 = vrot.slane %v5321, 5
      %v5324 = vor.u32 %v5320, %v5323
      %v5325 = vrot.slane %v5324, 4
      %v5327 = vshll.u32 %v5144, 16
      %v5329 = vrot.slane %v5327, 5
      %v5330 = vsel %vm341, %v5325, %v5329
      %v5331 = vshrl.u32 %v5144, 16
      %v5333 = vrot.slane %v5331, 4
      %v5334 = vor.u32 %v5333, %v5329
      %v5335 = vrot.slane %v5334, 4
      %v5337 = vshll.u32 %v5145, 16
      %v5339 = vrot.slane %v5337, 5
      %v5340 = vsel %vm341, %v5335, %v5339
      %v5342 = vshrl.u32 %v5146, 16
      %v5344 = vrot.slane %v5342, 4
      %v5345 = vshll.u32 %v5146, 16
      %v5347 = vrot.slane %v5345, 5
      %v5348 = vor.u32 %v5344, %v5347
      %v5349 = vrot.slane %v5348, 4
      %v5351 = vshll.u32 %v5147, 16
      %v5353 = vrot.slane %v5351, 5
      %v5354 = vsel %vm341, %v5349, %v5353
      %v5355 = vshrl.u32 %v5147, 16
      %v5357 = vrot.slane %v5355, 4
      %v5358 = vor.u32 %v5357, %v5353
      %v5359 = vrot.slane %v5358, 4
      %v5361 = vshll.u32 %v5148, 16
      %v5363 = vrot.slane %v5361, 5
      %v5364 = vsel %vm341, %v5359, %v5363
      %v5366 = vshrl.u32 %v5149, 16
      %v5368 = vrot.slane %v5366, 4
      %v5369 = vshll.u32 %v5149, 16
      %v5371 = vrot.slane %v5369, 5
      %v5372 = vor.u32 %v5368, %v5371
      %v5373 = vrot.slane %v5372, 4
      %v5375 = vshll.u32 %v5150, 16
      %v5377 = vrot.slane %v5375, 5
      %v5378 = vsel %vm341, %v5373, %v5377
      %v5379 = vshrl.u32 %v5150, 16
      %v5381 = vrot.slane %v5379, 4
      %v5382 = vor.u32 %v5381, %v5377
      %v5383 = vrot.slane %v5382, 4
      %v5385 = vshll.u32 %v5151, 16
      %v5387 = vrot.slane %v5385, 5
      %v5388 = vsel %vm341, %v5383, %v5387
      %v5390 = vshrl.u32 %v5152, 16
      %v5392 = vrot.slane %v5390, 4
      %v5393 = vshll.u32 %v5152, 16
      %v5395 = vrot.slane %v5393, 5
      %v5396 = vor.u32 %v5392, %v5395
      %v5397 = vrot.slane %v5396, 4
      %v5399 = vshll.u32 %v5153, 16
      %v5401 = vrot.slane %v5399, 5
      %v5402 = vsel %vm341, %v5397, %v5401
      %v5403 = vshrl.u32 %v5153, 16
      %v5405 = vrot.slane %v5403, 4
      %v5406 = vor.u32 %v5405, %v5401
      %v5407 = vrot.slane %v5406, 4
      %v5409 = vshll.u32 %v5154, 16
      %v5411 = vrot.slane %v5409, 5
      %v5412 = vsel %vm341, %v5407, %v5411
      %v5414 = vshrl.u32 %v5155, 16
      %v5416 = vrot.slane %v5414, 4
      %v5417 = vshll.u32 %v5155, 16
      %v5419 = vrot.slane %v5417, 5
      %v5420 = vor.u32 %v5416, %v5419
      %v5421 = vrot.slane %v5420, 4
      %v5423 = vshll.u32 %v5156, 16
      %v5425 = vrot.slane %v5423, 5
      %v5426 = vsel %vm341, %v5421, %v5425
      %v5427 = vshrl.u32 %v5156, 16
      %v5429 = vrot.slane %v5427, 4
      %v5430 = vor.u32 %v5429, %v5425
      %v5431 = vrot.slane %v5430, 4
      %v5433 = vshll.u32 %v5157, 16
      %v5435 = vrot.slane %v5433, 5
      %v5436 = vsel %vm341, %v5431, %v5435
      %v5438 = vshrl.u32 %v5158, 16
      %v5440 = vrot.slane %v5438, 4
      %v5441 = vshll.u32 %v5158, 16
      %v5443 = vrot.slane %v5441, 5
      %v5444 = vor.u32 %v5440, %v5443
      %v5445 = vrot.slane %v5444, 4
      %v5447 = vshll.u32 %v5159, 16
      %v5449 = vrot.slane %v5447, 5
      %v5450 = vsel %vm341, %v5445, %v5449
      %v5451 = vshrl.u32 %v5159, 16
      %v5453 = vrot.slane %v5451, 4
      %v5454 = vor.u32 %v5453, %v5449
      %v5455 = vrot.slane %v5454, 4
      %v5457 = vshll.u32 %v5160, 16
      %v5459 = vrot.slane %v5457, 5
      %v5460 = vsel %vm341, %v5455, %v5459
      %v5462 = vshrl.u32 %v5161, 16
      %v5464 = vrot.slane %v5462, 4
      %v5465 = vshll.u32 %v5161, 16
      %v5467 = vrot.slane %v5465, 5
      %v5468 = vor.u32 %v5464, %v5467
      %v5469 = vrot.slane %v5468, 4
      %v5471 = vshll.u32 %v5162, 16
      %v5473 = vrot.slane %v5471, 5
      %v5474 = vsel %vm341, %v5469, %v5473
      %v5475 = vshrl.u32 %v5162, 16
      %v5477 = vrot.slane %v5475, 4
      %v5478 = vor.u32 %v5477, %v5473
      %v5479 = vrot.slane %v5478, 4
      %v5481 = vshll.u32 %v5163, 16
      %v5483 = vrot.slane %v5481, 5
      %v5484 = vsel %vm341, %v5479, %v5483
      %v5486 = vshrl.u32 %v5164, 16
      %v5488 = vrot.slane %v5486, 4
      %v5489 = vshll.u32 %v5164, 16
      %v5491 = vrot.slane %v5489, 5
      %v5492 = vor.u32 %v5488, %v5491
      %v5493 = vrot.slane %v5492, 4
      %v5495 = vshll.u32 %v5165, 16
      %v5497 = vrot.slane %v5495, 5
      %v5498 = vsel %vm341, %v5493, %v5497
      %v5499 = vshrl.u32 %v5165, 16
      %v5501 = vrot.slane %v5499, 4
      %v5502 = vor.u32 %v5501, %v5497
      %v5503 = vrot.slane %v5502, 4
      %v5505 = vshll.u32 %v5166, 16
      %v5507 = vrot.slane %v5505, 5
      %v5508 = vsel %vm341, %v5503, %v5507
      %v5510 = vshrl.u32 %v5167, 16
      %v5512 = vrot.slane %v5510, 4
      %v5513 = vshll.u32 %v5167, 16
      %v5515 = vrot.slane %v5513, 5
      %v5516 = vor.u32 %v5512, %v5515
      %v5517 = vrot.slane %v5516, 4
      %v5519 = vshll.u32 %v5168, 16
      %v5521 = vrot.slane %v5519, 5
      %v5522 = vsel %vm341, %v5517, %v5521
      %v5523 = vshrl.u32 %v5168, 16
      %v5525 = vrot.slane %v5523, 4
      %v5526 = vor.u32 %v5525, %v5521
      %v5527 = vrot.slane %v5526, 4
      %v5529 = vshll.u32 %v5169, 16
      %v5531 = vrot.slane %v5529, 5
      %v5532 = vsel %vm341, %v5527, %v5531
      %v5534 = vshrl.u32 %v5170, 16
      %v5536 = vrot.slane %v5534, 4
      %v5537 = vshll.u32 %v5170, 16
      %v5539 = vrot.slane %v5537, 5
      %v5540 = vor.u32 %v5536, %v5539
      %v5541 = vrot.slane %v5540, 4
      %v5543 = vshll.u32 %v5171, 16
      %v5545 = vrot.slane %v5543, 5
      %v5546 = vsel %vm341, %v5541, %v5545
      %v5547 = vshrl.u32 %v5171, 16
      %v5549 = vrot.slane %v5547, 4
      %v5550 = vor.u32 %v5549, %v5545
      %v5551 = vrot.slane %v5550, 4
      %v5553 = vshll.u32 %v5172, 16
      %v5555 = vrot.slane %v5553, 5
      %v5556 = vsel %vm341, %v5551, %v5555
      %5557 = vrot.lane.b32.xlu0 %v5186, 64
      %v5558 = vpop.permute.xlu0 %5557
      %5559 = vrot.lane.b32.xlu0 %v5196, 64
      %v5560 = vpop.permute.xlu0 %5559
      %5561 = vrot.lane.b32.xlu0 %v5210, 64
      %v5562 = vpop.permute.xlu0 %5561
      %5563 = vrot.lane.b32.xlu0 %v5220, 64
      %v5564 = vpop.permute.xlu0 %5563
      %5565 = vrot.lane.b32.xlu0 %v5234, 64
      %v5566 = vpop.permute.xlu0 %5565
      %5567 = vrot.lane.b32.xlu0 %v5244, 64
      %v5568 = vpop.permute.xlu0 %5567
      %5569 = vrot.lane.b32.xlu0 %v5258, 64
      %v5570 = vpop.permute.xlu0 %5569
      %5571 = vrot.lane.b32.xlu0 %v5268, 64
      %v5572 = vpop.permute.xlu0 %5571
      %5573 = vrot.lane.b32.xlu0 %v5282, 64
      %v5574 = vpop.permute.xlu0 %5573
      %5575 = vrot.lane.b32.xlu0 %v5292, 64
      %v5576 = vpop.permute.xlu0 %5575
      %5577 = vrot.lane.b32.xlu0 %v5306, 64
      %v5578 = vpop.permute.xlu0 %5577
      %5579 = vrot.lane.b32.xlu0 %v5316, 64
      %v5580 = vpop.permute.xlu0 %5579
      %5581 = vrot.lane.b32.xlu0 %v5330, 64
      %v5582 = vpop.permute.xlu0 %5581
      %5583 = vrot.lane.b32.xlu0 %v5340, 64
      %v5584 = vpop.permute.xlu0 %5583
      %5585 = vrot.lane.b32.xlu0 %v5354, 64
      %v5586 = vpop.permute.xlu0 %5585
      %5587 = vrot.lane.b32.xlu0 %v5364, 64
      %v5588 = vpop.permute.xlu0 %5587
      %5589 = vrot.lane.b32.xlu0 %v5378, 64
      %v5590 = vpop.permute.xlu0 %5589
      %5591 = vrot.lane.b32.xlu0 %v5388, 64
      %v5592 = vpop.permute.xlu0 %5591
      %5593 = vrot.lane.b32.xlu0 %v5402, 64
      %v5594 = vpop.permute.xlu0 %5593
      %5595 = vrot.lane.b32.xlu0 %v5412, 64
      %v5596 = vpop.permute.xlu0 %5595
      %5597 = vrot.lane.b32.xlu0 %v5426, 64
      %v5598 = vpop.permute.xlu0 %5597
      %5599 = vrot.lane.b32.xlu0 %v5436, 64
      %v5600 = vpop.permute.xlu0 %5599
      %5601 = vrot.lane.b32.xlu0 %v5450, 64
      %v5602 = vpop.permute.xlu0 %5601
      %5603 = vrot.lane.b32.xlu0 %v5460, 64
      %v5604 = vpop.permute.xlu0 %5603
      %5605 = vrot.lane.b32.xlu0 %v5474, 64
      %v5606 = vpop.permute.xlu0 %5605
      %5607 = vrot.lane.b32.xlu0 %v5484, 64
      %v5608 = vpop.permute.xlu0 %5607
      %5609 = vrot.lane.b32.xlu0 %v5498, 64
      %v5610 = vpop.permute.xlu0 %5609
      %5611 = vrot.lane.b32.xlu0 %v5508, 64
      %v5612 = vpop.permute.xlu0 %5611
      %5613 = vrot.lane.b32.xlu0 %v5522, 64
      %v5614 = vpop.permute.xlu0 %5613
      %5615 = vrot.lane.b32.xlu0 %v5532, 64
      %v5616 = vpop.permute.xlu0 %5615
      %5617 = vrot.lane.b32.xlu0 %v5546, 64
      %v5618 = vpop.permute.xlu0 %5617
      %5619 = vrot.lane.b32.xlu0 %v5556, 64
      %v5620 = vpop.permute.xlu0 %5619
      %5653 = vst.msk [vmem:[#allocation4] sm:$0xf] %vm822, %v5558
      %5654 = vst.msk [vmem:[#allocation4 + $0x14] sm:$0xf] %vm822, %v5560
      %5655 = vst.msk [vmem:[#allocation4 + $0x28] sm:$0xf] %vm822, %v5562
      %5656 = vst.msk [vmem:[#allocation4 + $0x3c] sm:$0xf] %vm822, %v5564
      %5657 = vst.msk [vmem:[#allocation4 + $0x50] sm:$0xf] %vm822, %v5566
      %5658 = vst.msk [vmem:[#allocation4 + $0x64] sm:$0xf] %vm822, %v5568
      %5659 = vst.msk [vmem:[#allocation4 + $0x78] sm:$0xf] %vm822, %v5570
      %5660 = vst.msk [vmem:[#allocation4 + $0x8c] sm:$0xf] %vm822, %v5572
      %5661 = vst.msk [vmem:[#allocation4 + $0xa0] sm:$0xf] %vm822, %v5574
      %5662 = vst.msk [vmem:[#allocation4 + $0xb4] sm:$0xf] %vm822, %v5576
      %5663 = vst.msk [vmem:[#allocation4 + $0xc8] sm:$0xf] %vm822, %v5578
      %5664 = vst.msk [vmem:[#allocation4 + $0xdc] sm:$0xf] %vm822, %v5580
      %5665 = vst.msk [vmem:[#allocation4 + $0xf0] sm:$0xf] %vm822, %v5582
      %5666 = vst.msk [vmem:[#allocation4 + $0x104] sm:$0xf] %vm822, %v5584
      %5667 = vst.msk [vmem:[#allocation4 + $0x118] sm:$0xf] %vm822, %v5586
      %5668 = vst.msk [vmem:[#allocation4 + $0x12c] sm:$0xf] %vm822, %v5588
      %5669 = vst.msk [vmem:[#allocation4 + $0x140] sm:$0xf] %vm822, %v5590
      %5670 = vst.msk [vmem:[#allocation4 + $0x154] sm:$0xf] %vm822, %v5592
      %5671 = vst.msk [vmem:[#allocation4 + $0x168] sm:$0xf] %vm822, %v5594
      %5672 = vst.msk [vmem:[#allocation4 + $0x17c] sm:$0xf] %vm822, %v5596
      %5673 = vst.msk [vmem:[#allocation4 + $0x190] sm:$0xf] %vm822, %v5598
      %5674 = vst.msk [vmem:[#allocation4 + $0x1a4] sm:$0xf] %vm822, %v5600
      %5675 = vst.msk [vmem:[#allocation4 + $0x1b8] sm:$0xf] %vm822, %v5602
      %5676 = vst.msk [vmem:[#allocation4 + $0x1cc] sm:$0xf] %vm822, %v5604
      %5677 = vst.msk [vmem:[#allocation4 + $0x1e0] sm:$0xf] %vm822, %v5606
      %5678 = vst.msk [vmem:[#allocation4 + $0x1f4] sm:$0xf] %vm822, %v5608
      %5679 = vst.msk [vmem:[#allocation4 + $0x208] sm:$0xf] %vm822, %v5610
      %5680 = vst.msk [vmem:[#allocation4 + $0x21c] sm:$0xf] %vm822, %v5612
      %5681 = vst.msk [vmem:[#allocation4 + $0x230] sm:$0xf] %vm822, %v5614
      %5682 = vst.msk [vmem:[#allocation4 + $0x244] sm:$0xf] %vm822, %v5616
      %5683 = vst.msk [vmem:[#allocation4 + $0x258] sm:$0xf] %vm822, %v5618
      %5684 = vst.msk [vmem:[#allocation4 + $0x26c] sm:$0xf] %vm822, %v5620
      %v5685 = vld [vmem:[#allocation2] sm:$0xe]
      %v5686 = vld [vmem:[#allocation2 + $0x4] sm:$0xf]
      %v5687 = vld [vmem:[#allocation2 + $0x8] sm:$0x1]
      %v5688 = vld [vmem:[#allocation2 + $0xc] sm:$0xe]
      %v5689 = vld [vmem:[#allocation2 + $0x10] sm:$0xf]
      %v5690 = vld [vmem:[#allocation2 + $0x14] sm:$0x1]
      %v5691 = vld [vmem:[#allocation2 + $0x18] sm:$0xe]
      %v5692 = vld [vmem:[#allocation2 + $0x1c] sm:$0xf]
      %v5693 = vld [vmem:[#allocation2 + $0x20] sm:$0x1]
      %v5694 = vld [vmem:[#allocation2 + $0x24] sm:$0xe]
      %v5695 = vld [vmem:[#allocation2 + $0x28] sm:$0xf]
      %v5696 = vld [vmem:[#allocation2 + $0x2c] sm:$0x1]
      %v5697 = vld [vmem:[#allocation2 + $0x30] sm:$0xe]
      %v5698 = vld [vmem:[#allocation2 + $0x34] sm:$0xf]
      %v5699 = vld [vmem:[#allocation2 + $0x38] sm:$0x1]
      %v5700 = vld [vmem:[#allocation2 + $0x3c] sm:$0xe]
      %v5701 = vld [vmem:[#allocation2 + $0x40] sm:$0xf]
      %v5702 = vld [vmem:[#allocation2 + $0x44] sm:$0x1]
      %v5703 = vld [vmem:[#allocation2 + $0x48] sm:$0xe]
      %v5704 = vld [vmem:[#allocation2 + $0x4c] sm:$0xf]
      %v5705 = vld [vmem:[#allocation2 + $0x50] sm:$0x1]
      %v5706 = vld [vmem:[#allocation2 + $0x54] sm:$0xe]
      %v5707 = vld [vmem:[#allocation2 + $0x58] sm:$0xf]
      %v5708 = vld [vmem:[#allocation2 + $0x5c] sm:$0x1]
      %v5709 = vld [vmem:[#allocation2 + $0x60] sm:$0xe]
      %v5710 = vld [vmem:[#allocation2 + $0x64] sm:$0xf]
      %v5711 = vld [vmem:[#allocation2 + $0x68] sm:$0x1]
      %v5712 = vld [vmem:[#allocation2 + $0x6c] sm:$0xe]
      %v5713 = vld [vmem:[#allocation2 + $0x70] sm:$0xf]
      %v5714 = vld [vmem:[#allocation2 + $0x74] sm:$0x1]
      %v5715 = vld [vmem:[#allocation2 + $0x78] sm:$0xe]
      %v5716 = vld [vmem:[#allocation2 + $0x7c] sm:$0xf]
      %v5717 = vld [vmem:[#allocation2 + $0x80] sm:$0x1]
      %v5718 = vld [vmem:[#allocation2 + $0x84] sm:$0xe]
      %v5719 = vld [vmem:[#allocation2 + $0x88] sm:$0xf]
      %v5720 = vld [vmem:[#allocation2 + $0x8c] sm:$0x1]
      %v5721 = vld [vmem:[#allocation2 + $0x90] sm:$0xe]
      %v5722 = vld [vmem:[#allocation2 + $0x94] sm:$0xf]
      %v5723 = vld [vmem:[#allocation2 + $0x98] sm:$0x1]
      %v5724 = vld [vmem:[#allocation2 + $0x9c] sm:$0xe]
      %v5725 = vld [vmem:[#allocation2 + $0xa0] sm:$0xf]
      %v5726 = vld [vmem:[#allocation2 + $0xa4] sm:$0x1]
      %v5727 = vld [vmem:[#allocation2 + $0xa8] sm:$0xe]
      %v5728 = vld [vmem:[#allocation2 + $0xac] sm:$0xf]
      %v5729 = vld [vmem:[#allocation2 + $0xb0] sm:$0x1]
      %v5730 = vld [vmem:[#allocation2 + $0xb4] sm:$0xe]
      %v5731 = vld [vmem:[#allocation2 + $0xb8] sm:$0xf]
      %v5732 = vld [vmem:[#allocation2 + $0xbc] sm:$0x1]
      %v5781 = vrot.slane %v5685, 5
      %v5782 = vrot.slane %v5781, 4
      %v5783 = vrot.slane %v5686, 5
      %v5784 = vsel %vm953, %v5782, %v5783
      %v5785 = vrot.slane %v5783, 4
      %v5786 = vrot.slane %v5687, 5
      %v5787 = vsel %vm953, %v5785, %v5786
      %v5788 = vrot.slane %v5688, 5
      %v5789 = vrot.slane %v5788, 4
      %v5790 = vrot.slane %v5689, 5
      %v5791 = vsel %vm953, %v5789, %v5790
      %v5792 = vrot.slane %v5790, 4
      %v5793 = vrot.slane %v5690, 5
      %v5794 = vsel %vm953, %v5792, %v5793
      %v5795 = vrot.slane %v5691, 5
      %v5796 = vrot.slane %v5795, 4
      %v5797 = vrot.slane %v5692, 5
      %v5798 = vsel %vm953, %v5796, %v5797
      %v5799 = vrot.slane %v5797, 4
      %v5800 = vrot.slane %v5693, 5
      %v5801 = vsel %vm953, %v5799, %v5800
      %v5802 = vrot.slane %v5694, 5
      %v5803 = vrot.slane %v5802, 4
      %v5804 = vrot.slane %v5695, 5
      %v5805 = vsel %vm953, %v5803, %v5804
      %v5806 = vrot.slane %v5804, 4
      %v5807 = vrot.slane %v5696, 5
      %v5808 = vsel %vm953, %v5806, %v5807
      %v5809 = vrot.slane %v5697, 5
      %v5810 = vrot.slane %v5809, 4
      %v5811 = vrot.slane %v5698, 5
      %v5812 = vsel %vm953, %v5810, %v5811
      %v5813 = vrot.slane %v5811, 4
      %v5814 = vrot.slane %v5699, 5
      %v5815 = vsel %vm953, %v5813, %v5814
      %v5816 = vrot.slane %v5700, 5
      %v5817 = vrot.slane %v5816, 4
      %v5818 = vrot.slane %v5701, 5
      %v5819 = vsel %vm953, %v5817, %v5818
      %v5820 = vrot.slane %v5818, 4
      %v5821 = vrot.slane %v5702, 5
      %v5822 = vsel %vm953, %v5820, %v5821
      %v5823 = vrot.slane %v5703, 5
      %v5824 = vrot.slane %v5823, 4
      %v5825 = vrot.slane %v5704, 5
      %v5826 = vsel %vm953, %v5824, %v5825
      %v5827 = vrot.slane %v5825, 4
      %v5828 = vrot.slane %v5705, 5
      %v5829 = vsel %vm953, %v5827, %v5828
      %v5830 = vrot.slane %v5706, 5
      %v5831 = vrot.slane %v5830, 4
      %v5832 = vrot.slane %v5707, 5
      %v5833 = vsel %vm953, %v5831, %v5832
      %v5834 = vrot.slane %v5832, 4
      %v5835 = vrot.slane %v5708, 5
      %v5836 = vsel %vm953, %v5834, %v5835
      %v5837 = vrot.slane %v5709, 5
      %v5838 = vrot.slane %v5837, 4
      %v5839 = vrot.slane %v5710, 5
      %v5840 = vsel %vm953, %v5838, %v5839
      %v5841 = vrot.slane %v5839, 4
      %v5842 = vrot.slane %v5711, 5
      %v5843 = vsel %vm953, %v5841, %v5842
      %v5844 = vrot.slane %v5712, 5
      %v5845 = vrot.slane %v5844, 4
      %v5846 = vrot.slane %v5713, 5
      %v5847 = vsel %vm953, %v5845, %v5846
      %v5848 = vrot.slane %v5846, 4
      %v5849 = vrot.slane %v5714, 5
      %v5850 = vsel %vm953, %v5848, %v5849
      %v5851 = vrot.slane %v5715, 5
      %v5852 = vrot.slane %v5851, 4
      %v5853 = vrot.slane %v5716, 5
      %v5854 = vsel %vm953, %v5852, %v5853
      %v5855 = vrot.slane %v5853, 4
      %v5856 = vrot.slane %v5717, 5
      %v5857 = vsel %vm953, %v5855, %v5856
      %v5858 = vrot.slane %v5718, 5
      %v5859 = vrot.slane %v5858, 4
      %v5860 = vrot.slane %v5719, 5
      %v5861 = vsel %vm953, %v5859, %v5860
      %v5862 = vrot.slane %v5860, 4
      %v5863 = vrot.slane %v5720, 5
      %v5864 = vsel %vm953, %v5862, %v5863
      %v5865 = vrot.slane %v5721, 5
      %v5866 = vrot.slane %v5865, 4
      %v5867 = vrot.slane %v5722, 5
      %v5868 = vsel %vm953, %v5866, %v5867
      %v5869 = vrot.slane %v5867, 4
      %v5870 = vrot.slane %v5723, 5
      %v5871 = vsel %vm953, %v5869, %v5870
      %v5872 = vrot.slane %v5724, 5
      %v5873 = vrot.slane %v5872, 4
      %v5874 = vrot.slane %v5725, 5
      %v5875 = vsel %vm953, %v5873, %v5874
      %v5876 = vrot.slane %v5874, 4
      %v5877 = vrot.slane %v5726, 5
      %v5878 = vsel %vm953, %v5876, %v5877
      %v5879 = vrot.slane %v5727, 5
      %v5880 = vrot.slane %v5879, 4
      %v5881 = vrot.slane %v5728, 5
      %v5882 = vsel %vm953, %v5880, %v5881
      %v5883 = vrot.slane %v5881, 4
      %v5884 = vrot.slane %v5729, 5
      %v5885 = vsel %vm953, %v5883, %v5884
      %v5886 = vrot.slane %v5730, 5
      %v5887 = vrot.slane %v5886, 4
      %v5888 = vrot.slane %v5731, 5
      %v5889 = vsel %vm953, %v5887, %v5888
      %v5890 = vrot.slane %v5888, 4
      %v5891 = vrot.slane %v5732, 5
      %v5892 = vsel %vm953, %v5890, %v5891
      %5925 = vst.msk [vmem:[#allocation4 + $0x4] sm:$0xf] %vm258, %v5784
      %5926 = vst.msk [vmem:[#allocation4 + $0x18] sm:$0xf] %vm258, %v5787
      %5927 = vst.msk [vmem:[#allocation4 + $0x2c] sm:$0xf] %vm258, %v5791
      %5928 = vst.msk [vmem:[#allocation4 + $0x40] sm:$0xf] %vm258, %v5794
      %5929 = vst.msk [vmem:[#allocation4 + $0x54] sm:$0xf] %vm258, %v5798
      %5930 = vst.msk [vmem:[#allocation4 + $0x68] sm:$0xf] %vm258, %v5801
      %5931 = vst.msk [vmem:[#allocation4 + $0x7c] sm:$0xf] %vm258, %v5805
      %5932 = vst.msk [vmem:[#allocation4 + $0x90] sm:$0xf] %vm258, %v5808
      %5933 = vst.msk [vmem:[#allocation4 + $0xa4] sm:$0xf] %vm258, %v5812
      %5934 = vst.msk [vmem:[#allocation4 + $0xb8] sm:$0xf] %vm258, %v5815
      %5935 = vst.msk [vmem:[#allocation4 + $0xcc] sm:$0xf] %vm258, %v5819
      %5936 = vst.msk [vmem:[#allocation4 + $0xe0] sm:$0xf] %vm258, %v5822
      %5937 = vst.msk [vmem:[#allocation4 + $0xf4] sm:$0xf] %vm258, %v5826
      %5938 = vst.msk [vmem:[#allocation4 + $0x108] sm:$0xf] %vm258, %v5829
      %5939 = vst.msk [vmem:[#allocation4 + $0x11c] sm:$0xf] %vm258, %v5833
      %5940 = vst.msk [vmem:[#allocation4 + $0x130] sm:$0xf] %vm258, %v5836
      %5941 = vst.msk [vmem:[#allocation4 + $0x144] sm:$0xf] %vm258, %v5840
      %5942 = vst.msk [vmem:[#allocation4 + $0x158] sm:$0xf] %vm258, %v5843
      %5943 = vst.msk [vmem:[#allocation4 + $0x16c] sm:$0xf] %vm258, %v5847
      %5944 = vst.msk [vmem:[#allocation4 + $0x180] sm:$0xf] %vm258, %v5850
      %5945 = vst.msk [vmem:[#allocation4 + $0x194] sm:$0xf] %vm258, %v5854
      %5946 = vst.msk [vmem:[#allocation4 + $0x1a8] sm:$0xf] %vm258, %v5857
      %5947 = vst.msk [vmem:[#allocation4 + $0x1bc] sm:$0xf] %vm258, %v5861
      %5948 = vst.msk [vmem:[#allocation4 + $0x1d0] sm:$0xf] %vm258, %v5864
      %5949 = vst.msk [vmem:[#allocation4 + $0x1e4] sm:$0xf] %vm258, %v5868
      %5950 = vst.msk [vmem:[#allocation4 + $0x1f8] sm:$0xf] %vm258, %v5871
      %5951 = vst.msk [vmem:[#allocation4 + $0x20c] sm:$0xf] %vm258, %v5875
      %5952 = vst.msk [vmem:[#allocation4 + $0x220] sm:$0xf] %vm258, %v5878
      %5953 = vst.msk [vmem:[#allocation4 + $0x234] sm:$0xf] %vm258, %v5882
      %5954 = vst.msk [vmem:[#allocation4 + $0x248] sm:$0xf] %vm258, %v5885
      %5955 = vst.msk [vmem:[#allocation4 + $0x25c] sm:$0xf] %vm258, %v5889
      %5956 = vst.msk [vmem:[#allocation4 + $0x270] sm:$0xf] %vm258, %v5892
      %v5957 = vld [vmem:[%s4946] sm:$0xf]
      %v5958 = vld [vmem:[%s4946 + $0x4] sm:$0xf]
      %v5959 = vld [vmem:[%s4946 + $0xc] sm:$0xf]
      %v5960 = vld [vmem:[%s4946 + $0x10] sm:$0xf]
      %v5961 = vld [vmem:[%s4946 + $0x18] sm:$0xf]
      %v5962 = vld [vmem:[%s4946 + $0x1c] sm:$0xf]
      %v5963 = vld [vmem:[%s4946 + $0x24] sm:$0xf]
      %v5964 = vld [vmem:[%s4946 + $0x28] sm:$0xf]
      %v5965 = vld [vmem:[%s4946 + $0x30] sm:$0xf]
      %v5966 = vld [vmem:[%s4946 + $0x34] sm:$0xf]
      %v5967 = vld [vmem:[%s4946 + $0x3c] sm:$0xf]
      %v5968 = vld [vmem:[%s4946 + $0x40] sm:$0xf]
      %v5969 = vld [vmem:[%s4946 + $0x48] sm:$0xf]
      %v5970 = vld [vmem:[%s4946 + $0x4c] sm:$0xf]
      %v5971 = vld [vmem:[%s4946 + $0x54] sm:$0xf]
      %v5972 = vld [vmem:[%s4946 + $0x58] sm:$0xf]
      %v5973 = vld [vmem:[%s4946 + $0x60] sm:$0xf]
      %v5974 = vld [vmem:[%s4946 + $0x64] sm:$0xf]
      %v5975 = vld [vmem:[%s4946 + $0x6c] sm:$0xf]
      %v5976 = vld [vmem:[%s4946 + $0x70] sm:$0xf]
      %v5977 = vld [vmem:[%s4946 + $0x78] sm:$0xf]
      %v5978 = vld [vmem:[%s4946 + $0x7c] sm:$0xf]
      %v5979 = vld [vmem:[%s4946 + $0x84] sm:$0xf]
      %v5980 = vld [vmem:[%s4946 + $0x88] sm:$0xf]
      %v5981 = vld [vmem:[%s4946 + $0x90] sm:$0xf]
      %v5982 = vld [vmem:[%s4946 + $0x94] sm:$0xf]
      %v5983 = vld [vmem:[%s4946 + $0x9c] sm:$0xf]
      %v5984 = vld [vmem:[%s4946 + $0xa0] sm:$0xf]
      %v5985 = vld [vmem:[%s4946 + $0xa8] sm:$0xf]
      %v5986 = vld [vmem:[%s4946 + $0xac] sm:$0xf]
      %v5987 = vld [vmem:[%s4946 + $0xb4] sm:$0xf]
      %v5988 = vld [vmem:[%s4946 + $0xb8] sm:$0xf]
      %6021 = vrot.lane.b32.xlu0 %v5957, 64
      %v6022 = vpop.permute.xlu0 %6021
      %6023 = vrot.lane.b32.xlu0 %v5958, 64
      %v6024 = vpop.permute.xlu0 %6023
      %6025 = vrot.lane.b32.xlu0 %v5959, 64
      %v6026 = vpop.permute.xlu0 %6025
      %6027 = vrot.lane.b32.xlu0 %v5960, 64
      %v6028 = vpop.permute.xlu0 %6027
      %6029 = vrot.lane.b32.xlu0 %v5961, 64
      %v6030 = vpop.permute.xlu0 %6029
      %6031 = vrot.lane.b32.xlu0 %v5962, 64
      %v6032 = vpop.permute.xlu0 %6031
      %6033 = vrot.lane.b32.xlu0 %v5963, 64
      %v6034 = vpop.permute.xlu0 %6033
      %6035 = vrot.lane.b32.xlu0 %v5964, 64
      %v6036 = vpop.permute.xlu0 %6035
      %6037 = vrot.lane.b32.xlu0 %v5965, 64
      %v6038 = vpop.permute.xlu0 %6037
      %6039 = vrot.lane.b32.xlu0 %v5966, 64
      %v6040 = vpop.permute.xlu0 %6039
      %6041 = vrot.lane.b32.xlu0 %v5967, 64
      %v6042 = vpop.permute.xlu0 %6041
      %6043 = vrot.lane.b32.xlu0 %v5968, 64
      %v6044 = vpop.permute.xlu0 %6043
      %6045 = vrot.lane.b32.xlu0 %v5969, 64
      %v6046 = vpop.permute.xlu0 %6045
      %6047 = vrot.lane.b32.xlu0 %v5970, 64
      %v6048 = vpop.permute.xlu0 %6047
      %6049 = vrot.lane.b32.xlu0 %v5971, 64
      %v6050 = vpop.permute.xlu0 %6049
      %6051 = vrot.lane.b32.xlu0 %v5972, 64
      %v6052 = vpop.permute.xlu0 %6051
      %6053 = vrot.lane.b32.xlu0 %v5973, 64
      %v6054 = vpop.permute.xlu0 %6053
      %6055 = vrot.lane.b32.xlu0 %v5974, 64
      %v6056 = vpop.permute.xlu0 %6055
      %6057 = vrot.lane.b32.xlu0 %v5975, 64
      %v6058 = vpop.permute.xlu0 %6057
      %6059 = vrot.lane.b32.xlu0 %v5976, 64
      %v6060 = vpop.permute.xlu0 %6059
      %6061 = vrot.lane.b32.xlu0 %v5977, 64
      %v6062 = vpop.permute.xlu0 %6061
      %6063 = vrot.lane.b32.xlu0 %v5978, 64
      %v6064 = vpop.permute.xlu0 %6063
      %6065 = vrot.lane.b32.xlu0 %v5979, 64
      %v6066 = vpop.permute.xlu0 %6065
      %6067 = vrot.lane.b32.xlu0 %v5980, 64
      %v6068 = vpop.permute.xlu0 %6067
      %6069 = vrot.lane.b32.xlu0 %v5981, 64
      %v6070 = vpop.permute.xlu0 %6069
      %6071 = vrot.lane.b32.xlu0 %v5982, 64
      %v6072 = vpop.permute.xlu0 %6071
      %6073 = vrot.lane.b32.xlu0 %v5983, 64
      %v6074 = vpop.permute.xlu0 %6073
      %6075 = vrot.lane.b32.xlu0 %v5984, 64
      %v6076 = vpop.permute.xlu0 %6075
      %6077 = vrot.lane.b32.xlu0 %v5985, 64
      %v6078 = vpop.permute.xlu0 %6077
      %6079 = vrot.lane.b32.xlu0 %v5986, 64
      %v6080 = vpop.permute.xlu0 %6079
      %6081 = vrot.lane.b32.xlu0 %v5987, 64
      %v6082 = vpop.permute.xlu0 %6081
      %6083 = vrot.lane.b32.xlu0 %v5988, 64
      %v6084 = vpop.permute.xlu0 %6083
      %6117 = vst.msk [vmem:[#allocation4 + $0x4] sm:$0xf] %vm822, %v6022
      %6118 = vst.msk [vmem:[#allocation4 + $0x18] sm:$0xf] %vm822, %v6024
      %6119 = vst.msk [vmem:[#allocation4 + $0x2c] sm:$0xf] %vm822, %v6026
      %6120 = vst.msk [vmem:[#allocation4 + $0x40] sm:$0xf] %vm822, %v6028
      %6121 = vst.msk [vmem:[#allocation4 + $0x54] sm:$0xf] %vm822, %v6030
      %6122 = vst.msk [vmem:[#allocation4 + $0x68] sm:$0xf] %vm822, %v6032
      %6123 = vst.msk [vmem:[#allocation4 + $0x7c] sm:$0xf] %vm822, %v6034
      %6124 = vst.msk [vmem:[#allocation4 + $0x90] sm:$0xf] %vm822, %v6036
      %6125 = vst.msk [vmem:[#allocation4 + $0xa4] sm:$0xf] %vm822, %v6038
      %6126 = vst.msk [vmem:[#allocation4 + $0xb8] sm:$0xf] %vm822, %v6040
      %6127 = vst.msk [vmem:[#allocation4 + $0xcc] sm:$0xf] %vm822, %v6042
      %6128 = vst.msk [vmem:[#allocation4 + $0xe0] sm:$0xf] %vm822, %v6044
      %6129 = vst.msk [vmem:[#allocation4 + $0xf4] sm:$0xf] %vm822, %v6046
      %6130 = vst.msk [vmem:[#allocation4 + $0x108] sm:$0xf] %vm822, %v6048
      %6131 = vst.msk [vmem:[#allocation4 + $0x11c] sm:$0xf] %vm822, %v6050
      %6132 = vst.msk [vmem:[#allocation4 + $0x130] sm:$0xf] %vm822, %v6052
      %6133 = vst.msk [vmem:[#allocation4 + $0x144] sm:$0xf] %vm822, %v6054
      %6134 = vst.msk [vmem:[#allocation4 + $0x158] sm:$0xf] %vm822, %v6056
      %6135 = vst.msk [vmem:[#allocation4 + $0x16c] sm:$0xf] %vm822, %v6058
      %6136 = vst.msk [vmem:[#allocation4 + $0x180] sm:$0xf] %vm822, %v6060
      %6137 = vst.msk [vmem:[#allocation4 + $0x194] sm:$0xf] %vm822, %v6062
      %6138 = vst.msk [vmem:[#allocation4 + $0x1a8] sm:$0xf] %vm822, %v6064
      %6139 = vst.msk [vmem:[#allocation4 + $0x1bc] sm:$0xf] %vm822, %v6066
      %6140 = vst.msk [vmem:[#allocation4 + $0x1d0] sm:$0xf] %vm822, %v6068
      %6141 = vst.msk [vmem:[#allocation4 + $0x1e4] sm:$0xf] %vm822, %v6070
      %6142 = vst.msk [vmem:[#allocation4 + $0x1f8] sm:$0xf] %vm822, %v6072
      %6143 = vst.msk [vmem:[#allocation4 + $0x20c] sm:$0xf] %vm822, %v6074
      %6144 = vst.msk [vmem:[#allocation4 + $0x220] sm:$0xf] %vm822, %v6076
      %6145 = vst.msk [vmem:[#allocation4 + $0x234] sm:$0xf] %vm822, %v6078
      %6146 = vst.msk [vmem:[#allocation4 + $0x248] sm:$0xf] %vm822, %v6080
      %6147 = vst.msk [vmem:[#allocation4 + $0x25c] sm:$0xf] %vm822, %v6082
      %6148 = vst.msk [vmem:[#allocation4 + $0x270] sm:$0xf] %vm822, %v6084
      %v6149 = vld [vmem:[%s4946] sm:$0xf]
      %v6150 = vld [vmem:[%s4946 + $0x4] sm:$0xf]
      %v6151 = vld [vmem:[%s4946 + $0x8] sm:$0x1]
      %v6152 = vld [vmem:[%s4946 + $0xc] sm:$0xf]
      %v6153 = vld [vmem:[%s4946 + $0x10] sm:$0xf]
      %v6154 = vld [vmem:[%s4946 + $0x14] sm:$0x1]
      %v6155 = vld [vmem:[%s4946 + $0x18] sm:$0xf]
      %v6156 = vld [vmem:[%s4946 + $0x1c] sm:$0xf]
      %v6157 = vld [vmem:[%s4946 + $0x20] sm:$0x1]
      %v6158 = vld [vmem:[%s4946 + $0x24] sm:$0xf]
      %v6159 = vld [vmem:[%s4946 + $0x28] sm:$0xf]
      %v6160 = vld [vmem:[%s4946 + $0x2c] sm:$0x1]
      %v6161 = vld [vmem:[%s4946 + $0x30] sm:$0xf]
      %v6162 = vld [vmem:[%s4946 + $0x34] sm:$0xf]
      %v6163 = vld [vmem:[%s4946 + $0x38] sm:$0x1]
      %v6164 = vld [vmem:[%s4946 + $0x3c] sm:$0xf]
      %v6165 = vld [vmem:[%s4946 + $0x40] sm:$0xf]
      %v6166 = vld [vmem:[%s4946 + $0x44] sm:$0x1]
      %v6167 = vld [vmem:[%s4946 + $0x48] sm:$0xf]
      %v6168 = vld [vmem:[%s4946 + $0x4c] sm:$0xf]
      %v6169 = vld [vmem:[%s4946 + $0x50] sm:$0x1]
      %v6170 = vld [vmem:[%s4946 + $0x54] sm:$0xf]
      %v6171 = vld [vmem:[%s4946 + $0x58] sm:$0xf]
      %v6172 = vld [vmem:[%s4946 + $0x5c] sm:$0x1]
      %v6173 = vld [vmem:[%s4946 + $0x60] sm:$0xf]
      %v6174 = vld [vmem:[%s4946 + $0x64] sm:$0xf]
      %v6175 = vld [vmem:[%s4946 + $0x68] sm:$0x1]
      %v6176 = vld [vmem:[%s4946 + $0x6c] sm:$0xf]
      %v6177 = vld [vmem:[%s4946 + $0x70] sm:$0xf]
      %v6178 = vld [vmem:[%s4946 + $0x74] sm:$0x1]
      %v6179 = vld [vmem:[%s4946 + $0x78] sm:$0xf]
      %v6180 = vld [vmem:[%s4946 + $0x7c] sm:$0xf]
      %v6181 = vld [vmem:[%s4946 + $0x80] sm:$0x1]
      %v6182 = vld [vmem:[%s4946 + $0x84] sm:$0xf]
      %v6183 = vld [vmem:[%s4946 + $0x88] sm:$0xf]
      %v6184 = vld [vmem:[%s4946 + $0x8c] sm:$0x1]
      %v6185 = vld [vmem:[%s4946 + $0x90] sm:$0xf]
      %v6186 = vld [vmem:[%s4946 + $0x94] sm:$0xf]
      %v6187 = vld [vmem:[%s4946 + $0x98] sm:$0x1]
      %v6188 = vld [vmem:[%s4946 + $0x9c] sm:$0xf]
      %v6189 = vld [vmem:[%s4946 + $0xa0] sm:$0xf]
      %v6190 = vld [vmem:[%s4946 + $0xa4] sm:$0x1]
      %v6191 = vld [vmem:[%s4946 + $0xa8] sm:$0xf]
      %v6192 = vld [vmem:[%s4946 + $0xac] sm:$0xf]
      %v6193 = vld [vmem:[%s4946 + $0xb0] sm:$0x1]
      %v6194 = vld [vmem:[%s4946 + $0xb4] sm:$0xf]
      %v6195 = vld [vmem:[%s4946 + $0xb8] sm:$0xf]
      %v6196 = vld [vmem:[%s4946 + $0xbc] sm:$0x1]
      %v6198 = vshrl.u32 %v6149, 16
      %v6200 = vrot.slane %v6198, 4
      %v6201 = vshll.u32 %v6149, 16
      %v6203 = vrot.slane %v6201, 5
      %v6204 = vor.u32 %v6200, %v6203
      %v6205 = vrot.slane %v6204, 4
      %v6207 = vshll.u32 %v6150, 16
      %v6209 = vrot.slane %v6207, 5
      %v6210 = vsel %vm341, %v6205, %v6209
      %v6211 = vshrl.u32 %v6150, 16
      %v6213 = vrot.slane %v6211, 4
      %v6214 = vor.u32 %v6213, %v6209
      %v6215 = vrot.slane %v6214, 4
      %v6217 = vshll.u32 %v6151, 16
      %v6219 = vrot.slane %v6217, 5
      %v6220 = vsel %vm341, %v6215, %v6219
      %v6222 = vshrl.u32 %v6152, 16
      %v6224 = vrot.slane %v6222, 4
      %v6225 = vshll.u32 %v6152, 16
      %v6227 = vrot.slane %v6225, 5
      %v6228 = vor.u32 %v6224, %v6227
      %v6229 = vrot.slane %v6228, 4
      %v6231 = vshll.u32 %v6153, 16
      %v6233 = vrot.slane %v6231, 5
      %v6234 = vsel %vm341, %v6229, %v6233
      %v6235 = vshrl.u32 %v6153, 16
      %v6237 = vrot.slane %v6235, 4
      %v6238 = vor.u32 %v6237, %v6233
      %v6239 = vrot.slane %v6238, 4
      %v6241 = vshll.u32 %v6154, 16
      %v6243 = vrot.slane %v6241, 5
      %v6244 = vsel %vm341, %v6239, %v6243
      %v6246 = vshrl.u32 %v6155, 16
      %v6248 = vrot.slane %v6246, 4
      %v6249 = vshll.u32 %v6155, 16
      %v6251 = vrot.slane %v6249, 5
      %v6252 = vor.u32 %v6248, %v6251
      %v6253 = vrot.slane %v6252, 4
      %v6255 = vshll.u32 %v6156, 16
      %v6257 = vrot.slane %v6255, 5
      %v6258 = vsel %vm341, %v6253, %v6257
      %v6259 = vshrl.u32 %v6156, 16
      %v6261 = vrot.slane %v6259, 4
      %v6262 = vor.u32 %v6261, %v6257
      %v6263 = vrot.slane %v6262, 4
      %v6265 = vshll.u32 %v6157, 16
      %v6267 = vrot.slane %v6265, 5
      %v6268 = vsel %vm341, %v6263, %v6267
      %v6270 = vshrl.u32 %v6158, 16
      %v6272 = vrot.slane %v6270, 4
      %v6273 = vshll.u32 %v6158, 16
      %v6275 = vrot.slane %v6273, 5
      %v6276 = vor.u32 %v6272, %v6275
      %v6277 = vrot.slane %v6276, 4
      %v6279 = vshll.u32 %v6159, 16
      %v6281 = vrot.slane %v6279, 5
      %v6282 = vsel %vm341, %v6277, %v6281
      %v6283 = vshrl.u32 %v6159, 16
      %v6285 = vrot.slane %v6283, 4
      %v6286 = vor.u32 %v6285, %v6281
      %v6287 = vrot.slane %v6286, 4
      %v6289 = vshll.u32 %v6160, 16
      %v6291 = vrot.slane %v6289, 5
      %v6292 = vsel %vm341, %v6287, %v6291
      %v6294 = vshrl.u32 %v6161, 16
      %v6296 = vrot.slane %v6294, 4
      %v6297 = vshll.u32 %v6161, 16
      %v6299 = vrot.slane %v6297, 5
      %v6300 = vor.u32 %v6296, %v6299
      %v6301 = vrot.slane %v6300, 4
      %v6303 = vshll.u32 %v6162, 16
      %v6305 = vrot.slane %v6303, 5
      %v6306 = vsel %vm341, %v6301, %v6305
      %v6307 = vshrl.u32 %v6162, 16
      %v6309 = vrot.slane %v6307, 4
      %v6310 = vor.u32 %v6309, %v6305
      %v6311 = vrot.slane %v6310, 4
      %v6313 = vshll.u32 %v6163, 16
      %v6315 = vrot.slane %v6313, 5
      %v6316 = vsel %vm341, %v6311, %v6315
      %v6318 = vshrl.u32 %v6164, 16
      %v6320 = vrot.slane %v6318, 4
      %v6321 = vshll.u32 %v6164, 16
      %v6323 = vrot.slane %v6321, 5
      %v6324 = vor.u32 %v6320, %v6323
      %v6325 = vrot.slane %v6324, 4
      %v6327 = vshll.u32 %v6165, 16
      %v6329 = vrot.slane %v6327, 5
      %v6330 = vsel %vm341, %v6325, %v6329
      %v6331 = vshrl.u32 %v6165, 16
      %v6333 = vrot.slane %v6331, 4
      %v6334 = vor.u32 %v6333, %v6329
      %v6335 = vrot.slane %v6334, 4
      %v6337 = vshll.u32 %v6166, 16
      %v6339 = vrot.slane %v6337, 5
      %v6340 = vsel %vm341, %v6335, %v6339
      %v6342 = vshrl.u32 %v6167, 16
      %v6344 = vrot.slane %v6342, 4
      %v6345 = vshll.u32 %v6167, 16
      %v6347 = vrot.slane %v6345, 5
      %v6348 = vor.u32 %v6344, %v6347
      %v6349 = vrot.slane %v6348, 4
      %v6351 = vshll.u32 %v6168, 16
      %v6353 = vrot.slane %v6351, 5
      %v6354 = vsel %vm341, %v6349, %v6353
      %v6355 = vshrl.u32 %v6168, 16
      %v6357 = vrot.slane %v6355, 4
      %v6358 = vor.u32 %v6357, %v6353
      %v6359 = vrot.slane %v6358, 4
      %v6361 = vshll.u32 %v6169, 16
      %v6363 = vrot.slane %v6361, 5
      %v6364 = vsel %vm341, %v6359, %v6363
      %v6366 = vshrl.u32 %v6170, 16
      %v6368 = vrot.slane %v6366, 4
      %v6369 = vshll.u32 %v6170, 16
      %v6371 = vrot.slane %v6369, 5
      %v6372 = vor.u32 %v6368, %v6371
      %v6373 = vrot.slane %v6372, 4
      %v6375 = vshll.u32 %v6171, 16
      %v6377 = vrot.slane %v6375, 5
      %v6378 = vsel %vm341, %v6373, %v6377
      %v6379 = vshrl.u32 %v6171, 16
      %v6381 = vrot.slane %v6379, 4
      %v6382 = vor.u32 %v6381, %v6377
      %v6383 = vrot.slane %v6382, 4
      %v6385 = vshll.u32 %v6172, 16
      %v6387 = vrot.slane %v6385, 5
      %v6388 = vsel %vm341, %v6383, %v6387
      %v6390 = vshrl.u32 %v6173, 16
      %v6392 = vrot.slane %v6390, 4
      %v6393 = vshll.u32 %v6173, 16
      %v6395 = vrot.slane %v6393, 5
      %v6396 = vor.u32 %v6392, %v6395
      %v6397 = vrot.slane %v6396, 4
      %v6399 = vshll.u32 %v6174, 16
      %v6401 = vrot.slane %v6399, 5
      %v6402 = vsel %vm341, %v6397, %v6401
      %v6403 = vshrl.u32 %v6174, 16
      %v6405 = vrot.slane %v6403, 4
      %v6406 = vor.u32 %v6405, %v6401
      %v6407 = vrot.slane %v6406, 4
      %v6409 = vshll.u32 %v6175, 16
      %v6411 = vrot.slane %v6409, 5
      %v6412 = vsel %vm341, %v6407, %v6411
      %v6414 = vshrl.u32 %v6176, 16
      %v6416 = vrot.slane %v6414, 4
      %v6417 = vshll.u32 %v6176, 16
      %v6419 = vrot.slane %v6417, 5
      %v6420 = vor.u32 %v6416, %v6419
      %v6421 = vrot.slane %v6420, 4
      %v6423 = vshll.u32 %v6177, 16
      %v6425 = vrot.slane %v6423, 5
      %v6426 = vsel %vm341, %v6421, %v6425
      %v6427 = vshrl.u32 %v6177, 16
      %v6429 = vrot.slane %v6427, 4
      %v6430 = vor.u32 %v6429, %v6425
      %v6431 = vrot.slane %v6430, 4
      %v6433 = vshll.u32 %v6178, 16
      %v6435 = vrot.slane %v6433, 5
      %v6436 = vsel %vm341, %v6431, %v6435
      %v6438 = vshrl.u32 %v6179, 16
      %v6440 = vrot.slane %v6438, 4
      %v6441 = vshll.u32 %v6179, 16
      %v6443 = vrot.slane %v6441, 5
      %v6444 = vor.u32 %v6440, %v6443
      %v6445 = vrot.slane %v6444, 4
      %v6447 = vshll.u32 %v6180, 16
      %v6449 = vrot.slane %v6447, 5
      %v6450 = vsel %vm341, %v6445, %v6449
      %v6451 = vshrl.u32 %v6180, 16
      %v6453 = vrot.slane %v6451, 4
      %v6454 = vor.u32 %v6453, %v6449
      %v6455 = vrot.slane %v6454, 4
      %v6457 = vshll.u32 %v6181, 16
      %v6459 = vrot.slane %v6457, 5
      %v6460 = vsel %vm341, %v6455, %v6459
      %v6462 = vshrl.u32 %v6182, 16
      %v6464 = vrot.slane %v6462, 4
      %v6465 = vshll.u32 %v6182, 16
      %v6467 = vrot.slane %v6465, 5
      %v6468 = vor.u32 %v6464, %v6467
      %v6469 = vrot.slane %v6468, 4
      %v6471 = vshll.u32 %v6183, 16
      %v6473 = vrot.slane %v6471, 5
      %v6474 = vsel %vm341, %v6469, %v6473
      %v6475 = vshrl.u32 %v6183, 16
      %v6477 = vrot.slane %v6475, 4
      %v6478 = vor.u32 %v6477, %v6473
      %v6479 = vrot.slane %v6478, 4
      %v6481 = vshll.u32 %v6184, 16
      %v6483 = vrot.slane %v6481, 5
      %v6484 = vsel %vm341, %v6479, %v6483
      %v6486 = vshrl.u32 %v6185, 16
      %v6488 = vrot.slane %v6486, 4
      %v6489 = vshll.u32 %v6185, 16
      %v6491 = vrot.slane %v6489, 5
      %v6492 = vor.u32 %v6488, %v6491
      %v6493 = vrot.slane %v6492, 4
      %v6495 = vshll.u32 %v6186, 16
      %v6497 = vrot.slane %v6495, 5
      %v6498 = vsel %vm341, %v6493, %v6497
      %v6499 = vshrl.u32 %v6186, 16
      %v6501 = vrot.slane %v6499, 4
      %v6502 = vor.u32 %v6501, %v6497
      %v6503 = vrot.slane %v6502, 4
      %v6505 = vshll.u32 %v6187, 16
      %v6507 = vrot.slane %v6505, 5
      %v6508 = vsel %vm341, %v6503, %v6507
      %v6510 = vshrl.u32 %v6188, 16
      %v6512 = vrot.slane %v6510, 4
      %v6513 = vshll.u32 %v6188, 16
      %v6515 = vrot.slane %v6513, 5
      %v6516 = vor.u32 %v6512, %v6515
      %v6517 = vrot.slane %v6516, 4
      %v6519 = vshll.u32 %v6189, 16
      %v6521 = vrot.slane %v6519, 5
      %v6522 = vsel %vm341, %v6517, %v6521
      %v6523 = vshrl.u32 %v6189, 16
      %v6525 = vrot.slane %v6523, 4
      %v6526 = vor.u32 %v6525, %v6521
      %v6527 = vrot.slane %v6526, 4
      %v6529 = vshll.u32 %v6190, 16
      %v6531 = vrot.slane %v6529, 5
      %v6532 = vsel %vm341, %v6527, %v6531
      %v6534 = vshrl.u32 %v6191, 16
      %v6536 = vrot.slane %v6534, 4
      %v6537 = vshll.u32 %v6191, 16
      %v6539 = vrot.slane %v6537, 5
      %v6540 = vor.u32 %v6536, %v6539
      %v6541 = vrot.slane %v6540, 4
      %v6543 = vshll.u32 %v6192, 16
      %v6545 = vrot.slane %v6543, 5
      %v6546 = vsel %vm341, %v6541, %v6545
      %v6547 = vshrl.u32 %v6192, 16
      %v6549 = vrot.slane %v6547, 4
      %v6550 = vor.u32 %v6549, %v6545
      %v6551 = vrot.slane %v6550, 4
      %v6553 = vshll.u32 %v6193, 16
      %v6555 = vrot.slane %v6553, 5
      %v6556 = vsel %vm341, %v6551, %v6555
      %v6558 = vshrl.u32 %v6194, 16
      %v6560 = vrot.slane %v6558, 4
      %v6561 = vshll.u32 %v6194, 16
      %v6563 = vrot.slane %v6561, 5
      %v6564 = vor.u32 %v6560, %v6563
      %v6565 = vrot.slane %v6564, 4
      %v6567 = vshll.u32 %v6195, 16
      %v6569 = vrot.slane %v6567, 5
      %v6570 = vsel %vm341, %v6565, %v6569
      %v6571 = vshrl.u32 %v6195, 16
      %v6573 = vrot.slane %v6571, 4
      %v6574 = vor.u32 %v6573, %v6569
      %v6575 = vrot.slane %v6574, 4
      %v6577 = vshll.u32 %v6196, 16
      %v6579 = vrot.slane %v6577, 5
      %v6580 = vsel %vm341, %v6575, %v6579
      %6613 = vst.msk [vmem:[#allocation4 + $0x8] sm:$0xf] %vm258, %v6210
      %6614 = vst.msk [vmem:[#allocation4 + $0x1c] sm:$0xf] %vm258, %v6220
      %6615 = vst.msk [vmem:[#allocation4 + $0x30] sm:$0xf] %vm258, %v6234
      %6616 = vst.msk [vmem:[#allocation4 + $0x44] sm:$0xf] %vm258, %v6244
      %6617 = vst.msk [vmem:[#allocation4 + $0x58] sm:$0xf] %vm258, %v6258
      %6618 = vst.msk [vmem:[#allocation4 + $0x6c] sm:$0xf] %vm258, %v6268
      %6619 = vst.msk [vmem:[#allocation4 + $0x80] sm:$0xf] %vm258, %v6282
      %6620 = vst.msk [vmem:[#allocation4 + $0x94] sm:$0xf] %vm258, %v6292
      %6621 = vst.msk [vmem:[#allocation4 + $0xa8] sm:$0xf] %vm258, %v6306
      %6622 = vst.msk [vmem:[#allocation4 + $0xbc] sm:$0xf] %vm258, %v6316
      %6623 = vst.msk [vmem:[#allocation4 + $0xd0] sm:$0xf] %vm258, %v6330
      %6624 = vst.msk [vmem:[#allocation4 + $0xe4] sm:$0xf] %vm258, %v6340
      %6625 = vst.msk [vmem:[#allocation4 + $0xf8] sm:$0xf] %vm258, %v6354
      %6626 = vst.msk [vmem:[#allocation4 + $0x10c] sm:$0xf] %vm258, %v6364
      %6627 = vst.msk [vmem:[#allocation4 + $0x120] sm:$0xf] %vm258, %v6378
      %6628 = vst.msk [vmem:[#allocation4 + $0x134] sm:$0xf] %vm258, %v6388
      %6629 = vst.msk [vmem:[#allocation4 + $0x148] sm:$0xf] %vm258, %v6402
      %6630 = vst.msk [vmem:[#allocation4 + $0x15c] sm:$0xf] %vm258, %v6412
      %6631 = vst.msk [vmem:[#allocation4 + $0x170] sm:$0xf] %vm258, %v6426
      %6632 = vst.msk [vmem:[#allocation4 + $0x184] sm:$0xf] %vm258, %v6436
      %6633 = vst.msk [vmem:[#allocation4 + $0x198] sm:$0xf] %vm258, %v6450
      %6634 = vst.msk [vmem:[#allocation4 + $0x1ac] sm:$0xf] %vm258, %v6460
      %6635 = vst.msk [vmem:[#allocation4 + $0x1c0] sm:$0xf] %vm258, %v6474
      %6636 = vst.msk [vmem:[#allocation4 + $0x1d4] sm:$0xf] %vm258, %v6484
      %6637 = vst.msk [vmem:[#allocation4 + $0x1e8] sm:$0xf] %vm258, %v6498
      %6638 = vst.msk [vmem:[#allocation4 + $0x1fc] sm:$0xf] %vm258, %v6508
      %6639 = vst.msk [vmem:[#allocation4 + $0x210] sm:$0xf] %vm258, %v6522
      %6640 = vst.msk [vmem:[#allocation4 + $0x224] sm:$0xf] %vm258, %v6532
      %6641 = vst.msk [vmem:[#allocation4 + $0x238] sm:$0xf] %vm258, %v6546
      %6642 = vst.msk [vmem:[#allocation4 + $0x24c] sm:$0xf] %vm258, %v6556
      %6643 = vst.msk [vmem:[#allocation4 + $0x260] sm:$0xf] %vm258, %v6570
      %6644 = vst.msk [vmem:[#allocation4 + $0x274] sm:$0xf] %vm258, %v6580
      %v6645 = vld [vmem:[%s4946] sm:$0xe]
      %v6646 = vld [vmem:[%s4946 + $0x4] sm:$0xf]
      %v6647 = vld [vmem:[%s4946 + $0x8] sm:$0x1]
      %v6648 = vld [vmem:[%s4946 + $0xc] sm:$0xe]
      %v6649 = vld [vmem:[%s4946 + $0x10] sm:$0xf]
      %v6650 = vld [vmem:[%s4946 + $0x14] sm:$0x1]
      %v6651 = vld [vmem:[%s4946 + $0x18] sm:$0xe]
      %v6652 = vld [vmem:[%s4946 + $0x1c] sm:$0xf]
      %v6653 = vld [vmem:[%s4946 + $0x20] sm:$0x1]
      %v6654 = vld [vmem:[%s4946 + $0x24] sm:$0xe]
      %v6655 = vld [vmem:[%s4946 + $0x28] sm:$0xf]
      %v6656 = vld [vmem:[%s4946 + $0x2c] sm:$0x1]
      %v6657 = vld [vmem:[%s4946 + $0x30] sm:$0xe]
      %v6658 = vld [vmem:[%s4946 + $0x34] sm:$0xf]
      %v6659 = vld [vmem:[%s4946 + $0x38] sm:$0x1]
      %v6660 = vld [vmem:[%s4946 + $0x3c] sm:$0xe]
      %v6661 = vld [vmem:[%s4946 + $0x40] sm:$0xf]
      %v6662 = vld [vmem:[%s4946 + $0x44] sm:$0x1]
      %v6663 = vld [vmem:[%s4946 + $0x48] sm:$0xe]
      %v6664 = vld [vmem:[%s4946 + $0x4c] sm:$0xf]
      %v6665 = vld [vmem:[%s4946 + $0x50] sm:$0x1]
      %v6666 = vld [vmem:[%s4946 + $0x54] sm:$0xe]
      %v6667 = vld [vmem:[%s4946 + $0x58] sm:$0xf]
      %v6668 = vld [vmem:[%s4946 + $0x5c] sm:$0x1]
      %v6669 = vld [vmem:[%s4946 + $0x60] sm:$0xe]
      %v6670 = vld [vmem:[%s4946 + $0x64] sm:$0xf]
      %v6671 = vld [vmem:[%s4946 + $0x68] sm:$0x1]
      %v6672 = vld [vmem:[%s4946 + $0x6c] sm:$0xe]
      %v6673 = vld [vmem:[%s4946 + $0x70] sm:$0xf]
      %v6674 = vld [vmem:[%s4946 + $0x74] sm:$0x1]
      %v6675 = vld [vmem:[%s4946 + $0x78] sm:$0xe]
      %v6676 = vld [vmem:[%s4946 + $0x7c] sm:$0xf]
      %v6677 = vld [vmem:[%s4946 + $0x80] sm:$0x1]
      %v6678 = vld [vmem:[%s4946 + $0x84] sm:$0xe]
      %v6679 = vld [vmem:[%s4946 + $0x88] sm:$0xf]
      %v6680 = vld [vmem:[%s4946 + $0x8c] sm:$0x1]
      %v6681 = vld [vmem:[%s4946 + $0x90] sm:$0xe]
      %v6682 = vld [vmem:[%s4946 + $0x94] sm:$0xf]
      %v6683 = vld [vmem:[%s4946 + $0x98] sm:$0x1]
      %v6684 = vld [vmem:[%s4946 + $0x9c] sm:$0xe]
      %v6685 = vld [vmem:[%s4946 + $0xa0] sm:$0xf]
      %v6686 = vld [vmem:[%s4946 + $0xa4] sm:$0x1]
      %v6687 = vld [vmem:[%s4946 + $0xa8] sm:$0xe]
      %v6688 = vld [vmem:[%s4946 + $0xac] sm:$0xf]
      %v6689 = vld [vmem:[%s4946 + $0xb0] sm:$0x1]
      %v6690 = vld [vmem:[%s4946 + $0xb4] sm:$0xe]
      %v6691 = vld [vmem:[%s4946 + $0xb8] sm:$0xf]
      %v6692 = vld [vmem:[%s4946 + $0xbc] sm:$0x1]
      %v6741 = vrot.slane %v6645, 5
      %v6742 = vrot.slane %v6741, 4
      %v6743 = vrot.slane %v6646, 5
      %v6744 = vsel %vm953, %v6742, %v6743
      %v6745 = vrot.slane %v6743, 4
      %v6746 = vrot.slane %v6647, 5
      %v6747 = vsel %vm953, %v6745, %v6746
      %v6748 = vrot.slane %v6648, 5
      %v6749 = vrot.slane %v6748, 4
      %v6750 = vrot.slane %v6649, 5
      %v6751 = vsel %vm953, %v6749, %v6750
      %v6752 = vrot.slane %v6750, 4
      %v6753 = vrot.slane %v6650, 5
      %v6754 = vsel %vm953, %v6752, %v6753
      %v6755 = vrot.slane %v6651, 5
      %v6756 = vrot.slane %v6755, 4
      %v6757 = vrot.slane %v6652, 5
      %v6758 = vsel %vm953, %v6756, %v6757
      %v6759 = vrot.slane %v6757, 4
      %v6760 = vrot.slane %v6653, 5
      %v6761 = vsel %vm953, %v6759, %v6760
      %v6762 = vrot.slane %v6654, 5
      %v6763 = vrot.slane %v6762, 4
      %v6764 = vrot.slane %v6655, 5
      %v6765 = vsel %vm953, %v6763, %v6764
      %v6766 = vrot.slane %v6764, 4
      %v6767 = vrot.slane %v6656, 5
      %v6768 = vsel %vm953, %v6766, %v6767
      %v6769 = vrot.slane %v6657, 5
      %v6770 = vrot.slane %v6769, 4
      %v6771 = vrot.slane %v6658, 5
      %v6772 = vsel %vm953, %v6770, %v6771
      %v6773 = vrot.slane %v6771, 4
      %v6774 = vrot.slane %v6659, 5
      %v6775 = vsel %vm953, %v6773, %v6774
      %v6776 = vrot.slane %v6660, 5
      %v6777 = vrot.slane %v6776, 4
      %v6778 = vrot.slane %v6661, 5
      %v6779 = vsel %vm953, %v6777, %v6778
      %v6780 = vrot.slane %v6778, 4
      %v6781 = vrot.slane %v6662, 5
      %v6782 = vsel %vm953, %v6780, %v6781
      %v6783 = vrot.slane %v6663, 5
      %v6784 = vrot.slane %v6783, 4
      %v6785 = vrot.slane %v6664, 5
      %v6786 = vsel %vm953, %v6784, %v6785
      %v6787 = vrot.slane %v6785, 4
      %v6788 = vrot.slane %v6665, 5
      %v6789 = vsel %vm953, %v6787, %v6788
      %v6790 = vrot.slane %v6666, 5
      %v6791 = vrot.slane %v6790, 4
      %v6792 = vrot.slane %v6667, 5
      %v6793 = vsel %vm953, %v6791, %v6792
      %v6794 = vrot.slane %v6792, 4
      %v6795 = vrot.slane %v6668, 5
      %v6796 = vsel %vm953, %v6794, %v6795
      %v6797 = vrot.slane %v6669, 5
      %v6798 = vrot.slane %v6797, 4
      %v6799 = vrot.slane %v6670, 5
      %v6800 = vsel %vm953, %v6798, %v6799
      %v6801 = vrot.slane %v6799, 4
      %v6802 = vrot.slane %v6671, 5
      %v6803 = vsel %vm953, %v6801, %v6802
      %v6804 = vrot.slane %v6672, 5
      %v6805 = vrot.slane %v6804, 4
      %v6806 = vrot.slane %v6673, 5
      %v6807 = vsel %vm953, %v6805, %v6806
      %v6808 = vrot.slane %v6806, 4
      %v6809 = vrot.slane %v6674, 5
      %v6810 = vsel %vm953, %v6808, %v6809
      %v6811 = vrot.slane %v6675, 5
      %v6812 = vrot.slane %v6811, 4
      %v6813 = vrot.slane %v6676, 5
      %v6814 = vsel %vm953, %v6812, %v6813
      %v6815 = vrot.slane %v6813, 4
      %v6816 = vrot.slane %v6677, 5
      %v6817 = vsel %vm953, %v6815, %v6816
      %v6818 = vrot.slane %v6678, 5
      %v6819 = vrot.slane %v6818, 4
      %v6820 = vrot.slane %v6679, 5
      %v6821 = vsel %vm953, %v6819, %v6820
      %v6822 = vrot.slane %v6820, 4
      %v6823 = vrot.slane %v6680, 5
      %v6824 = vsel %vm953, %v6822, %v6823
      %v6825 = vrot.slane %v6681, 5
      %v6826 = vrot.slane %v6825, 4
      %v6827 = vrot.slane %v6682, 5
      %v6828 = vsel %vm953, %v6826, %v6827
      %v6829 = vrot.slane %v6827, 4
      %v6830 = vrot.slane %v6683, 5
      %v6831 = vsel %vm953, %v6829, %v6830
      %v6832 = vrot.slane %v6684, 5
      %v6833 = vrot.slane %v6832, 4
      %v6834 = vrot.slane %v6685, 5
      %v6835 = vsel %vm953, %v6833, %v6834
      %v6836 = vrot.slane %v6834, 4
      %v6837 = vrot.slane %v6686, 5
      %v6838 = vsel %vm953, %v6836, %v6837
      %v6839 = vrot.slane %v6687, 5
      %v6840 = vrot.slane %v6839, 4
      %v6841 = vrot.slane %v6688, 5
      %v6842 = vsel %vm953, %v6840, %v6841
      %v6843 = vrot.slane %v6841, 4
      %v6844 = vrot.slane %v6689, 5
      %v6845 = vsel %vm953, %v6843, %v6844
      %v6846 = vrot.slane %v6690, 5
      %v6847 = vrot.slane %v6846, 4
      %v6848 = vrot.slane %v6691, 5
      %v6849 = vsel %vm953, %v6847, %v6848
      %v6850 = vrot.slane %v6848, 4
      %v6851 = vrot.slane %v6692, 5
      %v6852 = vsel %vm953, %v6850, %v6851
      %6853 = vrot.lane.b32.xlu0 %v6744, 64
      %v6854 = vpop.permute.xlu0 %6853
      %6855 = vrot.lane.b32.xlu0 %v6747, 64
      %v6856 = vpop.permute.xlu0 %6855
      %6857 = vrot.lane.b32.xlu0 %v6751, 64
      %v6858 = vpop.permute.xlu0 %6857
      %6859 = vrot.lane.b32.xlu0 %v6754, 64
      %v6860 = vpop.permute.xlu0 %6859
      %6861 = vrot.lane.b32.xlu0 %v6758, 64
      %v6862 = vpop.permute.xlu0 %6861
      %6863 = vrot.lane.b32.xlu0 %v6761, 64
      %v6864 = vpop.permute.xlu0 %6863
      %6865 = vrot.lane.b32.xlu0 %v6765, 64
      %v6866 = vpop.permute.xlu0 %6865
      %6867 = vrot.lane.b32.xlu0 %v6768, 64
      %v6868 = vpop.permute.xlu0 %6867
      %6869 = vrot.lane.b32.xlu0 %v6772, 64
      %v6870 = vpop.permute.xlu0 %6869
      %6871 = vrot.lane.b32.xlu0 %v6775, 64
      %v6872 = vpop.permute.xlu0 %6871
      %6873 = vrot.lane.b32.xlu0 %v6779, 64
      %v6874 = vpop.permute.xlu0 %6873
      %6875 = vrot.lane.b32.xlu0 %v6782, 64
      %v6876 = vpop.permute.xlu0 %6875
      %6877 = vrot.lane.b32.xlu0 %v6786, 64
      %v6878 = vpop.permute.xlu0 %6877
      %6879 = vrot.lane.b32.xlu0 %v6789, 64
      %v6880 = vpop.permute.xlu0 %6879
      %6881 = vrot.lane.b32.xlu0 %v6793, 64
      %v6882 = vpop.permute.xlu0 %6881
      %6883 = vrot.lane.b32.xlu0 %v6796, 64
      %v6884 = vpop.permute.xlu0 %6883
      %6885 = vrot.lane.b32.xlu0 %v6800, 64
      %v6886 = vpop.permute.xlu0 %6885
      %6887 = vrot.lane.b32.xlu0 %v6803, 64
      %v6888 = vpop.permute.xlu0 %6887
      %6889 = vrot.lane.b32.xlu0 %v6807, 64
      %v6890 = vpop.permute.xlu0 %6889
      %6891 = vrot.lane.b32.xlu0 %v6810, 64
      %v6892 = vpop.permute.xlu0 %6891
      %6893 = vrot.lane.b32.xlu0 %v6814, 64
      %v6894 = vpop.permute.xlu0 %6893
      %6895 = vrot.lane.b32.xlu0 %v6817, 64
      %v6896 = vpop.permute.xlu0 %6895
      %6897 = vrot.lane.b32.xlu0 %v6821, 64
      %v6898 = vpop.permute.xlu0 %6897
      %6899 = vrot.lane.b32.xlu0 %v6824, 64
      %v6900 = vpop.permute.xlu0 %6899
      %6901 = vrot.lane.b32.xlu0 %v6828, 64
      %v6902 = vpop.permute.xlu0 %6901
      %6903 = vrot.lane.b32.xlu0 %v6831, 64
      %v6904 = vpop.permute.xlu0 %6903
      %6905 = vrot.lane.b32.xlu0 %v6835, 64
      %v6906 = vpop.permute.xlu0 %6905
      %6907 = vrot.lane.b32.xlu0 %v6838, 64
      %v6908 = vpop.permute.xlu0 %6907
      %6909 = vrot.lane.b32.xlu0 %v6842, 64
      %v6910 = vpop.permute.xlu0 %6909
      %6911 = vrot.lane.b32.xlu0 %v6845, 64
      %v6912 = vpop.permute.xlu0 %6911
      %6913 = vrot.lane.b32.xlu0 %v6849, 64
      %v6914 = vpop.permute.xlu0 %6913
      %6915 = vrot.lane.b32.xlu0 %v6852, 64
      %v6916 = vpop.permute.xlu0 %6915
      %6949 = vst.msk [vmem:[#allocation4 + $0x8] sm:$0xf] %vm822, %v6854
      %6950 = vst.msk [vmem:[#allocation4 + $0x1c] sm:$0xf] %vm822, %v6856
      %6951 = vst.msk [vmem:[#allocation4 + $0x30] sm:$0xf] %vm822, %v6858
      %6952 = vst.msk [vmem:[#allocation4 + $0x44] sm:$0xf] %vm822, %v6860
      %6953 = vst.msk [vmem:[#allocation4 + $0x58] sm:$0xf] %vm822, %v6862
      %6954 = vst.msk [vmem:[#allocation4 + $0x6c] sm:$0xf] %vm822, %v6864
      %6955 = vst.msk [vmem:[#allocation4 + $0x80] sm:$0xf] %vm822, %v6866
      %6956 = vst.msk [vmem:[#allocation4 + $0x94] sm:$0xf] %vm822, %v6868
      %6957 = vst.msk [vmem:[#allocation4 + $0xa8] sm:$0xf] %vm822, %v6870
      %6958 = vst.msk [vmem:[#allocation4 + $0xbc] sm:$0xf] %vm822, %v6872
      %6959 = vst.msk [vmem:[#allocation4 + $0xd0] sm:$0xf] %vm822, %v6874
      %6960 = vst.msk [vmem:[#allocation4 + $0xe4] sm:$0xf] %vm822, %v6876
      %6961 = vst.msk [vmem:[#allocation4 + $0xf8] sm:$0xf] %vm822, %v6878
      %6962 = vst.msk [vmem:[#allocation4 + $0x10c] sm:$0xf] %vm822, %v6880
      %6963 = vst.msk [vmem:[#allocation4 + $0x120] sm:$0xf] %vm822, %v6882
      %6964 = vst.msk [vmem:[#allocation4 + $0x134] sm:$0xf] %vm822, %v6884
      %6965 = vst.msk [vmem:[#allocation4 + $0x148] sm:$0xf] %vm822, %v6886
      %6966 = vst.msk [vmem:[#allocation4 + $0x15c] sm:$0xf] %vm822, %v6888
      %6967 = vst.msk [vmem:[#allocation4 + $0x170] sm:$0xf] %vm822, %v6890
      %6968 = vst.msk [vmem:[#allocation4 + $0x184] sm:$0xf] %vm822, %v6892
      %6969 = vst.msk [vmem:[#allocation4 + $0x198] sm:$0xf] %vm822, %v6894
      %6970 = vst.msk [vmem:[#allocation4 + $0x1ac] sm:$0xf] %vm822, %v6896
      %6971 = vst.msk [vmem:[#allocation4 + $0x1c0] sm:$0xf] %vm822, %v6898
      %6972 = vst.msk [vmem:[#allocation4 + $0x1d4] sm:$0xf] %vm822, %v6900
      %6973 = vst.msk [vmem:[#allocation4 + $0x1e8] sm:$0xf] %vm822, %v6902
      %6974 = vst.msk [vmem:[#allocation4 + $0x1fc] sm:$0xf] %vm822, %v6904
      %6975 = vst.msk [vmem:[#allocation4 + $0x210] sm:$0xf] %vm822, %v6906
      %6976 = vst.msk [vmem:[#allocation4 + $0x224] sm:$0xf] %vm822, %v6908
      %6977 = vst.msk [vmem:[#allocation4 + $0x238] sm:$0xf] %vm822, %v6910
      %6978 = vst.msk [vmem:[#allocation4 + $0x24c] sm:$0xf] %vm822, %v6912
      %6979 = vst.msk [vmem:[#allocation4 + $0x260] sm:$0xf] %vm822, %v6914
      %6980 = vst.msk [vmem:[#allocation4 + $0x274] sm:$0xf] %vm822, %v6916
      %s6981 = scalar_lea.vmem [#allocation2], 24
      %v6982 = vld [vmem:[%s6981] sm:$0xf]
      %v6983 = vld [vmem:[%s6981 + $0x4] sm:$0xf]
      %v6984 = vld [vmem:[%s6981 + $0xc] sm:$0xf]
      %v6985 = vld [vmem:[%s6981 + $0x10] sm:$0xf]
      %v6986 = vld [vmem:[%s6981 + $0x18] sm:$0xf]
      %v6987 = vld [vmem:[%s6981 + $0x1c] sm:$0xf]
      %v6988 = vld [vmem:[%s6981 + $0x24] sm:$0xf]
      %v6989 = vld [vmem:[%s6981 + $0x28] sm:$0xf]
      %v6990 = vld [vmem:[%s6981 + $0x30] sm:$0xf]
      %v6991 = vld [vmem:[%s6981 + $0x34] sm:$0xf]
      %v6992 = vld [vmem:[%s6981 + $0x3c] sm:$0xf]
      %v6993 = vld [vmem:[%s6981 + $0x40] sm:$0xf]
      %v6994 = vld [vmem:[%s6981 + $0x48] sm:$0xf]
      %v6995 = vld [vmem:[%s6981 + $0x4c] sm:$0xf]
      %v6996 = vld [vmem:[%s6981 + $0x54] sm:$0xf]
      %v6997 = vld [vmem:[%s6981 + $0x58] sm:$0xf]
      %v6998 = vld [vmem:[%s6981 + $0x60] sm:$0xf]
      %v6999 = vld [vmem:[%s6981 + $0x64] sm:$0xf]
      %v7000 = vld [vmem:[%s6981 + $0x6c] sm:$0xf]
      %v7001 = vld [vmem:[%s6981 + $0x70] sm:$0xf]
      %v7002 = vld [vmem:[%s6981 + $0x78] sm:$0xf]
      %v7003 = vld [vmem:[%s6981 + $0x7c] sm:$0xf]
      %v7004 = vld [vmem:[%s6981 + $0x84] sm:$0xf]
      %v7005 = vld [vmem:[%s6981 + $0x88] sm:$0xf]
      %v7006 = vld [vmem:[%s6981 + $0x90] sm:$0xf]
      %v7007 = vld [vmem:[%s6981 + $0x94] sm:$0xf]
      %v7008 = vld [vmem:[%s6981 + $0x9c] sm:$0xf]
      %v7009 = vld [vmem:[%s6981 + $0xa0] sm:$0xf]
      %v7010 = vld [vmem:[%s6981 + $0xa8] sm:$0xf]
      %v7011 = vld [vmem:[%s6981 + $0xac] sm:$0xf]
      %v7012 = vld [vmem:[%s6981 + $0xb4] sm:$0xf]
      %v7013 = vld [vmem:[%s6981 + $0xb8] sm:$0xf]
      %7014 = vst.msk [vmem:[#allocation4 + $0xc] sm:$0xf] %vm258, %v6982
      %7015 = vst.msk [vmem:[#allocation4 + $0x20] sm:$0xf] %vm258, %v6983
      %7016 = vst.msk [vmem:[#allocation4 + $0x34] sm:$0xf] %vm258, %v6984
      %7017 = vst.msk [vmem:[#allocation4 + $0x48] sm:$0xf] %vm258, %v6985
      %7018 = vst.msk [vmem:[#allocation4 + $0x5c] sm:$0xf] %vm258, %v6986
      %7019 = vst.msk [vmem:[#allocation4 + $0x70] sm:$0xf] %vm258, %v6987
      %7020 = vst.msk [vmem:[#allocation4 + $0x84] sm:$0xf] %vm258, %v6988
      %7021 = vst.msk [vmem:[#allocation4 + $0x98] sm:$0xf] %vm258, %v6989
      %7022 = vst.msk [vmem:[#allocation4 + $0xac] sm:$0xf] %vm258, %v6990
      %7023 = vst.msk [vmem:[#allocation4 + $0xc0] sm:$0xf] %vm258, %v6991
      %7024 = vst.msk [vmem:[#allocation4 + $0xd4] sm:$0xf] %vm258, %v6992
      %7025 = vst.msk [vmem:[#allocation4 + $0xe8] sm:$0xf] %vm258, %v6993
      %7026 = vst.msk [vmem:[#allocation4 + $0xfc] sm:$0xf] %vm258, %v6994
      %7027 = vst.msk [vmem:[#allocation4 + $0x110] sm:$0xf] %vm258, %v6995
      %7028 = vst.msk [vmem:[#allocation4 + $0x124] sm:$0xf] %vm258, %v6996
      %7029 = vst.msk [vmem:[#allocation4 + $0x138] sm:$0xf] %vm258, %v6997
      %7030 = vst.msk [vmem:[#allocation4 + $0x14c] sm:$0xf] %vm258, %v6998
      %7031 = vst.msk [vmem:[#allocation4 + $0x160] sm:$0xf] %vm258, %v6999
      %7032 = vst.msk [vmem:[#allocation4 + $0x174] sm:$0xf] %vm258, %v7000
      %7033 = vst.msk [vmem:[#allocation4 + $0x188] sm:$0xf] %vm258, %v7001
      %7034 = vst.msk [vmem:[#allocation4 + $0x19c] sm:$0xf] %vm258, %v7002
      %7035 = vst.msk [vmem:[#allocation4 + $0x1b0] sm:$0xf] %vm258, %v7003
      %7036 = vst.msk [vmem:[#allocation4 + $0x1c4] sm:$0xf] %vm258, %v7004
      %7037 = vst.msk [vmem:[#allocation4 + $0x1d8] sm:$0xf] %vm258, %v7005
      %7038 = vst.msk [vmem:[#allocation4 + $0x1ec] sm:$0xf] %vm258, %v7006
      %7039 = vst.msk [vmem:[#allocation4 + $0x200] sm:$0xf] %vm258, %v7007
      %7040 = vst.msk [vmem:[#allocation4 + $0x214] sm:$0xf] %vm258, %v7008
      %7041 = vst.msk [vmem:[#allocation4 + $0x228] sm:$0xf] %vm258, %v7009
      %7042 = vst.msk [vmem:[#allocation4 + $0x23c] sm:$0xf] %vm258, %v7010
      %7043 = vst.msk [vmem:[#allocation4 + $0x250] sm:$0xf] %vm258, %v7011
      %7044 = vst.msk [vmem:[#allocation4 + $0x264] sm:$0xf] %vm258, %v7012
      %7045 = vst.msk [vmem:[#allocation4 + $0x278] sm:$0xf] %vm258, %v7013
      %v7046 = vld [vmem:[%s6981] sm:$0xf]
      %v7047 = vld [vmem:[%s6981 + $0x4] sm:$0xf]
      %v7048 = vld [vmem:[%s6981 + $0x8] sm:$0x1]
      %v7049 = vld [vmem:[%s6981 + $0xc] sm:$0xf]
      %v7050 = vld [vmem:[%s6981 + $0x10] sm:$0xf]
      %v7051 = vld [vmem:[%s6981 + $0x14] sm:$0x1]
      %v7052 = vld [vmem:[%s6981 + $0x18] sm:$0xf]
      %v7053 = vld [vmem:[%s6981 + $0x1c] sm:$0xf]
      %v7054 = vld [vmem:[%s6981 + $0x20] sm:$0x1]
      %v7055 = vld [vmem:[%s6981 + $0x24] sm:$0xf]
      %v7056 = vld [vmem:[%s6981 + $0x28] sm:$0xf]
      %v7057 = vld [vmem:[%s6981 + $0x2c] sm:$0x1]
      %v7058 = vld [vmem:[%s6981 + $0x30] sm:$0xf]
      %v7059 = vld [vmem:[%s6981 + $0x34] sm:$0xf]
      %v7060 = vld [vmem:[%s6981 + $0x38] sm:$0x1]
      %v7061 = vld [vmem:[%s6981 + $0x3c] sm:$0xf]
      %v7062 = vld [vmem:[%s6981 + $0x40] sm:$0xf]
      %v7063 = vld [vmem:[%s6981 + $0x44] sm:$0x1]
      %v7064 = vld [vmem:[%s6981 + $0x48] sm:$0xf]
      %v7065 = vld [vmem:[%s6981 + $0x4c] sm:$0xf]
      %v7066 = vld [vmem:[%s6981 + $0x50] sm:$0x1]
      %v7067 = vld [vmem:[%s6981 + $0x54] sm:$0xf]
      %v7068 = vld [vmem:[%s6981 + $0x58] sm:$0xf]
      %v7069 = vld [vmem:[%s6981 + $0x5c] sm:$0x1]
      %v7070 = vld [vmem:[%s6981 + $0x60] sm:$0xf]
      %v7071 = vld [vmem:[%s6981 + $0x64] sm:$0xf]
      %v7072 = vld [vmem:[%s6981 + $0x68] sm:$0x1]
      %v7073 = vld [vmem:[%s6981 + $0x6c] sm:$0xf]
      %v7074 = vld [vmem:[%s6981 + $0x70] sm:$0xf]
      %v7075 = vld [vmem:[%s6981 + $0x74] sm:$0x1]
      %v7076 = vld [vmem:[%s6981 + $0x78] sm:$0xf]
      %v7077 = vld [vmem:[%s6981 + $0x7c] sm:$0xf]
      %v7078 = vld [vmem:[%s6981 + $0x80] sm:$0x1]
      %v7079 = vld [vmem:[%s6981 + $0x84] sm:$0xf]
      %v7080 = vld [vmem:[%s6981 + $0x88] sm:$0xf]
      %v7081 = vld [vmem:[%s6981 + $0x8c] sm:$0x1]
      %v7082 = vld [vmem:[%s6981 + $0x90] sm:$0xf]
      %v7083 = vld [vmem:[%s6981 + $0x94] sm:$0xf]
      %v7084 = vld [vmem:[%s6981 + $0x98] sm:$0x1]
      %v7085 = vld [vmem:[%s6981 + $0x9c] sm:$0xf]
      %v7086 = vld [vmem:[%s6981 + $0xa0] sm:$0xf]
      %v7087 = vld [vmem:[%s6981 + $0xa4] sm:$0x1]
      %v7088 = vld [vmem:[%s6981 + $0xa8] sm:$0xf]
      %v7089 = vld [vmem:[%s6981 + $0xac] sm:$0xf]
      %v7090 = vld [vmem:[%s6981 + $0xb0] sm:$0x1]
      %v7091 = vld [vmem:[%s6981 + $0xb4] sm:$0xf]
      %v7092 = vld [vmem:[%s6981 + $0xb8] sm:$0xf]
      %v7093 = vld [vmem:[%s6981 + $0xbc] sm:$0x1]
      %v7095 = vshrl.u32 %v7046, 16
      %v7097 = vrot.slane %v7095, 4
      %v7098 = vshll.u32 %v7046, 16
      %v7100 = vrot.slane %v7098, 5
      %v7101 = vor.u32 %v7097, %v7100
      %v7102 = vrot.slane %v7101, 4
      %v7104 = vshll.u32 %v7047, 16
      %v7106 = vrot.slane %v7104, 5
      %v7107 = vsel %vm341, %v7102, %v7106
      %v7108 = vshrl.u32 %v7047, 16
      %v7110 = vrot.slane %v7108, 4
      %v7111 = vor.u32 %v7110, %v7106
      %v7112 = vrot.slane %v7111, 4
      %v7114 = vshll.u32 %v7048, 16
      %v7116 = vrot.slane %v7114, 5
      %v7117 = vsel %vm341, %v7112, %v7116
      %v7119 = vshrl.u32 %v7049, 16
      %v7121 = vrot.slane %v7119, 4
      %v7122 = vshll.u32 %v7049, 16
      %v7124 = vrot.slane %v7122, 5
      %v7125 = vor.u32 %v7121, %v7124
      %v7126 = vrot.slane %v7125, 4
      %v7128 = vshll.u32 %v7050, 16
      %v7130 = vrot.slane %v7128, 5
      %v7131 = vsel %vm341, %v7126, %v7130
      %v7132 = vshrl.u32 %v7050, 16
      %v7134 = vrot.slane %v7132, 4
      %v7135 = vor.u32 %v7134, %v7130
      %v7136 = vrot.slane %v7135, 4
      %v7138 = vshll.u32 %v7051, 16
      %v7140 = vrot.slane %v7138, 5
      %v7141 = vsel %vm341, %v7136, %v7140
      %v7143 = vshrl.u32 %v7052, 16
      %v7145 = vrot.slane %v7143, 4
      %v7146 = vshll.u32 %v7052, 16
      %v7148 = vrot.slane %v7146, 5
      %v7149 = vor.u32 %v7145, %v7148
      %v7150 = vrot.slane %v7149, 4
      %v7152 = vshll.u32 %v7053, 16
      %v7154 = vrot.slane %v7152, 5
      %v7155 = vsel %vm341, %v7150, %v7154
      %v7156 = vshrl.u32 %v7053, 16
      %v7158 = vrot.slane %v7156, 4
      %v7159 = vor.u32 %v7158, %v7154
      %v7160 = vrot.slane %v7159, 4
      %v7162 = vshll.u32 %v7054, 16
      %v7164 = vrot.slane %v7162, 5
      %v7165 = vsel %vm341, %v7160, %v7164
      %v7167 = vshrl.u32 %v7055, 16
      %v7169 = vrot.slane %v7167, 4
      %v7170 = vshll.u32 %v7055, 16
      %v7172 = vrot.slane %v7170, 5
      %v7173 = vor.u32 %v7169, %v7172
      %v7174 = vrot.slane %v7173, 4
      %v7176 = vshll.u32 %v7056, 16
      %v7178 = vrot.slane %v7176, 5
      %v7179 = vsel %vm341, %v7174, %v7178
      %v7180 = vshrl.u32 %v7056, 16
      %v7182 = vrot.slane %v7180, 4
      %v7183 = vor.u32 %v7182, %v7178
      %v7184 = vrot.slane %v7183, 4
      %v7186 = vshll.u32 %v7057, 16
      %v7188 = vrot.slane %v7186, 5
      %v7189 = vsel %vm341, %v7184, %v7188
      %v7191 = vshrl.u32 %v7058, 16
      %v7193 = vrot.slane %v7191, 4
      %v7194 = vshll.u32 %v7058, 16
      %v7196 = vrot.slane %v7194, 5
      %v7197 = vor.u32 %v7193, %v7196
      %v7198 = vrot.slane %v7197, 4
      %v7200 = vshll.u32 %v7059, 16
      %v7202 = vrot.slane %v7200, 5
      %v7203 = vsel %vm341, %v7198, %v7202
      %v7204 = vshrl.u32 %v7059, 16
      %v7206 = vrot.slane %v7204, 4
      %v7207 = vor.u32 %v7206, %v7202
      %v7208 = vrot.slane %v7207, 4
      %v7210 = vshll.u32 %v7060, 16
      %v7212 = vrot.slane %v7210, 5
      %v7213 = vsel %vm341, %v7208, %v7212
      %v7215 = vshrl.u32 %v7061, 16
      %v7217 = vrot.slane %v7215, 4
      %v7218 = vshll.u32 %v7061, 16
      %v7220 = vrot.slane %v7218, 5
      %v7221 = vor.u32 %v7217, %v7220
      %v7222 = vrot.slane %v7221, 4
      %v7224 = vshll.u32 %v7062, 16
      %v7226 = vrot.slane %v7224, 5
      %v7227 = vsel %vm341, %v7222, %v7226
      %v7228 = vshrl.u32 %v7062, 16
      %v7230 = vrot.slane %v7228, 4
      %v7231 = vor.u32 %v7230, %v7226
      %v7232 = vrot.slane %v7231, 4
      %v7234 = vshll.u32 %v7063, 16
      %v7236 = vrot.slane %v7234, 5
      %v7237 = vsel %vm341, %v7232, %v7236
      %v7239 = vshrl.u32 %v7064, 16
      %v7241 = vrot.slane %v7239, 4
      %v7242 = vshll.u32 %v7064, 16
      %v7244 = vrot.slane %v7242, 5
      %v7245 = vor.u32 %v7241, %v7244
      %v7246 = vrot.slane %v7245, 4
      %v7248 = vshll.u32 %v7065, 16
      %v7250 = vrot.slane %v7248, 5
      %v7251 = vsel %vm341, %v7246, %v7250
      %v7252 = vshrl.u32 %v7065, 16
      %v7254 = vrot.slane %v7252, 4
      %v7255 = vor.u32 %v7254, %v7250
      %v7256 = vrot.slane %v7255, 4
      %v7258 = vshll.u32 %v7066, 16
      %v7260 = vrot.slane %v7258, 5
      %v7261 = vsel %vm341, %v7256, %v7260
      %v7263 = vshrl.u32 %v7067, 16
      %v7265 = vrot.slane %v7263, 4
      %v7266 = vshll.u32 %v7067, 16
      %v7268 = vrot.slane %v7266, 5
      %v7269 = vor.u32 %v7265, %v7268
      %v7270 = vrot.slane %v7269, 4
      %v7272 = vshll.u32 %v7068, 16
      %v7274 = vrot.slane %v7272, 5
      %v7275 = vsel %vm341, %v7270, %v7274
      %v7276 = vshrl.u32 %v7068, 16
      %v7278 = vrot.slane %v7276, 4
      %v7279 = vor.u32 %v7278, %v7274
      %v7280 = vrot.slane %v7279, 4
      %v7282 = vshll.u32 %v7069, 16
      %v7284 = vrot.slane %v7282, 5
      %v7285 = vsel %vm341, %v7280, %v7284
      %v7287 = vshrl.u32 %v7070, 16
      %v7289 = vrot.slane %v7287, 4
      %v7290 = vshll.u32 %v7070, 16
      %v7292 = vrot.slane %v7290, 5
      %v7293 = vor.u32 %v7289, %v7292
      %v7294 = vrot.slane %v7293, 4
      %v7296 = vshll.u32 %v7071, 16
      %v7298 = vrot.slane %v7296, 5
      %v7299 = vsel %vm341, %v7294, %v7298
      %v7300 = vshrl.u32 %v7071, 16
      %v7302 = vrot.slane %v7300, 4
      %v7303 = vor.u32 %v7302, %v7298
      %v7304 = vrot.slane %v7303, 4
      %v7306 = vshll.u32 %v7072, 16
      %v7308 = vrot.slane %v7306, 5
      %v7309 = vsel %vm341, %v7304, %v7308
      %v7311 = vshrl.u32 %v7073, 16
      %v7313 = vrot.slane %v7311, 4
      %v7314 = vshll.u32 %v7073, 16
      %v7316 = vrot.slane %v7314, 5
      %v7317 = vor.u32 %v7313, %v7316
      %v7318 = vrot.slane %v7317, 4
      %v7320 = vshll.u32 %v7074, 16
      %v7322 = vrot.slane %v7320, 5
      %v7323 = vsel %vm341, %v7318, %v7322
      %v7324 = vshrl.u32 %v7074, 16
      %v7326 = vrot.slane %v7324, 4
      %v7327 = vor.u32 %v7326, %v7322
      %v7328 = vrot.slane %v7327, 4
      %v7330 = vshll.u32 %v7075, 16
      %v7332 = vrot.slane %v7330, 5
      %v7333 = vsel %vm341, %v7328, %v7332
      %v7335 = vshrl.u32 %v7076, 16
      %v7337 = vrot.slane %v7335, 4
      %v7338 = vshll.u32 %v7076, 16
      %v7340 = vrot.slane %v7338, 5
      %v7341 = vor.u32 %v7337, %v7340
      %v7342 = vrot.slane %v7341, 4
      %v7344 = vshll.u32 %v7077, 16
      %v7346 = vrot.slane %v7344, 5
      %v7347 = vsel %vm341, %v7342, %v7346
      %v7348 = vshrl.u32 %v7077, 16
      %v7350 = vrot.slane %v7348, 4
      %v7351 = vor.u32 %v7350, %v7346
      %v7352 = vrot.slane %v7351, 4
      %v7354 = vshll.u32 %v7078, 16
      %v7356 = vrot.slane %v7354, 5
      %v7357 = vsel %vm341, %v7352, %v7356
      %v7359 = vshrl.u32 %v7079, 16
      %v7361 = vrot.slane %v7359, 4
      %v7362 = vshll.u32 %v7079, 16
      %v7364 = vrot.slane %v7362, 5
      %v7365 = vor.u32 %v7361, %v7364
      %v7366 = vrot.slane %v7365, 4
      %v7368 = vshll.u32 %v7080, 16
      %v7370 = vrot.slane %v7368, 5
      %v7371 = vsel %vm341, %v7366, %v7370
      %v7372 = vshrl.u32 %v7080, 16
      %v7374 = vrot.slane %v7372, 4
      %v7375 = vor.u32 %v7374, %v7370
      %v7376 = vrot.slane %v7375, 4
      %v7378 = vshll.u32 %v7081, 16
      %v7380 = vrot.slane %v7378, 5
      %v7381 = vsel %vm341, %v7376, %v7380
      %v7383 = vshrl.u32 %v7082, 16
      %v7385 = vrot.slane %v7383, 4
      %v7386 = vshll.u32 %v7082, 16
      %v7388 = vrot.slane %v7386, 5
      %v7389 = vor.u32 %v7385, %v7388
      %v7390 = vrot.slane %v7389, 4
      %v7392 = vshll.u32 %v7083, 16
      %v7394 = vrot.slane %v7392, 5
      %v7395 = vsel %vm341, %v7390, %v7394
      %v7396 = vshrl.u32 %v7083, 16
      %v7398 = vrot.slane %v7396, 4
      %v7399 = vor.u32 %v7398, %v7394
      %v7400 = vrot.slane %v7399, 4
      %v7402 = vshll.u32 %v7084, 16
      %v7404 = vrot.slane %v7402, 5
      %v7405 = vsel %vm341, %v7400, %v7404
      %v7407 = vshrl.u32 %v7085, 16
      %v7409 = vrot.slane %v7407, 4
      %v7410 = vshll.u32 %v7085, 16
      %v7412 = vrot.slane %v7410, 5
      %v7413 = vor.u32 %v7409, %v7412
      %v7414 = vrot.slane %v7413, 4
      %v7416 = vshll.u32 %v7086, 16
      %v7418 = vrot.slane %v7416, 5
      %v7419 = vsel %vm341, %v7414, %v7418
      %v7420 = vshrl.u32 %v7086, 16
      %v7422 = vrot.slane %v7420, 4
      %v7423 = vor.u32 %v7422, %v7418
      %v7424 = vrot.slane %v7423, 4
      %v7426 = vshll.u32 %v7087, 16
      %v7428 = vrot.slane %v7426, 5
      %v7429 = vsel %vm341, %v7424, %v7428
      %v7431 = vshrl.u32 %v7088, 16
      %v7433 = vrot.slane %v7431, 4
      %v7434 = vshll.u32 %v7088, 16
      %v7436 = vrot.slane %v7434, 5
      %v7437 = vor.u32 %v7433, %v7436
      %v7438 = vrot.slane %v7437, 4
      %v7440 = vshll.u32 %v7089, 16
      %v7442 = vrot.slane %v7440, 5
      %v7443 = vsel %vm341, %v7438, %v7442
      %v7444 = vshrl.u32 %v7089, 16
      %v7446 = vrot.slane %v7444, 4
      %v7447 = vor.u32 %v7446, %v7442
      %v7448 = vrot.slane %v7447, 4
      %v7450 = vshll.u32 %v7090, 16
      %v7452 = vrot.slane %v7450, 5
      %v7453 = vsel %vm341, %v7448, %v7452
      %v7455 = vshrl.u32 %v7091, 16
      %v7457 = vrot.slane %v7455, 4
      %v7458 = vshll.u32 %v7091, 16
      %v7460 = vrot.slane %v7458, 5
      %v7461 = vor.u32 %v7457, %v7460
      %v7462 = vrot.slane %v7461, 4
      %v7464 = vshll.u32 %v7092, 16
      %v7466 = vrot.slane %v7464, 5
      %v7467 = vsel %vm341, %v7462, %v7466
      %v7468 = vshrl.u32 %v7092, 16
      %v7470 = vrot.slane %v7468, 4
      %v7471 = vor.u32 %v7470, %v7466
      %v7472 = vrot.slane %v7471, 4
      %v7474 = vshll.u32 %v7093, 16
      %v7476 = vrot.slane %v7474, 5
      %v7477 = vsel %vm341, %v7472, %v7476
      %7478 = vrot.lane.b32.xlu0 %v7107, 64
      %v7479 = vpop.permute.xlu0 %7478
      %7480 = vrot.lane.b32.xlu0 %v7117, 64
      %v7481 = vpop.permute.xlu0 %7480
      %7482 = vrot.lane.b32.xlu0 %v7131, 64
      %v7483 = vpop.permute.xlu0 %7482
      %7484 = vrot.lane.b32.xlu0 %v7141, 64
      %v7485 = vpop.permute.xlu0 %7484
      %7486 = vrot.lane.b32.xlu0 %v7155, 64
      %v7487 = vpop.permute.xlu0 %7486
      %7488 = vrot.lane.b32.xlu0 %v7165, 64
      %v7489 = vpop.permute.xlu0 %7488
      %7490 = vrot.lane.b32.xlu0 %v7179, 64
      %v7491 = vpop.permute.xlu0 %7490
      %7492 = vrot.lane.b32.xlu0 %v7189, 64
      %v7493 = vpop.permute.xlu0 %7492
      %7494 = vrot.lane.b32.xlu0 %v7203, 64
      %v7495 = vpop.permute.xlu0 %7494
      %7496 = vrot.lane.b32.xlu0 %v7213, 64
      %v7497 = vpop.permute.xlu0 %7496
      %7498 = vrot.lane.b32.xlu0 %v7227, 64
      %v7499 = vpop.permute.xlu0 %7498
      %7500 = vrot.lane.b32.xlu0 %v7237, 64
      %v7501 = vpop.permute.xlu0 %7500
      %7502 = vrot.lane.b32.xlu0 %v7251, 64
      %v7503 = vpop.permute.xlu0 %7502
      %7504 = vrot.lane.b32.xlu0 %v7261, 64
      %v7505 = vpop.permute.xlu0 %7504
      %7506 = vrot.lane.b32.xlu0 %v7275, 64
      %v7507 = vpop.permute.xlu0 %7506
      %7508 = vrot.lane.b32.xlu0 %v7285, 64
      %v7509 = vpop.permute.xlu0 %7508
      %7510 = vrot.lane.b32.xlu0 %v7299, 64
      %v7511 = vpop.permute.xlu0 %7510
      %7512 = vrot.lane.b32.xlu0 %v7309, 64
      %v7513 = vpop.permute.xlu0 %7512
      %7514 = vrot.lane.b32.xlu0 %v7323, 64
      %v7515 = vpop.permute.xlu0 %7514
      %7516 = vrot.lane.b32.xlu0 %v7333, 64
      %v7517 = vpop.permute.xlu0 %7516
      %7518 = vrot.lane.b32.xlu0 %v7347, 64
      %v7519 = vpop.permute.xlu0 %7518
      %7520 = vrot.lane.b32.xlu0 %v7357, 64
      %v7521 = vpop.permute.xlu0 %7520
      %7522 = vrot.lane.b32.xlu0 %v7371, 64
      %v7523 = vpop.permute.xlu0 %7522
      %7524 = vrot.lane.b32.xlu0 %v7381, 64
      %v7525 = vpop.permute.xlu0 %7524
      %7526 = vrot.lane.b32.xlu0 %v7395, 64
      %v7527 = vpop.permute.xlu0 %7526
      %7528 = vrot.lane.b32.xlu0 %v7405, 64
      %v7529 = vpop.permute.xlu0 %7528
      %7530 = vrot.lane.b32.xlu0 %v7419, 64
      %v7531 = vpop.permute.xlu0 %7530
      %7532 = vrot.lane.b32.xlu0 %v7429, 64
      %v7533 = vpop.permute.xlu0 %7532
      %7534 = vrot.lane.b32.xlu0 %v7443, 64
      %v7535 = vpop.permute.xlu0 %7534
      %7536 = vrot.lane.b32.xlu0 %v7453, 64
      %v7537 = vpop.permute.xlu0 %7536
      %7538 = vrot.lane.b32.xlu0 %v7467, 64
      %v7539 = vpop.permute.xlu0 %7538
      %7540 = vrot.lane.b32.xlu0 %v7477, 64
      %v7541 = vpop.permute.xlu0 %7540
      %7574 = vst.msk [vmem:[#allocation4 + $0xc] sm:$0xf] %vm822, %v7479
      %7575 = vst.msk [vmem:[#allocation4 + $0x20] sm:$0xf] %vm822, %v7481
      %7576 = vst.msk [vmem:[#allocation4 + $0x34] sm:$0xf] %vm822, %v7483
      %7577 = vst.msk [vmem:[#allocation4 + $0x48] sm:$0xf] %vm822, %v7485
      %7578 = vst.msk [vmem:[#allocation4 + $0x5c] sm:$0xf] %vm822, %v7487
      %7579 = vst.msk [vmem:[#allocation4 + $0x70] sm:$0xf] %vm822, %v7489
      %7580 = vst.msk [vmem:[#allocation4 + $0x84] sm:$0xf] %vm822, %v7491
      %7581 = vst.msk [vmem:[#allocation4 + $0x98] sm:$0xf] %vm822, %v7493
      %7582 = vst.msk [vmem:[#allocation4 + $0xac] sm:$0xf] %vm822, %v7495
      %7583 = vst.msk [vmem:[#allocation4 + $0xc0] sm:$0xf] %vm822, %v7497
      %7584 = vst.msk [vmem:[#allocation4 + $0xd4] sm:$0xf] %vm822, %v7499
      %7585 = vst.msk [vmem:[#allocation4 + $0xe8] sm:$0xf] %vm822, %v7501
      %7586 = vst.msk [vmem:[#allocation4 + $0xfc] sm:$0xf] %vm822, %v7503
      %7587 = vst.msk [vmem:[#allocation4 + $0x110] sm:$0xf] %vm822, %v7505
      %7588 = vst.msk [vmem:[#allocation4 + $0x124] sm:$0xf] %vm822, %v7507
      %7589 = vst.msk [vmem:[#allocation4 + $0x138] sm:$0xf] %vm822, %v7509
      %7590 = vst.msk [vmem:[#allocation4 + $0x14c] sm:$0xf] %vm822, %v7511
      %7591 = vst.msk [vmem:[#allocation4 + $0x160] sm:$0xf] %vm822, %v7513
      %7592 = vst.msk [vmem:[#allocation4 + $0x174] sm:$0xf] %vm822, %v7515
      %7593 = vst.msk [vmem:[#allocation4 + $0x188] sm:$0xf] %vm822, %v7517
      %7594 = vst.msk [vmem:[#allocation4 + $0x19c] sm:$0xf] %vm822, %v7519
      %7595 = vst.msk [vmem:[#allocation4 + $0x1b0] sm:$0xf] %vm822, %v7521
      %7596 = vst.msk [vmem:[#allocation4 + $0x1c4] sm:$0xf] %vm822, %v7523
      %7597 = vst.msk [vmem:[#allocation4 + $0x1d8] sm:$0xf] %vm822, %v7525
      %7598 = vst.msk [vmem:[#allocation4 + $0x1ec] sm:$0xf] %vm822, %v7527
      %7599 = vst.msk [vmem:[#allocation4 + $0x200] sm:$0xf] %vm822, %v7529
      %7600 = vst.msk [vmem:[#allocation4 + $0x214] sm:$0xf] %vm822, %v7531
      %7601 = vst.msk [vmem:[#allocation4 + $0x228] sm:$0xf] %vm822, %v7533
      %7602 = vst.msk [vmem:[#allocation4 + $0x23c] sm:$0xf] %vm822, %v7535
      %7603 = vst.msk [vmem:[#allocation4 + $0x250] sm:$0xf] %vm822, %v7537
      %7604 = vst.msk [vmem:[#allocation4 + $0x264] sm:$0xf] %vm822, %v7539
      %7605 = vst.msk [vmem:[#allocation4 + $0x278] sm:$0xf] %vm822, %v7541
      %v7606 = vld [vmem:[%s6981] sm:$0xe]
      %v7607 = vld [vmem:[%s6981 + $0x4] sm:$0xf]
      %v7608 = vld [vmem:[%s6981 + $0x8] sm:$0x1]
      %v7609 = vld [vmem:[%s6981 + $0xc] sm:$0xe]
      %v7610 = vld [vmem:[%s6981 + $0x10] sm:$0xf]
      %v7611 = vld [vmem:[%s6981 + $0x14] sm:$0x1]
      %v7612 = vld [vmem:[%s6981 + $0x18] sm:$0xe]
      %v7613 = vld [vmem:[%s6981 + $0x1c] sm:$0xf]
      %v7614 = vld [vmem:[%s6981 + $0x20] sm:$0x1]
      %v7615 = vld [vmem:[%s6981 + $0x24] sm:$0xe]
      %v7616 = vld [vmem:[%s6981 + $0x28] sm:$0xf]
      %v7617 = vld [vmem:[%s6981 + $0x2c] sm:$0x1]
      %v7618 = vld [vmem:[%s6981 + $0x30] sm:$0xe]
      %v7619 = vld [vmem:[%s6981 + $0x34] sm:$0xf]
      %v7620 = vld [vmem:[%s6981 + $0x38] sm:$0x1]
      %v7621 = vld [vmem:[%s6981 + $0x3c] sm:$0xe]
      %v7622 = vld [vmem:[%s6981 + $0x40] sm:$0xf]
      %v7623 = vld [vmem:[%s6981 + $0x44] sm:$0x1]
      %v7624 = vld [vmem:[%s6981 + $0x48] sm:$0xe]
      %v7625 = vld [vmem:[%s6981 + $0x4c] sm:$0xf]
      %v7626 = vld [vmem:[%s6981 + $0x50] sm:$0x1]
      %v7627 = vld [vmem:[%s6981 + $0x54] sm:$0xe]
      %v7628 = vld [vmem:[%s6981 + $0x58] sm:$0xf]
      %v7629 = vld [vmem:[%s6981 + $0x5c] sm:$0x1]
      %v7630 = vld [vmem:[%s6981 + $0x60] sm:$0xe]
      %v7631 = vld [vmem:[%s6981 + $0x64] sm:$0xf]
      %v7632 = vld [vmem:[%s6981 + $0x68] sm:$0x1]
      %v7633 = vld [vmem:[%s6981 + $0x6c] sm:$0xe]
      %v7634 = vld [vmem:[%s6981 + $0x70] sm:$0xf]
      %v7635 = vld [vmem:[%s6981 + $0x74] sm:$0x1]
      %v7636 = vld [vmem:[%s6981 + $0x78] sm:$0xe]
      %v7637 = vld [vmem:[%s6981 + $0x7c] sm:$0xf]
      %v7638 = vld [vmem:[%s6981 + $0x80] sm:$0x1]
      %v7639 = vld [vmem:[%s6981 + $0x84] sm:$0xe]
      %v7640 = vld [vmem:[%s6981 + $0x88] sm:$0xf]
      %v7641 = vld [vmem:[%s6981 + $0x8c] sm:$0x1]
      %v7642 = vld [vmem:[%s6981 + $0x90] sm:$0xe]
      %v7643 = vld [vmem:[%s6981 + $0x94] sm:$0xf]
      %v7644 = vld [vmem:[%s6981 + $0x98] sm:$0x1]
      %v7645 = vld [vmem:[%s6981 + $0x9c] sm:$0xe]
      %v7646 = vld [vmem:[%s6981 + $0xa0] sm:$0xf]
      %v7647 = vld [vmem:[%s6981 + $0xa4] sm:$0x1]
      %v7648 = vld [vmem:[%s6981 + $0xa8] sm:$0xe]
      %v7649 = vld [vmem:[%s6981 + $0xac] sm:$0xf]
      %v7650 = vld [vmem:[%s6981 + $0xb0] sm:$0x1]
      %v7651 = vld [vmem:[%s6981 + $0xb4] sm:$0xe]
      %v7652 = vld [vmem:[%s6981 + $0xb8] sm:$0xf]
      %v7653 = vld [vmem:[%s6981 + $0xbc] sm:$0x1]
      %v7702 = vrot.slane %v7606, 5
      %v7703 = vrot.slane %v7702, 4
      %v7704 = vrot.slane %v7607, 5
      %v7705 = vsel %vm953, %v7703, %v7704
      %v7706 = vrot.slane %v7704, 4
      %v7707 = vrot.slane %v7608, 5
      %v7708 = vsel %vm953, %v7706, %v7707
      %v7709 = vrot.slane %v7609, 5
      %v7710 = vrot.slane %v7709, 4
      %v7711 = vrot.slane %v7610, 5
      %v7712 = vsel %vm953, %v7710, %v7711
      %v7713 = vrot.slane %v7711, 4
      %v7714 = vrot.slane %v7611, 5
      %v7715 = vsel %vm953, %v7713, %v7714
      %v7716 = vrot.slane %v7612, 5
      %v7717 = vrot.slane %v7716, 4
      %v7718 = vrot.slane %v7613, 5
      %v7719 = vsel %vm953, %v7717, %v7718
      %v7720 = vrot.slane %v7718, 4
      %v7721 = vrot.slane %v7614, 5
      %v7722 = vsel %vm953, %v7720, %v7721
      %v7723 = vrot.slane %v7615, 5
      %v7724 = vrot.slane %v7723, 4
      %v7725 = vrot.slane %v7616, 5
      %v7726 = vsel %vm953, %v7724, %v7725
      %v7727 = vrot.slane %v7725, 4
      %v7728 = vrot.slane %v7617, 5
      %v7729 = vsel %vm953, %v7727, %v7728
      %v7730 = vrot.slane %v7618, 5
      %v7731 = vrot.slane %v7730, 4
      %v7732 = vrot.slane %v7619, 5
      %v7733 = vsel %vm953, %v7731, %v7732
      %v7734 = vrot.slane %v7732, 4
      %v7735 = vrot.slane %v7620, 5
      %v7736 = vsel %vm953, %v7734, %v7735
      %v7737 = vrot.slane %v7621, 5
      %v7738 = vrot.slane %v7737, 4
      %v7739 = vrot.slane %v7622, 5
      %v7740 = vsel %vm953, %v7738, %v7739
      %v7741 = vrot.slane %v7739, 4
      %v7742 = vrot.slane %v7623, 5
      %v7743 = vsel %vm953, %v7741, %v7742
      %v7744 = vrot.slane %v7624, 5
      %v7745 = vrot.slane %v7744, 4
      %v7746 = vrot.slane %v7625, 5
      %v7747 = vsel %vm953, %v7745, %v7746
      %v7748 = vrot.slane %v7746, 4
      %v7749 = vrot.slane %v7626, 5
      %v7750 = vsel %vm953, %v7748, %v7749
      %v7751 = vrot.slane %v7627, 5
      %v7752 = vrot.slane %v7751, 4
      %v7753 = vrot.slane %v7628, 5
      %v7754 = vsel %vm953, %v7752, %v7753
      %v7755 = vrot.slane %v7753, 4
      %v7756 = vrot.slane %v7629, 5
      %v7757 = vsel %vm953, %v7755, %v7756
      %v7758 = vrot.slane %v7630, 5
      %v7759 = vrot.slane %v7758, 4
      %v7760 = vrot.slane %v7631, 5
      %v7761 = vsel %vm953, %v7759, %v7760
      %v7762 = vrot.slane %v7760, 4
      %v7763 = vrot.slane %v7632, 5
      %v7764 = vsel %vm953, %v7762, %v7763
      %v7765 = vrot.slane %v7633, 5
      %v7766 = vrot.slane %v7765, 4
      %v7767 = vrot.slane %v7634, 5
      %v7768 = vsel %vm953, %v7766, %v7767
      %v7769 = vrot.slane %v7767, 4
      %v7770 = vrot.slane %v7635, 5
      %v7771 = vsel %vm953, %v7769, %v7770
      %v7772 = vrot.slane %v7636, 5
      %v7773 = vrot.slane %v7772, 4
      %v7774 = vrot.slane %v7637, 5
      %v7775 = vsel %vm953, %v7773, %v7774
      %v7776 = vrot.slane %v7774, 4
      %v7777 = vrot.slane %v7638, 5
      %v7778 = vsel %vm953, %v7776, %v7777
      %v7779 = vrot.slane %v7639, 5
      %v7780 = vrot.slane %v7779, 4
      %v7781 = vrot.slane %v7640, 5
      %v7782 = vsel %vm953, %v7780, %v7781
      %v7783 = vrot.slane %v7781, 4
      %v7784 = vrot.slane %v7641, 5
      %v7785 = vsel %vm953, %v7783, %v7784
      %v7786 = vrot.slane %v7642, 5
      %v7787 = vrot.slane %v7786, 4
      %v7788 = vrot.slane %v7643, 5
      %v7789 = vsel %vm953, %v7787, %v7788
      %v7790 = vrot.slane %v7788, 4
      %v7791 = vrot.slane %v7644, 5
      %v7792 = vsel %vm953, %v7790, %v7791
      %v7793 = vrot.slane %v7645, 5
      %v7794 = vrot.slane %v7793, 4
      %v7795 = vrot.slane %v7646, 5
      %v7796 = vsel %vm953, %v7794, %v7795
      %v7797 = vrot.slane %v7795, 4
      %v7798 = vrot.slane %v7647, 5
      %v7799 = vsel %vm953, %v7797, %v7798
      %v7800 = vrot.slane %v7648, 5
      %v7801 = vrot.slane %v7800, 4
      %v7802 = vrot.slane %v7649, 5
      %v7803 = vsel %vm953, %v7801, %v7802
      %v7804 = vrot.slane %v7802, 4
      %v7805 = vrot.slane %v7650, 5
      %v7806 = vsel %vm953, %v7804, %v7805
      %v7807 = vrot.slane %v7651, 5
      %v7808 = vrot.slane %v7807, 4
      %v7809 = vrot.slane %v7652, 5
      %v7810 = vsel %vm953, %v7808, %v7809
      %v7811 = vrot.slane %v7809, 4
      %v7812 = vrot.slane %v7653, 5
      %v7813 = vsel %vm953, %v7811, %v7812
      %7846 = vst.msk [vmem:[#allocation4 + $0x10] sm:$0xf] %vm258, %v7705
      %7847 = vst.msk [vmem:[#allocation4 + $0x24] sm:$0xf] %vm258, %v7708
      %7848 = vst.msk [vmem:[#allocation4 + $0x38] sm:$0xf] %vm258, %v7712
      %7849 = vst.msk [vmem:[#allocation4 + $0x4c] sm:$0xf] %vm258, %v7715
      %7850 = vst.msk [vmem:[#allocation4 + $0x60] sm:$0xf] %vm258, %v7719
      %7851 = vst.msk [vmem:[#allocation4 + $0x74] sm:$0xf] %vm258, %v7722
      %7852 = vst.msk [vmem:[#allocation4 + $0x88] sm:$0xf] %vm258, %v7726
      %7853 = vst.msk [vmem:[#allocation4 + $0x9c] sm:$0xf] %vm258, %v7729
      %7854 = vst.msk [vmem:[#allocation4 + $0xb0] sm:$0xf] %vm258, %v7733
      %7855 = vst.msk [vmem:[#allocation4 + $0xc4] sm:$0xf] %vm258, %v7736
      %7856 = vst.msk [vmem:[#allocation4 + $0xd8] sm:$0xf] %vm258, %v7740
      %7857 = vst.msk [vmem:[#allocation4 + $0xec] sm:$0xf] %vm258, %v7743
      %7858 = vst.msk [vmem:[#allocation4 + $0x100] sm:$0xf] %vm258, %v7747
      %7859 = vst.msk [vmem:[#allocation4 + $0x114] sm:$0xf] %vm258, %v7750
      %7860 = vst.msk [vmem:[#allocation4 + $0x128] sm:$0xf] %vm258, %v7754
      %7861 = vst.msk [vmem:[#allocation4 + $0x13c] sm:$0xf] %vm258, %v7757
      %7862 = vst.msk [vmem:[#allocation4 + $0x150] sm:$0xf] %vm258, %v7761
      %7863 = vst.msk [vmem:[#allocation4 + $0x164] sm:$0xf] %vm258, %v7764
      %7864 = vst.msk [vmem:[#allocation4 + $0x178] sm:$0xf] %vm258, %v7768
      %7865 = vst.msk [vmem:[#allocation4 + $0x18c] sm:$0xf] %vm258, %v7771
      %7866 = vst.msk [vmem:[#allocation4 + $0x1a0] sm:$0xf] %vm258, %v7775
      %7867 = vst.msk [vmem:[#allocation4 + $0x1b4] sm:$0xf] %vm258, %v7778
      %7868 = vst.msk [vmem:[#allocation4 + $0x1c8] sm:$0xf] %vm258, %v7782
      %7869 = vst.msk [vmem:[#allocation4 + $0x1dc] sm:$0xf] %vm258, %v7785
      %7870 = vst.msk [vmem:[#allocation4 + $0x1f0] sm:$0xf] %vm258, %v7789
      %7871 = vst.msk [vmem:[#allocation4 + $0x204] sm:$0xf] %vm258, %v7792
      %7872 = vst.msk [vmem:[#allocation4 + $0x218] sm:$0xf] %vm258, %v7796
      %7873 = vst.msk [vmem:[#allocation4 + $0x22c] sm:$0xf] %vm258, %v7799
      %7874 = vst.msk [vmem:[#allocation4 + $0x240] sm:$0xf] %vm258, %v7803
      %7875 = vst.msk [vmem:[#allocation4 + $0x254] sm:$0xf] %vm258, %v7806
      %7876 = vst.msk [vmem:[#allocation4 + $0x268] sm:$0xf] %vm258, %v7810
      %7877 = vst.msk [vmem:[#allocation4 + $0x27c] sm:$0xf] %vm258, %v7813
      %v7878 = vld [vmem:[#allocation4] sm:$0xff]
      %v7879 = vld [vmem:[#allocation4 + $0x8] sm:$0xff]
      %v7880 = vld [vmem:[#allocation4 + $0x10] sm:$0xf]
      %v7881 = vld [vmem:[#allocation4 + $0x14] sm:$0xff]
      %v7882 = vld [vmem:[#allocation4 + $0x1c] sm:$0xff]
      %v7883 = vld [vmem:[#allocation4 + $0x24] sm:$0xf]
      %v7884 = vld [vmem:[#allocation4 + $0x28] sm:$0xff]
      %v7885 = vld [vmem:[#allocation4 + $0x30] sm:$0xff]
      %v7886 = vld [vmem:[#allocation4 + $0x38] sm:$0xf]
      %v7887 = vld [vmem:[#allocation4 + $0x3c] sm:$0xff]
      %v7888 = vld [vmem:[#allocation4 + $0x44] sm:$0xff]
      %v7889 = vld [vmem:[#allocation4 + $0x4c] sm:$0xf]
      %v7890 = vld [vmem:[#allocation4 + $0x50] sm:$0xff]
      %v7891 = vld [vmem:[#allocation4 + $0x58] sm:$0xff]
      %v7892 = vld [vmem:[#allocation4 + $0x60] sm:$0xf]
      %v7893 = vld [vmem:[#allocation4 + $0x64] sm:$0xff]
      %v7894 = vld [vmem:[#allocation4 + $0x6c] sm:$0xff]
      %v7895 = vld [vmem:[#allocation4 + $0x74] sm:$0xf]
      %v7896 = vld [vmem:[#allocation4 + $0x78] sm:$0xff]
      %v7897 = vld [vmem:[#allocation4 + $0x80] sm:$0xff]
      %v7898 = vld [vmem:[#allocation4 + $0x88] sm:$0xf]
      %v7899 = vld [vmem:[#allocation4 + $0x8c] sm:$0xff]
      %v7900 = vld [vmem:[#allocation4 + $0x94] sm:$0xff]
      %v7901 = vld [vmem:[#allocation4 + $0x9c] sm:$0xf]
      %v7902 = vld [vmem:[#allocation4 + $0xa0] sm:$0xff]
      %v7903 = vld [vmem:[#allocation4 + $0xa8] sm:$0xff]
      %v7904 = vld [vmem:[#allocation4 + $0xb0] sm:$0xf]
      %v7905 = vld [vmem:[#allocation4 + $0xb4] sm:$0xff]
      %v7906 = vld [vmem:[#allocation4 + $0xbc] sm:$0xff]
      %v7907 = vld [vmem:[#allocation4 + $0xc4] sm:$0xf]
      %v7908 = vld [vmem:[#allocation4 + $0xc8] sm:$0xff]
      %v7909 = vld [vmem:[#allocation4 + $0xd0] sm:$0xff]
      %v7910 = vld [vmem:[#allocation4 + $0xd8] sm:$0xf]
      %v7911 = vld [vmem:[#allocation4 + $0xdc] sm:$0xff]
      %v7912 = vld [vmem:[#allocation4 + $0xe4] sm:$0xff]
      %v7913 = vld [vmem:[#allocation4 + $0xec] sm:$0xf]
      %v7914 = vld [vmem:[#allocation4 + $0xf0] sm:$0xff]
      %v7915 = vld [vmem:[#allocation4 + $0xf8] sm:$0xff]
      %v7916 = vld [vmem:[#allocation4 + $0x100] sm:$0xf]
      %v7917 = vld [vmem:[#allocation4 + $0x104] sm:$0xff]
      %v7918 = vld [vmem:[#allocation4 + $0x10c] sm:$0xff]
      %v7919 = vld [vmem:[#allocation4 + $0x114] sm:$0xf]
      %v7920 = vld [vmem:[#allocation4 + $0x118] sm:$0xff]
      %v7921 = vld [vmem:[#allocation4 + $0x120] sm:$0xff]
      %v7922 = vld [vmem:[#allocation4 + $0x128] sm:$0xf]
      %v7923 = vld [vmem:[#allocation4 + $0x12c] sm:$0xff]
      %v7924 = vld [vmem:[#allocation4 + $0x134] sm:$0xff]
      %v7925 = vld [vmem:[#allocation4 + $0x13c] sm:$0xf]
      %v7926 = vld [vmem:[#allocation4 + $0x140] sm:$0xff]
      %v7927 = vld [vmem:[#allocation4 + $0x148] sm:$0xff]
      %v7928 = vld [vmem:[#allocation4 + $0x150] sm:$0xf]
      %v7929 = vld [vmem:[#allocation4 + $0x154] sm:$0xff]
      %v7930 = vld [vmem:[#allocation4 + $0x15c] sm:$0xff]
      %v7931 = vld [vmem:[#allocation4 + $0x164] sm:$0xf]
      %v7932 = vld [vmem:[#allocation4 + $0x168] sm:$0xff]
      %v7933 = vld [vmem:[#allocation4 + $0x170] sm:$0xff]
      %v7934 = vld [vmem:[#allocation4 + $0x178] sm:$0xf]
      %v7935 = vld [vmem:[#allocation4 + $0x17c] sm:$0xff]
      %v7936 = vld [vmem:[#allocation4 + $0x184] sm:$0xff]
      %v7937 = vld [vmem:[#allocation4 + $0x18c] sm:$0xf]
      %v7938 = vld [vmem:[#allocation4 + $0x190] sm:$0xff]
      %v7939 = vld [vmem:[#allocation4 + $0x198] sm:$0xff]
      %v7940 = vld [vmem:[#allocation4 + $0x1a0] sm:$0xf]
      %v7941 = vld [vmem:[#allocation4 + $0x1a4] sm:$0xff]
      %v7942 = vld [vmem:[#allocation4 + $0x1ac] sm:$0xff]
      %v7943 = vld [vmem:[#allocation4 + $0x1b4] sm:$0xf]
      %v7944 = vld [vmem:[#allocation4 + $0x1b8] sm:$0xff]
      %v7945 = vld [vmem:[#allocation4 + $0x1c0] sm:$0xff]
      %v7946 = vld [vmem:[#allocation4 + $0x1c8] sm:$0xf]
      %v7947 = vld [vmem:[#allocation4 + $0x1cc] sm:$0xff]
      %v7948 = vld [vmem:[#allocation4 + $0x1d4] sm:$0xff]
      %v7949 = vld [vmem:[#allocation4 + $0x1dc] sm:$0xf]
      %v7950 = vld [vmem:[#allocation4 + $0x1e0] sm:$0xff]
      %v7951 = vld [vmem:[#allocation4 + $0x1e8] sm:$0xff]
      %v7952 = vld [vmem:[#allocation4 + $0x1f0] sm:$0xf]
      %v7953 = vld [vmem:[#allocation4 + $0x1f4] sm:$0xff]
      %v7954 = vld [vmem:[#allocation4 + $0x1fc] sm:$0xff]
      %v7955 = vld [vmem:[#allocation4 + $0x204] sm:$0xf]
      %v7956 = vld [vmem:[#allocation4 + $0x208] sm:$0xff]
      %v7957 = vld [vmem:[#allocation4 + $0x210] sm:$0xff]
      %v7958 = vld [vmem:[#allocation4 + $0x218] sm:$0xf]
      %v7959 = vld [vmem:[#allocation4 + $0x21c] sm:$0xff]
      %v7960 = vld [vmem:[#allocation4 + $0x224] sm:$0xff]
      %v7961 = vld [vmem:[#allocation4 + $0x22c] sm:$0xf]
      %v7962 = vld [vmem:[#allocation4 + $0x230] sm:$0xff]
      %v7963 = vld [vmem:[#allocation4 + $0x238] sm:$0xff]
      %v7964 = vld [vmem:[#allocation4 + $0x240] sm:$0xf]
      %v7965 = vld [vmem:[#allocation4 + $0x244] sm:$0xff]
      %v7966 = vld [vmem:[#allocation4 + $0x24c] sm:$0xff]
      %v7967 = vld [vmem:[#allocation4 + $0x254] sm:$0xf]
      %v7968 = vld [vmem:[#allocation4 + $0x258] sm:$0xff]
      %v7969 = vld [vmem:[#allocation4 + $0x260] sm:$0xff]
      %v7970 = vld [vmem:[#allocation4 + $0x268] sm:$0xf]
      %v7971 = vld [vmem:[#allocation4 + $0x26c] sm:$0xff]
      %v7972 = vld [vmem:[#allocation4 + $0x274] sm:$0xff]
      %v7973 = vld [vmem:[#allocation4 + $0x27c] sm:$0xf]
      %v7974 = vld [vmem:[%s3] sm:$0xf]
      %v7975 = vld [vmem:[%s3 + $0x4] sm:$0xf]
      %v7976 = vld [vmem:[%s3 + $0x8] sm:$0xf]
      %v7977 = vld [vmem:[%s3 + $0xc] sm:$0xf]
      %v7978 = vld [vmem:[%s3 + $0x10] sm:$0xf]
      %v7979 = vld [vmem:[%s3 + $0x14] sm:$0xf]
      %v7980 = vld [vmem:[%s3 + $0x18] sm:$0xf]
      %v7981 = vld [vmem:[%s3 + $0x1c] sm:$0xf]
      %v7982 = vld [vmem:[%s3 + $0x20] sm:$0xf]
      %v7983 = vld [vmem:[%s3 + $0x24] sm:$0xf]
      %v7984 = vld [vmem:[%s3 + $0x28] sm:$0xf]
      %v7985 = vld [vmem:[%s3 + $0x2c] sm:$0xf]
      %v7986 = vld [vmem:[%s3 + $0x30] sm:$0xf]
      %v7987 = vld [vmem:[%s3 + $0x34] sm:$0xf]
      %v7988 = vld [vmem:[%s3 + $0x38] sm:$0xf]
      %v7989 = vld [vmem:[%s3 + $0x3c] sm:$0xf]
      %v7990 = vld [vmem:[%s3 + $0x40] sm:$0xf]
      %v7991 = vld [vmem:[%s3 + $0x44] sm:$0xf]
      %v7992 = vld [vmem:[%s3 + $0x48] sm:$0xf]
      %v7993 = vld [vmem:[%s3 + $0x4c] sm:$0xf]
      %v7994 = vld [vmem:[%s3 + $0x50] sm:$0xf]
      %v7995 = vld [vmem:[%s3 + $0x54] sm:$0xf]
      %v7996 = vld [vmem:[%s3 + $0x58] sm:$0xf]
      %v7997 = vld [vmem:[%s3 + $0x5c] sm:$0xf]
      %v7998 = vld [vmem:[%s3 + $0x60] sm:$0xf]
      %v7999 = vld [vmem:[%s3 + $0x64] sm:$0xf]
      %v8000 = vld [vmem:[%s3 + $0x68] sm:$0xf]
      %v8001 = vld [vmem:[%s3 + $0x6c] sm:$0xf]
      %v8002 = vld [vmem:[%s3 + $0x70] sm:$0xf]
      %v8003 = vld [vmem:[%s3 + $0x74] sm:$0xf]
      %v8004 = vld [vmem:[%s3 + $0x78] sm:$0xf]
      %v8005 = vld [vmem:[%s3 + $0x7c] sm:$0xf]
      %v8006 = vld [vmem:[%s3 + $0x80] sm:$0xf]
      %v8007 = vld [vmem:[%s3 + $0x84] sm:$0xf]
      %v8008 = vld [vmem:[%s3 + $0x88] sm:$0xf]
      %v8009 = vld [vmem:[%s3 + $0x8c] sm:$0xf]
      %v8010 = vld [vmem:[%s3 + $0x90] sm:$0xf]
      %v8011 = vld [vmem:[%s3 + $0x94] sm:$0xf]
      %v8012 = vld [vmem:[%s3 + $0x98] sm:$0xf]
      %v8013 = vld [vmem:[%s3 + $0x9c] sm:$0xf]
      %v8014 = vld [vmem:[%s3 + $0xa0] sm:$0xf]
      %v8015 = vld [vmem:[%s3 + $0xa4] sm:$0xf]
      %v8016 = vld [vmem:[%s3 + $0xa8] sm:$0xf]
      %v8017 = vld [vmem:[%s3 + $0xac] sm:$0xf]
      %v8018 = vld [vmem:[%s3 + $0xb0] sm:$0xf]
      %v8019 = vld [vmem:[%s3 + $0xb4] sm:$0xf]
      %v8020 = vld [vmem:[%s3 + $0xb8] sm:$0xf]
      %v8021 = vld [vmem:[%s3 + $0xbc] sm:$0xf]
      %v8022 = vld [vmem:[%s3 + $0xc0] sm:$0xf]
      %v8023 = vld [vmem:[%s3 + $0xc4] sm:$0xf]
      %v8024 = vld [vmem:[%s3 + $0xc8] sm:$0xf]
      %v8025 = vld [vmem:[%s3 + $0xcc] sm:$0xf]
      %v8026 = vld [vmem:[%s3 + $0xd0] sm:$0xf]
      %v8027 = vld [vmem:[%s3 + $0xd4] sm:$0xf]
      %v8028 = vld [vmem:[%s3 + $0xd8] sm:$0xf]
      %v8029 = vld [vmem:[%s3 + $0xdc] sm:$0xf]
      %v8030 = vld [vmem:[%s3 + $0xe0] sm:$0xf]
      %v8031 = vld [vmem:[%s3 + $0xe4] sm:$0xf]
      %v8032 = vld [vmem:[%s3 + $0xe8] sm:$0xf]
      %v8033 = vld [vmem:[%s3 + $0xec] sm:$0xf]
      %v8034 = vld [vmem:[%s3 + $0xf0] sm:$0xf]
      %v8035 = vld [vmem:[%s3 + $0xf4] sm:$0xf]
      %v8036 = vld [vmem:[%s3 + $0xf8] sm:$0xf]
      %v8037 = vld [vmem:[%s3 + $0xfc] sm:$0xf]
      %v8038 = vld [vmem:[%s3 + $0x100] sm:$0xf]
      %v8039 = vld [vmem:[%s3 + $0x104] sm:$0xf]
      %v8040 = vld [vmem:[%s3 + $0x108] sm:$0xf]
      %v8041 = vld [vmem:[%s3 + $0x10c] sm:$0xf]
      %v8042 = vld [vmem:[%s3 + $0x110] sm:$0xf]
      %v8043 = vld [vmem:[%s3 + $0x114] sm:$0xf]
      %v8044 = vld [vmem:[%s3 + $0x118] sm:$0xf]
      %v8045 = vld [vmem:[%s3 + $0x11c] sm:$0xf]
      %v8046 = vld [vmem:[%s4] sm:$0x1]
      %v8048 = vlaneseq
      %v8049 = vshrl.u32 %v8048, 7
      %v8050 = vsub.s32 0, %v8049
      %v8051 = vrot.slane %v8046, %v8050
      %v8149 = vunpack.c.l.b16 %v7878
      %v8150 = vunpack.c.h.b16 %v7878
      %v8151 = vunpack.c.l.b16 %v7879
      %v8152 = vunpack.c.h.b16 %v7879
      %v8153 = vunpack.c.l.b16 %v7880
      %v8154 = vunpack.c.l.b16 %v7881
      %v8155 = vunpack.c.h.b16 %v7881
      %v8156 = vunpack.c.l.b16 %v7882
      %v8157 = vunpack.c.h.b16 %v7882
      %v8158 = vunpack.c.l.b16 %v7883
      %v8159 = vunpack.c.l.b16 %v7884
      %v8160 = vunpack.c.h.b16 %v7884
      %v8161 = vunpack.c.l.b16 %v7885
      %v8162 = vunpack.c.h.b16 %v7885
      %v8163 = vunpack.c.l.b16 %v7886
      %v8164 = vunpack.c.l.b16 %v7887
      %v8165 = vunpack.c.h.b16 %v7887
      %v8166 = vunpack.c.l.b16 %v7888
      %v8167 = vunpack.c.h.b16 %v7888
      %v8168 = vunpack.c.l.b16 %v7889
      %v8169 = vunpack.c.l.b16 %v7890
      %v8170 = vunpack.c.h.b16 %v7890
      %v8171 = vunpack.c.l.b16 %v7891
      %v8172 = vunpack.c.h.b16 %v7891
      %v8173 = vunpack.c.l.b16 %v7892
      %v8174 = vunpack.c.l.b16 %v7893
      %v8175 = vunpack.c.h.b16 %v7893
      %v8176 = vunpack.c.l.b16 %v7894
      %v8177 = vunpack.c.h.b16 %v7894
      %v8178 = vunpack.c.l.b16 %v7895
      %v8179 = vunpack.c.l.b16 %v7896
      %v8180 = vunpack.c.h.b16 %v7896
      %v8181 = vunpack.c.l.b16 %v7897
      %v8182 = vunpack.c.h.b16 %v7897
      %v8183 = vunpack.c.l.b16 %v7898
      %v8184 = vunpack.c.l.b16 %v7899
      %v8185 = vunpack.c.h.b16 %v7899
      %v8186 = vunpack.c.l.b16 %v7900
      %v8187 = vunpack.c.h.b16 %v7900
      %v8188 = vunpack.c.l.b16 %v7901
      %v8189 = vunpack.c.l.b16 %v7902
      %v8190 = vunpack.c.h.b16 %v7902
      %v8191 = vunpack.c.l.b16 %v7903
      %v8192 = vunpack.c.h.b16 %v7903
      %v8193 = vunpack.c.l.b16 %v7904
      %v8194 = vunpack.c.l.b16 %v7905
      %v8195 = vunpack.c.h.b16 %v7905
      %v8196 = vunpack.c.l.b16 %v7906
      %v8197 = vunpack.c.h.b16 %v7906
      %v8198 = vunpack.c.l.b16 %v7907
      %v8199 = vunpack.c.l.b16 %v7908
      %v8200 = vunpack.c.h.b16 %v7908
      %v8201 = vunpack.c.l.b16 %v7909
      %v8202 = vunpack.c.h.b16 %v7909
      %v8203 = vunpack.c.l.b16 %v7910
      %v8204 = vunpack.c.l.b16 %v7911
      %v8205 = vunpack.c.h.b16 %v7911
      %v8206 = vunpack.c.l.b16 %v7912
      %v8207 = vunpack.c.h.b16 %v7912
      %v8208 = vunpack.c.l.b16 %v7913
      %v8209 = vunpack.c.l.b16 %v7914
      %v8210 = vunpack.c.h.b16 %v7914
      %v8211 = vunpack.c.l.b16 %v7915
      %v8212 = vunpack.c.h.b16 %v7915
      %v8213 = vunpack.c.l.b16 %v7916
      %v8214 = vunpack.c.l.b16 %v7917
      %v8215 = vunpack.c.h.b16 %v7917
      %v8216 = vunpack.c.l.b16 %v7918
      %v8217 = vunpack.c.h.b16 %v7918
      %v8218 = vunpack.c.l.b16 %v7919
      %v8219 = vunpack.c.l.b16 %v7920
      %v8220 = vunpack.c.h.b16 %v7920
      %v8221 = vunpack.c.l.b16 %v7921
      %v8222 = vunpack.c.h.b16 %v7921
      %v8223 = vunpack.c.l.b16 %v7922
      %v8224 = vunpack.c.l.b16 %v7923
      %v8225 = vunpack.c.h.b16 %v7923
      %v8226 = vunpack.c.l.b16 %v7924
      %v8227 = vunpack.c.h.b16 %v7924
      %v8228 = vunpack.c.l.b16 %v7925
      %v8229 = vunpack.c.l.b16 %v7926
      %v8230 = vunpack.c.h.b16 %v7926
      %v8231 = vunpack.c.l.b16 %v7927
      %v8232 = vunpack.c.h.b16 %v7927
      %v8233 = vunpack.c.l.b16 %v7928
      %v8234 = vunpack.c.l.b16 %v7929
      %v8235 = vunpack.c.h.b16 %v7929
      %v8236 = vunpack.c.l.b16 %v7930
      %v8237 = vunpack.c.h.b16 %v7930
      %v8238 = vunpack.c.l.b16 %v7931
      %v8239 = vunpack.c.l.b16 %v7932
      %v8240 = vunpack.c.h.b16 %v7932
      %v8241 = vunpack.c.l.b16 %v7933
      %v8242 = vunpack.c.h.b16 %v7933
      %v8243 = vunpack.c.l.b16 %v7934
      %v8244 = vunpack.c.l.b16 %v7935
      %v8245 = vunpack.c.h.b16 %v7935
      %v8246 = vunpack.c.l.b16 %v7936
      %v8247 = vunpack.c.h.b16 %v7936
      %v8248 = vunpack.c.l.b16 %v7937
      %v8249 = vunpack.c.l.b16 %v7938
      %v8250 = vunpack.c.h.b16 %v7938
      %v8251 = vunpack.c.l.b16 %v7939
      %v8252 = vunpack.c.h.b16 %v7939
      %v8253 = vunpack.c.l.b16 %v7940
      %v8254 = vunpack.c.l.b16 %v7941
      %v8255 = vunpack.c.h.b16 %v7941
      %v8256 = vunpack.c.l.b16 %v7942
      %v8257 = vunpack.c.h.b16 %v7942
      %v8258 = vunpack.c.l.b16 %v7943
      %v8259 = vunpack.c.l.b16 %v7944
      %v8260 = vunpack.c.h.b16 %v7944
      %v8261 = vunpack.c.l.b16 %v7945
      %v8262 = vunpack.c.h.b16 %v7945
      %v8263 = vunpack.c.l.b16 %v7946
      %v8264 = vunpack.c.l.b16 %v7947
      %v8265 = vunpack.c.h.b16 %v7947
      %v8266 = vunpack.c.l.b16 %v7948
      %v8267 = vunpack.c.h.b16 %v7948
      %v8268 = vunpack.c.l.b16 %v7949
      %v8269 = vunpack.c.l.b16 %v7950
      %v8270 = vunpack.c.h.b16 %v7950
      %v8271 = vunpack.c.l.b16 %v7951
      %v8272 = vunpack.c.h.b16 %v7951
      %v8273 = vunpack.c.l.b16 %v7952
      %v8274 = vunpack.c.l.b16 %v7953
      %v8275 = vunpack.c.h.b16 %v7953
      %v8276 = vunpack.c.l.b16 %v7954
      %v8277 = vunpack.c.h.b16 %v7954
      %v8278 = vunpack.c.l.b16 %v7955
      %v8279 = vunpack.c.l.b16 %v7956
      %v8280 = vunpack.c.h.b16 %v7956
      %v8281 = vunpack.c.l.b16 %v7957
      %v8282 = vunpack.c.h.b16 %v7957
      %v8283 = vunpack.c.l.b16 %v7958
      %v8284 = vunpack.c.l.b16 %v7959
      %v8285 = vunpack.c.h.b16 %v7959
      %v8286 = vunpack.c.l.b16 %v7960
      %v8287 = vunpack.c.h.b16 %v7960
      %v8288 = vunpack.c.l.b16 %v7961
      %v8289 = vunpack.c.l.b16 %v7962
      %v8290 = vunpack.c.h.b16 %v7962
      %v8291 = vunpack.c.l.b16 %v7963
      %v8292 = vunpack.c.h.b16 %v7963
      %v8293 = vunpack.c.l.b16 %v7964
      %v8294 = vunpack.c.l.b16 %v7965
      %v8295 = vunpack.c.h.b16 %v7965
      %v8296 = vunpack.c.l.b16 %v7966
      %v8297 = vunpack.c.h.b16 %v7966
      %v8298 = vunpack.c.l.b16 %v7967
      %v8299 = vunpack.c.l.b16 %v7968
      %v8300 = vunpack.c.h.b16 %v7968
      %v8301 = vunpack.c.l.b16 %v7969
      %v8302 = vunpack.c.h.b16 %v7969
      %v8303 = vunpack.c.l.b16 %v7970
      %v8304 = vunpack.c.l.b16 %v7971
      %v8305 = vunpack.c.h.b16 %v7971
      %v8306 = vunpack.c.l.b16 %v7972
      %v8307 = vunpack.c.h.b16 %v7972
      %v8308 = vunpack.c.l.b16 %v7973
      %v8309 = vpack.c.b16 %v8154, %v8149
      %v8310 = vpack.c.b16 %v8155, %v8150
      %v8311 = vpack.c.b16 %v8156, %v8151
      %v8312 = vpack.c.b16 %v8157, %v8152
      %v8313 = vpack.c.b16 %v8158, %v8153
      %v8314 = vpack.c.b16 %v8164, %v8159
      %v8315 = vpack.c.b16 %v8165, %v8160
      %v8316 = vpack.c.b16 %v8166, %v8161
      %v8317 = vpack.c.b16 %v8167, %v8162
      %v8318 = vpack.c.b16 %v8168, %v8163
      %v8319 = vpack.c.b16 %v8174, %v8169
      %v8320 = vpack.c.b16 %v8175, %v8170
      %v8321 = vpack.c.b16 %v8176, %v8171
      %v8322 = vpack.c.b16 %v8177, %v8172
      %v8323 = vpack.c.b16 %v8178, %v8173
      %v8324 = vpack.c.b16 %v8184, %v8179
      %v8325 = vpack.c.b16 %v8185, %v8180
      %v8326 = vpack.c.b16 %v8186, %v8181
      %v8327 = vpack.c.b16 %v8187, %v8182
      %v8328 = vpack.c.b16 %v8188, %v8183
      %v8329 = vpack.c.b16 %v8194, %v8189
      %v8330 = vpack.c.b16 %v8195, %v8190
      %v8331 = vpack.c.b16 %v8196, %v8191
      %v8332 = vpack.c.b16 %v8197, %v8192
      %v8333 = vpack.c.b16 %v8198, %v8193
      %v8334 = vpack.c.b16 %v8204, %v8199
      %v8335 = vpack.c.b16 %v8205, %v8200
      %v8336 = vpack.c.b16 %v8206, %v8201
      %v8337 = vpack.c.b16 %v8207, %v8202
      %v8338 = vpack.c.b16 %v8208, %v8203
      %v8339 = vpack.c.b16 %v8214, %v8209
      %v8340 = vpack.c.b16 %v8215, %v8210
      %v8341 = vpack.c.b16 %v8216, %v8211
      %v8342 = vpack.c.b16 %v8217, %v8212
      %v8343 = vpack.c.b16 %v8218, %v8213
      %v8344 = vpack.c.b16 %v8224, %v8219
      %v8345 = vpack.c.b16 %v8225, %v8220
      %v8346 = vpack.c.b16 %v8226, %v8221
      %v8347 = vpack.c.b16 %v8227, %v8222
      %v8348 = vpack.c.b16 %v8228, %v8223
      %v8349 = vpack.c.b16 %v8234, %v8229
      %v8350 = vpack.c.b16 %v8235, %v8230
      %v8351 = vpack.c.b16 %v8236, %v8231
      %v8352 = vpack.c.b16 %v8237, %v8232
      %v8353 = vpack.c.b16 %v8238, %v8233
      %v8354 = vpack.c.b16 %v8244, %v8239
      %v8355 = vpack.c.b16 %v8245, %v8240
      %v8356 = vpack.c.b16 %v8246, %v8241
      %v8357 = vpack.c.b16 %v8247, %v8242
      %v8358 = vpack.c.b16 %v8248, %v8243
      %v8359 = vpack.c.b16 %v8254, %v8249
      %v8360 = vpack.c.b16 %v8255, %v8250
      %v8361 = vpack.c.b16 %v8256, %v8251
      %v8362 = vpack.c.b16 %v8257, %v8252
      %v8363 = vpack.c.b16 %v8258, %v8253
      %v8364 = vpack.c.b16 %v8264, %v8259
      %v8365 = vpack.c.b16 %v8265, %v8260
      %v8366 = vpack.c.b16 %v8266, %v8261
      %v8367 = vpack.c.b16 %v8267, %v8262
      %v8368 = vpack.c.b16 %v8268, %v8263
      %v8369 = vpack.c.b16 %v8274, %v8269
      %v8370 = vpack.c.b16 %v8275, %v8270
      %v8371 = vpack.c.b16 %v8276, %v8271
      %v8372 = vpack.c.b16 %v8277, %v8272
      %v8373 = vpack.c.b16 %v8278, %v8273
      %v8374 = vpack.c.b16 %v8284, %v8279
      %v8375 = vpack.c.b16 %v8285, %v8280
      %v8376 = vpack.c.b16 %v8286, %v8281
      %v8377 = vpack.c.b16 %v8287, %v8282
      %v8378 = vpack.c.b16 %v8288, %v8283
      %v8379 = vpack.c.b16 %v8294, %v8289
      %v8380 = vpack.c.b16 %v8295, %v8290
      %v8381 = vpack.c.b16 %v8296, %v8291
      %v8382 = vpack.c.b16 %v8297, %v8292
      %v8383 = vpack.c.b16 %v8298, %v8293
      %v8384 = vpack.c.b16 %v8304, %v8299
      %v8385 = vpack.c.b16 %v8305, %v8300
      %v8386 = vpack.c.b16 %v8306, %v8301
      %v8387 = vpack.c.b16 %v8307, %v8302
      %v8388 = vpack.c.b16 %v8308, %v8303
      %v8525 = vunpack.c.l.b16 %v7974
      %v8526 = vunpack.c.l.b16 %v7975
      %v8527 = vunpack.c.l.b16 %v7976
      %v8528 = vunpack.c.l.b16 %v7977
      %v8529 = vunpack.c.l.b16 %v7978
      %v8530 = vunpack.c.l.b16 %v7979
      %v8531 = vunpack.c.l.b16 %v7980
      %v8532 = vunpack.c.l.b16 %v7981
      %v8533 = vunpack.c.l.b16 %v7982
      %v8534 = vunpack.c.l.b16 %v7983
      %v8535 = vunpack.c.l.b16 %v7984
      %v8536 = vunpack.c.l.b16 %v7985
      %v8537 = vunpack.c.l.b16 %v7986
      %v8538 = vunpack.c.l.b16 %v7987
      %v8539 = vunpack.c.l.b16 %v7988
      %v8540 = vunpack.c.l.b16 %v7989
      %v8541 = vunpack.c.l.b16 %v7990
      %v8542 = vunpack.c.l.b16 %v7991
      %v8543 = vunpack.c.l.b16 %v7992
      %v8544 = vunpack.c.l.b16 %v7993
      %v8545 = vunpack.c.l.b16 %v7994
      %v8546 = vunpack.c.l.b16 %v7995
      %v8547 = vunpack.c.l.b16 %v7996
      %v8548 = vunpack.c.l.b16 %v7997
      %v8549 = vunpack.c.l.b16 %v7998
      %v8550 = vunpack.c.l.b16 %v7999
      %v8551 = vunpack.c.l.b16 %v8000
      %v8552 = vunpack.c.l.b16 %v8001
      %v8553 = vunpack.c.l.b16 %v8002
      %v8554 = vunpack.c.l.b16 %v8003
      %v8555 = vunpack.c.l.b16 %v8004
      %v8556 = vunpack.c.l.b16 %v8005
      %v8557 = vunpack.c.l.b16 %v8006
      %v8558 = vunpack.c.l.b16 %v8007
      %v8559 = vunpack.c.l.b16 %v8008
      %v8560 = vunpack.c.l.b16 %v8009
      %v8561 = vunpack.c.l.b16 %v8010
      %v8562 = vunpack.c.l.b16 %v8011
      %v8563 = vunpack.c.l.b16 %v8012
      %v8564 = vunpack.c.l.b16 %v8013
      %v8565 = vunpack.c.l.b16 %v8014
      %v8566 = vunpack.c.l.b16 %v8015
      %v8567 = vunpack.c.l.b16 %v8016
      %v8568 = vunpack.c.l.b16 %v8017
      %v8569 = vunpack.c.l.b16 %v8018
      %v8570 = vunpack.c.l.b16 %v8019
      %v8571 = vunpack.c.l.b16 %v8020
      %v8572 = vunpack.c.l.b16 %v8021
      %v8573 = vunpack.c.l.b16 %v8022
      %v8574 = vunpack.c.l.b16 %v8023
      %v8575 = vunpack.c.l.b16 %v8024
      %v8576 = vunpack.c.l.b16 %v8025
      %v8577 = vunpack.c.l.b16 %v8026
      %v8578 = vunpack.c.l.b16 %v8027
      %v8579 = vunpack.c.l.b16 %v8028
      %v8580 = vunpack.c.l.b16 %v8029
      %v8581 = vunpack.c.l.b16 %v8030
      %v8582 = vunpack.c.l.b16 %v8031
      %v8583 = vunpack.c.l.b16 %v8032
      %v8584 = vunpack.c.l.b16 %v8033
      %v8585 = vunpack.c.l.b16 %v8034
      %v8586 = vunpack.c.l.b16 %v8035
      %v8587 = vunpack.c.l.b16 %v8036
      %v8588 = vunpack.c.l.b16 %v8037
      %v8589 = vunpack.c.l.b16 %v8038
      %v8590 = vunpack.c.l.b16 %v8039
      %v8591 = vunpack.c.l.b16 %v8040
      %v8592 = vunpack.c.l.b16 %v8041
      %v8593 = vunpack.c.l.b16 %v8042
      %v8594 = vunpack.c.l.b16 %v8043
      %v8595 = vunpack.c.l.b16 %v8044
      %v8596 = vunpack.c.l.b16 %v8045
      %v8597 = vpack.c.b16 %v8526, %v8525
      %v8598 = vpack.c.b16 %v8528, %v8527
      %v8599 = vpack.c.b16 %v8530, %v8529
      %v8600 = vpack.c.b16 %v8532, %v8531
      %v8601 = vpack.c.b16 %v8534, %v8533
      %v8602 = vpack.c.b16 %v8536, %v8535
      %v8603 = vpack.c.b16 %v8538, %v8537
      %v8604 = vpack.c.b16 %v8540, %v8539
      %v8605 = vpack.c.b16 %v8542, %v8541
      %v8606 = vpack.c.b16 %v8544, %v8543
      %v8607 = vpack.c.b16 %v8546, %v8545
      %v8608 = vpack.c.b16 %v8548, %v8547
      %v8609 = vpack.c.b16 %v8550, %v8549
      %v8610 = vpack.c.b16 %v8552, %v8551
      %v8611 = vpack.c.b16 %v8554, %v8553
      %v8612 = vpack.c.b16 %v8556, %v8555
      %v8613 = vpack.c.b16 %v8558, %v8557
      %v8614 = vpack.c.b16 %v8560, %v8559
      %v8615 = vpack.c.b16 %v8562, %v8561
      %v8616 = vpack.c.b16 %v8564, %v8563
      %v8617 = vpack.c.b16 %v8566, %v8565
      %v8618 = vpack.c.b16 %v8568, %v8567
      %v8619 = vpack.c.b16 %v8570, %v8569
      %v8620 = vpack.c.b16 %v8572, %v8571
      %v8621 = vpack.c.b16 %v8574, %v8573
      %v8622 = vpack.c.b16 %v8576, %v8575
      %v8623 = vpack.c.b16 %v8578, %v8577
      %v8624 = vpack.c.b16 %v8580, %v8579
      %v8625 = vpack.c.b16 %v8582, %v8581
      %v8626 = vpack.c.b16 %v8584, %v8583
      %v8627 = vpack.c.b16 %v8586, %v8585
      %v8628 = vpack.c.b16 %v8588, %v8587
      %v8629 = vpack.c.b16 %v8590, %v8589
      %v8630 = vpack.c.b16 %v8592, %v8591
      %v8631 = vpack.c.b16 %v8594, %v8593
      %v8632 = vpack.c.b16 %v8596, %v8595
      %v8670 = vsel %vm3843, %v8313, 0
      %v8673 = vsel %vm3843, %v8318, 0
      %v8676 = vsel %vm3843, %v8323, 0
      %v8679 = vsel %vm3843, %v8328, 0
      %v8682 = vsel %vm3843, %v8333, 0
      %v8685 = vsel %vm3843, %v8338, 0
      %v8688 = vsel %vm3843, %v8343, 0
      %v8691 = vsel %vm3843, %v8348, 0
      %v8694 = vsel %vm3843, %v8353, 0
      %v8697 = vsel %vm3843, %v8358, 0
      %v8700 = vsel %vm3843, %v8363, 0
      %v8703 = vsel %vm3843, %v8368, 0
      %v8706 = vsel %vm3843, %v8373, 0
      %v8709 = vsel %vm3843, %v8378, 0
      %v8712 = vsel %vm3843, %v8383, 0
      %v8715 = vsel %vm3843, %v8388, 0
      %8717 = vmatprep.subr.bf16.mxu0 0
      %8718 = vmatpush1.bf16.msra.mxu0 %v8604
      %8719 = vmatprep.subr.bf16.mxu0 0
      %8720 = vmatpush1.bf16.msra.mxu0 %v8603
      %8721 = vmatprep.subr.bf16.mxu0 0
      %8722 = vmatpush1.bf16.msra.mxu0 %v8602
      %8723 = vmatprep.subr.bf16.mxu0 0
      %8724 = vmatpush1.bf16.msra.mxu0 %v8601
      %8725 = vmatprep.subr.bf16.mxu0 0
      %8726 = vmatpush1.bf16.msra.mxu0 %v8600
      %8727 = vmatprep.subr.bf16.mxu0 0
      %8728 = vmatpush1.bf16.msra.mxu0 %v8599
      %8729 = vmatprep.subr.bf16.mxu0 0
      %8730 = vmatpush1.bf16.msra.mxu0 %v8598
      %8731 = vmatprep.subr.bf16.mxu0 0
      %8732 = vmatpush1.bf16.msra.mxu0 %v8597
      %8733 = vmatprep.subr.bf16.mxu0 0
      %8734 = vmatpush2.bf16.msra.mxu0 %v8612
      %8735 = vmatprep.subr.bf16.mxu0 0
      %8736 = vmatpush2.bf16.msra.mxu0 %v8611
      %8737 = vmatprep.subr.bf16.mxu0 0
      %8738 = vmatpush2.bf16.msra.mxu0 %v8610
      %8739 = vmatprep.subr.bf16.mxu0 0
      %8740 = vmatpush2.bf16.msra.mxu0 %v8609
      %8741 = vmatprep.subr.bf16.mxu0 0
      %8742 = vmatpush2.bf16.msra.mxu0 %v8608
      %8743 = vmatprep.subr.bf16.mxu0 0
      %8744 = vmatpush2.bf16.msra.mxu0 %v8607
      %8745 = vmatprep.subr.bf16.mxu0 0
      %8746 = vmatpush2.bf16.msra.mxu0 %v8606
      %8747 = vmatprep.subr.bf16.mxu0 0
      %8748 = vmatpush2.bf16.msra.mxu0 %v8605
      %8749 = vmatprep.mubr.bf16.mxu0 %v8310
      %8750 = vmatmul.mubr.bf16.gmra.mxu0 %v8309
      %v8751 = vpop.f32.mrf.mxu0
      %v8752 = vadd.f32 %v8051, %v8751
      %v8753 = vpop.f32.mrf.mxu0
      %v8754 = vpop.f32.mrf.mxu0
      %v8755 = vadd.f32 %v8051, %v8754
      %v8756 = vpop.f32.mrf.mxu0
      %8757 = vmatprep.mubr.bf16.mxu0 %v8315
      %8758 = vmatmul.mubr.bf16.gmra.mxu0 %v8314
      %v8759 = vpop.f32.mrf.mxu0
      %v8760 = vadd.f32 %v8051, %v8759
      %v8761 = vpop.f32.mrf.mxu0
      %v8762 = vpop.f32.mrf.mxu0
      %v8763 = vadd.f32 %v8051, %v8762
      %v8764 = vpop.f32.mrf.mxu0
      %8765 = vmatprep.mubr.bf16.mxu0 %v8320
      %8766 = vmatmul.mubr.bf16.gmra.mxu0 %v8319
      %v8767 = vpop.f32.mrf.mxu0
      %v8768 = vadd.f32 %v8051, %v8767
      %v8769 = vpop.f32.mrf.mxu0
      %v8770 = vpop.f32.mrf.mxu0
      %v8771 = vadd.f32 %v8051, %v8770
      %v8772 = vpop.f32.mrf.mxu0
      %8773 = vmatprep.mubr.bf16.mxu0 %v8325
      %8774 = vmatmul.mubr.bf16.gmra.mxu0 %v8324
      %v8775 = vpop.f32.mrf.mxu0
      %v8776 = vadd.f32 %v8051, %v8775
      %v8777 = vpop.f32.mrf.mxu0
      %v8778 = vpop.f32.mrf.mxu0
      %v8779 = vadd.f32 %v8051, %v8778
      %v8780 = vpop.f32.mrf.mxu0
      %8781 = vmatprep.mubr.bf16.mxu0 %v8330
      %8782 = vmatmul.mubr.bf16.gmra.mxu0 %v8329
      %v8783 = vpop.f32.mrf.mxu0
      %v8784 = vadd.f32 %v8051, %v8783
      %v8785 = vpop.f32.mrf.mxu0
      %v8786 = vpop.f32.mrf.mxu0
      %v8787 = vadd.f32 %v8051, %v8786
      %v8788 = vpop.f32.mrf.mxu0
      %8789 = vmatprep.mubr.bf16.mxu0 %v8335
      %8790 = vmatmul.mubr.bf16.gmra.mxu0 %v8334
      %v8791 = vpop.f32.mrf.mxu0
      %v8792 = vadd.f32 %v8051, %v8791
      %v8793 = vpop.f32.mrf.mxu0
      %v8794 = vpop.f32.mrf.mxu0
      %v8795 = vadd.f32 %v8051, %v8794
      %v8796 = vpop.f32.mrf.mxu0
      %8797 = vmatprep.mubr.bf16.mxu0 %v8340
      %8798 = vmatmul.mubr.bf16.gmra.mxu0 %v8339
      %v8799 = vpop.f32.mrf.mxu0
      %v8800 = vadd.f32 %v8051, %v8799
      %v8801 = vpop.f32.mrf.mxu0
      %v8802 = vpop.f32.mrf.mxu0
      %v8803 = vadd.f32 %v8051, %v8802
      %v8804 = vpop.f32.mrf.mxu0
      %8805 = vmatprep.mubr.bf16.mxu0 %v8345
      %8806 = vmatmul.mubr.bf16.gmra.mxu0 %v8344
      %v8807 = vpop.f32.mrf.mxu0
      %v8808 = vadd.f32 %v8051, %v8807
      %v8809 = vpop.f32.mrf.mxu0
      %v8810 = vpop.f32.mrf.mxu0
      %v8811 = vadd.f32 %v8051, %v8810
      %v8812 = vpop.f32.mrf.mxu0
      %8813 = vmatprep.mubr.bf16.mxu0 %v8350
      %8814 = vmatmul.mubr.bf16.gmra.mxu0 %v8349
      %v8815 = vpop.f32.mrf.mxu0
      %v8816 = vadd.f32 %v8051, %v8815
      %v8817 = vpop.f32.mrf.mxu0
      %v8818 = vpop.f32.mrf.mxu0
      %v8819 = vadd.f32 %v8051, %v8818
      %v8820 = vpop.f32.mrf.mxu0
      %8821 = vmatprep.mubr.bf16.mxu0 %v8355
      %8822 = vmatmul.mubr.bf16.gmra.mxu0 %v8354
      %v8823 = vpop.f32.mrf.mxu0
      %v8824 = vadd.f32 %v8051, %v8823
      %v8825 = vpop.f32.mrf.mxu0
      %v8826 = vpop.f32.mrf.mxu0
      %v8827 = vadd.f32 %v8051, %v8826
      %v8828 = vpop.f32.mrf.mxu0
      %8829 = vmatprep.mubr.bf16.mxu0 %v8360
      %8830 = vmatmul.mubr.bf16.gmra.mxu0 %v8359
      %v8831 = vpop.f32.mrf.mxu0
      %v8832 = vadd.f32 %v8051, %v8831
      %v8833 = vpop.f32.mrf.mxu0
      %v8834 = vpop.f32.mrf.mxu0
      %v8835 = vadd.f32 %v8051, %v8834
      %v8836 = vpop.f32.mrf.mxu0
      %8837 = vmatprep.mubr.bf16.mxu0 %v8365
      %8838 = vmatmul.mubr.bf16.gmra.mxu0 %v8364
      %v8839 = vpop.f32.mrf.mxu0
      %v8840 = vadd.f32 %v8051, %v8839
      %v8841 = vpop.f32.mrf.mxu0
      %v8842 = vpop.f32.mrf.mxu0
      %v8843 = vadd.f32 %v8051, %v8842
      %v8844 = vpop.f32.mrf.mxu0
      %8845 = vmatprep.mubr.bf16.mxu0 %v8370
      %8846 = vmatmul.mubr.bf16.gmra.mxu0 %v8369
      %v8847 = vpop.f32.mrf.mxu0
      %v8848 = vadd.f32 %v8051, %v8847
      %v8849 = vpop.f32.mrf.mxu0
      %v8850 = vpop.f32.mrf.mxu0
      %v8851 = vadd.f32 %v8051, %v8850
      %v8852 = vpop.f32.mrf.mxu0
      %8853 = vmatprep.mubr.bf16.mxu0 %v8375
      %8854 = vmatmul.mubr.bf16.gmra.mxu0 %v8374
      %v8855 = vpop.f32.mrf.mxu0
      %v8856 = vadd.f32 %v8051, %v8855
      %v8857 = vpop.f32.mrf.mxu0
      %v8858 = vpop.f32.mrf.mxu0
      %v8859 = vadd.f32 %v8051, %v8858
      %v8860 = vpop.f32.mrf.mxu0
      %8861 = vmatprep.mubr.bf16.mxu0 %v8380
      %8862 = vmatmul.mubr.bf16.gmra.mxu0 %v8379
      %v8863 = vpop.f32.mrf.mxu0
      %v8864 = vadd.f32 %v8051, %v8863
      %v8865 = vpop.f32.mrf.mxu0
      %v8866 = vpop.f32.mrf.mxu0
      %v8867 = vadd.f32 %v8051, %v8866
      %v8868 = vpop.f32.mrf.mxu0
      %8869 = vmatprep.mubr.bf16.mxu0 %v8385
      %8870 = vmatmul.mubr.bf16.gmra.mxu0 %v8384
      %v8871 = vpop.f32.mrf.mxu0
      %v8872 = vadd.f32 %v8051, %v8871
      %v8873 = vpop.f32.mrf.mxu0
      %v8874 = vpop.f32.mrf.mxu0
      %v8875 = vadd.f32 %v8051, %v8874
      %v8876 = vpop.f32.mrf.mxu0
      %8877 = vdwg.mxu0
      %8878 = vmatprep.subr.bf16.mxu0 0
      %8879 = vmatpush1.bf16.msra.mxu0 %v8620
      %8880 = vmatprep.subr.bf16.mxu0 0
      %8881 = vmatpush1.bf16.msra.mxu0 %v8619
      %8882 = vmatprep.subr.bf16.mxu0 0
      %8883 = vmatpush1.bf16.msra.mxu0 %v8618
      %8884 = vmatprep.subr.bf16.mxu0 0
      %8885 = vmatpush1.bf16.msra.mxu0 %v8617
      %8886 = vmatprep.subr.bf16.mxu0 0
      %8887 = vmatpush1.bf16.msra.mxu0 %v8616
      %8888 = vmatprep.subr.bf16.mxu0 0
      %8889 = vmatpush1.bf16.msra.mxu0 %v8615
      %8890 = vmatprep.subr.bf16.mxu0 0
      %8891 = vmatpush1.bf16.msra.mxu0 %v8614
      %8892 = vmatprep.subr.bf16.mxu0 0
      %8893 = vmatpush1.bf16.msra.mxu0 %v8613
      %8894 = vmatprep.subr.bf16.mxu0 0
      %8895 = vmatpush2.bf16.msra.mxu0 %v8628
      %8896 = vmatprep.subr.bf16.mxu0 0
      %8897 = vmatpush2.bf16.msra.mxu0 %v8627
      %8898 = vmatprep.subr.bf16.mxu0 0
      %8899 = vmatpush2.bf16.msra.mxu0 %v8626
      %8900 = vmatprep.subr.bf16.mxu0 0
      %8901 = vmatpush2.bf16.msra.mxu0 %v8625
      %8902 = vmatprep.subr.bf16.mxu0 0
      %8903 = vmatpush2.bf16.msra.mxu0 %v8624
      %8904 = vmatprep.subr.bf16.mxu0 0
      %8905 = vmatpush2.bf16.msra.mxu0 %v8623
      %8906 = vmatprep.subr.bf16.mxu0 0
      %8907 = vmatpush2.bf16.msra.mxu0 %v8622
      %8908 = vmatprep.subr.bf16.mxu0 0
      %8909 = vmatpush2.bf16.msra.mxu0 %v8621
      %8910 = vmatprep.mubr.bf16.mxu0 %v8312
      %8911 = vmatmul.mubr.bf16.gmra.mxu0 %v8311
      %v8912 = vpop.f32.mrf.mxu0
      %v8913 = vadd.f32 %v8752, %v8912
      %v8914 = vpop.f32.mrf.mxu0
      %v8915 = vpop.f32.mrf.mxu0
      %v8916 = vadd.f32 %v8755, %v8915
      %v8917 = vpop.f32.mrf.mxu0
      %8918 = vmatprep.mubr.bf16.mxu0 %v8317
      %8919 = vmatmul.mubr.bf16.gmra.mxu0 %v8316
      %v8920 = vpop.f32.mrf.mxu0
      %v8921 = vadd.f32 %v8760, %v8920
      %v8922 = vpop.f32.mrf.mxu0
      %v8923 = vpop.f32.mrf.mxu0
      %v8924 = vadd.f32 %v8763, %v8923
      %v8925 = vpop.f32.mrf.mxu0
      %8926 = vmatprep.mubr.bf16.mxu0 %v8322
      %8927 = vmatmul.mubr.bf16.gmra.mxu0 %v8321
      %v8928 = vpop.f32.mrf.mxu0
      %v8929 = vadd.f32 %v8768, %v8928
      %v8930 = vpop.f32.mrf.mxu0
      %v8931 = vpop.f32.mrf.mxu0
      %v8932 = vadd.f32 %v8771, %v8931
      %v8933 = vpop.f32.mrf.mxu0
      %8934 = vmatprep.mubr.bf16.mxu0 %v8327
      %8935 = vmatmul.mubr.bf16.gmra.mxu0 %v8326
      %v8936 = vpop.f32.mrf.mxu0
      %v8937 = vadd.f32 %v8776, %v8936
      %v8938 = vpop.f32.mrf.mxu0
      %v8939 = vpop.f32.mrf.mxu0
      %v8940 = vadd.f32 %v8779, %v8939
      %v8941 = vpop.f32.mrf.mxu0
      %8942 = vmatprep.mubr.bf16.mxu0 %v8332
      %8943 = vmatmul.mubr.bf16.gmra.mxu0 %v8331
      %v8944 = vpop.f32.mrf.mxu0
      %v8945 = vadd.f32 %v8784, %v8944
      %v8946 = vpop.f32.mrf.mxu0
      %v8947 = vpop.f32.mrf.mxu0
      %v8948 = vadd.f32 %v8787, %v8947
      %v8949 = vpop.f32.mrf.mxu0
      %8950 = vmatprep.mubr.bf16.mxu0 %v8337
      %8951 = vmatmul.mubr.bf16.gmra.mxu0 %v8336
      %v8952 = vpop.f32.mrf.mxu0
      %v8953 = vadd.f32 %v8792, %v8952
      %v8954 = vpop.f32.mrf.mxu0
      %v8955 = vpop.f32.mrf.mxu0
      %v8956 = vadd.f32 %v8795, %v8955
      %v8957 = vpop.f32.mrf.mxu0
      %8958 = vmatprep.mubr.bf16.mxu0 %v8342
      %8959 = vmatmul.mubr.bf16.gmra.mxu0 %v8341
      %v8960 = vpop.f32.mrf.mxu0
      %v8961 = vadd.f32 %v8800, %v8960
      %v8962 = vpop.f32.mrf.mxu0
      %v8963 = vpop.f32.mrf.mxu0
      %v8964 = vadd.f32 %v8803, %v8963
      %v8965 = vpop.f32.mrf.mxu0
      %8966 = vmatprep.mubr.bf16.mxu0 %v8347
      %8967 = vmatmul.mubr.bf16.gmra.mxu0 %v8346
      %v8968 = vpop.f32.mrf.mxu0
      %v8969 = vadd.f32 %v8808, %v8968
      %v8970 = vpop.f32.mrf.mxu0
      %v8971 = vpop.f32.mrf.mxu0
      %v8972 = vadd.f32 %v8811, %v8971
      %v8973 = vpop.f32.mrf.mxu0
      %8974 = vmatprep.mubr.bf16.mxu0 %v8352
      %8975 = vmatmul.mubr.bf16.gmra.mxu0 %v8351
      %v8976 = vpop.f32.mrf.mxu0
      %v8977 = vadd.f32 %v8816, %v8976
      %v8978 = vpop.f32.mrf.mxu0
      %v8979 = vpop.f32.mrf.mxu0
      %v8980 = vadd.f32 %v8819, %v8979
      %v8981 = vpop.f32.mrf.mxu0
      %8982 = vmatprep.mubr.bf16.mxu0 %v8357
      %8983 = vmatmul.mubr.bf16.gmra.mxu0 %v8356
      %v8984 = vpop.f32.mrf.mxu0
      %v8985 = vadd.f32 %v8824, %v8984
      %v8986 = vpop.f32.mrf.mxu0
      %v8987 = vpop.f32.mrf.mxu0
      %v8988 = vadd.f32 %v8827, %v8987
      %v8989 = vpop.f32.mrf.mxu0
      %8990 = vmatprep.mubr.bf16.mxu0 %v8362
      %8991 = vmatmul.mubr.bf16.gmra.mxu0 %v8361
      %v8992 = vpop.f32.mrf.mxu0
      %v8993 = vadd.f32 %v8832, %v8992
      %v8994 = vpop.f32.mrf.mxu0
      %v8995 = vpop.f32.mrf.mxu0
      %v8996 = vadd.f32 %v8835, %v8995
      %v8997 = vpop.f32.mrf.mxu0
      %8998 = vmatprep.mubr.bf16.mxu0 %v8367
      %8999 = vmatmul.mubr.bf16.gmra.mxu0 %v8366
      %v9000 = vpop.f32.mrf.mxu0
      %v9001 = vadd.f32 %v8840, %v9000
      %v9002 = vpop.f32.mrf.mxu0
      %v9003 = vpop.f32.mrf.mxu0
      %v9004 = vadd.f32 %v8843, %v9003
      %v9005 = vpop.f32.mrf.mxu0
      %9006 = vmatprep.mubr.bf16.mxu0 %v8372
      %9007 = vmatmul.mubr.bf16.gmra.mxu0 %v8371
      %v9008 = vpop.f32.mrf.mxu0
      %v9009 = vadd.f32 %v8848, %v9008
      %v9010 = vpop.f32.mrf.mxu0
      %v9011 = vpop.f32.mrf.mxu0
      %v9012 = vadd.f32 %v8851, %v9011
      %v9013 = vpop.f32.mrf.mxu0
      %9014 = vmatprep.mubr.bf16.mxu0 %v8377
      %9015 = vmatmul.mubr.bf16.gmra.mxu0 %v8376
      %v9016 = vpop.f32.mrf.mxu0
      %v9017 = vadd.f32 %v8856, %v9016
      %v9018 = vpop.f32.mrf.mxu0
      %v9019 = vpop.f32.mrf.mxu0
      %v9020 = vadd.f32 %v8859, %v9019
      %v9021 = vpop.f32.mrf.mxu0
      %9022 = vmatprep.mubr.bf16.mxu0 %v8382
      %9023 = vmatmul.mubr.bf16.gmra.mxu0 %v8381
      %v9024 = vpop.f32.mrf.mxu0
      %v9025 = vadd.f32 %v8864, %v9024
      %v9026 = vpop.f32.mrf.mxu0
      %v9027 = vpop.f32.mrf.mxu0
      %v9028 = vadd.f32 %v8867, %v9027
      %v9029 = vpop.f32.mrf.mxu0
      %9030 = vmatprep.mubr.bf16.mxu0 %v8387
      %9031 = vmatmul.mubr.bf16.gmra.mxu0 %v8386
      %v9032 = vpop.f32.mrf.mxu0
      %v9033 = vadd.f32 %v8872, %v9032
      %v9034 = vpop.f32.mrf.mxu0
      %v9035 = vpop.f32.mrf.mxu0
      %v9036 = vadd.f32 %v8875, %v9035
      %v9037 = vpop.f32.mrf.mxu0
      %9038 = vdwg.mxu0
      %9039 = vmatprep.subr.bf16.mxu0 0
      %9040 = vmatpush1.bf16.msra.mxu0 0
      %9041 = vmatprep.subr.bf16.mxu0 0
      %9042 = vmatpush1.bf16.msra.mxu0 0
      %9043 = vmatprep.subr.bf16.mxu0 0
      %9044 = vmatpush1.bf16.msra.mxu0 0
      %9045 = vmatprep.subr.bf16.mxu0 0
      %9046 = vmatpush1.bf16.msra.mxu0 0
      %9047 = vmatprep.subr.bf16.mxu0 0
      %9048 = vmatpush1.bf16.msra.mxu0 %v8632
      %9049 = vmatprep.subr.bf16.mxu0 0
      %9050 = vmatpush1.bf16.msra.mxu0 %v8631
      %9051 = vmatprep.subr.bf16.mxu0 0
      %9052 = vmatpush1.bf16.msra.mxu0 %v8630
      %9053 = vmatprep.subr.bf16.mxu0 0
      %9054 = vmatpush1.bf16.msra.mxu0 %v8629
      %9055 = vmatprep.subr.bf16.mxu0 0
      %9056 = vmatpush2.bf16.msra.mxu0 0
      %9057 = vmatprep.subr.bf16.mxu0 0
      %9058 = vmatpush2.bf16.msra.mxu0 0
      %9059 = vmatprep.subr.bf16.mxu0 0
      %9060 = vmatpush2.bf16.msra.mxu0 0
      %9061 = vmatprep.subr.bf16.mxu0 0
      %9062 = vmatpush2.bf16.msra.mxu0 0
      %9063 = vmatprep.subr.bf16.mxu0 0
      %9064 = vmatpush2.bf16.msra.mxu0 0
      %9065 = vmatprep.subr.bf16.mxu0 0
      %9066 = vmatpush2.bf16.msra.mxu0 0
      %9067 = vmatprep.subr.bf16.mxu0 0
      %9068 = vmatpush2.bf16.msra.mxu0 0
      %9069 = vmatprep.subr.bf16.mxu0 0
      %9070 = vmatpush2.bf16.msra.mxu0 0
      %9071 = vmatprep.mubr.bf16.mxu0 0
      %9072 = vmatmul.mubr.bf16.gmra.mxu0 %v8670
      %v9073 = vpop.f32.mrf.mxu0
      %v9074 = vadd.f32 %v8913, %v9073
      %v9075 = vpop.f32.mrf.mxu0
      %v9076 = vpop.f32.mrf.mxu0
      %v9077 = vadd.f32 %v8916, %v9076
      %v9078 = vpop.f32.mrf.mxu0
      %9079 = vmatprep.mubr.bf16.mxu0 0
      %9080 = vmatmul.mubr.bf16.gmra.mxu0 %v8673
      %v9081 = vpop.f32.mrf.mxu0
      %v9082 = vadd.f32 %v8921, %v9081
      %v9083 = vpop.f32.mrf.mxu0
      %v9084 = vpop.f32.mrf.mxu0
      %v9085 = vadd.f32 %v8924, %v9084
      %v9086 = vpop.f32.mrf.mxu0
      %9087 = vmatprep.mubr.bf16.mxu0 0
      %9088 = vmatmul.mubr.bf16.gmra.mxu0 %v8676
      %v9089 = vpop.f32.mrf.mxu0
      %v9090 = vadd.f32 %v8929, %v9089
      %v9091 = vpop.f32.mrf.mxu0
      %v9092 = vpop.f32.mrf.mxu0
      %v9093 = vadd.f32 %v8932, %v9092
      %v9094 = vpop.f32.mrf.mxu0
      %9095 = vmatprep.mubr.bf16.mxu0 0
      %9096 = vmatmul.mubr.bf16.gmra.mxu0 %v8679
      %v9097 = vpop.f32.mrf.mxu0
      %v9098 = vadd.f32 %v8937, %v9097
      %v9099 = vpop.f32.mrf.mxu0
      %v9100 = vpop.f32.mrf.mxu0
      %v9101 = vadd.f32 %v8940, %v9100
      %v9102 = vpop.f32.mrf.mxu0
      %9103 = vmatprep.mubr.bf16.mxu0 0
      %9104 = vmatmul.mubr.bf16.gmra.mxu0 %v8682
      %v9105 = vpop.f32.mrf.mxu0
      %v9106 = vadd.f32 %v8945, %v9105
      %v9107 = vpop.f32.mrf.mxu0
      %v9108 = vpop.f32.mrf.mxu0
      %v9109 = vadd.f32 %v8948, %v9108
      %v9110 = vpop.f32.mrf.mxu0
      %9111 = vmatprep.mubr.bf16.mxu0 0
      %9112 = vmatmul.mubr.bf16.gmra.mxu0 %v8685
      %v9113 = vpop.f32.mrf.mxu0
      %v9114 = vadd.f32 %v8953, %v9113
      %v9115 = vpop.f32.mrf.mxu0
      %v9116 = vpop.f32.mrf.mxu0
      %v9117 = vadd.f32 %v8956, %v9116
      %v9118 = vpop.f32.mrf.mxu0
      %9119 = vmatprep.mubr.bf16.mxu0 0
      %9120 = vmatmul.mubr.bf16.gmra.mxu0 %v8688
      %v9121 = vpop.f32.mrf.mxu0
      %v9122 = vadd.f32 %v8961, %v9121
      %v9123 = vpop.f32.mrf.mxu0
      %v9124 = vpop.f32.mrf.mxu0
      %v9125 = vadd.f32 %v8964, %v9124
      %v9126 = vpop.f32.mrf.mxu0
      %9127 = vmatprep.mubr.bf16.mxu0 0
      %9128 = vmatmul.mubr.bf16.gmra.mxu0 %v8691
      %v9129 = vpop.f32.mrf.mxu0
      %v9130 = vadd.f32 %v8969, %v9129
      %v9131 = vpop.f32.mrf.mxu0
      %v9132 = vpop.f32.mrf.mxu0
      %v9133 = vadd.f32 %v8972, %v9132
      %v9134 = vpop.f32.mrf.mxu0
      %9135 = vmatprep.mubr.bf16.mxu0 0
      %9136 = vmatmul.mubr.bf16.gmra.mxu0 %v8694
      %v9137 = vpop.f32.mrf.mxu0
      %v9138 = vadd.f32 %v8977, %v9137
      %v9139 = vpop.f32.mrf.mxu0
      %v9140 = vpop.f32.mrf.mxu0
      %v9141 = vadd.f32 %v8980, %v9140
      %v9142 = vpop.f32.mrf.mxu0
      %9143 = vmatprep.mubr.bf16.mxu0 0
      %9144 = vmatmul.mubr.bf16.gmra.mxu0 %v8697
      %v9145 = vpop.f32.mrf.mxu0
      %v9146 = vadd.f32 %v8985, %v9145
      %v9147 = vpop.f32.mrf.mxu0
      %v9148 = vpop.f32.mrf.mxu0
      %v9149 = vadd.f32 %v8988, %v9148
      %v9150 = vpop.f32.mrf.mxu0
      %9151 = vmatprep.mubr.bf16.mxu0 0
      %9152 = vmatmul.mubr.bf16.gmra.mxu0 %v8700
      %v9153 = vpop.f32.mrf.mxu0
      %v9154 = vadd.f32 %v8993, %v9153
      %v9155 = vpop.f32.mrf.mxu0
      %v9156 = vpop.f32.mrf.mxu0
      %v9157 = vadd.f32 %v8996, %v9156
      %v9158 = vpop.f32.mrf.mxu0
      %9159 = vmatprep.mubr.bf16.mxu0 0
      %9160 = vmatmul.mubr.bf16.gmra.mxu0 %v8703
      %v9161 = vpop.f32.mrf.mxu0
      %v9162 = vadd.f32 %v9001, %v9161
      %v9163 = vpop.f32.mrf.mxu0
      %v9164 = vpop.f32.mrf.mxu0
      %v9165 = vadd.f32 %v9004, %v9164
      %v9166 = vpop.f32.mrf.mxu0
      %9167 = vmatprep.mubr.bf16.mxu0 0
      %9168 = vmatmul.mubr.bf16.gmra.mxu0 %v8706
      %v9169 = vpop.f32.mrf.mxu0
      %v9170 = vadd.f32 %v9009, %v9169
      %v9171 = vpop.f32.mrf.mxu0
      %v9172 = vpop.f32.mrf.mxu0
      %v9173 = vadd.f32 %v9012, %v9172
      %v9174 = vpop.f32.mrf.mxu0
      %9175 = vmatprep.mubr.bf16.mxu0 0
      %9176 = vmatmul.mubr.bf16.gmra.mxu0 %v8709
      %v9177 = vpop.f32.mrf.mxu0
      %v9178 = vadd.f32 %v9017, %v9177
      %v9179 = vpop.f32.mrf.mxu0
      %v9180 = vpop.f32.mrf.mxu0
      %v9181 = vadd.f32 %v9020, %v9180
      %v9182 = vpop.f32.mrf.mxu0
      %9183 = vmatprep.mubr.bf16.mxu0 0
      %9184 = vmatmul.mubr.bf16.gmra.mxu0 %v8712
      %v9185 = vpop.f32.mrf.mxu0
      %v9186 = vadd.f32 %v9025, %v9185
      %v9187 = vpop.f32.mrf.mxu0
      %v9188 = vpop.f32.mrf.mxu0
      %v9189 = vadd.f32 %v9028, %v9188
      %v9190 = vpop.f32.mrf.mxu0
      %9191 = vmatprep.mubr.bf16.mxu0 0
      %9192 = vmatmul.mubr.bf16.gmra.mxu0 %v8715
      %v9193 = vpop.f32.mrf.mxu0
      %v9194 = vadd.f32 %v9033, %v9193
      %v9195 = vpop.f32.mrf.mxu0
      %v9196 = vpop.f32.mrf.mxu0
      %v9197 = vadd.f32 %v9036, %v9196
      %v9198 = vpop.f32.mrf.mxu0
      %9199 = vdwg.mxu0
      %v9200 = vld [vmem:[%s1130] sm:$0xf]
      %v9201 = vld [vmem:[%s1130 + $0x4] sm:$0xf]
      %v9202 = vld [vmem:[%s1130 + $0x8] sm:$0x1]
      %v9203 = vld [vmem:[%s1130 + $0xc] sm:$0xf]
      %v9204 = vld [vmem:[%s1130 + $0x10] sm:$0xf]
      %v9205 = vld [vmem:[%s1130 + $0x14] sm:$0x1]
      %v9206 = vld [vmem:[%s1130 + $0x18] sm:$0xf]
      %v9207 = vld [vmem:[%s1130 + $0x1c] sm:$0xf]
      %v9208 = vld [vmem:[%s1130 + $0x20] sm:$0x1]
      %v9209 = vld [vmem:[%s1130 + $0x24] sm:$0xf]
      %v9210 = vld [vmem:[%s1130 + $0x28] sm:$0xf]
      %v9211 = vld [vmem:[%s1130 + $0x2c] sm:$0x1]
      %v9212 = vld [vmem:[%s1130 + $0x30] sm:$0xf]
      %v9213 = vld [vmem:[%s1130 + $0x34] sm:$0xf]
      %v9214 = vld [vmem:[%s1130 + $0x38] sm:$0x1]
      %v9215 = vld [vmem:[%s1130 + $0x3c] sm:$0xf]
      %v9216 = vld [vmem:[%s1130 + $0x40] sm:$0xf]
      %v9217 = vld [vmem:[%s1130 + $0x44] sm:$0x1]
      %v9218 = vld [vmem:[%s1130 + $0x48] sm:$0xf]
      %v9219 = vld [vmem:[%s1130 + $0x4c] sm:$0xf]
      %v9220 = vld [vmem:[%s1130 + $0x50] sm:$0x1]
      %v9221 = vld [vmem:[%s1130 + $0x54] sm:$0xf]
      %v9222 = vld [vmem:[%s1130 + $0x58] sm:$0xf]
      %v9223 = vld [vmem:[%s1130 + $0x5c] sm:$0x1]
      %v9224 = vld [vmem:[%s1130 + $0x60] sm:$0xf]
      %v9225 = vld [vmem:[%s1130 + $0x64] sm:$0xf]
      %v9226 = vld [vmem:[%s1130 + $0x68] sm:$0x1]
      %v9227 = vld [vmem:[%s1130 + $0x6c] sm:$0xf]
      %v9228 = vld [vmem:[%s1130 + $0x70] sm:$0xf]
      %v9229 = vld [vmem:[%s1130 + $0x74] sm:$0x1]
      %v9230 = vld [vmem:[%s1130 + $0x78] sm:$0xf]
      %v9231 = vld [vmem:[%s1130 + $0x7c] sm:$0xf]
      %v9232 = vld [vmem:[%s1130 + $0x80] sm:$0x1]
      %v9233 = vld [vmem:[%s1130 + $0x84] sm:$0xf]
      %v9234 = vld [vmem:[%s1130 + $0x88] sm:$0xf]
      %v9235 = vld [vmem:[%s1130 + $0x8c] sm:$0x1]
      %v9236 = vld [vmem:[%s1130 + $0x90] sm:$0xf]
      %v9237 = vld [vmem:[%s1130 + $0x94] sm:$0xf]
      %v9238 = vld [vmem:[%s1130 + $0x98] sm:$0x1]
      %v9239 = vld [vmem:[%s1130 + $0x9c] sm:$0xf]
      %v9240 = vld [vmem:[%s1130 + $0xa0] sm:$0xf]
      %v9241 = vld [vmem:[%s1130 + $0xa4] sm:$0x1]
      %v9242 = vld [vmem:[%s1130 + $0xa8] sm:$0xf]
      %v9243 = vld [vmem:[%s1130 + $0xac] sm:$0xf]
      %v9244 = vld [vmem:[%s1130 + $0xb0] sm:$0x1]
      %v9245 = vld [vmem:[%s1130 + $0xb4] sm:$0xf]
      %v9246 = vld [vmem:[%s1130 + $0xb8] sm:$0xf]
      %v9247 = vld [vmem:[%s1130 + $0xbc] sm:$0x1]
      %v9249 = vshrl.u32 %v9200, 16
      %v9251 = vrot.slane %v9249, 4
      %v9252 = vshll.u32 %v9200, 16
      %v9254 = vrot.slane %v9252, 5
      %v9255 = vor.u32 %v9251, %v9254
      %v9256 = vrot.slane %v9255, 4
      %v9258 = vshll.u32 %v9201, 16
      %v9260 = vrot.slane %v9258, 5
      %v9261 = vsel %vm341, %v9256, %v9260
      %v9262 = vshrl.u32 %v9201, 16
      %v9264 = vrot.slane %v9262, 4
      %v9265 = vor.u32 %v9264, %v9260
      %v9266 = vrot.slane %v9265, 4
      %v9268 = vshll.u32 %v9202, 16
      %v9270 = vrot.slane %v9268, 5
      %v9271 = vsel %vm341, %v9266, %v9270
      %v9273 = vshrl.u32 %v9203, 16
      %v9275 = vrot.slane %v9273, 4
      %v9276 = vshll.u32 %v9203, 16
      %v9278 = vrot.slane %v9276, 5
      %v9279 = vor.u32 %v9275, %v9278
      %v9280 = vrot.slane %v9279, 4
      %v9282 = vshll.u32 %v9204, 16
      %v9284 = vrot.slane %v9282, 5
      %v9285 = vsel %vm341, %v9280, %v9284
      %v9286 = vshrl.u32 %v9204, 16
      %v9288 = vrot.slane %v9286, 4
      %v9289 = vor.u32 %v9288, %v9284
      %v9290 = vrot.slane %v9289, 4
      %v9292 = vshll.u32 %v9205, 16
      %v9294 = vrot.slane %v9292, 5
      %v9295 = vsel %vm341, %v9290, %v9294
      %v9297 = vshrl.u32 %v9206, 16
      %v9299 = vrot.slane %v9297, 4
      %v9300 = vshll.u32 %v9206, 16
      %v9302 = vrot.slane %v9300, 5
      %v9303 = vor.u32 %v9299, %v9302
      %v9304 = vrot.slane %v9303, 4
      %v9306 = vshll.u32 %v9207, 16
      %v9308 = vrot.slane %v9306, 5
      %v9309 = vsel %vm341, %v9304, %v9308
      %v9310 = vshrl.u32 %v9207, 16
      %v9312 = vrot.slane %v9310, 4
      %v9313 = vor.u32 %v9312, %v9308
      %v9314 = vrot.slane %v9313, 4
      %v9316 = vshll.u32 %v9208, 16
      %v9318 = vrot.slane %v9316, 5
      %v9319 = vsel %vm341, %v9314, %v9318
      %v9321 = vshrl.u32 %v9209, 16
      %v9323 = vrot.slane %v9321, 4
      %v9324 = vshll.u32 %v9209, 16
      %v9326 = vrot.slane %v9324, 5
      %v9327 = vor.u32 %v9323, %v9326
      %v9328 = vrot.slane %v9327, 4
      %v9330 = vshll.u32 %v9210, 16
      %v9332 = vrot.slane %v9330, 5
      %v9333 = vsel %vm341, %v9328, %v9332
      %v9334 = vshrl.u32 %v9210, 16
      %v9336 = vrot.slane %v9334, 4
      %v9337 = vor.u32 %v9336, %v9332
      %v9338 = vrot.slane %v9337, 4
      %v9340 = vshll.u32 %v9211, 16
      %v9342 = vrot.slane %v9340, 5
      %v9343 = vsel %vm341, %v9338, %v9342
      %v9345 = vshrl.u32 %v9212, 16
      %v9347 = vrot.slane %v9345, 4
      %v9348 = vshll.u32 %v9212, 16
      %v9350 = vrot.slane %v9348, 5
      %v9351 = vor.u32 %v9347, %v9350
      %v9352 = vrot.slane %v9351, 4
      %v9354 = vshll.u32 %v9213, 16
      %v9356 = vrot.slane %v9354, 5
      %v9357 = vsel %vm341, %v9352, %v9356
      %v9358 = vshrl.u32 %v9213, 16
      %v9360 = vrot.slane %v9358, 4
      %v9361 = vor.u32 %v9360, %v9356
      %v9362 = vrot.slane %v9361, 4
      %v9364 = vshll.u32 %v9214, 16
      %v9366 = vrot.slane %v9364, 5
      %v9367 = vsel %vm341, %v9362, %v9366
      %v9369 = vshrl.u32 %v9215, 16
      %v9371 = vrot.slane %v9369, 4
      %v9372 = vshll.u32 %v9215, 16
      %v9374 = vrot.slane %v9372, 5
      %v9375 = vor.u32 %v9371, %v9374
      %v9376 = vrot.slane %v9375, 4
      %v9378 = vshll.u32 %v9216, 16
      %v9380 = vrot.slane %v9378, 5
      %v9381 = vsel %vm341, %v9376, %v9380
      %v9382 = vshrl.u32 %v9216, 16
      %v9384 = vrot.slane %v9382, 4
      %v9385 = vor.u32 %v9384, %v9380
      %v9386 = vrot.slane %v9385, 4
      %v9388 = vshll.u32 %v9217, 16
      %v9390 = vrot.slane %v9388, 5
      %v9391 = vsel %vm341, %v9386, %v9390
      %v9393 = vshrl.u32 %v9218, 16
      %v9395 = vrot.slane %v9393, 4
      %v9396 = vshll.u32 %v9218, 16
      %v9398 = vrot.slane %v9396, 5
      %v9399 = vor.u32 %v9395, %v9398
      %v9400 = vrot.slane %v9399, 4
      %v9402 = vshll.u32 %v9219, 16
      %v9404 = vrot.slane %v9402, 5
      %v9405 = vsel %vm341, %v9400, %v9404
      %v9406 = vshrl.u32 %v9219, 16
      %v9408 = vrot.slane %v9406, 4
      %v9409 = vor.u32 %v9408, %v9404
      %v9410 = vrot.slane %v9409, 4
      %v9412 = vshll.u32 %v9220, 16
      %v9414 = vrot.slane %v9412, 5
      %v9415 = vsel %vm341, %v9410, %v9414
      %v9417 = vshrl.u32 %v9221, 16
      %v9419 = vrot.slane %v9417, 4
      %v9420 = vshll.u32 %v9221, 16
      %v9422 = vrot.slane %v9420, 5
      %v9423 = vor.u32 %v9419, %v9422
      %v9424 = vrot.slane %v9423, 4
      %v9426 = vshll.u32 %v9222, 16
      %v9428 = vrot.slane %v9426, 5
      %v9429 = vsel %vm341, %v9424, %v9428
      %v9430 = vshrl.u32 %v9222, 16
      %v9432 = vrot.slane %v9430, 4
      %v9433 = vor.u32 %v9432, %v9428
      %v9434 = vrot.slane %v9433, 4
      %v9436 = vshll.u32 %v9223, 16
      %v9438 = vrot.slane %v9436, 5
      %v9439 = vsel %vm341, %v9434, %v9438
      %v9441 = vshrl.u32 %v9224, 16
      %v9443 = vrot.slane %v9441, 4
      %v9444 = vshll.u32 %v9224, 16
      %v9446 = vrot.slane %v9444, 5
      %v9447 = vor.u32 %v9443, %v9446
      %v9448 = vrot.slane %v9447, 4
      %v9450 = vshll.u32 %v9225, 16
      %v9452 = vrot.slane %v9450, 5
      %v9453 = vsel %vm341, %v9448, %v9452
      %v9454 = vshrl.u32 %v9225, 16
      %v9456 = vrot.slane %v9454, 4
      %v9457 = vor.u32 %v9456, %v9452
      %v9458 = vrot.slane %v9457, 4
      %v9460 = vshll.u32 %v9226, 16
      %v9462 = vrot.slane %v9460, 5
      %v9463 = vsel %vm341, %v9458, %v9462
      %v9465 = vshrl.u32 %v9227, 16
      %v9467 = vrot.slane %v9465, 4
      %v9468 = vshll.u32 %v9227, 16
      %v9470 = vrot.slane %v9468, 5
      %v9471 = vor.u32 %v9467, %v9470
      %v9472 = vrot.slane %v9471, 4
      %v9474 = vshll.u32 %v9228, 16
      %v9476 = vrot.slane %v9474, 5
      %v9477 = vsel %vm341, %v9472, %v9476
      %v9478 = vshrl.u32 %v9228, 16
      %v9480 = vrot.slane %v9478, 4
      %v9481 = vor.u32 %v9480, %v9476
      %v9482 = vrot.slane %v9481, 4
      %v9484 = vshll.u32 %v9229, 16
      %v9486 = vrot.slane %v9484, 5
      %v9487 = vsel %vm341, %v9482, %v9486
      %v9489 = vshrl.u32 %v9230, 16
      %v9491 = vrot.slane %v9489, 4
      %v9492 = vshll.u32 %v9230, 16
      %v9494 = vrot.slane %v9492, 5
      %v9495 = vor.u32 %v9491, %v9494
      %v9496 = vrot.slane %v9495, 4
      %v9498 = vshll.u32 %v9231, 16
      %v9500 = vrot.slane %v9498, 5
      %v9501 = vsel %vm341, %v9496, %v9500
      %v9502 = vshrl.u32 %v9231, 16
      %v9504 = vrot.slane %v9502, 4
      %v9505 = vor.u32 %v9504, %v9500
      %v9506 = vrot.slane %v9505, 4
      %v9508 = vshll.u32 %v9232, 16
      %v9510 = vrot.slane %v9508, 5
      %v9511 = vsel %vm341, %v9506, %v9510
      %v9513 = vshrl.u32 %v9233, 16
      %v9515 = vrot.slane %v9513, 4
      %v9516 = vshll.u32 %v9233, 16
      %v9518 = vrot.slane %v9516, 5
      %v9519 = vor.u32 %v9515, %v9518
      %v9520 = vrot.slane %v9519, 4
      %v9522 = vshll.u32 %v9234, 16
      %v9524 = vrot.slane %v9522, 5
      %v9525 = vsel %vm341, %v9520, %v9524
      %v9526 = vshrl.u32 %v9234, 16
      %v9528 = vrot.slane %v9526, 4
      %v9529 = vor.u32 %v9528, %v9524
      %v9530 = vrot.slane %v9529, 4
      %v9532 = vshll.u32 %v9235, 16
      %v9534 = vrot.slane %v9532, 5
      %v9535 = vsel %vm341, %v9530, %v9534
      %v9537 = vshrl.u32 %v9236, 16
      %v9539 = vrot.slane %v9537, 4
      %v9540 = vshll.u32 %v9236, 16
      %v9542 = vrot.slane %v9540, 5
      %v9543 = vor.u32 %v9539, %v9542
      %v9544 = vrot.slane %v9543, 4
      %v9546 = vshll.u32 %v9237, 16
      %v9548 = vrot.slane %v9546, 5
      %v9549 = vsel %vm341, %v9544, %v9548
      %v9550 = vshrl.u32 %v9237, 16
      %v9552 = vrot.slane %v9550, 4
      %v9553 = vor.u32 %v9552, %v9548
      %v9554 = vrot.slane %v9553, 4
      %v9556 = vshll.u32 %v9238, 16
      %v9558 = vrot.slane %v9556, 5
      %v9559 = vsel %vm341, %v9554, %v9558
      %v9561 = vshrl.u32 %v9239, 16
      %v9563 = vrot.slane %v9561, 4
      %v9564 = vshll.u32 %v9239, 16
      %v9566 = vrot.slane %v9564, 5
      %v9567 = vor.u32 %v9563, %v9566
      %v9568 = vrot.slane %v9567, 4
      %v9570 = vshll.u32 %v9240, 16
      %v9572 = vrot.slane %v9570, 5
      %v9573 = vsel %vm341, %v9568, %v9572
      %v9574 = vshrl.u32 %v9240, 16
      %v9576 = vrot.slane %v9574, 4
      %v9577 = vor.u32 %v9576, %v9572
      %v9578 = vrot.slane %v9577, 4
      %v9580 = vshll.u32 %v9241, 16
      %v9582 = vrot.slane %v9580, 5
      %v9583 = vsel %vm341, %v9578, %v9582
      %v9585 = vshrl.u32 %v9242, 16
      %v9587 = vrot.slane %v9585, 4
      %v9588 = vshll.u32 %v9242, 16
      %v9590 = vrot.slane %v9588, 5
      %v9591 = vor.u32 %v9587, %v9590
      %v9592 = vrot.slane %v9591, 4
      %v9594 = vshll.u32 %v9243, 16
      %v9596 = vrot.slane %v9594, 5
      %v9597 = vsel %vm341, %v9592, %v9596
      %v9598 = vshrl.u32 %v9243, 16
      %v9600 = vrot.slane %v9598, 4
      %v9601 = vor.u32 %v9600, %v9596
      %v9602 = vrot.slane %v9601, 4
      %v9604 = vshll.u32 %v9244, 16
      %v9606 = vrot.slane %v9604, 5
      %v9607 = vsel %vm341, %v9602, %v9606
      %v9609 = vshrl.u32 %v9245, 16
      %v9611 = vrot.slane %v9609, 4
      %v9612 = vshll.u32 %v9245, 16
      %v9614 = vrot.slane %v9612, 5
      %v9615 = vor.u32 %v9611, %v9614
      %v9616 = vrot.slane %v9615, 4
      %v9618 = vshll.u32 %v9246, 16
      %v9620 = vrot.slane %v9618, 5
      %v9621 = vsel %vm341, %v9616, %v9620
      %v9622 = vshrl.u32 %v9246, 16
      %v9624 = vrot.slane %v9622, 4
      %v9625 = vor.u32 %v9624, %v9620
      %v9626 = vrot.slane %v9625, 4
      %v9628 = vshll.u32 %v9247, 16
      %v9630 = vrot.slane %v9628, 5
      %v9631 = vsel %vm341, %v9626, %v9630
      %v9664 = vunpack.c.l.bf16 %v9261
      %v9665 = vunpack.c.l.bf16 %v9271
      %v9666 = vunpack.c.l.bf16 %v9285
      %v9667 = vunpack.c.l.bf16 %v9295
      %v9668 = vunpack.c.l.bf16 %v9309
      %v9669 = vunpack.c.l.bf16 %v9319
      %v9670 = vunpack.c.l.bf16 %v9333
      %v9671 = vunpack.c.l.bf16 %v9343
      %v9672 = vunpack.c.l.bf16 %v9357
      %v9673 = vunpack.c.l.bf16 %v9367
      %v9674 = vunpack.c.l.bf16 %v9381
      %v9675 = vunpack.c.l.bf16 %v9391
      %v9676 = vunpack.c.l.bf16 %v9405
      %v9677 = vunpack.c.l.bf16 %v9415
      %v9678 = vunpack.c.l.bf16 %v9429
      %v9679 = vunpack.c.l.bf16 %v9439
      %v9680 = vunpack.c.l.bf16 %v9453
      %v9681 = vunpack.c.l.bf16 %v9463
      %v9682 = vunpack.c.l.bf16 %v9477
      %v9683 = vunpack.c.l.bf16 %v9487
      %v9684 = vunpack.c.l.bf16 %v9501
      %v9685 = vunpack.c.l.bf16 %v9511
      %v9686 = vunpack.c.l.bf16 %v9525
      %v9687 = vunpack.c.l.bf16 %v9535
      %v9688 = vunpack.c.l.bf16 %v9549
      %v9689 = vunpack.c.l.bf16 %v9559
      %v9690 = vunpack.c.l.bf16 %v9573
      %v9691 = vunpack.c.l.bf16 %v9583
      %v9692 = vunpack.c.l.bf16 %v9597
      %v9693 = vunpack.c.l.bf16 %v9607
      %v9694 = vunpack.c.l.bf16 %v9621
      %v9695 = vunpack.c.l.bf16 %v9631
      %v9696 = vadd.f32 %v9074, %v9664
      %v9697 = vadd.f32 %v9077, %v9665
      %v9698 = vadd.f32 %v9082, %v9666
      %v9699 = vadd.f32 %v9085, %v9667
      %v9700 = vadd.f32 %v9090, %v9668
      %v9701 = vadd.f32 %v9093, %v9669
      %v9702 = vadd.f32 %v9098, %v9670
      %v9703 = vadd.f32 %v9101, %v9671
      %v9704 = vadd.f32 %v9106, %v9672
      %v9705 = vadd.f32 %v9109, %v9673
      %v9706 = vadd.f32 %v9114, %v9674
      %v9707 = vadd.f32 %v9117, %v9675
      %v9708 = vadd.f32 %v9122, %v9676
      %v9709 = vadd.f32 %v9125, %v9677
      %v9710 = vadd.f32 %v9130, %v9678
      %v9711 = vadd.f32 %v9133, %v9679
      %v9712 = vadd.f32 %v9138, %v9680
      %v9713 = vadd.f32 %v9141, %v9681
      %v9714 = vadd.f32 %v9146, %v9682
      %v9715 = vadd.f32 %v9149, %v9683
      %v9716 = vadd.f32 %v9154, %v9684
      %v9717 = vadd.f32 %v9157, %v9685
      %v9718 = vadd.f32 %v9162, %v9686
      %v9719 = vadd.f32 %v9165, %v9687
      %v9720 = vadd.f32 %v9170, %v9688
      %v9721 = vadd.f32 %v9173, %v9689
      %v9722 = vadd.f32 %v9178, %v9690
      %v9723 = vadd.f32 %v9181, %v9691
      %v9724 = vadd.f32 %v9186, %v9692
      %v9725 = vadd.f32 %v9189, %v9693
      %v9726 = vadd.f32 %v9194, %v9694
      %v9727 = vadd.f32 %v9197, %v9695
      %v9728 = vmax.f32 %v9696, 0.0
      %v9729 = vmax.f32 %v9697, 0.0
      %v9730 = vmax.f32 %v9698, 0.0
      %v9731 = vmax.f32 %v9699, 0.0
      %v9732 = vmax.f32 %v9700, 0.0
      %v9733 = vmax.f32 %v9701, 0.0
      %v9734 = vmax.f32 %v9702, 0.0
      %v9735 = vmax.f32 %v9703, 0.0
      %v9736 = vmax.f32 %v9704, 0.0
      %v9737 = vmax.f32 %v9705, 0.0
      %v9738 = vmax.f32 %v9706, 0.0
      %v9739 = vmax.f32 %v9707, 0.0
      %v9740 = vmax.f32 %v9708, 0.0
      %v9741 = vmax.f32 %v9709, 0.0
      %v9742 = vmax.f32 %v9710, 0.0
      %v9743 = vmax.f32 %v9711, 0.0
      %v9744 = vmax.f32 %v9712, 0.0
      %v9745 = vmax.f32 %v9713, 0.0
      %v9746 = vmax.f32 %v9714, 0.0
      %v9747 = vmax.f32 %v9715, 0.0
      %v9748 = vmax.f32 %v9716, 0.0
      %v9749 = vmax.f32 %v9717, 0.0
      %v9750 = vmax.f32 %v9718, 0.0
      %v9751 = vmax.f32 %v9719, 0.0
      %v9752 = vmax.f32 %v9720, 0.0
      %v9753 = vmax.f32 %v9721, 0.0
      %v9754 = vmax.f32 %v9722, 0.0
      %v9755 = vmax.f32 %v9723, 0.0
      %v9756 = vmax.f32 %v9724, 0.0
      %v9757 = vmax.f32 %v9725, 0.0
      %v9758 = vmax.f32 %v9726, 0.0
      %v9759 = vmax.f32 %v9727, 0.0
      %v9760 = vpack.c.bf16 %v9729, %v9728
      %v9761 = vpack.c.bf16 %v9731, %v9730
      %v9762 = vpack.c.bf16 %v9733, %v9732
      %v9763 = vpack.c.bf16 %v9735, %v9734
      %v9764 = vpack.c.bf16 %v9737, %v9736
      %v9765 = vpack.c.bf16 %v9739, %v9738
      %v9766 = vpack.c.bf16 %v9741, %v9740
      %v9767 = vpack.c.bf16 %v9743, %v9742
      %v9768 = vpack.c.bf16 %v9745, %v9744
      %v9769 = vpack.c.bf16 %v9747, %v9746
      %v9770 = vpack.c.bf16 %v9749, %v9748
      %v9771 = vpack.c.bf16 %v9751, %v9750
      %v9772 = vpack.c.bf16 %v9753, %v9752
      %v9773 = vpack.c.bf16 %v9755, %v9754
      %v9774 = vpack.c.bf16 %v9757, %v9756
      %v9775 = vpack.c.bf16 %v9759, %v9758
      %v9792 = vunpack.c.l.b16 %v9760
      %v9793 = vunpack.c.h.b16 %v9760
      %v9794 = vunpack.c.l.b16 %v9761
      %v9795 = vunpack.c.h.b16 %v9761
      %v9796 = vunpack.c.l.b16 %v9762
      %v9797 = vunpack.c.h.b16 %v9762
      %v9798 = vunpack.c.l.b16 %v9763
      %v9799 = vunpack.c.h.b16 %v9763
      %v9800 = vunpack.c.l.b16 %v9764
      %v9801 = vunpack.c.h.b16 %v9764
      %v9802 = vunpack.c.l.b16 %v9765
      %v9803 = vunpack.c.h.b16 %v9765
      %v9804 = vunpack.c.l.b16 %v9766
      %v9805 = vunpack.c.h.b16 %v9766
      %v9806 = vunpack.c.l.b16 %v9767
      %v9807 = vunpack.c.h.b16 %v9767
      %v9808 = vunpack.c.l.b16 %v9768
      %v9809 = vunpack.c.h.b16 %v9768
      %v9810 = vunpack.c.l.b16 %v9769
      %v9811 = vunpack.c.h.b16 %v9769
      %v9812 = vunpack.c.l.b16 %v9770
      %v9813 = vunpack.c.h.b16 %v9770
      %v9814 = vunpack.c.l.b16 %v9771
      %v9815 = vunpack.c.h.b16 %v9771
      %v9816 = vunpack.c.l.b16 %v9772
      %v9817 = vunpack.c.h.b16 %v9772
      %v9818 = vunpack.c.l.b16 %v9773
      %v9819 = vunpack.c.h.b16 %v9773
      %v9820 = vunpack.c.l.b16 %v9774
      %v9821 = vunpack.c.h.b16 %v9774
      %v9822 = vunpack.c.l.b16 %v9775
      %v9823 = vunpack.c.h.b16 %v9775
      %v9824 = vpack.c.b16 %v9792, %v9792
      %v9825 = vpack.c.b16 %v9793, %v9793
      %v9826 = vpack.c.b16 %v9794, %v9794
      %v9827 = vpack.c.b16 %v9795, %v9795
      %v9828 = vpack.c.b16 %v9796, %v9796
      %v9829 = vpack.c.b16 %v9797, %v9797
      %v9830 = vpack.c.b16 %v9798, %v9798
      %v9831 = vpack.c.b16 %v9799, %v9799
      %v9832 = vpack.c.b16 %v9800, %v9800
      %v9833 = vpack.c.b16 %v9801, %v9801
      %v9834 = vpack.c.b16 %v9802, %v9802
      %v9835 = vpack.c.b16 %v9803, %v9803
      %v9836 = vpack.c.b16 %v9804, %v9804
      %v9837 = vpack.c.b16 %v9805, %v9805
      %v9838 = vpack.c.b16 %v9806, %v9806
      %v9839 = vpack.c.b16 %v9807, %v9807
      %v9840 = vpack.c.b16 %v9808, %v9808
      %v9841 = vpack.c.b16 %v9809, %v9809
      %v9842 = vpack.c.b16 %v9810, %v9810
      %v9843 = vpack.c.b16 %v9811, %v9811
      %v9844 = vpack.c.b16 %v9812, %v9812
      %v9845 = vpack.c.b16 %v9813, %v9813
      %v9846 = vpack.c.b16 %v9814, %v9814
      %v9847 = vpack.c.b16 %v9815, %v9815
      %v9848 = vpack.c.b16 %v9816, %v9816
      %v9849 = vpack.c.b16 %v9817, %v9817
      %v9850 = vpack.c.b16 %v9818, %v9818
      %v9851 = vpack.c.b16 %v9819, %v9819
      %v9852 = vpack.c.b16 %v9820, %v9820
      %v9853 = vpack.c.b16 %v9821, %v9821
      %v9854 = vpack.c.b16 %v9822, %v9822
      %v9855 = vpack.c.b16 %v9823, %v9823
      %9888 = vst.msk [vmem:[%s224] sm:$0xf] %vm258, %v9824
      %9889 = vst.msk [vmem:[%s224 + $0x4] sm:$0xf] %vm258, %v9825
      %9890 = vst.msk [vmem:[%s224 + $0x8] sm:$0xf] %vm258, %v9826
      %9891 = vst.msk [vmem:[%s224 + $0xc] sm:$0xf] %vm258, %v9827
      %9892 = vst.msk [vmem:[%s224 + $0x10] sm:$0xf] %vm258, %v9828
      %9893 = vst.msk [vmem:[%s224 + $0x14] sm:$0xf] %vm258, %v9829
      %9894 = vst.msk [vmem:[%s224 + $0x18] sm:$0xf] %vm258, %v9830
      %9895 = vst.msk [vmem:[%s224 + $0x1c] sm:$0xf] %vm258, %v9831
      %9896 = vst.msk [vmem:[%s224 + $0x20] sm:$0xf] %vm258, %v9832
      %9897 = vst.msk [vmem:[%s224 + $0x24] sm:$0xf] %vm258, %v9833
      %9898 = vst.msk [vmem:[%s224 + $0x28] sm:$0xf] %vm258, %v9834
      %9899 = vst.msk [vmem:[%s224 + $0x2c] sm:$0xf] %vm258, %v9835
      %9900 = vst.msk [vmem:[%s224 + $0x30] sm:$0xf] %vm258, %v9836
      %9901 = vst.msk [vmem:[%s224 + $0x34] sm:$0xf] %vm258, %v9837
      %9902 = vst.msk [vmem:[%s224 + $0x38] sm:$0xf] %vm258, %v9838
      %9903 = vst.msk [vmem:[%s224 + $0x3c] sm:$0xf] %vm258, %v9839
      %9904 = vst.msk [vmem:[%s224 + $0x40] sm:$0xf] %vm258, %v9840
      %9905 = vst.msk [vmem:[%s224 + $0x44] sm:$0xf] %vm258, %v9841
      %9906 = vst.msk [vmem:[%s224 + $0x48] sm:$0xf] %vm258, %v9842
      %9907 = vst.msk [vmem:[%s224 + $0x4c] sm:$0xf] %vm258, %v9843
      %9908 = vst.msk [vmem:[%s224 + $0x50] sm:$0xf] %vm258, %v9844
      %9909 = vst.msk [vmem:[%s224 + $0x54] sm:$0xf] %vm258, %v9845
      %9910 = vst.msk [vmem:[%s224 + $0x58] sm:$0xf] %vm258, %v9846
      %9911 = vst.msk [vmem:[%s224 + $0x5c] sm:$0xf] %vm258, %v9847
      %9912 = vst.msk [vmem:[%s224 + $0x60] sm:$0xf] %vm258, %v9848
      %9913 = vst.msk [vmem:[%s224 + $0x64] sm:$0xf] %vm258, %v9849
      %9914 = vst.msk [vmem:[%s224 + $0x68] sm:$0xf] %vm258, %v9850
      %9915 = vst.msk [vmem:[%s224 + $0x6c] sm:$0xf] %vm258, %v9851
      %9916 = vst.msk [vmem:[%s224 + $0x70] sm:$0xf] %vm258, %v9852
      %9917 = vst.msk [vmem:[%s224 + $0x74] sm:$0xf] %vm258, %v9853
      %9918 = vst.msk [vmem:[%s224 + $0x78] sm:$0xf] %vm258, %v9854
      %9919 = vst.msk [vmem:[%s224 + $0x7c] sm:$0xf] %vm258, %v9855
      %p9920 = scmp.lt.s32.totalorder %s16, 1
      %s9921 = scalar_select %p9920, %s16, 1
      %s9922 = smul.addr %s9921, 32
      %s9923 = smul.addr %s9922, 4
      %s9924 = scalar_lea.vmem %s5, %s9923
      // Predicated region
      $region41: #{tpu_custom_call.1} parent=39 // pred_check
        %p9925 = pneg %p144
      $region42: #{tpu_custom_call.1} parent=39 // pred_check_branch
        %9927 = sbr.rel (%p9925) target = $region44
      $region43: #{tpu_custom_call.1} parent=39 // pred_region
        _
      $region44: #{tpu_custom_call.1} parent=39 // pred_fallthru
        _
    $region40: #{tpu_custom_call.1} parent=5 // pred_fallthru
      _
    %p9928 = scmp.le.s32.totalorder 2, %s11
    // Predicated region
    $region45: #{tpu_custom_call.1} parent=5 // pred_check
      %p9929 = pneg %p9928
    $region46: #{tpu_custom_call.1} parent=5 // pred_check_branch
      %9931 = sbr.rel (%p9929) target = $region48
    $region47: #{tpu_custom_call.1} parent=5 // pred_region
      %s9932 = ssub.s32 %s11, 2
      // Predicated region
      $region49: #{tpu_custom_call.1} parent=47 // pred_check
        %p9933 = pneg %p150
      $region50: #{tpu_custom_call.1} parent=47 // pred_check_branch
        %9935 = sbr.rel (%p9933) target = $region52
      $region51: #{tpu_custom_call.1} parent=47 // pred_region
        %p9936 = scmp.lt.s32.totalorder %s17, 1
        %s9937 = scalar_select %p9936, %s17, 1
        %s9938 = smul.addr %s9937, 32
        %s9939 = smul.addr %s9938, 4
        %s9940 = scalar_lea.vmem %s5, %s9939
      $region52: #{tpu_custom_call.1} parent=47 // pred_fallthru
        _
    $region48: #{tpu_custom_call.1} parent=5 // pred_fallthru
      _
  $region6: #{tpu_custom_call.1} parent=0 // loop_footer
    %s15 = sadd.s32 1, %s11
  $region7: #{tpu_custom_call.1} parent=0 // loop_footer_branch
    %10 = sbr.rel target = $region3
  $region8: #{tpu_custom_call.1} parent=0 // loop_exit
    _

</llo_original>
